<compile_context>
chip_gen: v6e
topology: v6e:2x2x1
jax: 0.10.0
libtpu: 0.0.40
codegen_flags: <defaults>
</compile_context>

<pallas_src>
import math
from functools import partial

import numpy as np
import jax
import jax.numpy as jnp
from jax.experimental import pallas as pl
from jax.experimental.pallas import tpu as pltpu

# ---- config (stand-ins for the argparse args) ----
D_MODEL = 64
NHEAD = 4
NUM_LAYERS = 2
TOKEN_T_SIZE = 8
TOKEN_T_OVERLAP = 4
HEAD_DIM = D_MODEL // NHEAD
LN_EPS = 1e-5

# Number of grid programs the batch is split over.  1 = fully collapsed (optimal on
# single-TensorCore v5e/v6e); set to 2 on a 2-TC chip (v7x) to use both cores.
BATCH_GRID_PROGRAMS = 1


# ----------------------------------------------------------------------------
# Fused Pallas kernel: embed linear -> +PE -> N encoder layers -> projection.
# One program handles `b_blk` batch elements as a (b_blk*N, d_model) slab.
# ----------------------------------------------------------------------------
def _fused_forward_kernel(patches_ref, pe_ref, emb_w_ref, proj_w_ref,
                          wqkv_ref, bqkv_ref, wother_ref, vecs_ref, out_ref,
                          *, num_layers, nhead, head_dim, b_blk, n_tok):
    d_model = nhead * head_dim
    bn = b_blk * n_tok
    tsz = patches_ref.shape[-1]

    def layernorm(v, g, b):
        mu = jnp.mean(v, axis=-1, keepdims=True)
        vc = v - mu
        var = jnp.mean(vc * vc, axis=-1, keepdims=True)
        return vc * jax.lax.rsqrt(var + LN_EPS) * g + b

    def split_heads(t):                                  # (BN, d_model) -> (B*H, N, hd)
        t = t.reshape(b_blk, n_tok, nhead, head_dim)
        t = jnp.transpose(t, (0, 2, 1, 3))               # (B, H, N, hd)
        return t.reshape(b_blk * nhead, n_tok, head_dim)

    # --- TimeOnlyEmbedding linear + positional encoding (dropout = identity) ---
    p = patches_ref[...].reshape(bn, tsz)                # (BN, token_t_size)
    emb_b = vecs_ref[0:1, :]                             # (1, d_model)
    x = jnp.dot(p, emb_w_ref[...], preferred_element_type=jnp.float32) + emb_b
    x = x + pe_ref[...]                                  # (BN, d_model)

    # --- stacked custom transformer encoder layers (post-LN, PyTorch MHA) ---
    # NOTE: NUM_LAYERS is tiny (2) so static unroll is fine; if it grows, switch to
    # lax.fori_loop indexing the already-stacked (L, ...) weight slabs.
    for l in range(num_layers):
        base = 2 + 7 * l
        bo  = vecs_ref[base + 0: base + 1, :]
        b1  = vecs_ref[base + 1: base + 2, :]
        b2  = vecs_ref[base + 2: base + 3, :]
        g1  = vecs_ref[base + 3: base + 4, :]
        be1 = vecs_ref[base + 4: base + 5, :]
        g2  = vecs_ref[base + 5: base + 6, :]
        be2 = vecs_ref[base + 6: base + 7, :]

        # Fused QKV projection: one lane-dense (BN,64)x(64,192) MXU dot.
        # (1/sqrt(head_dim) was folded into the Q columns at pack time.)
        qkv = jnp.dot(x, wqkv_ref[l], preferred_element_type=jnp.float32) + bqkv_ref[l]
        q = split_heads(qkv[:, 0:d_model])
        k = split_heads(qkv[:, d_model:2 * d_model])
        v = split_heads(qkv[:, 2 * d_model:3 * d_model])

        # scaled dot-product attention, batched over (batch*head)
        s = jnp.einsum('xqd,xkd->xqk', q, k, preferred_element_type=jnp.float32)
        s = s - jnp.max(s, axis=-1, keepdims=True)
        e = jnp.exp(s)
        pattn = e / jnp.sum(e, axis=-1, keepdims=True)   # exact softmax (parity w/ PyTorch)
        o = jnp.einsum('xqk,xkd->xqd', pattn, v, preferred_element_type=jnp.float32)

        # merge heads back to the lane axis: (B*H, N, hd) -> (BN, d_model)
        o = o.reshape(b_blk, nhead, n_tok, head_dim)
        o = jnp.transpose(o, (0, 2, 1, 3)).reshape(bn, d_model)

        # output projection: one (BN,64)x(64,64) dot (no per-head matmuls / sum)
        attn_out = jnp.dot(o, wother_ref[l, 0], preferred_element_type=jnp.float32) + bo

        # residual + norm1
        x = layernorm(x + attn_out, g1, be1)

        # feed-forward: linear2(relu(linear1(x)))  (dropouts = identity)
        h1 = jnp.maximum(
            jnp.dot(x, wother_ref[l, 1], preferred_element_type=jnp.float32) + b1, 0.0)
        h2 = jnp.dot(h1, wother_ref[l, 2], preferred_element_type=jnp.float32) + b2

        # residual + norm2
        x = layernorm(x + h2, g2, be2)

    # --- final projection back to token_t_size ---
    # Output last dim is 8 (<128 lanes) -> masked store, but total output is tiny.
    proj_b = vecs_ref[1:2, 0:tsz]                        # (1, token_t_size)
    y = jnp.dot(x, proj_w_ref[...], preferred_element_type=jnp.float32) + proj_b
    out_ref[...] = y.reshape(b_blk, n_tok, tsz).astype(out_ref.dtype)


def _const_spec(a):
    nd = a.ndim
    return pl.BlockSpec(a.shape, lambda g, _nd=nd: (0,) * _nd)


# ----------------------------------------------------------------------------
# Host-side constants & parameter packing (done once, not per forward)
# ----------------------------------------------------------------------------
def positional_encoding_np(seq_len, d_model):
    position = np.arange(seq_len, dtype=np.float32)[:, None]
    div_term = np.exp(np.arange(0, d_model, 2, dtype=np.float32)
                      * (-math.log(10000.0) / d_model))
    pe = np.zeros((seq_len, d_model), np.float32)
    pe[:, 0::2] = np.sin(position * div_term)
    pe[:, 1::2] = np.cos(position * div_term)
    return pe


def init_params(key):
    """PyTorch-layout parameters: linear weights are (out_features, in_features)."""
    def dense(k, out_f, in_f, scale=0.05):
        return scale * jax.random.normal(k, (out_f, in_f), dtype=jnp.float32)

    keys = jax.random.split(key, 2 + NUM_LAYERS)
    params = {
        "embed_w": dense(keys[0], D_MODEL, TOKEN_T_SIZE),
        "embed_b": jnp.zeros((D_MODEL,), jnp.float32),
        "proj_w":  dense(keys[1], TOKEN_T_SIZE, D_MODEL),
        "proj_b":  jnp.zeros((TOKEN_T_SIZE,), jnp.float32),
        "layers":  [],
    }
    for i in range(NUM_LAYERS):
        lk = jax.random.split(keys[2 + i], 4)
        params["layers"].append(dict(
            wqkv=dense(lk[0], 3 * D_MODEL, D_MODEL),
            bqkv=jnp.zeros((3 * D_MODEL,), jnp.float32),
            wo=dense(lk[1], D_MODEL, D_MODEL),
            bo=jnp.zeros((D_MODEL,), jnp.float32),
            w1=dense(lk[2], D_MODEL, D_MODEL),
            b1=jnp.zeros((D_MODEL,), jnp.float32),
            w2=dense(lk[3], D_MODEL, D_MODEL),
            b2=jnp.zeros((D_MODEL,), jnp.float32),
            g1=jnp.ones((D_MODEL,), jnp.float32),
            be1=jnp.zeros((D_MODEL,), jnp.float32),
            g2=jnp.ones((D_MODEL,), jnp.float32),
            be2=jnp.zeros((D_MODEL,), jnp.float32),
        ))
    return params


def pack_params(params):
    """One-time conversion to the kernel layout:
       * fused QKV weight (L, d_model, 3*d_model), columns q|k|v, scale folded into q
       * (L, 3, d_model, d_model) slab for [wo, w1, w2] (already (in, out))
       * (L, 1, 3*d_model) fused QKV bias (scale folded into q part)
       * (2 + 7L, d_model) vector slab: embed_b, proj_b(padded), then per layer
         [bo, b1, b2, g1, be1, g2, be2]."""
    scale = 1.0 / math.sqrt(HEAD_DIM)
    layers = params["layers"]

    def qkv_w(lp):
        w = lp["wqkv"].T                                  # (d_model, 3*d_model)
        return w.at[:, :D_MODEL].multiply(scale)          # fold softmax scale into q
    def qkv_b(lp):
        b = lp["bqkv"].at[:D_MODEL].multiply(scale)
        return b.reshape(1, 3 * D_MODEL)

    w_qkv = jnp.stack([qkv_w(lp) for lp in layers], axis=0)            # (L, 64, 192)
    b_qkv = jnp.stack([qkv_b(lp) for lp in layers], axis=0)            # (L, 1, 192)
    w_other = jnp.stack(
        [jnp.stack([lp["wo"].T, lp["w1"].T, lp["w2"].T], axis=0) for lp in layers],
        axis=0)                                                        # (L, 3, 64, 64)

    proj_b_pad = jnp.zeros((D_MODEL,), jnp.float32).at[:TOKEN_T_SIZE].set(params["proj_b"])
    rows = [params["embed_b"], proj_b_pad]
    for lp in layers:
        rows += [lp["bo"], lp["b1"], lp["b2"], lp["g1"], lp["be1"], lp["g2"], lp["be2"]]
    vecs = jnp.stack(rows, axis=0)                                     # (2+7L, 64)

    return {
        "embed_w": params["embed_w"].T,      # (token_t_size, d_model)
        "proj_w":  params["proj_w"].T,       # (d_model, token_t_size)
        "w_qkv": w_qkv, "b_qkv": b_qkv, "w_other": w_other, "vecs": vecs,
    }


# ----------------------------------------------------------------------------
# Full forward pass (matches BaselineTransformerEncoder.forward, eval mode)
# ----------------------------------------------------------------------------
@jax.jit
def baseline_transformer_forward(x, mask, packed):
    x = jnp.where(mask, x, 0.0)                                      # masking
    B, T, D = x.shape

    # TimeOnlyEmbedding patch extraction: index table is a trace-time constant.
    stride = TOKEN_T_SIZE - TOKEN_T_OVERLAP
    starts = np.arange(0, T - TOKEN_T_SIZE + 1, stride)              # (P,)
    idx = starts[:, None] + np.arange(TOKEN_T_SIZE)[None, :]         # (P, token_t_size)
    n_patches = int(starts.shape[0])
    N = D * n_patches
    # token order = (variable d, patch), matching the PyTorch nested loops.
    patches = jnp.transpose(x[:, idx, :], (0, 3, 1, 2)).reshape(B, N, TOKEN_T_SIZE)

    # Grid sizing: default 1 program (whole batch); optionally split across TCs.
    G = BATCH_GRID_PROGRAMS if (BATCH_GRID_PROGRAMS > 0 and B % BATCH_GRID_PROGRAMS == 0) else 1
    b_blk = B // G

    # Positional encoding: numpy constant, pre-tiled to the per-program slab.
    pe = np.tile(positional_encoding_np(N, D_MODEL), (b_blk, 1))     # (b_blk*N, d_model)

    shared = (pe, packed["embed_w"], packed["proj_w"],
              packed["w_qkv"], packed["b_qkv"], packed["w_other"], packed["vecs"])

    kernel = partial(_fused_forward_kernel,
                     num_layers=NUM_LAYERS, nhead=NHEAD, head_dim=HEAD_DIM,
                     b_blk=b_blk, n_tok=N)

    out = pl.pallas_call(
        kernel,
        out_shape=jax.ShapeDtypeStruct((B, N, TOKEN_T_SIZE), jnp.float32),
        grid=(G,),
        in_specs=[pl.BlockSpec((b_blk, N, TOKEN_T_SIZE), lambda g: (g, 0, 0))]
                 + [_const_spec(a) for a in shared],
        out_specs=pl.BlockSpec((b_blk, N, TOKEN_T_SIZE), lambda g: (g, 0, 0)),
        compiler_params=pltpu.CompilerParams(dimension_semantics=("parallel",)),
    )(patches, *shared)
    return out


if __name__ == "__main__":
    key = jax.random.PRNGKey(0)
    kx, km, kp = jax.random.split(key, 3)

    B, T, D = 2, 16, 4                       # batch, time steps, variables
    x = jax.random.normal(kx, (B, T, D), dtype=jnp.float32)
    mask = jax.random.uniform(km, (B, T, D)) > 0.2

    params = init_params(kp)
    packed = pack_params(params)             # one-time layout conversion

    out = baseline_transformer_forward(x, mask, packed)
    out = jax.block_until_ready(out)

    n_patches = len(range(0, T - TOKEN_T_SIZE + 1, TOKEN_T_SIZE - TOKEN_T_OVERLAP))
    assert out.shape == (B, D * n_patches, TOKEN_T_SIZE), out.shape
    assert bool(jnp.all(jnp.isfinite(out)))
    print("KERNEL_OK")
</pallas_src>

<mosaic_0001>
module attributes {stable_mosaic.version = 11 : i64} {
  func.func @_fused_forward_kernel(%arg0: i32, %arg1: memref<2x12x8xf32, #tpu.memory_space<vmem>>, %arg2: memref<24x64xf32, #tpu.memory_space<vmem>>, %arg3: memref<8x64xf32, #tpu.memory_space<vmem>>, %arg4: memref<64x8xf32, #tpu.memory_space<vmem>>, %arg5: memref<2x64x192xf32, #tpu.memory_space<vmem>>, %arg6: memref<2x1x192xf32, #tpu.memory_space<vmem>>, %arg7: memref<2x3x64x64xf32, #tpu.memory_space<vmem>>, %arg8: memref<16x64xf32, #tpu.memory_space<vmem>>, %arg9: memref<2x12x8xf32, #tpu.memory_space<vmem>>) attributes {dimension_semantics = [#tpu.dimension_semantics<parallel>], iteration_bounds = array<i64: 1>, scalar_prefetch = 0 : i64, scratch_operands = 0 : i64, tpu.core_type = #tpu.core_type<tc>, window_params = [{transform_indices = @transform_0, window_bounds = array<i64: 2, 12, 8>}, {pipeline_mode = #tpu.pipeline_mode<synchronous>, transform_indices = @transform_1, window_bounds = array<i64: 24, 64>}, {pipeline_mode = #tpu.pipeline_mode<synchronous>, transform_indices = @transform_2, window_bounds = array<i64: 8, 64>}, {pipeline_mode = #tpu.pipeline_mode<synchronous>, transform_indices = @transform_3, window_bounds = array<i64: 64, 8>}, {pipeline_mode = #tpu.pipeline_mode<synchronous>, transform_indices = @transform_4, window_bounds = array<i64: 2, 64, 192>}, {pipeline_mode = #tpu.pipeline_mode<synchronous>, transform_indices = @transform_5, window_bounds = array<i64: 2, 1, 192>}, {pipeline_mode = #tpu.pipeline_mode<synchronous>, transform_indices = @transform_6, window_bounds = array<i64: 2, 3, 64, 64>}, {pipeline_mode = #tpu.pipeline_mode<synchronous>, transform_indices = @transform_7, window_bounds = array<i64: 16, 64>}, {transform_indices = @transform_8, window_bounds = array<i64: 2, 12, 8>}]} {
    %c0 = arith.constant 0 : index
    %c0_0 = arith.constant 0 : index
    %c0_1 = arith.constant 0 : index
    %0 = vector.load %arg1[%c0, %c0_0, %c0_1] : memref<2x12x8xf32, #tpu.memory_space<vmem>>, vector<2x12x8xf32>
    %1 = vector.shape_cast %0 : vector<2x12x8xf32> to vector<24x8xf32>
    %c0_2 = arith.constant 0 : index
    %c0_3 = arith.constant 0 : index
    %2 = vector.load %arg8[%c0_2, %c0_3] : memref<16x64xf32, #tpu.memory_space<vmem>>, vector<1x64xf32>
    %c0_4 = arith.constant 0 : index
    %c0_5 = arith.constant 0 : index
    %3 = vector.load %arg3[%c0_4, %c0_5] : memref<8x64xf32, #tpu.memory_space<vmem>>, vector<8x64xf32>
    %cst = arith.constant dense<0.000000e+00> : vector<24x64xf32>
    %4 = tpu.matmul %1, %3, %cst {dimension_numbers = #tpu.dot_dimension_numbers<[1], [0], [0], [1], [0, 0, 1, 1], [], []>} : vector<24x8xf32>, vector<8x64xf32>, vector<24x64xf32> -> vector<24x64xf32>
    %5 = vector.broadcast %2 : vector<1x64xf32> to vector<24x64xf32>
    %6 = arith.addf %4, %5 : vector<24x64xf32>
    %c0_6 = arith.constant 0 : index
    %c0_7 = arith.constant 0 : index
    %7 = vector.load %arg2[%c0_6, %c0_7] : memref<24x64xf32, #tpu.memory_space<vmem>>, vector<24x64xf32>
    %8 = arith.addf %6, %7 : vector<24x64xf32>
    %c2 = arith.constant 2 : index
    %c0_8 = arith.constant 0 : index
    %9 = vector.load %arg8[%c2, %c0_8] : memref<16x64xf32, #tpu.memory_space<vmem>>, vector<1x64xf32>
    %c3 = arith.constant 3 : index
    %c0_9 = arith.constant 0 : index
    %10 = vector.load %arg8[%c3, %c0_9] : memref<16x64xf32, #tpu.memory_space<vmem>>, vector<1x64xf32>
    %c4 = arith.constant 4 : index
    %c0_10 = arith.constant 0 : index
    %11 = vector.load %arg8[%c4, %c0_10] : memref<16x64xf32, #tpu.memory_space<vmem>>, vector<1x64xf32>
    %c5 = arith.constant 5 : index
    %c0_11 = arith.constant 0 : index
    %12 = vector.load %arg8[%c5, %c0_11] : memref<16x64xf32, #tpu.memory_space<vmem>>, vector<1x64xf32>
    %c6 = arith.constant 6 : index
    %c0_12 = arith.constant 0 : index
    %13 = vector.load %arg8[%c6, %c0_12] : memref<16x64xf32, #tpu.memory_space<vmem>>, vector<1x64xf32>
    %c7 = arith.constant 7 : index
    %c0_13 = arith.constant 0 : index
    %14 = vector.load %arg8[%c7, %c0_13] : memref<16x64xf32, #tpu.memory_space<vmem>>, vector<1x64xf32>
    %c8 = arith.constant 8 : index
    %c0_14 = arith.constant 0 : index
    %15 = vector.load %arg8[%c8, %c0_14] : memref<16x64xf32, #tpu.memory_space<vmem>>, vector<1x64xf32>
    %c0_15 = arith.constant 0 : index
    %c0_16 = arith.constant 0 : index
    %c0_17 = arith.constant 0 : index
    %16 = vector.load %arg5[%c0_15, %c0_16, %c0_17] : memref<2x64x192xf32, #tpu.memory_space<vmem>>, vector<1x64x192xf32>
    %17 = vector.shape_cast %16 : vector<1x64x192xf32> to vector<64x192xf32>
    %cst_18 = arith.constant dense<0.000000e+00> : vector<24x192xf32>
    %18 = tpu.matmul %8, %17, %cst_18 {dimension_numbers = #tpu.dot_dimension_numbers<[1], [0], [0], [1], [0, 0, 1, 1], [], []>} : vector<24x64xf32>, vector<64x192xf32>, vector<24x192xf32> -> vector<24x192xf32>
    %c0_19 = arith.constant 0 : index
    %c0_20 = arith.constant 0 : index
    %c0_21 = arith.constant 0 : index
    %19 = vector.load %arg6[%c0_19, %c0_20, %c0_21] : memref<2x1x192xf32, #tpu.memory_space<vmem>>, vector<1x1x192xf32>
    %20 = vector.shape_cast %19 : vector<1x1x192xf32> to vector<1x192xf32>
    %21 = vector.broadcast %20 : vector<1x192xf32> to vector<24x192xf32>
    %22 = arith.addf %18, %21 : vector<24x192xf32>
    %23 = vector.extract_strided_slice %22 {offsets = [0, 0], sizes = [24, 64], strides = [1, 1]} : vector<24x192xf32> to vector<24x64xf32>
    %24 = vector.shape_cast %23 : vector<24x64xf32> to vector<2x12x4x16xf32>
    %25 = tpu.transpose %24, [0, 2, 1, 3] : vector<2x12x4x16xf32> -> vector<2x4x12x16xf32>
    %26 = vector.shape_cast %25 : vector<2x4x12x16xf32> to vector<8x12x16xf32>
    %27 = vector.extract_strided_slice %22 {offsets = [0, 64], sizes = [24, 64], strides = [1, 1]} : vector<24x192xf32> to vector<24x64xf32>
    %28 = vector.shape_cast %27 : vector<24x64xf32> to vector<2x12x4x16xf32>
    %29 = tpu.transpose %28, [0, 2, 1, 3] : vector<2x12x4x16xf32> -> vector<2x4x12x16xf32>
    %30 = vector.shape_cast %29 : vector<2x4x12x16xf32> to vector<8x12x16xf32>
    %31 = vector.extract_strided_slice %22 {offsets = [0, 128], sizes = [24, 64], strides = [1, 1]} : vector<24x192xf32> to vector<24x64xf32>
    %32 = vector.shape_cast %31 : vector<24x64xf32> to vector<2x12x4x16xf32>
    %33 = tpu.transpose %32, [0, 2, 1, 3] : vector<2x12x4x16xf32> -> vector<2x4x12x16xf32>
    %34 = vector.shape_cast %33 : vector<2x4x12x16xf32> to vector<8x12x16xf32>
    "tpu.trace_start"() <{level = 10 : i32, message = "xqd,xkd->xqk"}> : () -> ()
    %cst_22 = arith.constant dense<0.000000e+00> : vector<8x12x12xf32>
    %35 = tpu.matmul %26, %30, %cst_22 {dimension_numbers = #tpu.dot_dimension_numbers<[2], [2], [1], [1], [0, 0, 0, 1, 1, 1], [0], [0]>} : vector<8x12x16xf32>, vector<8x12x16xf32>, vector<8x12x12xf32> -> vector<8x12x12xf32>
    "tpu.trace_stop"() : () -> ()
    %cst_23 = arith.constant dense<0xFF800000> : vector<8x12xf32>
    %36 = vector.multi_reduction <maximumf>, %35, %cst_23 [2] : vector<8x12x12xf32> to vector<8x12xf32>
    %37 = vector.shape_cast %36 : vector<8x12xf32> to vector<8x12x1xf32>
    %38 = vector.broadcast %37 : vector<8x12x1xf32> to vector<8x12x12xf32>
    %39 = arith.subf %35, %38 : vector<8x12x12xf32>
    %40 = math.exp %39 : vector<8x12x12xf32>
    %cst_24 = arith.constant dense<0.000000e+00> : vector<8x12xf32>
    %41 = vector.multi_reduction <add>, %40, %cst_24 [2] : vector<8x12x12xf32> to vector<8x12xf32>
    %42 = vector.shape_cast %41 : vector<8x12xf32> to vector<8x12x1xf32>
    %43 = vector.broadcast %42 : vector<8x12x1xf32> to vector<8x12x12xf32>
    %44 = arith.divf %40, %43 : vector<8x12x12xf32>
    "tpu.trace_start"() <{level = 10 : i32, message = "xqk,xkd->xqd"}> : () -> ()
    %cst_25 = arith.constant dense<0.000000e+00> : vector<8x12x16xf32>
    %45 = tpu.matmul %44, %34, %cst_25 {dimension_numbers = #tpu.dot_dimension_numbers<[2], [1], [1], [2], [0, 0, 0, 1, 1, 2], [0], [0]>} : vector<8x12x12xf32>, vector<8x12x16xf32>, vector<8x12x16xf32> -> vector<8x12x16xf32>
    "tpu.trace_stop"() : () -> ()
    %46 = vector.shape_cast %45 : vector<8x12x16xf32> to vector<2x4x12x16xf32>
    %47 = tpu.transpose %46, [0, 2, 1, 3] : vector<2x4x12x16xf32> -> vector<2x12x4x16xf32>
    %48 = vector.shape_cast %47 : vector<2x12x4x16xf32> to vector<24x64xf32>
    %c0_26 = arith.constant 0 : index
    %c0_27 = arith.constant 0 : index
    %c0_28 = arith.constant 0 : index
    %c0_29 = arith.constant 0 : index
    %49 = vector.load %arg7[%c0_26, %c0_27, %c0_28, %c0_29] : memref<2x3x64x64xf32, #tpu.memory_space<vmem>>, vector<1x1x64x64xf32>
    %50 = vector.shape_cast %49 : vector<1x1x64x64xf32> to vector<64x64xf32>
    %cst_30 = arith.constant dense<0.000000e+00> : vector<24x64xf32>
    %51 = tpu.matmul %48, %50, %cst_30 {dimension_numbers = #tpu.dot_dimension_numbers<[1], [0], [0], [1], [0, 0, 1, 1], [], []>} : vector<24x64xf32>, vector<64x64xf32>, vector<24x64xf32> -> vector<24x64xf32>
    %52 = vector.broadcast %9 : vector<1x64xf32> to vector<24x64xf32>
    %53 = arith.addf %51, %52 : vector<24x64xf32>
    %54 = arith.addf %8, %53 : vector<24x64xf32>
    %cst_31 = arith.constant dense<0.000000e+00> : vector<24xf32>
    %55 = vector.multi_reduction <add>, %54, %cst_31 [1] : vector<24x64xf32> to vector<24xf32>
    %56 = vector.shape_cast %55 : vector<24xf32> to vector<24x1xf32>
    %cst_32 = arith.constant 6.400000e+01 : f32
    %57 = vector.broadcast %cst_32 : f32 to vector<24x1xf32>
    %58 = arith.divf %56, %57 : vector<24x1xf32>
    %59 = vector.broadcast %58 : vector<24x1xf32> to vector<24x64xf32>
    %60 = arith.subf %54, %59 : vector<24x64xf32>
    %61 = arith.mulf %60, %60 : vector<24x64xf32>
    %cst_33 = arith.constant dense<0.000000e+00> : vector<24xf32>
    %62 = vector.multi_reduction <add>, %61, %cst_33 [1] : vector<24x64xf32> to vector<24xf32>
    %63 = vector.shape_cast %62 : vector<24xf32> to vector<24x1xf32>
    %cst_34 = arith.constant 6.400000e+01 : f32
    %64 = vector.broadcast %cst_34 : f32 to vector<24x1xf32>
    %65 = arith.divf %63, %64 : vector<24x1xf32>
    %cst_35 = arith.constant 9.99999974E-6 : f32
    %66 = vector.broadcast %cst_35 : f32 to vector<24x1xf32>
    %67 = arith.addf %65, %66 : vector<24x1xf32>
    %68 = math.rsqrt %67 : vector<24x1xf32>
    %69 = vector.broadcast %68 : vector<24x1xf32> to vector<24x64xf32>
    %70 = arith.mulf %60, %69 : vector<24x64xf32>
    %71 = vector.broadcast %12 : vector<1x64xf32> to vector<24x64xf32>
    %72 = arith.mulf %70, %71 : vector<24x64xf32>
    %73 = vector.broadcast %13 : vector<1x64xf32> to vector<24x64xf32>
    %74 = arith.addf %72, %73 : vector<24x64xf32>
    %c0_36 = arith.constant 0 : index
    %c1 = arith.constant 1 : index
    %c0_37 = arith.constant 0 : index
    %c0_38 = arith.constant 0 : index
    %75 = vector.load %arg7[%c0_36, %c1, %c0_37, %c0_38] : memref<2x3x64x64xf32, #tpu.memory_space<vmem>>, vector<1x1x64x64xf32>
    %76 = vector.shape_cast %75 : vector<1x1x64x64xf32> to vector<64x64xf32>
    %cst_39 = arith.constant dense<0.000000e+00> : vector<24x64xf32>
    %77 = tpu.matmul %74, %76, %cst_39 {dimension_numbers = #tpu.dot_dimension_numbers<[1], [0], [0], [1], [0, 0, 1, 1], [], []>} : vector<24x64xf32>, vector<64x64xf32>, vector<24x64xf32> -> vector<24x64xf32>
    %78 = vector.broadcast %10 : vector<1x64xf32> to vector<24x64xf32>
    %79 = arith.addf %77, %78 : vector<24x64xf32>
    %cst_40 = arith.constant 0.000000e+00 : f32
    %80 = vector.broadcast %cst_40 : f32 to vector<24x64xf32>
    %81 = arith.maximumf %79, %80 : vector<24x64xf32>
    %c0_41 = arith.constant 0 : index
    %c2_42 = arith.constant 2 : index
    %c0_43 = arith.constant 0 : index
    %c0_44 = arith.constant 0 : index
    %82 = vector.load %arg7[%c0_41, %c2_42, %c0_43, %c0_44] : memref<2x3x64x64xf32, #tpu.memory_space<vmem>>, vector<1x1x64x64xf32>
    %83 = vector.shape_cast %82 : vector<1x1x64x64xf32> to vector<64x64xf32>
    %cst_45 = arith.constant dense<0.000000e+00> : vector<24x64xf32>
    %84 = tpu.matmul %81, %83, %cst_45 {dimension_numbers = #tpu.dot_dimension_numbers<[1], [0], [0], [1], [0, 0, 1, 1], [], []>} : vector<24x64xf32>, vector<64x64xf32>, vector<24x64xf32> -> vector<24x64xf32>
    %85 = vector.broadcast %11 : vector<1x64xf32> to vector<24x64xf32>
    %86 = arith.addf %84, %85 : vector<24x64xf32>
    %87 = arith.addf %74, %86 : vector<24x64xf32>
    %cst_46 = arith.constant dense<0.000000e+00> : vector<24xf32>
    %88 = vector.multi_reduction <add>, %87, %cst_46 [1] : vector<24x64xf32> to vector<24xf32>
    %89 = vector.shape_cast %88 : vector<24xf32> to vector<24x1xf32>
    %cst_47 = arith.constant 6.400000e+01 : f32
    %90 = vector.broadcast %cst_47 : f32 to vector<24x1xf32>
    %91 = arith.divf %89, %90 : vector<24x1xf32>
    %92 = vector.broadcast %91 : vector<24x1xf32> to vector<24x64xf32>
    %93 = arith.subf %87, %92 : vector<24x64xf32>
    %94 = arith.mulf %93, %93 : vector<24x64xf32>
    %cst_48 = arith.constant dense<0.000000e+00> : vector<24xf32>
    %95 = vector.multi_reduction <add>, %94, %cst_48 [1] : vector<24x64xf32> to vector<24xf32>
    %96 = vector.shape_cast %95 : vector<24xf32> to vector<24x1xf32>
    %cst_49 = arith.constant 6.400000e+01 : f32
    %97 = vector.broadcast %cst_49 : f32 to vector<24x1xf32>
    %98 = arith.divf %96, %97 : vector<24x1xf32>
    %cst_50 = arith.constant 9.99999974E-6 : f32
    %99 = vector.broadcast %cst_50 : f32 to vector<24x1xf32>
    %100 = arith.addf %98, %99 : vector<24x1xf32>
    %101 = math.rsqrt %100 : vector<24x1xf32>
    %102 = vector.broadcast %101 : vector<24x1xf32> to vector<24x64xf32>
    %103 = arith.mulf %93, %102 : vector<24x64xf32>
    %104 = vector.broadcast %14 : vector<1x64xf32> to vector<24x64xf32>
    %105 = arith.mulf %103, %104 : vector<24x64xf32>
    %106 = vector.broadcast %15 : vector<1x64xf32> to vector<24x64xf32>
    %107 = arith.addf %105, %106 : vector<24x64xf32>
    %c9 = arith.constant 9 : index
    %c0_51 = arith.constant 0 : index
    %108 = vector.load %arg8[%c9, %c0_51] : memref<16x64xf32, #tpu.memory_space<vmem>>, vector<1x64xf32>
    %c10 = arith.constant 10 : index
    %c0_52 = arith.constant 0 : index
    %109 = vector.load %arg8[%c10, %c0_52] : memref<16x64xf32, #tpu.memory_space<vmem>>, vector<1x64xf32>
    %c11 = arith.constant 11 : index
    %c0_53 = arith.constant 0 : index
    %110 = vector.load %arg8[%c11, %c0_53] : memref<16x64xf32, #tpu.memory_space<vmem>>, vector<1x64xf32>
    %c12 = arith.constant 12 : index
    %c0_54 = arith.constant 0 : index
    %111 = vector.load %arg8[%c12, %c0_54] : memref<16x64xf32, #tpu.memory_space<vmem>>, vector<1x64xf32>
    %c13 = arith.constant 13 : index
    %c0_55 = arith.constant 0 : index
    %112 = vector.load %arg8[%c13, %c0_55] : memref<16x64xf32, #tpu.memory_space<vmem>>, vector<1x64xf32>
    %c14 = arith.constant 14 : index
    %c0_56 = arith.constant 0 : index
    %113 = vector.load %arg8[%c14, %c0_56] : memref<16x64xf32, #tpu.memory_space<vmem>>, vector<1x64xf32>
    %c15 = arith.constant 15 : index
    %c0_57 = arith.constant 0 : index
    %114 = vector.load %arg8[%c15, %c0_57] : memref<16x64xf32, #tpu.memory_space<vmem>>, vector<1x64xf32>
    %c1_58 = arith.constant 1 : index
    %c0_59 = arith.constant 0 : index
    %c0_60 = arith.constant 0 : index
    %115 = vector.load %arg5[%c1_58, %c0_59, %c0_60] : memref<2x64x192xf32, #tpu.memory_space<vmem>>, vector<1x64x192xf32>
    %116 = vector.shape_cast %115 : vector<1x64x192xf32> to vector<64x192xf32>
    %cst_61 = arith.constant dense<0.000000e+00> : vector<24x192xf32>
    %117 = tpu.matmul %107, %116, %cst_61 {dimension_numbers = #tpu.dot_dimension_numbers<[1], [0], [0], [1], [0, 0, 1, 1], [], []>} : vector<24x64xf32>, vector<64x192xf32>, vector<24x192xf32> -> vector<24x192xf32>
    %c1_62 = arith.constant 1 : index
    %c0_63 = arith.constant 0 : index
    %c0_64 = arith.constant 0 : index
    %118 = vector.load %arg6[%c1_62, %c0_63, %c0_64] : memref<2x1x192xf32, #tpu.memory_space<vmem>>, vector<1x1x192xf32>
    %119 = vector.shape_cast %118 : vector<1x1x192xf32> to vector<1x192xf32>
    %120 = vector.broadcast %119 : vector<1x192xf32> to vector<24x192xf32>
    %121 = arith.addf %117, %120 : vector<24x192xf32>
    %122 = vector.extract_strided_slice %121 {offsets = [0, 0], sizes = [24, 64], strides = [1, 1]} : vector<24x192xf32> to vector<24x64xf32>
    %123 = vector.shape_cast %122 : vector<24x64xf32> to vector<2x12x4x16xf32>
    %124 = tpu.transpose %123, [0, 2, 1, 3] : vector<2x12x4x16xf32> -> vector<2x4x12x16xf32>
    %125 = vector.shape_cast %124 : vector<2x4x12x16xf32> to vector<8x12x16xf32>
    %126 = vector.extract_strided_slice %121 {offsets = [0, 64], sizes = [24, 64], strides = [1, 1]} : vector<24x192xf32> to vector<24x64xf32>
    %127 = vector.shape_cast %126 : vector<24x64xf32> to vector<2x12x4x16xf32>
    %128 = tpu.transpose %127, [0, 2, 1, 3] : vector<2x12x4x16xf32> -> vector<2x4x12x16xf32>
    %129 = vector.shape_cast %128 : vector<2x4x12x16xf32> to vector<8x12x16xf32>
    %130 = vector.extract_strided_slice %121 {offsets = [0, 128], sizes = [24, 64], strides = [1, 1]} : vector<24x192xf32> to vector<24x64xf32>
    %131 = vector.shape_cast %130 : vector<24x64xf32> to vector<2x12x4x16xf32>
    %132 = tpu.transpose %131, [0, 2, 1, 3] : vector<2x12x4x16xf32> -> vector<2x4x12x16xf32>
    %133 = vector.shape_cast %132 : vector<2x4x12x16xf32> to vector<8x12x16xf32>
    "tpu.trace_start"() <{level = 10 : i32, message = "xqd,xkd->xqk"}> : () -> ()
    %cst_65 = arith.constant dense<0.000000e+00> : vector<8x12x12xf32>
    %134 = tpu.matmul %125, %129, %cst_65 {dimension_numbers = #tpu.dot_dimension_numbers<[2], [2], [1], [1], [0, 0, 0, 1, 1, 1], [0], [0]>} : vector<8x12x16xf32>, vector<8x12x16xf32>, vector<8x12x12xf32> -> vector<8x12x12xf32>
    "tpu.trace_stop"() : () -> ()
    %cst_66 = arith.constant dense<0xFF800000> : vector<8x12xf32>
    %135 = vector.multi_reduction <maximumf>, %134, %cst_66 [2] : vector<8x12x12xf32> to vector<8x12xf32>
    %136 = vector.shape_cast %135 : vector<8x12xf32> to vector<8x12x1xf32>
    %137 = vector.broadcast %136 : vector<8x12x1xf32> to vector<8x12x12xf32>
    %138 = arith.subf %134, %137 : vector<8x12x12xf32>
    %139 = math.exp %138 : vector<8x12x12xf32>
    %cst_67 = arith.constant dense<0.000000e+00> : vector<8x12xf32>
    %140 = vector.multi_reduction <add>, %139, %cst_67 [2] : vector<8x12x12xf32> to vector<8x12xf32>
    %141 = vector.shape_cast %140 : vector<8x12xf32> to vector<8x12x1xf32>
    %142 = vector.broadcast %141 : vector<8x12x1xf32> to vector<8x12x12xf32>
    %143 = arith.divf %139, %142 : vector<8x12x12xf32>
    "tpu.trace_start"() <{level = 10 : i32, message = "xqk,xkd->xqd"}> : () -> ()
    %cst_68 = arith.constant dense<0.000000e+00> : vector<8x12x16xf32>
    %144 = tpu.matmul %143, %133, %cst_68 {dimension_numbers = #tpu.dot_dimension_numbers<[2], [1], [1], [2], [0, 0, 0, 1, 1, 2], [0], [0]>} : vector<8x12x12xf32>, vector<8x12x16xf32>, vector<8x12x16xf32> -> vector<8x12x16xf32>
    "tpu.trace_stop"() : () -> ()
    %145 = vector.shape_cast %144 : vector<8x12x16xf32> to vector<2x4x12x16xf32>
    %146 = tpu.transpose %145, [0, 2, 1, 3] : vector<2x4x12x16xf32> -> vector<2x12x4x16xf32>
    %147 = vector.shape_cast %146 : vector<2x12x4x16xf32> to vector<24x64xf32>
    %c1_69 = arith.constant 1 : index
    %c0_70 = arith.constant 0 : index
    %c0_71 = arith.constant 0 : index
    %c0_72 = arith.constant 0 : index
    %148 = vector.load %arg7[%c1_69, %c0_70, %c0_71, %c0_72] : memref<2x3x64x64xf32, #tpu.memory_space<vmem>>, vector<1x1x64x64xf32>
    %149 = vector.shape_cast %148 : vector<1x1x64x64xf32> to vector<64x64xf32>
    %cst_73 = arith.constant dense<0.000000e+00> : vector<24x64xf32>
    %150 = tpu.matmul %147, %149, %cst_73 {dimension_numbers = #tpu.dot_dimension_numbers<[1], [0], [0], [1], [0, 0, 1, 1], [], []>} : vector<24x64xf32>, vector<64x64xf32>, vector<24x64xf32> -> vector<24x64xf32>
    %151 = vector.broadcast %108 : vector<1x64xf32> to vector<24x64xf32>
    %152 = arith.addf %150, %151 : vector<24x64xf32>
    %153 = arith.addf %107, %152 : vector<24x64xf32>
    %cst_74 = arith.constant dense<0.000000e+00> : vector<24xf32>
    %154 = vector.multi_reduction <add>, %153, %cst_74 [1] : vector<24x64xf32> to vector<24xf32>
    %155 = vector.shape_cast %154 : vector<24xf32> to vector<24x1xf32>
    %cst_75 = arith.constant 6.400000e+01 : f32
    %156 = vector.broadcast %cst_75 : f32 to vector<24x1xf32>
    %157 = arith.divf %155, %156 : vector<24x1xf32>
    %158 = vector.broadcast %157 : vector<24x1xf32> to vector<24x64xf32>
    %159 = arith.subf %153, %158 : vector<24x64xf32>
    %160 = arith.mulf %159, %159 : vector<24x64xf32>
    %cst_76 = arith.constant dense<0.000000e+00> : vector<24xf32>
    %161 = vector.multi_reduction <add>, %160, %cst_76 [1] : vector<24x64xf32> to vector<24xf32>
    %162 = vector.shape_cast %161 : vector<24xf32> to vector<24x1xf32>
    %cst_77 = arith.constant 6.400000e+01 : f32
    %163 = vector.broadcast %cst_77 : f32 to vector<24x1xf32>
    %164 = arith.divf %162, %163 : vector<24x1xf32>
    %cst_78 = arith.constant 9.99999974E-6 : f32
    %165 = vector.broadcast %cst_78 : f32 to vector<24x1xf32>
    %166 = arith.addf %164, %165 : vector<24x1xf32>
    %167 = math.rsqrt %166 : vector<24x1xf32>
    %168 = vector.broadcast %167 : vector<24x1xf32> to vector<24x64xf32>
    %169 = arith.mulf %159, %168 : vector<24x64xf32>
    %170 = vector.broadcast %111 : vector<1x64xf32> to vector<24x64xf32>
    %171 = arith.mulf %169, %170 : vector<24x64xf32>
    %172 = vector.broadcast %112 : vector<1x64xf32> to vector<24x64xf32>
    %173 = arith.addf %171, %172 : vector<24x64xf32>
    %c1_79 = arith.constant 1 : index
    %c1_80 = arith.constant 1 : index
    %c0_81 = arith.constant 0 : index
    %c0_82 = arith.constant 0 : index
    %174 = vector.load %arg7[%c1_79, %c1_80, %c0_81, %c0_82] : memref<2x3x64x64xf32, #tpu.memory_space<vmem>>, vector<1x1x64x64xf32>
    %175 = vector.shape_cast %174 : vector<1x1x64x64xf32> to vector<64x64xf32>
    %cst_83 = arith.constant dense<0.000000e+00> : vector<24x64xf32>
    %176 = tpu.matmul %173, %175, %cst_83 {dimension_numbers = #tpu.dot_dimension_numbers<[1], [0], [0], [1], [0, 0, 1, 1], [], []>} : vector<24x64xf32>, vector<64x64xf32>, vector<24x64xf32> -> vector<24x64xf32>
    %177 = vector.broadcast %109 : vector<1x64xf32> to vector<24x64xf32>
    %178 = arith.addf %176, %177 : vector<24x64xf32>
    %cst_84 = arith.constant 0.000000e+00 : f32
    %179 = vector.broadcast %cst_84 : f32 to vector<24x64xf32>
    %180 = arith.maximumf %178, %179 : vector<24x64xf32>
    %c1_85 = arith.constant 1 : index
    %c2_86 = arith.constant 2 : index
    %c0_87 = arith.constant 0 : index
    %c0_88 = arith.constant 0 : index
    %181 = vector.load %arg7[%c1_85, %c2_86, %c0_87, %c0_88] : memref<2x3x64x64xf32, #tpu.memory_space<vmem>>, vector<1x1x64x64xf32>
    %182 = vector.shape_cast %181 : vector<1x1x64x64xf32> to vector<64x64xf32>
    %cst_89 = arith.constant dense<0.000000e+00> : vector<24x64xf32>
    %183 = tpu.matmul %180, %182, %cst_89 {dimension_numbers = #tpu.dot_dimension_numbers<[1], [0], [0], [1], [0, 0, 1, 1], [], []>} : vector<24x64xf32>, vector<64x64xf32>, vector<24x64xf32> -> vector<24x64xf32>
    %184 = vector.broadcast %110 : vector<1x64xf32> to vector<24x64xf32>
    %185 = arith.addf %183, %184 : vector<24x64xf32>
    %186 = arith.addf %173, %185 : vector<24x64xf32>
    %cst_90 = arith.constant dense<0.000000e+00> : vector<24xf32>
    %187 = vector.multi_reduction <add>, %186, %cst_90 [1] : vector<24x64xf32> to vector<24xf32>
    %188 = vector.shape_cast %187 : vector<24xf32> to vector<24x1xf32>
    %cst_91 = arith.constant 6.400000e+01 : f32
    %189 = vector.broadcast %cst_91 : f32 to vector<24x1xf32>
    %190 = arith.divf %188, %189 : vector<24x1xf32>
    %191 = vector.broadcast %190 : vector<24x1xf32> to vector<24x64xf32>
    %192 = arith.subf %186, %191 : vector<24x64xf32>
    %193 = arith.mulf %192, %192 : vector<24x64xf32>
    %cst_92 = arith.constant dense<0.000000e+00> : vector<24xf32>
    %194 = vector.multi_reduction <add>, %193, %cst_92 [1] : vector<24x64xf32> to vector<24xf32>
    %195 = vector.shape_cast %194 : vector<24xf32> to vector<24x1xf32>
    %cst_93 = arith.constant 6.400000e+01 : f32
    %196 = vector.broadcast %cst_93 : f32 to vector<24x1xf32>
    %197 = arith.divf %195, %196 : vector<24x1xf32>
    %cst_94 = arith.constant 9.99999974E-6 : f32
    %198 = vector.broadcast %cst_94 : f32 to vector<24x1xf32>
    %199 = arith.addf %197, %198 : vector<24x1xf32>
    %200 = math.rsqrt %199 : vector<24x1xf32>
    %201 = vector.broadcast %200 : vector<24x1xf32> to vector<24x64xf32>
    %202 = arith.mulf %192, %201 : vector<24x64xf32>
    %203 = vector.broadcast %113 : vector<1x64xf32> to vector<24x64xf32>
    %204 = arith.mulf %202, %203 : vector<24x64xf32>
    %205 = vector.broadcast %114 : vector<1x64xf32> to vector<24x64xf32>
    %206 = arith.addf %204, %205 : vector<24x64xf32>
    %c1_95 = arith.constant 1 : index
    %c0_96 = arith.constant 0 : index
    %207 = vector.load %arg8[%c1_95, %c0_96] : memref<16x64xf32, #tpu.memory_space<vmem>>, vector<1x8xf32>
    %c0_97 = arith.constant 0 : index
    %c0_98 = arith.constant 0 : index
    %208 = vector.load %arg4[%c0_97, %c0_98] : memref<64x8xf32, #tpu.memory_space<vmem>>, vector<64x8xf32>
    %cst_99 = arith.constant dense<0.000000e+00> : vector<24x8xf32>
    %209 = tpu.matmul %206, %208, %cst_99 {dimension_numbers = #tpu.dot_dimension_numbers<[1], [0], [0], [1], [0, 0, 1, 1], [], []>} : vector<24x64xf32>, vector<64x8xf32>, vector<24x8xf32> -> vector<24x8xf32>
    %210 = vector.broadcast %207 : vector<1x8xf32> to vector<24x8xf32>
    %211 = arith.addf %209, %210 : vector<24x8xf32>
    %212 = vector.shape_cast %211 : vector<24x8xf32> to vector<2x12x8xf32>
    %c0_100 = arith.constant 0 : index
    %c0_101 = arith.constant 0 : index
    %c0_102 = arith.constant 0 : index
    %213 = vector.load %arg9[%c0_100, %c0_101, %c0_102] : memref<2x12x8xf32, #tpu.memory_space<vmem>>, vector<2x12x8xf32>
    tpu.vector_store %arg9[%c0_100, %c0_101, %c0_102], %212 {strides = array<i32>} : memref<2x12x8xf32, #tpu.memory_space<vmem>>, vector<2x12x8xf32>,
    return
  }
  func.func @transform_0(%arg0: i32) -> (i32, i32, i32) {
    %c0_i32 = arith.constant 0 : i32
    %c0_i32_0 = arith.constant 0 : i32
    %c0_i32_1 = arith.constant 0 : i32
    return %arg0, %c0_i32, %c0_i32_0 : i32, i32, i32
  }
  func.func @transform_1(%arg0: i32) -> (i32, i32) {
    %c0_i32 = arith.constant 0 : i32
    %c0_i32_0 = arith.constant 0 : i32
    %c0_i32_1 = arith.constant 0 : i32
    return %c0_i32, %c0_i32_0 : i32, i32
  }
  func.func @transform_2(%arg0: i32) -> (i32, i32) {
    %c0_i32 = arith.constant 0 : i32
    %c0_i32_0 = arith.constant 0 : i32
    %c0_i32_1 = arith.constant 0 : i32
    return %c0_i32, %c0_i32_0 : i32, i32
  }
  func.func @transform_3(%arg0: i32) -> (i32, i32) {
    %c0_i32 = arith.constant 0 : i32
    %c0_i32_0 = arith.constant 0 : i32
    %c0_i32_1 = arith.constant 0 : i32
    return %c0_i32, %c0_i32_0 : i32, i32
  }
  func.func @transform_4(%arg0: i32) -> (i32, i32, i32) {
    %c0_i32 = arith.constant 0 : i32
    %c0_i32_0 = arith.constant 0 : i32
    %c0_i32_1 = arith.constant 0 : i32
    %c0_i32_2 = arith.constant 0 : i32
    return %c0_i32, %c0_i32_0, %c0_i32_1 : i32, i32, i32
  }
  func.func @transform_5(%arg0: i32) -> (i32, i32, i32) {
    %c0_i32 = arith.constant 0 : i32
    %c0_i32_0 = arith.constant 0 : i32
    %c0_i32_1 = arith.constant 0 : i32
    %c0_i32_2 = arith.constant 0 : i32
    return %c0_i32, %c0_i32_0, %c0_i32_1 : i32, i32, i32
  }
  func.func @transform_6(%arg0: i32) -> (i32, i32, i32, i32) {
    %c0_i32 = arith.constant 0 : i32
    %c0_i32_0 = arith.constant 0 : i32
    %c0_i32_1 = arith.constant 0 : i32
    %c0_i32_2 = arith.constant 0 : i32
    %c0_i32_3 = arith.constant 0 : i32
    return %c0_i32, %c0_i32_0, %c0_i32_1, %c0_i32_2 : i32, i32, i32, i32
  }
  func.func @transform_7(%arg0: i32) -> (i32, i32) {
    %c0_i32 = arith.constant 0 : i32
    %c0_i32_0 = arith.constant 0 : i32
    %c0_i32_1 = arith.constant 0 : i32
    return %c0_i32, %c0_i32_0 : i32, i32
  }
  func.func @transform_8(%arg0: i32) -> (i32, i32, i32) {
    %c0_i32 = arith.constant 0 : i32
    %c0_i32_0 = arith.constant 0 : i32
    %c0_i32_1 = arith.constant 0 : i32
    return %arg0, %c0_i32, %c0_i32_0 : i32, i32, i32
  }
}

</mosaic_0001>

<llo_original>
// kernel: baseline_transformer_forward.1
$region0: #{baseline_transformer_forward.1}
  #allocation0 [shape = 'u32[]', space=smem, size = 0x4, offset = 0x4, fixed_abs, tag = 'smem constant byte address 0x4 - core index']
  #allocation1 [shape = 'u32[144,128]{1,0:T(1,128)}', space=vmem, size = 0x12000, scoped, tag = 'internal scratch']
  %s0 = inlined_call_operand.vmem [shape: f32[2,12,8], index: 0, kind: input, shape index: {}]
  %s1 = inlined_call_operand.vmem [shape: f32[24,64], index: 1, kind: input, shape index: {}]
  %s2 = inlined_call_operand.vmem [shape: f32[8,64], index: 2, kind: input, shape index: {}]
  %s3 = inlined_call_operand.vmem [shape: f32[64,8], index: 3, kind: input, shape index: {}]
  %s4 = inlined_call_operand.hbm [shape: f32[2,64,192], index: 4, kind: input, shape index: {}]
  %s5 = inlined_call_operand.vmem [shape: f32[2,1,192], index: 5, kind: input, shape index: {}]
  %s6 = inlined_call_operand.vmem [shape: f32[2,3,64,64], index: 6, kind: input, shape index: {}]
  %s7 = inlined_call_operand.vmem [shape: f32[16,64], index: 7, kind: input, shape index: {}]
  %s8 = inlined_call_operand.vmem [shape: f32[2,12,8], index: 8, kind: output, shape index: {}]
  %s9 = sld [smem:[#allocation0]]
  $region46: #{baseline_transformer_forward.1} parent=0
    _
  %s11 = ssub.s32 1, %s9
  %s12 = scalar_select 0, %s11, %s9
  $region1: #{baseline_transformer_forward.1} parent=0
    #allocation2 [shape = 'u8[131072]{0}', space=vmem, size = 0x20000, scoped, tag = 'input window, operand 4, single buffered']
    #allocation3 [shape = 's32[1]{0}', space=sflag, size = 0x4, scoped, tag = 'scoped memory for baseline_transformer_forward.1']
    %13 = vsyncpa [#allocation3], 0
    // Predicated region
    $region2: #{baseline_transformer_forward.1} parent=1 // pred_check
      _
    $region3: #{baseline_transformer_forward.1} parent=1 // pred_check_branch
      %15 = sbr.rel (0) target = $region5
    $region4: #{baseline_transformer_forward.1} parent=1 // pred_region
      _
    $region5: #{baseline_transformer_forward.1} parent=1 // pred_fallthru
      _
    // Predicated region
    $region6: #{baseline_transformer_forward.1} parent=1 // pred_check
      _
    $region7: #{baseline_transformer_forward.1} parent=1 // pred_check_branch
      %17 = sbr.rel (0) target = $region9
    $region8: #{baseline_transformer_forward.1} parent=1 // pred_region
      _
    $region9: #{baseline_transformer_forward.1} parent=1 // pred_fallthru
      _
    // Predicated region
    $region10: #{baseline_transformer_forward.1} parent=1 // pred_check
      _
    $region11: #{baseline_transformer_forward.1} parent=1 // pred_check_branch
      %19 = sbr.rel (0) target = $region13
    $region12: #{baseline_transformer_forward.1} parent=1 // pred_region
      _
    $region13: #{baseline_transformer_forward.1} parent=1 // pred_fallthru
      _
    // Predicated region
    $region14: #{baseline_transformer_forward.1} parent=1 // pred_check
      _
    $region15: #{baseline_transformer_forward.1} parent=1 // pred_check_branch
      %21 = sbr.rel (0) target = $region17
    $region16: #{baseline_transformer_forward.1} parent=1 // pred_region
      _
    $region17: #{baseline_transformer_forward.1} parent=1 // pred_fallthru
      _
    // Predicated region
    $region18: #{baseline_transformer_forward.1} parent=1 // pred_check
      _
    $region19: #{baseline_transformer_forward.1} parent=1 // pred_check_branch
      %23 = sbr.rel (0) target = $region21
    $region20: #{baseline_transformer_forward.1} parent=1 // pred_region
      %s25 = ssub.s32 4096, 4096
      %26 = vsyncadd [#allocation3], %s25
      %s27 = sshll.u32 [#allocation2], 4
      %s28 = int_to_ptr.vmem [resolvable:$true] %s27
      %33 = dma.hbm_to_vmem [thread:$0]  %s4, 4096, %s28, [#allocation3], 256, 256, 16
    $region21: #{baseline_transformer_forward.1} parent=1 // pred_fallthru
      _
    // Predicated region
    $region22: #{baseline_transformer_forward.1} parent=1 // pred_check
      _
    $region23: #{baseline_transformer_forward.1} parent=1 // pred_check_branch
      %35 = sbr.rel (0) target = $region25
    $region24: #{baseline_transformer_forward.1} parent=1 // pred_region
      _
    $region25: #{baseline_transformer_forward.1} parent=1 // pred_fallthru
      _
    // Predicated region
    $region26: #{baseline_transformer_forward.1} parent=1 // pred_check
      _
    $region27: #{baseline_transformer_forward.1} parent=1 // pred_check_branch
      %37 = sbr.rel (0) target = $region29
    $region28: #{baseline_transformer_forward.1} parent=1 // pred_region
      _
    $region29: #{baseline_transformer_forward.1} parent=1 // pred_fallthru
      _
    // Predicated region
    $region30: #{baseline_transformer_forward.1} parent=1 // pred_check
      _
    $region31: #{baseline_transformer_forward.1} parent=1 // pred_check_branch
      %39 = sbr.rel (0) target = $region33
    $region32: #{baseline_transformer_forward.1} parent=1 // pred_region
      _
    $region33: #{baseline_transformer_forward.1} parent=1 // pred_fallthru
      _
    // Predicated region
    $region34: #{baseline_transformer_forward.1} parent=1 // pred_check
      _
    $region35: #{baseline_transformer_forward.1} parent=1 // pred_check_branch
      %41 = sbr.rel (0) target = $region37
    $region36: #{baseline_transformer_forward.1} parent=1 // pred_region
      %42 = dma.done [#allocation3], 4096
    $region37: #{baseline_transformer_forward.1} parent=1 // pred_fallthru
      _
    %v43 = vld [vmem:[%s0] sm:$0xff]
    %v44 = vld [vmem:[%s0 + $0x8] sm:$0xf]
    %v45 = vld [vmem:[%s0 + $0x10] sm:$0xff]
    %v46 = vld [vmem:[%s0 + $0x18] sm:$0xf]
    %v51 = vcombine.high %v43, %v43
    %v52 = vcombine.high %v45, %v45
    %v53 = vld [vmem:[%s7] sm:$0x1]
    %v54 = vld [vmem:[%s2] sm:$0xff]
    %v55 = vlaneseq
    %v56 = vshrl.u32 %v55, 7
    %v57 = vsub.s32 0, %v56
    %v58 = vrot.slane %v53, %v57
    %v59 = vcombine.low %v43, %v51
    %v60 = vcombine.low %v44, %v45
    %v61 = vcombine.low %v52, %v46
    %vm62 = vcmask 64512
    %v63 = vsel %vm62, %v59, 0
    %v65 = vsel %vm62, %v60, 0
    %v67 = vsel %vm62, %v61, 0
    %69 = vmatprep.subr.mxu0 0.0
    %70 = vmatpush1.msra.mxu0 0.0
    %71 = vmatprep.subr.mxu0 0.0
    %72 = vmatpush1.msra.mxu0 0.0
    %73 = vmatprep.subr.mxu0 0.0
    %74 = vmatpush1.msra.mxu0 0.0
    %75 = vmatprep.subr.mxu0 0.0
    %76 = vmatpush1.msra.mxu0 0.0
    %77 = vmatprep.subr.mxu0 0.0
    %78 = vmatpush1.msra.mxu0 0.0
    %79 = vmatprep.subr.mxu0 0.0
    %80 = vmatpush1.msra.mxu0 0.0
    %81 = vmatprep.subr.mxu0 0.0
    %82 = vmatpush1.msra.mxu0 0.0
    %83 = vmatprep.subr.mxu0 0.0
    %84 = vmatpush1.msra.mxu0 0.0
    %85 = vmatprep.subr.mxu0 0.0
    %86 = vmatpush1.msra.mxu0 0.0
    %87 = vmatprep.subr.mxu0 0.0
    %88 = vmatpush1.msra.mxu0 0.0
    %89 = vmatprep.subr.mxu0 0.0
    %90 = vmatpush1.msra.mxu0 0.0
    %91 = vmatprep.subr.mxu0 0.0
    %92 = vmatpush1.msra.mxu0 0.0
    %93 = vmatprep.subr.mxu0 0.0
    %94 = vmatpush1.msra.mxu0 0.0
    %95 = vmatprep.subr.mxu0 0.0
    %96 = vmatpush1.msra.mxu0 0.0
    %97 = vmatprep.subr.mxu0 0.0
    %98 = vmatpush1.msra.mxu0 0.0
    %99 = vmatprep.subr.mxu0 0.0
    %100 = vmatpush1.msra.mxu0 %v54
    %101 = vmatprep.subr.mxu0 0.0
    %102 = vmatpush2.msra.mxu0 0.0
    %103 = vmatprep.subr.mxu0 0.0
    %104 = vmatpush2.msra.mxu0 0.0
    %105 = vmatprep.subr.mxu0 0.0
    %106 = vmatpush2.msra.mxu0 0.0
    %107 = vmatprep.subr.mxu0 0.0
    %108 = vmatpush2.msra.mxu0 0.0
    %109 = vmatprep.subr.mxu0 0.0
    %110 = vmatpush2.msra.mxu0 0.0
    %111 = vmatprep.subr.mxu0 0.0
    %112 = vmatpush2.msra.mxu0 0.0
    %113 = vmatprep.subr.mxu0 0.0
    %114 = vmatpush2.msra.mxu0 0.0
    %115 = vmatprep.subr.mxu0 0.0
    %116 = vmatpush2.msra.mxu0 0.0
    %117 = vmatprep.subr.mxu0 0.0
    %118 = vmatpush2.msra.mxu0 0.0
    %119 = vmatprep.subr.mxu0 0.0
    %120 = vmatpush2.msra.mxu0 0.0
    %121 = vmatprep.subr.mxu0 0.0
    %122 = vmatpush2.msra.mxu0 0.0
    %123 = vmatprep.subr.mxu0 0.0
    %124 = vmatpush2.msra.mxu0 0.0
    %125 = vmatprep.subr.mxu0 0.0
    %126 = vmatpush2.msra.mxu0 0.0
    %127 = vmatprep.subr.mxu0 0.0
    %128 = vmatpush2.msra.mxu0 0.0
    %129 = vmatprep.subr.mxu0 0.0
    %130 = vmatpush2.msra.mxu0 0.0
    %131 = vmatprep.subr.mxu0 0.0
    %132 = vmatpush2.msra.mxu0 0.0
    %133 = vmatprep.mubr.f32.mxu0 0.0
    %134 = vmatmul.mubr.f32.gmra.mxu0 %v63
    %v135 = vpop.f32.mrf.mxu0
    %v136 = vadd.f32 %v58, %v135
    %v137 = vpop.f32.mrf.mxu0
    %138 = vmatprep.mubr.f32.mxu0 0.0
    %139 = vmatmul.mubr.f32.gmra.mxu0 %v65
    %v140 = vpop.f32.mrf.mxu0
    %v141 = vadd.f32 %v58, %v140
    %v142 = vpop.f32.mrf.mxu0
    %143 = vmatprep.mubr.f32.mxu0 0.0
    %144 = vmatmul.mubr.f32.gmra.mxu0 %v67
    %v145 = vpop.f32.mrf.mxu0
    %v146 = vadd.f32 %v58, %v145
    %v147 = vpop.f32.mrf.mxu0
    %148 = vdwg.mxu0
    %v149 = vld [vmem:[%s1] sm:$0xff]
    %v150 = vld [vmem:[%s1 + $0x8] sm:$0xff]
    %v151 = vld [vmem:[%s1 + $0x10] sm:$0xff]
    %v152 = vadd.f32 %v136, %v149
    %v153 = vadd.f32 %v141, %v150
    %v154 = vadd.f32 %v146, %v151
    %v155 = vld [vmem:[%s7 + $0x2] sm:$0x1]
    %v156 = vld [vmem:[%s7 + $0x3] sm:$0x1]
    %v157 = vld [vmem:[%s7 + $0x4] sm:$0x1]
    %v158 = vld [vmem:[%s7 + $0x5] sm:$0x1]
    %v159 = vld [vmem:[%s7 + $0x6] sm:$0x1]
    %v160 = vld [vmem:[%s7 + $0x7] sm:$0x1]
    %v161 = vld [vmem:[%s7 + $0x8] sm:$0x1]
    %v162 = vld [vmem:[#allocation2] sm:$0xff]
    %v163 = vld [vmem:[#allocation2 + $0x8] sm:$0xff]
    %v164 = vld [vmem:[#allocation2 + $0x10] sm:$0xff]
    %v165 = vld [vmem:[#allocation2 + $0x18] sm:$0xff]
    %v166 = vld [vmem:[#allocation2 + $0x20] sm:$0xff]
    %v167 = vld [vmem:[#allocation2 + $0x28] sm:$0xff]
    %v168 = vld [vmem:[#allocation2 + $0x30] sm:$0xff]
    %v169 = vld [vmem:[#allocation2 + $0x38] sm:$0xff]
    %v170 = vld [vmem:[#allocation2 + $0x40] sm:$0xff]
    %v171 = vld [vmem:[#allocation2 + $0x48] sm:$0xff]
    %v172 = vld [vmem:[#allocation2 + $0x50] sm:$0xff]
    %v173 = vld [vmem:[#allocation2 + $0x58] sm:$0xff]
    %v174 = vld [vmem:[#allocation2 + $0x60] sm:$0xff]
    %v175 = vld [vmem:[#allocation2 + $0x68] sm:$0xff]
    %v176 = vld [vmem:[#allocation2 + $0x70] sm:$0xff]
    %v177 = vld [vmem:[#allocation2 + $0x78] sm:$0xff]
    %v178 = vld [vmem:[%s5] sm:$0x3]
    %v180 = vlaneseq
    %v181 = vshrl.u32 %v180, 7
    %v182 = vsub.s32 0, %v181
    %v183 = vrot.slane %v178, %v182
    %v184 = vlaneseq
    %v185 = vshrl.u32 %v184, 7
    %v186 = vsub.s32 1, %v185
    %v187 = vrot.slane %v178, %v186
    %vm190 = vcmask 523264
    %v192 = vsel %vm190, %v152, 0
    %v195 = vsel %vm190, %v153, 0
    %v198 = vsel %vm190, %v154, 0
    %200 = vmatprep.subr.mxu0 0.0
    %201 = vmatpush1.msra.mxu0 0.0
    %202 = vmatprep.subr.mxu0 0.0
    %203 = vmatpush1.msra.mxu0 0.0
    %204 = vmatprep.subr.mxu0 0.0
    %205 = vmatpush1.msra.mxu0 0.0
    %206 = vmatprep.subr.mxu0 0.0
    %207 = vmatpush1.msra.mxu0 0.0
    %208 = vmatprep.subr.mxu0 0.0
    %209 = vmatpush1.msra.mxu0 0.0
    %210 = vmatprep.subr.mxu0 0.0
    %211 = vmatpush1.msra.mxu0 0.0
    %212 = vmatprep.subr.mxu0 0.0
    %213 = vmatpush1.msra.mxu0 0.0
    %214 = vmatprep.subr.mxu0 0.0
    %215 = vmatpush1.msra.mxu0 0.0
    %216 = vmatprep.subr.mxu0 %v177
    %217 = vmatpush1.msra.mxu0 %v176
    %218 = vmatprep.subr.mxu0 %v175
    %219 = vmatpush1.msra.mxu0 %v174
    %220 = vmatprep.subr.mxu0 %v173
    %221 = vmatpush1.msra.mxu0 %v172
    %222 = vmatprep.subr.mxu0 %v171
    %223 = vmatpush1.msra.mxu0 %v170
    %224 = vmatprep.subr.mxu0 %v169
    %225 = vmatpush1.msra.mxu0 %v168
    %226 = vmatprep.subr.mxu0 %v167
    %227 = vmatpush1.msra.mxu0 %v166
    %228 = vmatprep.subr.mxu0 %v165
    %229 = vmatpush1.msra.mxu0 %v164
    %230 = vmatprep.subr.mxu0 %v163
    %231 = vmatpush1.msra.mxu0 %v162
    %232 = vmatprep.subr.mxu0 0.0
    %233 = vmatpush2.msra.mxu0 0.0
    %234 = vmatprep.subr.mxu0 0.0
    %235 = vmatpush2.msra.mxu0 0.0
    %236 = vmatprep.subr.mxu0 0.0
    %237 = vmatpush2.msra.mxu0 0.0
    %238 = vmatprep.subr.mxu0 0.0
    %239 = vmatpush2.msra.mxu0 0.0
    %240 = vmatprep.subr.mxu0 0.0
    %241 = vmatpush2.msra.mxu0 0.0
    %242 = vmatprep.subr.mxu0 0.0
    %243 = vmatpush2.msra.mxu0 0.0
    %244 = vmatprep.subr.mxu0 0.0
    %245 = vmatpush2.msra.mxu0 0.0
    %246 = vmatprep.subr.mxu0 0.0
    %247 = vmatpush2.msra.mxu0 0.0
    %248 = vmatprep.subr.mxu0 0.0
    %249 = vmatpush2.msra.mxu0 0.0
    %250 = vmatprep.subr.mxu0 0.0
    %251 = vmatpush2.msra.mxu0 0.0
    %252 = vmatprep.subr.mxu0 0.0
    %253 = vmatpush2.msra.mxu0 0.0
    %254 = vmatprep.subr.mxu0 0.0
    %255 = vmatpush2.msra.mxu0 0.0
    %256 = vmatprep.subr.mxu0 0.0
    %257 = vmatpush2.msra.mxu0 0.0
    %258 = vmatprep.subr.mxu0 0.0
    %259 = vmatpush2.msra.mxu0 0.0
    %260 = vmatprep.subr.mxu0 0.0
    %261 = vmatpush2.msra.mxu0 0.0
    %262 = vmatprep.subr.mxu0 0.0
    %263 = vmatpush2.msra.mxu0 0.0
    %264 = vmatprep.mubr.f32.mxu0 0.0
    %265 = vmatmul.mubr.f32.gmra.mxu0 %v192
    %v266 = vpop.f32.mrf.mxu0
    %v267 = vadd.f32 %v183, %v266
    %v268 = vpop.f32.mrf.mxu0
    %v269 = vadd.f32 %v187, %v268
    %270 = vmatprep.mubr.f32.mxu0 0.0
    %271 = vmatmul.mubr.f32.gmra.mxu0 %v195
    %v272 = vpop.f32.mrf.mxu0
    %v273 = vadd.f32 %v183, %v272
    %v274 = vpop.f32.mrf.mxu0
    %v275 = vadd.f32 %v187, %v274
    %276 = vmatprep.mubr.f32.mxu0 0.0
    %277 = vmatmul.mubr.f32.gmra.mxu0 %v198
    %v278 = vpop.f32.mrf.mxu0
    %v279 = vadd.f32 %v183, %v278
    %v280 = vpop.f32.mrf.mxu0
    %v281 = vadd.f32 %v187, %v280
    %282 = vdwg.mxu0
    %286 = vrot.lane.b32.xlu0 %v267, 112
    %v287 = vpop.permute.xlu0 %286
    %288 = vrot.lane.b32.xlu0 %v273, 112
    %v289 = vpop.permute.xlu0 %288
    %290 = vrot.lane.b32.xlu0 %v279, 112
    %v291 = vpop.permute.xlu0 %290
    %295 = vrot.lane.b32.xlu0 %v267, 96
    %v296 = vpop.permute.xlu0 %295
    %297 = vrot.lane.b32.xlu0 %v273, 96
    %v298 = vpop.permute.xlu0 %297
    %299 = vrot.lane.b32.xlu0 %v279, 96
    %v300 = vpop.permute.xlu0 %299
    %304 = vrot.lane.b32.xlu0 %v267, 80
    %v305 = vpop.permute.xlu0 %304
    %306 = vrot.lane.b32.xlu0 %v273, 80
    %v307 = vpop.permute.xlu0 %306
    %308 = vrot.lane.b32.xlu0 %v279, 80
    %v309 = vpop.permute.xlu0 %308
    %v313 = vcombine.low %v267, %v296
    %v314 = vcombine.high %v267, %v296
    %v316 = vunpack.c.l.s4 1983009808
    %v317 = vunpack.c.0.s8 %v316
    %v318 = vlaneseq
    %v319 = vshrl.u32 %v318, 7
    %v320 = vsub.s32 %v317, %v319
    %v321 = vrot.slane %v313, %v320
    %v323 = vunpack.c.l.s4 1983009808
    %v324 = vunpack.c.0.s8 %v323
    %v325 = vlaneseq
    %v326 = vshrl.u32 %v325, 7
    %v327 = vsub.s32 %v324, %v326
    %v328 = vrot.slane %v314, %v327
    %v329 = vcombine.low %v287, %v305
    %v330 = vcombine.high %v287, %v305
    %v332 = vunpack.c.l.s4 1983009808
    %v333 = vunpack.c.0.s8 %v332
    %v334 = vlaneseq
    %v335 = vshrl.u32 %v334, 7
    %v336 = vsub.s32 %v333, %v335
    %v337 = vrot.slane %v329, %v336
    %v339 = vunpack.c.l.s4 1983009808
    %v340 = vunpack.c.0.s8 %v339
    %v341 = vlaneseq
    %v342 = vshrl.u32 %v341, 7
    %v343 = vsub.s32 %v340, %v342
    %v344 = vrot.slane %v330, %v343
    %v345 = vcombine.low %v321, %v337
    %v346 = vcombine.high %v321, %v337
    %v348 = vunpack.c.l.s4 1934713408
    %v349 = vunpack.c.0.s8 %v348
    %v350 = vlaneseq
    %v351 = vshrl.u32 %v350, 7
    %v352 = vsub.s32 %v349, %v351
    %v353 = vrot.slane %v345, %v352
    %v355 = vunpack.c.l.s4 1934713408
    %v356 = vunpack.c.0.s8 %v355
    %v357 = vlaneseq
    %v358 = vshrl.u32 %v357, 7
    %v359 = vsub.s32 %v356, %v358
    %v360 = vrot.slane %v346, %v359
    %v361 = vcombine.low %v328, %v344
    %v362 = vcombine.high %v328, %v344
    %v364 = vunpack.c.l.s4 1934713408
    %v365 = vunpack.c.0.s8 %v364
    %v366 = vlaneseq
    %v367 = vshrl.u32 %v366, 7
    %v368 = vsub.s32 %v365, %v367
    %v369 = vrot.slane %v361, %v368
    %v371 = vunpack.c.l.s4 1934713408
    %v372 = vunpack.c.0.s8 %v371
    %v373 = vlaneseq
    %v374 = vshrl.u32 %v373, 7
    %v375 = vsub.s32 %v372, %v374
    %v376 = vrot.slane %v362, %v375
    %v377 = vcombine.high %v353, 0.0
    %v378 = vcombine.high %v360, 0.0
    %v379 = vcombine.high %v369, 0.0
    %v380 = vcombine.high %v376, 0.0
    %v381 = vcombine.low %v273, %v298
    %v382 = vcombine.high %v273, %v298
    %v384 = vunpack.c.l.s4 1983009808
    %v385 = vunpack.c.0.s8 %v384
    %v386 = vlaneseq
    %v387 = vshrl.u32 %v386, 7
    %v388 = vsub.s32 %v385, %v387
    %v389 = vrot.slane %v381, %v388
    %v391 = vunpack.c.l.s4 1983009808
    %v392 = vunpack.c.0.s8 %v391
    %v393 = vlaneseq
    %v394 = vshrl.u32 %v393, 7
    %v395 = vsub.s32 %v392, %v394
    %v396 = vrot.slane %v382, %v395
    %v397 = vcombine.low %v289, %v307
    %v398 = vcombine.high %v289, %v307
    %v400 = vunpack.c.l.s4 1983009808
    %v401 = vunpack.c.0.s8 %v400
    %v402 = vlaneseq
    %v403 = vshrl.u32 %v402, 7
    %v404 = vsub.s32 %v401, %v403
    %v405 = vrot.slane %v397, %v404
    %v407 = vunpack.c.l.s4 1983009808
    %v408 = vunpack.c.0.s8 %v407
    %v409 = vlaneseq
    %v410 = vshrl.u32 %v409, 7
    %v411 = vsub.s32 %v408, %v410
    %v412 = vrot.slane %v398, %v411
    %v413 = vcombine.low %v389, %v405
    %v414 = vcombine.high %v389, %v405
    %v416 = vunpack.c.l.s4 1934713408
    %v417 = vunpack.c.0.s8 %v416
    %v418 = vlaneseq
    %v419 = vshrl.u32 %v418, 7
    %v420 = vsub.s32 %v417, %v419
    %v421 = vrot.slane %v413, %v420
    %v423 = vunpack.c.l.s4 1934713408
    %v424 = vunpack.c.0.s8 %v423
    %v425 = vlaneseq
    %v426 = vshrl.u32 %v425, 7
    %v427 = vsub.s32 %v424, %v426
    %v428 = vrot.slane %v414, %v427
    %v429 = vcombine.low %v396, %v412
    %v430 = vcombine.high %v396, %v412
    %v432 = vunpack.c.l.s4 1934713408
    %v433 = vunpack.c.0.s8 %v432
    %v434 = vlaneseq
    %v435 = vshrl.u32 %v434, 7
    %v436 = vsub.s32 %v433, %v435
    %v437 = vrot.slane %v429, %v436
    %v439 = vunpack.c.l.s4 1934713408
    %v440 = vunpack.c.0.s8 %v439
    %v441 = vlaneseq
    %v442 = vshrl.u32 %v441, 7
    %v443 = vsub.s32 %v440, %v442
    %v444 = vrot.slane %v430, %v443
    %v445 = vcombine.high %v421, 0.0
    %v446 = vcombine.high %v428, 0.0
    %v447 = vcombine.high %v437, 0.0
    %v448 = vcombine.high %v444, 0.0
    %v449 = vcombine.low %v279, %v300
    %v450 = vcombine.high %v279, %v300
    %v452 = vunpack.c.l.s4 1983009808
    %v453 = vunpack.c.0.s8 %v452
    %v454 = vlaneseq
    %v455 = vshrl.u32 %v454, 7
    %v456 = vsub.s32 %v453, %v455
    %v457 = vrot.slane %v449, %v456
    %v459 = vunpack.c.l.s4 1983009808
    %v460 = vunpack.c.0.s8 %v459
    %v461 = vlaneseq
    %v462 = vshrl.u32 %v461, 7
    %v463 = vsub.s32 %v460, %v462
    %v464 = vrot.slane %v450, %v463
    %v465 = vcombine.low %v291, %v309
    %v466 = vcombine.high %v291, %v309
    %v468 = vunpack.c.l.s4 1983009808
    %v469 = vunpack.c.0.s8 %v468
    %v470 = vlaneseq
    %v471 = vshrl.u32 %v470, 7
    %v472 = vsub.s32 %v469, %v471
    %v473 = vrot.slane %v465, %v472
    %v475 = vunpack.c.l.s4 1983009808
    %v476 = vunpack.c.0.s8 %v475
    %v477 = vlaneseq
    %v478 = vshrl.u32 %v477, 7
    %v479 = vsub.s32 %v476, %v478
    %v480 = vrot.slane %v466, %v479
    %v481 = vcombine.low %v457, %v473
    %v482 = vcombine.high %v457, %v473
    %v484 = vunpack.c.l.s4 1934713408
    %v485 = vunpack.c.0.s8 %v484
    %v486 = vlaneseq
    %v487 = vshrl.u32 %v486, 7
    %v488 = vsub.s32 %v485, %v487
    %v489 = vrot.slane %v481, %v488
    %v491 = vunpack.c.l.s4 1934713408
    %v492 = vunpack.c.0.s8 %v491
    %v493 = vlaneseq
    %v494 = vshrl.u32 %v493, 7
    %v495 = vsub.s32 %v492, %v494
    %v496 = vrot.slane %v482, %v495
    %v497 = vcombine.low %v464, %v480
    %v498 = vcombine.high %v464, %v480
    %v500 = vunpack.c.l.s4 1934713408
    %v501 = vunpack.c.0.s8 %v500
    %v502 = vlaneseq
    %v503 = vshrl.u32 %v502, 7
    %v504 = vsub.s32 %v501, %v503
    %v505 = vrot.slane %v497, %v504
    %v507 = vunpack.c.l.s4 1934713408
    %v508 = vunpack.c.0.s8 %v507
    %v509 = vlaneseq
    %v510 = vshrl.u32 %v509, 7
    %v511 = vsub.s32 %v508, %v510
    %v512 = vrot.slane %v498, %v511
    %v513 = vcombine.high %v489, 0.0
    %v514 = vcombine.high %v496, 0.0
    %v515 = vcombine.high %v505, 0.0
    %v516 = vcombine.high %v512, 0.0
    %v517 = vcombine.low %v353, %v360
    %v519 = vunpack.c.l.s4 1983009808
    %v520 = vunpack.c.0.s8 %v519
    %v521 = vlaneseq
    %v522 = vshrl.u32 %v521, 7
    %v523 = vsub.s32 %v520, %v522
    %v524 = vrot.slane %v517, %v523
    %v525 = vcombine.low %v377, %v378
    %v527 = vunpack.c.l.s4 1983009808
    %v528 = vunpack.c.0.s8 %v527
    %v529 = vlaneseq
    %v530 = vshrl.u32 %v529, 7
    %v531 = vsub.s32 %v528, %v530
    %v532 = vrot.slane %v525, %v531
    %v533 = vcombine.low %v369, %v376
    %v535 = vunpack.c.l.s4 1983009808
    %v536 = vunpack.c.0.s8 %v535
    %v537 = vlaneseq
    %v538 = vshrl.u32 %v537, 7
    %v539 = vsub.s32 %v536, %v538
    %v540 = vrot.slane %v533, %v539
    %v541 = vcombine.low %v379, %v380
    %v543 = vunpack.c.l.s4 1983009808
    %v544 = vunpack.c.0.s8 %v543
    %v545 = vlaneseq
    %v546 = vshrl.u32 %v545, 7
    %v547 = vsub.s32 %v544, %v546
    %v548 = vrot.slane %v541, %v547
    %v549 = vcombine.low %v524, %v532
    %v550 = vcombine.high %v524, %v532
    %v552 = vunpack.c.l.s4 1934713408
    %v553 = vunpack.c.0.s8 %v552
    %v554 = vlaneseq
    %v555 = vshrl.u32 %v554, 7
    %v556 = vsub.s32 %v553, %v555
    %v557 = vrot.slane %v549, %v556
    %v559 = vunpack.c.l.s4 1934713408
    %v560 = vunpack.c.0.s8 %v559
    %v561 = vlaneseq
    %v562 = vshrl.u32 %v561, 7
    %v563 = vsub.s32 %v560, %v562
    %v564 = vrot.slane %v550, %v563
    %v565 = vcombine.low %v540, %v548
    %v566 = vcombine.high %v540, %v548
    %v568 = vunpack.c.l.s4 1934713408
    %v569 = vunpack.c.0.s8 %v568
    %v570 = vlaneseq
    %v571 = vshrl.u32 %v570, 7
    %v572 = vsub.s32 %v569, %v571
    %v573 = vrot.slane %v565, %v572
    %v575 = vunpack.c.l.s4 1934713408
    %v576 = vunpack.c.0.s8 %v575
    %v577 = vlaneseq
    %v578 = vshrl.u32 %v577, 7
    %v579 = vsub.s32 %v576, %v578
    %v580 = vrot.slane %v566, %v579
    %v581 = vcombine.low %v557, %v573
    %v582 = vcombine.high %v557, %v573
    %v583 = vcombine.low %v564, %v580
    %v584 = vcombine.high %v564, %v580
    %v585 = vcombine.low %v421, %v428
    %v587 = vunpack.c.l.s4 1983009808
    %v588 = vunpack.c.0.s8 %v587
    %v589 = vlaneseq
    %v590 = vshrl.u32 %v589, 7
    %v591 = vsub.s32 %v588, %v590
    %v592 = vrot.slane %v585, %v591
    %v593 = vcombine.low %v445, %v446
    %v595 = vunpack.c.l.s4 1983009808
    %v596 = vunpack.c.0.s8 %v595
    %v597 = vlaneseq
    %v598 = vshrl.u32 %v597, 7
    %v599 = vsub.s32 %v596, %v598
    %v600 = vrot.slane %v593, %v599
    %v601 = vcombine.low %v592, %v600
    %v602 = vcombine.high %v592, %v600
    %v604 = vunpack.c.l.s4 1934713408
    %v605 = vunpack.c.0.s8 %v604
    %v606 = vlaneseq
    %v607 = vshrl.u32 %v606, 7
    %v608 = vsub.s32 %v605, %v607
    %v609 = vrot.slane %v601, %v608
    %v611 = vunpack.c.l.s4 1934713408
    %v612 = vunpack.c.0.s8 %v611
    %v613 = vlaneseq
    %v614 = vshrl.u32 %v613, 7
    %v615 = vsub.s32 %v612, %v614
    %v616 = vrot.slane %v602, %v615
    %v617 = vcombine.high %v609, 0.0
    %v618 = vcombine.high %v616, 0.0
    %v619 = vcombine.low %v437, %v444
    %v621 = vunpack.c.l.s4 1983009808
    %v622 = vunpack.c.0.s8 %v621
    %v623 = vlaneseq
    %v624 = vshrl.u32 %v623, 7
    %v625 = vsub.s32 %v622, %v624
    %v626 = vrot.slane %v619, %v625
    %v627 = vcombine.low %v447, %v448
    %v629 = vunpack.c.l.s4 1983009808
    %v630 = vunpack.c.0.s8 %v629
    %v631 = vlaneseq
    %v632 = vshrl.u32 %v631, 7
    %v633 = vsub.s32 %v630, %v632
    %v634 = vrot.slane %v627, %v633
    %v635 = vcombine.low %v489, %v496
    %v637 = vunpack.c.l.s4 1983009808
    %v638 = vunpack.c.0.s8 %v637
    %v639 = vlaneseq
    %v640 = vshrl.u32 %v639, 7
    %v641 = vsub.s32 %v638, %v640
    %v642 = vrot.slane %v635, %v641
    %v643 = vcombine.low %v513, %v514
    %v645 = vunpack.c.l.s4 1983009808
    %v646 = vunpack.c.0.s8 %v645
    %v647 = vlaneseq
    %v648 = vshrl.u32 %v647, 7
    %v649 = vsub.s32 %v646, %v648
    %v650 = vrot.slane %v643, %v649
    %v651 = vcombine.low %v626, %v634
    %v652 = vcombine.high %v626, %v634
    %v654 = vunpack.c.l.s4 1934713408
    %v655 = vunpack.c.0.s8 %v654
    %v656 = vlaneseq
    %v657 = vshrl.u32 %v656, 7
    %v658 = vsub.s32 %v655, %v657
    %v659 = vrot.slane %v651, %v658
    %v661 = vunpack.c.l.s4 1934713408
    %v662 = vunpack.c.0.s8 %v661
    %v663 = vlaneseq
    %v664 = vshrl.u32 %v663, 7
    %v665 = vsub.s32 %v662, %v664
    %v666 = vrot.slane %v652, %v665
    %v667 = vcombine.low %v642, %v650
    %v668 = vcombine.high %v642, %v650
    %v670 = vunpack.c.l.s4 1934713408
    %v671 = vunpack.c.0.s8 %v670
    %v672 = vlaneseq
    %v673 = vshrl.u32 %v672, 7
    %v674 = vsub.s32 %v671, %v673
    %v675 = vrot.slane %v667, %v674
    %v677 = vunpack.c.l.s4 1934713408
    %v678 = vunpack.c.0.s8 %v677
    %v679 = vlaneseq
    %v680 = vshrl.u32 %v679, 7
    %v681 = vsub.s32 %v678, %v680
    %v682 = vrot.slane %v668, %v681
    %v683 = vcombine.low %v659, %v675
    %v684 = vcombine.high %v659, %v675
    %v685 = vcombine.low %v666, %v682
    %v686 = vcombine.high %v666, %v682
    %v687 = vcombine.low %v505, %v512
    %v689 = vunpack.c.l.s4 1983009808
    %v690 = vunpack.c.0.s8 %v689
    %v691 = vlaneseq
    %v692 = vshrl.u32 %v691, 7
    %v693 = vsub.s32 %v690, %v692
    %v694 = vrot.slane %v687, %v693
    %v695 = vcombine.low %v515, %v516
    %v697 = vunpack.c.l.s4 1983009808
    %v698 = vunpack.c.0.s8 %v697
    %v699 = vlaneseq
    %v700 = vshrl.u32 %v699, 7
    %v701 = vsub.s32 %v698, %v700
    %v702 = vrot.slane %v695, %v701
    %v703 = vcombine.low %v694, %v702
    %v704 = vcombine.high %v694, %v702
    %v706 = vunpack.c.l.s4 1934713408
    %v707 = vunpack.c.0.s8 %v706
    %v708 = vlaneseq
    %v709 = vshrl.u32 %v708, 7
    %v710 = vsub.s32 %v707, %v709
    %v711 = vrot.slane %v703, %v710
    %v713 = vunpack.c.l.s4 1934713408
    %v714 = vunpack.c.0.s8 %v713
    %v715 = vlaneseq
    %v716 = vshrl.u32 %v715, 7
    %v717 = vsub.s32 %v714, %v716
    %v718 = vrot.slane %v704, %v717
    %v719 = vcombine.high %v711, 0.0
    %v720 = vcombine.high %v718, 0.0
    %721 = vrot.lane.b32.xlu0 %v267, 64
    %v722 = vpop.permute.xlu0 %721
    %723 = vrot.lane.b32.xlu0 %v273, 64
    %v724 = vpop.permute.xlu0 %723
    %725 = vrot.lane.b32.xlu0 %v279, 64
    %v726 = vpop.permute.xlu0 %725
    %727 = vrot.lane.b32.xlu0 %v287, 64
    %v728 = vpop.permute.xlu0 %727
    %729 = vrot.lane.b32.xlu0 %v289, 64
    %v730 = vpop.permute.xlu0 %729
    %731 = vrot.lane.b32.xlu0 %v291, 64
    %v732 = vpop.permute.xlu0 %731
    %733 = vrot.lane.b32.xlu0 %v296, 64
    %v734 = vpop.permute.xlu0 %733
    %735 = vrot.lane.b32.xlu0 %v298, 64
    %v736 = vpop.permute.xlu0 %735
    %737 = vrot.lane.b32.xlu0 %v300, 64
    %v738 = vpop.permute.xlu0 %737
    %739 = vrot.lane.b32.xlu0 %v305, 64
    %v740 = vpop.permute.xlu0 %739
    %741 = vrot.lane.b32.xlu0 %v307, 64
    %v742 = vpop.permute.xlu0 %741
    %743 = vrot.lane.b32.xlu0 %v309, 64
    %v744 = vpop.permute.xlu0 %743
    %v757 = vcombine.low %v722, %v734
    %v758 = vcombine.high %v722, %v734
    %v760 = vunpack.c.l.s4 1983009808
    %v761 = vunpack.c.0.s8 %v760
    %v762 = vlaneseq
    %v763 = vshrl.u32 %v762, 7
    %v764 = vsub.s32 %v761, %v763
    %v765 = vrot.slane %v757, %v764
    %v767 = vunpack.c.l.s4 1983009808
    %v768 = vunpack.c.0.s8 %v767
    %v769 = vlaneseq
    %v770 = vshrl.u32 %v769, 7
    %v771 = vsub.s32 %v768, %v770
    %v772 = vrot.slane %v758, %v771
    %v773 = vcombine.low %v728, %v740
    %v774 = vcombine.high %v728, %v740
    %v776 = vunpack.c.l.s4 1983009808
    %v777 = vunpack.c.0.s8 %v776
    %v778 = vlaneseq
    %v779 = vshrl.u32 %v778, 7
    %v780 = vsub.s32 %v777, %v779
    %v781 = vrot.slane %v773, %v780
    %v783 = vunpack.c.l.s4 1983009808
    %v784 = vunpack.c.0.s8 %v783
    %v785 = vlaneseq
    %v786 = vshrl.u32 %v785, 7
    %v787 = vsub.s32 %v784, %v786
    %v788 = vrot.slane %v774, %v787
    %v789 = vcombine.low %v765, %v781
    %v790 = vcombine.high %v765, %v781
    %v792 = vunpack.c.l.s4 1934713408
    %v793 = vunpack.c.0.s8 %v792
    %v794 = vlaneseq
    %v795 = vshrl.u32 %v794, 7
    %v796 = vsub.s32 %v793, %v795
    %v797 = vrot.slane %v789, %v796
    %v799 = vunpack.c.l.s4 1934713408
    %v800 = vunpack.c.0.s8 %v799
    %v801 = vlaneseq
    %v802 = vshrl.u32 %v801, 7
    %v803 = vsub.s32 %v800, %v802
    %v804 = vrot.slane %v790, %v803
    %v805 = vcombine.low %v772, %v788
    %v806 = vcombine.high %v772, %v788
    %v808 = vunpack.c.l.s4 1934713408
    %v809 = vunpack.c.0.s8 %v808
    %v810 = vlaneseq
    %v811 = vshrl.u32 %v810, 7
    %v812 = vsub.s32 %v809, %v811
    %v813 = vrot.slane %v805, %v812
    %v815 = vunpack.c.l.s4 1934713408
    %v816 = vunpack.c.0.s8 %v815
    %v817 = vlaneseq
    %v818 = vshrl.u32 %v817, 7
    %v819 = vsub.s32 %v816, %v818
    %v820 = vrot.slane %v806, %v819
    %v821 = vcombine.high %v797, 0.0
    %v822 = vcombine.high %v804, 0.0
    %v823 = vcombine.high %v813, 0.0
    %v824 = vcombine.high %v820, 0.0
    %v825 = vcombine.low %v724, %v736
    %v826 = vcombine.high %v724, %v736
    %v828 = vunpack.c.l.s4 1983009808
    %v829 = vunpack.c.0.s8 %v828
    %v830 = vlaneseq
    %v831 = vshrl.u32 %v830, 7
    %v832 = vsub.s32 %v829, %v831
    %v833 = vrot.slane %v825, %v832
    %v835 = vunpack.c.l.s4 1983009808
    %v836 = vunpack.c.0.s8 %v835
    %v837 = vlaneseq
    %v838 = vshrl.u32 %v837, 7
    %v839 = vsub.s32 %v836, %v838
    %v840 = vrot.slane %v826, %v839
    %v841 = vcombine.low %v730, %v742
    %v842 = vcombine.high %v730, %v742
    %v844 = vunpack.c.l.s4 1983009808
    %v845 = vunpack.c.0.s8 %v844
    %v846 = vlaneseq
    %v847 = vshrl.u32 %v846, 7
    %v848 = vsub.s32 %v845, %v847
    %v849 = vrot.slane %v841, %v848
    %v851 = vunpack.c.l.s4 1983009808
    %v852 = vunpack.c.0.s8 %v851
    %v853 = vlaneseq
    %v854 = vshrl.u32 %v853, 7
    %v855 = vsub.s32 %v852, %v854
    %v856 = vrot.slane %v842, %v855
    %v857 = vcombine.low %v833, %v849
    %v858 = vcombine.high %v833, %v849
    %v860 = vunpack.c.l.s4 1934713408
    %v861 = vunpack.c.0.s8 %v860
    %v862 = vlaneseq
    %v863 = vshrl.u32 %v862, 7
    %v864 = vsub.s32 %v861, %v863
    %v865 = vrot.slane %v857, %v864
    %v867 = vunpack.c.l.s4 1934713408
    %v868 = vunpack.c.0.s8 %v867
    %v869 = vlaneseq
    %v870 = vshrl.u32 %v869, 7
    %v871 = vsub.s32 %v868, %v870
    %v872 = vrot.slane %v858, %v871
    %v873 = vcombine.low %v840, %v856
    %v874 = vcombine.high %v840, %v856
    %v876 = vunpack.c.l.s4 1934713408
    %v877 = vunpack.c.0.s8 %v876
    %v878 = vlaneseq
    %v879 = vshrl.u32 %v878, 7
    %v880 = vsub.s32 %v877, %v879
    %v881 = vrot.slane %v873, %v880
    %v883 = vunpack.c.l.s4 1934713408
    %v884 = vunpack.c.0.s8 %v883
    %v885 = vlaneseq
    %v886 = vshrl.u32 %v885, 7
    %v887 = vsub.s32 %v884, %v886
    %v888 = vrot.slane %v874, %v887
    %v889 = vcombine.high %v865, 0.0
    %v890 = vcombine.high %v872, 0.0
    %v891 = vcombine.high %v881, 0.0
    %v892 = vcombine.high %v888, 0.0
    %v893 = vcombine.low %v726, %v738
    %v894 = vcombine.high %v726, %v738
    %v896 = vunpack.c.l.s4 1983009808
    %v897 = vunpack.c.0.s8 %v896
    %v898 = vlaneseq
    %v899 = vshrl.u32 %v898, 7
    %v900 = vsub.s32 %v897, %v899
    %v901 = vrot.slane %v893, %v900
    %v903 = vunpack.c.l.s4 1983009808
    %v904 = vunpack.c.0.s8 %v903
    %v905 = vlaneseq
    %v906 = vshrl.u32 %v905, 7
    %v907 = vsub.s32 %v904, %v906
    %v908 = vrot.slane %v894, %v907
    %v909 = vcombine.low %v732, %v744
    %v910 = vcombine.high %v732, %v744
    %v912 = vunpack.c.l.s4 1983009808
    %v913 = vunpack.c.0.s8 %v912
    %v914 = vlaneseq
    %v915 = vshrl.u32 %v914, 7
    %v916 = vsub.s32 %v913, %v915
    %v917 = vrot.slane %v909, %v916
    %v919 = vunpack.c.l.s4 1983009808
    %v920 = vunpack.c.0.s8 %v919
    %v921 = vlaneseq
    %v922 = vshrl.u32 %v921, 7
    %v923 = vsub.s32 %v920, %v922
    %v924 = vrot.slane %v910, %v923
    %v925 = vcombine.low %v901, %v917
    %v926 = vcombine.high %v901, %v917
    %v928 = vunpack.c.l.s4 1934713408
    %v929 = vunpack.c.0.s8 %v928
    %v930 = vlaneseq
    %v931 = vshrl.u32 %v930, 7
    %v932 = vsub.s32 %v929, %v931
    %v933 = vrot.slane %v925, %v932
    %v935 = vunpack.c.l.s4 1934713408
    %v936 = vunpack.c.0.s8 %v935
    %v937 = vlaneseq
    %v938 = vshrl.u32 %v937, 7
    %v939 = vsub.s32 %v936, %v938
    %v940 = vrot.slane %v926, %v939
    %v941 = vcombine.low %v908, %v924
    %v942 = vcombine.high %v908, %v924
    %v944 = vunpack.c.l.s4 1934713408
    %v945 = vunpack.c.0.s8 %v944
    %v946 = vlaneseq
    %v947 = vshrl.u32 %v946, 7
    %v948 = vsub.s32 %v945, %v947
    %v949 = vrot.slane %v941, %v948
    %v951 = vunpack.c.l.s4 1934713408
    %v952 = vunpack.c.0.s8 %v951
    %v953 = vlaneseq
    %v954 = vshrl.u32 %v953, 7
    %v955 = vsub.s32 %v952, %v954
    %v956 = vrot.slane %v942, %v955
    %v957 = vcombine.high %v933, 0.0
    %v958 = vcombine.high %v940, 0.0
    %v959 = vcombine.high %v949, 0.0
    %v960 = vcombine.high %v956, 0.0
    %v961 = vcombine.low %v797, %v804
    %v963 = vunpack.c.l.s4 1983009808
    %v964 = vunpack.c.0.s8 %v963
    %v965 = vlaneseq
    %v966 = vshrl.u32 %v965, 7
    %v967 = vsub.s32 %v964, %v966
    %v968 = vrot.slane %v961, %v967
    %v969 = vcombine.low %v821, %v822
    %v971 = vunpack.c.l.s4 1983009808
    %v972 = vunpack.c.0.s8 %v971
    %v973 = vlaneseq
    %v974 = vshrl.u32 %v973, 7
    %v975 = vsub.s32 %v972, %v974
    %v976 = vrot.slane %v969, %v975
    %v977 = vcombine.low %v813, %v820
    %v979 = vunpack.c.l.s4 1983009808
    %v980 = vunpack.c.0.s8 %v979
    %v981 = vlaneseq
    %v982 = vshrl.u32 %v981, 7
    %v983 = vsub.s32 %v980, %v982
    %v984 = vrot.slane %v977, %v983
    %v985 = vcombine.low %v823, %v824
    %v987 = vunpack.c.l.s4 1983009808
    %v988 = vunpack.c.0.s8 %v987
    %v989 = vlaneseq
    %v990 = vshrl.u32 %v989, 7
    %v991 = vsub.s32 %v988, %v990
    %v992 = vrot.slane %v985, %v991
    %v993 = vcombine.low %v968, %v976
    %v994 = vcombine.high %v968, %v976
    %v996 = vunpack.c.l.s4 1934713408
    %v997 = vunpack.c.0.s8 %v996
    %v998 = vlaneseq
    %v999 = vshrl.u32 %v998, 7
    %v1000 = vsub.s32 %v997, %v999
    %v1001 = vrot.slane %v993, %v1000
    %v1003 = vunpack.c.l.s4 1934713408
    %v1004 = vunpack.c.0.s8 %v1003
    %v1005 = vlaneseq
    %v1006 = vshrl.u32 %v1005, 7
    %v1007 = vsub.s32 %v1004, %v1006
    %v1008 = vrot.slane %v994, %v1007
    %v1009 = vcombine.low %v984, %v992
    %v1010 = vcombine.high %v984, %v992
    %v1012 = vunpack.c.l.s4 1934713408
    %v1013 = vunpack.c.0.s8 %v1012
    %v1014 = vlaneseq
    %v1015 = vshrl.u32 %v1014, 7
    %v1016 = vsub.s32 %v1013, %v1015
    %v1017 = vrot.slane %v1009, %v1016
    %v1019 = vunpack.c.l.s4 1934713408
    %v1020 = vunpack.c.0.s8 %v1019
    %v1021 = vlaneseq
    %v1022 = vshrl.u32 %v1021, 7
    %v1023 = vsub.s32 %v1020, %v1022
    %v1024 = vrot.slane %v1010, %v1023
    %v1025 = vcombine.low %v1001, %v1017
    %v1026 = vcombine.high %v1001, %v1017
    %v1027 = vcombine.low %v1008, %v1024
    %v1028 = vcombine.high %v1008, %v1024
    %v1029 = vcombine.low %v865, %v872
    %v1031 = vunpack.c.l.s4 1983009808
    %v1032 = vunpack.c.0.s8 %v1031
    %v1033 = vlaneseq
    %v1034 = vshrl.u32 %v1033, 7
    %v1035 = vsub.s32 %v1032, %v1034
    %v1036 = vrot.slane %v1029, %v1035
    %v1037 = vcombine.low %v889, %v890
    %v1039 = vunpack.c.l.s4 1983009808
    %v1040 = vunpack.c.0.s8 %v1039
    %v1041 = vlaneseq
    %v1042 = vshrl.u32 %v1041, 7
    %v1043 = vsub.s32 %v1040, %v1042
    %v1044 = vrot.slane %v1037, %v1043
    %v1045 = vcombine.low %v1036, %v1044
    %v1046 = vcombine.high %v1036, %v1044
    %v1048 = vunpack.c.l.s4 1934713408
    %v1049 = vunpack.c.0.s8 %v1048
    %v1050 = vlaneseq
    %v1051 = vshrl.u32 %v1050, 7
    %v1052 = vsub.s32 %v1049, %v1051
    %v1053 = vrot.slane %v1045, %v1052
    %v1055 = vunpack.c.l.s4 1934713408
    %v1056 = vunpack.c.0.s8 %v1055
    %v1057 = vlaneseq
    %v1058 = vshrl.u32 %v1057, 7
    %v1059 = vsub.s32 %v1056, %v1058
    %v1060 = vrot.slane %v1046, %v1059
    %v1061 = vcombine.high %v1053, 0.0
    %v1062 = vcombine.high %v1060, 0.0
    %v1063 = vcombine.low %v881, %v888
    %v1065 = vunpack.c.l.s4 1983009808
    %v1066 = vunpack.c.0.s8 %v1065
    %v1067 = vlaneseq
    %v1068 = vshrl.u32 %v1067, 7
    %v1069 = vsub.s32 %v1066, %v1068
    %v1070 = vrot.slane %v1063, %v1069
    %v1071 = vcombine.low %v891, %v892
    %v1073 = vunpack.c.l.s4 1983009808
    %v1074 = vunpack.c.0.s8 %v1073
    %v1075 = vlaneseq
    %v1076 = vshrl.u32 %v1075, 7
    %v1077 = vsub.s32 %v1074, %v1076
    %v1078 = vrot.slane %v1071, %v1077
    %v1079 = vcombine.low %v933, %v940
    %v1081 = vunpack.c.l.s4 1983009808
    %v1082 = vunpack.c.0.s8 %v1081
    %v1083 = vlaneseq
    %v1084 = vshrl.u32 %v1083, 7
    %v1085 = vsub.s32 %v1082, %v1084
    %v1086 = vrot.slane %v1079, %v1085
    %v1087 = vcombine.low %v957, %v958
    %v1089 = vunpack.c.l.s4 1983009808
    %v1090 = vunpack.c.0.s8 %v1089
    %v1091 = vlaneseq
    %v1092 = vshrl.u32 %v1091, 7
    %v1093 = vsub.s32 %v1090, %v1092
    %v1094 = vrot.slane %v1087, %v1093
    %v1095 = vcombine.low %v1070, %v1078
    %v1096 = vcombine.high %v1070, %v1078
    %v1098 = vunpack.c.l.s4 1934713408
    %v1099 = vunpack.c.0.s8 %v1098
    %v1100 = vlaneseq
    %v1101 = vshrl.u32 %v1100, 7
    %v1102 = vsub.s32 %v1099, %v1101
    %v1103 = vrot.slane %v1095, %v1102
    %v1105 = vunpack.c.l.s4 1934713408
    %v1106 = vunpack.c.0.s8 %v1105
    %v1107 = vlaneseq
    %v1108 = vshrl.u32 %v1107, 7
    %v1109 = vsub.s32 %v1106, %v1108
    %v1110 = vrot.slane %v1096, %v1109
    %v1111 = vcombine.low %v1086, %v1094
    %v1112 = vcombine.high %v1086, %v1094
    %v1114 = vunpack.c.l.s4 1934713408
    %v1115 = vunpack.c.0.s8 %v1114
    %v1116 = vlaneseq
    %v1117 = vshrl.u32 %v1116, 7
    %v1118 = vsub.s32 %v1115, %v1117
    %v1119 = vrot.slane %v1111, %v1118
    %v1121 = vunpack.c.l.s4 1934713408
    %v1122 = vunpack.c.0.s8 %v1121
    %v1123 = vlaneseq
    %v1124 = vshrl.u32 %v1123, 7
    %v1125 = vsub.s32 %v1122, %v1124
    %v1126 = vrot.slane %v1112, %v1125
    %v1127 = vcombine.low %v1103, %v1119
    %v1128 = vcombine.high %v1103, %v1119
    %v1129 = vcombine.low %v1110, %v1126
    %v1130 = vcombine.high %v1110, %v1126
    %v1131 = vcombine.low %v949, %v956
    %v1133 = vunpack.c.l.s4 1983009808
    %v1134 = vunpack.c.0.s8 %v1133
    %v1135 = vlaneseq
    %v1136 = vshrl.u32 %v1135, 7
    %v1137 = vsub.s32 %v1134, %v1136
    %v1138 = vrot.slane %v1131, %v1137
    %v1139 = vcombine.low %v959, %v960
    %v1141 = vunpack.c.l.s4 1983009808
    %v1142 = vunpack.c.0.s8 %v1141
    %v1143 = vlaneseq
    %v1144 = vshrl.u32 %v1143, 7
    %v1145 = vsub.s32 %v1142, %v1144
    %v1146 = vrot.slane %v1139, %v1145
    %v1147 = vcombine.low %v1138, %v1146
    %v1148 = vcombine.high %v1138, %v1146
    %v1150 = vunpack.c.l.s4 1934713408
    %v1151 = vunpack.c.0.s8 %v1150
    %v1152 = vlaneseq
    %v1153 = vshrl.u32 %v1152, 7
    %v1154 = vsub.s32 %v1151, %v1153
    %v1155 = vrot.slane %v1147, %v1154
    %v1157 = vunpack.c.l.s4 1934713408
    %v1158 = vunpack.c.0.s8 %v1157
    %v1159 = vlaneseq
    %v1160 = vshrl.u32 %v1159, 7
    %v1161 = vsub.s32 %v1158, %v1160
    %v1162 = vrot.slane %v1148, %v1161
    %v1163 = vcombine.high %v1155, 0.0
    %v1164 = vcombine.high %v1162, 0.0
    %1168 = vrot.lane.b32.xlu0 %v269, 112
    %v1169 = vpop.permute.xlu0 %1168
    %1170 = vrot.lane.b32.xlu0 %v275, 112
    %v1171 = vpop.permute.xlu0 %1170
    %1172 = vrot.lane.b32.xlu0 %v281, 112
    %v1173 = vpop.permute.xlu0 %1172
    %1177 = vrot.lane.b32.xlu0 %v269, 96
    %v1178 = vpop.permute.xlu0 %1177
    %1179 = vrot.lane.b32.xlu0 %v275, 96
    %v1180 = vpop.permute.xlu0 %1179
    %1181 = vrot.lane.b32.xlu0 %v281, 96
    %v1182 = vpop.permute.xlu0 %1181
    %1186 = vrot.lane.b32.xlu0 %v269, 80
    %v1187 = vpop.permute.xlu0 %1186
    %1188 = vrot.lane.b32.xlu0 %v275, 80
    %v1189 = vpop.permute.xlu0 %1188
    %1190 = vrot.lane.b32.xlu0 %v281, 80
    %v1191 = vpop.permute.xlu0 %1190
    %v1195 = vcombine.low %v269, %v1178
    %v1196 = vcombine.high %v269, %v1178
    %v1198 = vunpack.c.l.s4 1983009808
    %v1199 = vunpack.c.0.s8 %v1198
    %v1200 = vlaneseq
    %v1201 = vshrl.u32 %v1200, 7
    %v1202 = vsub.s32 %v1199, %v1201
    %v1203 = vrot.slane %v1195, %v1202
    %v1205 = vunpack.c.l.s4 1983009808
    %v1206 = vunpack.c.0.s8 %v1205
    %v1207 = vlaneseq
    %v1208 = vshrl.u32 %v1207, 7
    %v1209 = vsub.s32 %v1206, %v1208
    %v1210 = vrot.slane %v1196, %v1209
    %v1211 = vcombine.low %v1169, %v1187
    %v1212 = vcombine.high %v1169, %v1187
    %v1214 = vunpack.c.l.s4 1983009808
    %v1215 = vunpack.c.0.s8 %v1214
    %v1216 = vlaneseq
    %v1217 = vshrl.u32 %v1216, 7
    %v1218 = vsub.s32 %v1215, %v1217
    %v1219 = vrot.slane %v1211, %v1218
    %v1221 = vunpack.c.l.s4 1983009808
    %v1222 = vunpack.c.0.s8 %v1221
    %v1223 = vlaneseq
    %v1224 = vshrl.u32 %v1223, 7
    %v1225 = vsub.s32 %v1222, %v1224
    %v1226 = vrot.slane %v1212, %v1225
    %v1227 = vcombine.low %v1203, %v1219
    %v1228 = vcombine.high %v1203, %v1219
    %v1230 = vunpack.c.l.s4 1934713408
    %v1231 = vunpack.c.0.s8 %v1230
    %v1232 = vlaneseq
    %v1233 = vshrl.u32 %v1232, 7
    %v1234 = vsub.s32 %v1231, %v1233
    %v1235 = vrot.slane %v1227, %v1234
    %v1237 = vunpack.c.l.s4 1934713408
    %v1238 = vunpack.c.0.s8 %v1237
    %v1239 = vlaneseq
    %v1240 = vshrl.u32 %v1239, 7
    %v1241 = vsub.s32 %v1238, %v1240
    %v1242 = vrot.slane %v1228, %v1241
    %v1243 = vcombine.low %v1210, %v1226
    %v1244 = vcombine.high %v1210, %v1226
    %v1246 = vunpack.c.l.s4 1934713408
    %v1247 = vunpack.c.0.s8 %v1246
    %v1248 = vlaneseq
    %v1249 = vshrl.u32 %v1248, 7
    %v1250 = vsub.s32 %v1247, %v1249
    %v1251 = vrot.slane %v1243, %v1250
    %v1253 = vunpack.c.l.s4 1934713408
    %v1254 = vunpack.c.0.s8 %v1253
    %v1255 = vlaneseq
    %v1256 = vshrl.u32 %v1255, 7
    %v1257 = vsub.s32 %v1254, %v1256
    %v1258 = vrot.slane %v1244, %v1257
    %v1259 = vcombine.high %v1235, 0.0
    %v1260 = vcombine.high %v1242, 0.0
    %v1261 = vcombine.high %v1251, 0.0
    %v1262 = vcombine.high %v1258, 0.0
    %v1263 = vcombine.low %v275, %v1180
    %v1264 = vcombine.high %v275, %v1180
    %v1266 = vunpack.c.l.s4 1983009808
    %v1267 = vunpack.c.0.s8 %v1266
    %v1268 = vlaneseq
    %v1269 = vshrl.u32 %v1268, 7
    %v1270 = vsub.s32 %v1267, %v1269
    %v1271 = vrot.slane %v1263, %v1270
    %v1273 = vunpack.c.l.s4 1983009808
    %v1274 = vunpack.c.0.s8 %v1273
    %v1275 = vlaneseq
    %v1276 = vshrl.u32 %v1275, 7
    %v1277 = vsub.s32 %v1274, %v1276
    %v1278 = vrot.slane %v1264, %v1277
    %v1279 = vcombine.low %v1171, %v1189
    %v1280 = vcombine.high %v1171, %v1189
    %v1282 = vunpack.c.l.s4 1983009808
    %v1283 = vunpack.c.0.s8 %v1282
    %v1284 = vlaneseq
    %v1285 = vshrl.u32 %v1284, 7
    %v1286 = vsub.s32 %v1283, %v1285
    %v1287 = vrot.slane %v1279, %v1286
    %v1289 = vunpack.c.l.s4 1983009808
    %v1290 = vunpack.c.0.s8 %v1289
    %v1291 = vlaneseq
    %v1292 = vshrl.u32 %v1291, 7
    %v1293 = vsub.s32 %v1290, %v1292
    %v1294 = vrot.slane %v1280, %v1293
    %v1295 = vcombine.low %v1271, %v1287
    %v1296 = vcombine.high %v1271, %v1287
    %v1298 = vunpack.c.l.s4 1934713408
    %v1299 = vunpack.c.0.s8 %v1298
    %v1300 = vlaneseq
    %v1301 = vshrl.u32 %v1300, 7
    %v1302 = vsub.s32 %v1299, %v1301
    %v1303 = vrot.slane %v1295, %v1302
    %v1305 = vunpack.c.l.s4 1934713408
    %v1306 = vunpack.c.0.s8 %v1305
    %v1307 = vlaneseq
    %v1308 = vshrl.u32 %v1307, 7
    %v1309 = vsub.s32 %v1306, %v1308
    %v1310 = vrot.slane %v1296, %v1309
    %v1311 = vcombine.low %v1278, %v1294
    %v1312 = vcombine.high %v1278, %v1294
    %v1314 = vunpack.c.l.s4 1934713408
    %v1315 = vunpack.c.0.s8 %v1314
    %v1316 = vlaneseq
    %v1317 = vshrl.u32 %v1316, 7
    %v1318 = vsub.s32 %v1315, %v1317
    %v1319 = vrot.slane %v1311, %v1318
    %v1321 = vunpack.c.l.s4 1934713408
    %v1322 = vunpack.c.0.s8 %v1321
    %v1323 = vlaneseq
    %v1324 = vshrl.u32 %v1323, 7
    %v1325 = vsub.s32 %v1322, %v1324
    %v1326 = vrot.slane %v1312, %v1325
    %v1327 = vcombine.high %v1303, 0.0
    %v1328 = vcombine.high %v1310, 0.0
    %v1329 = vcombine.high %v1319, 0.0
    %v1330 = vcombine.high %v1326, 0.0
    %v1331 = vcombine.low %v281, %v1182
    %v1332 = vcombine.high %v281, %v1182
    %v1334 = vunpack.c.l.s4 1983009808
    %v1335 = vunpack.c.0.s8 %v1334
    %v1336 = vlaneseq
    %v1337 = vshrl.u32 %v1336, 7
    %v1338 = vsub.s32 %v1335, %v1337
    %v1339 = vrot.slane %v1331, %v1338
    %v1341 = vunpack.c.l.s4 1983009808
    %v1342 = vunpack.c.0.s8 %v1341
    %v1343 = vlaneseq
    %v1344 = vshrl.u32 %v1343, 7
    %v1345 = vsub.s32 %v1342, %v1344
    %v1346 = vrot.slane %v1332, %v1345
    %v1347 = vcombine.low %v1173, %v1191
    %v1348 = vcombine.high %v1173, %v1191
    %v1350 = vunpack.c.l.s4 1983009808
    %v1351 = vunpack.c.0.s8 %v1350
    %v1352 = vlaneseq
    %v1353 = vshrl.u32 %v1352, 7
    %v1354 = vsub.s32 %v1351, %v1353
    %v1355 = vrot.slane %v1347, %v1354
    %v1357 = vunpack.c.l.s4 1983009808
    %v1358 = vunpack.c.0.s8 %v1357
    %v1359 = vlaneseq
    %v1360 = vshrl.u32 %v1359, 7
    %v1361 = vsub.s32 %v1358, %v1360
    %v1362 = vrot.slane %v1348, %v1361
    %v1363 = vcombine.low %v1339, %v1355
    %v1364 = vcombine.high %v1339, %v1355
    %v1366 = vunpack.c.l.s4 1934713408
    %v1367 = vunpack.c.0.s8 %v1366
    %v1368 = vlaneseq
    %v1369 = vshrl.u32 %v1368, 7
    %v1370 = vsub.s32 %v1367, %v1369
    %v1371 = vrot.slane %v1363, %v1370
    %v1373 = vunpack.c.l.s4 1934713408
    %v1374 = vunpack.c.0.s8 %v1373
    %v1375 = vlaneseq
    %v1376 = vshrl.u32 %v1375, 7
    %v1377 = vsub.s32 %v1374, %v1376
    %v1378 = vrot.slane %v1364, %v1377
    %v1379 = vcombine.low %v1346, %v1362
    %v1380 = vcombine.high %v1346, %v1362
    %v1382 = vunpack.c.l.s4 1934713408
    %v1383 = vunpack.c.0.s8 %v1382
    %v1384 = vlaneseq
    %v1385 = vshrl.u32 %v1384, 7
    %v1386 = vsub.s32 %v1383, %v1385
    %v1387 = vrot.slane %v1379, %v1386
    %v1389 = vunpack.c.l.s4 1934713408
    %v1390 = vunpack.c.0.s8 %v1389
    %v1391 = vlaneseq
    %v1392 = vshrl.u32 %v1391, 7
    %v1393 = vsub.s32 %v1390, %v1392
    %v1394 = vrot.slane %v1380, %v1393
    %v1395 = vcombine.high %v1371, 0.0
    %v1396 = vcombine.high %v1378, 0.0
    %v1397 = vcombine.high %v1387, 0.0
    %v1398 = vcombine.high %v1394, 0.0
    %v1399 = vcombine.low %v1235, %v1242
    %v1401 = vunpack.c.l.s4 1983009808
    %v1402 = vunpack.c.0.s8 %v1401
    %v1403 = vlaneseq
    %v1404 = vshrl.u32 %v1403, 7
    %v1405 = vsub.s32 %v1402, %v1404
    %v1406 = vrot.slane %v1399, %v1405
    %v1407 = vcombine.low %v1259, %v1260
    %v1409 = vunpack.c.l.s4 1983009808
    %v1410 = vunpack.c.0.s8 %v1409
    %v1411 = vlaneseq
    %v1412 = vshrl.u32 %v1411, 7
    %v1413 = vsub.s32 %v1410, %v1412
    %v1414 = vrot.slane %v1407, %v1413
    %v1415 = vcombine.low %v1251, %v1258
    %v1417 = vunpack.c.l.s4 1983009808
    %v1418 = vunpack.c.0.s8 %v1417
    %v1419 = vlaneseq
    %v1420 = vshrl.u32 %v1419, 7
    %v1421 = vsub.s32 %v1418, %v1420
    %v1422 = vrot.slane %v1415, %v1421
    %v1423 = vcombine.low %v1261, %v1262
    %v1425 = vunpack.c.l.s4 1983009808
    %v1426 = vunpack.c.0.s8 %v1425
    %v1427 = vlaneseq
    %v1428 = vshrl.u32 %v1427, 7
    %v1429 = vsub.s32 %v1426, %v1428
    %v1430 = vrot.slane %v1423, %v1429
    %v1431 = vcombine.low %v1406, %v1414
    %v1432 = vcombine.high %v1406, %v1414
    %v1434 = vunpack.c.l.s4 1934713408
    %v1435 = vunpack.c.0.s8 %v1434
    %v1436 = vlaneseq
    %v1437 = vshrl.u32 %v1436, 7
    %v1438 = vsub.s32 %v1435, %v1437
    %v1439 = vrot.slane %v1431, %v1438
    %v1441 = vunpack.c.l.s4 1934713408
    %v1442 = vunpack.c.0.s8 %v1441
    %v1443 = vlaneseq
    %v1444 = vshrl.u32 %v1443, 7
    %v1445 = vsub.s32 %v1442, %v1444
    %v1446 = vrot.slane %v1432, %v1445
    %v1447 = vcombine.low %v1422, %v1430
    %v1448 = vcombine.high %v1422, %v1430
    %v1450 = vunpack.c.l.s4 1934713408
    %v1451 = vunpack.c.0.s8 %v1450
    %v1452 = vlaneseq
    %v1453 = vshrl.u32 %v1452, 7
    %v1454 = vsub.s32 %v1451, %v1453
    %v1455 = vrot.slane %v1447, %v1454
    %v1457 = vunpack.c.l.s4 1934713408
    %v1458 = vunpack.c.0.s8 %v1457
    %v1459 = vlaneseq
    %v1460 = vshrl.u32 %v1459, 7
    %v1461 = vsub.s32 %v1458, %v1460
    %v1462 = vrot.slane %v1448, %v1461
    %v1463 = vcombine.low %v1439, %v1455
    %v1464 = vcombine.high %v1439, %v1455
    %v1465 = vcombine.low %v1446, %v1462
    %v1466 = vcombine.high %v1446, %v1462
    %v1467 = vcombine.low %v1303, %v1310
    %v1469 = vunpack.c.l.s4 1983009808
    %v1470 = vunpack.c.0.s8 %v1469
    %v1471 = vlaneseq
    %v1472 = vshrl.u32 %v1471, 7
    %v1473 = vsub.s32 %v1470, %v1472
    %v1474 = vrot.slane %v1467, %v1473
    %v1475 = vcombine.low %v1327, %v1328
    %v1477 = vunpack.c.l.s4 1983009808
    %v1478 = vunpack.c.0.s8 %v1477
    %v1479 = vlaneseq
    %v1480 = vshrl.u32 %v1479, 7
    %v1481 = vsub.s32 %v1478, %v1480
    %v1482 = vrot.slane %v1475, %v1481
    %v1483 = vcombine.low %v1474, %v1482
    %v1484 = vcombine.high %v1474, %v1482
    %v1486 = vunpack.c.l.s4 1934713408
    %v1487 = vunpack.c.0.s8 %v1486
    %v1488 = vlaneseq
    %v1489 = vshrl.u32 %v1488, 7
    %v1490 = vsub.s32 %v1487, %v1489
    %v1491 = vrot.slane %v1483, %v1490
    %v1493 = vunpack.c.l.s4 1934713408
    %v1494 = vunpack.c.0.s8 %v1493
    %v1495 = vlaneseq
    %v1496 = vshrl.u32 %v1495, 7
    %v1497 = vsub.s32 %v1494, %v1496
    %v1498 = vrot.slane %v1484, %v1497
    %v1499 = vcombine.high %v1491, 0.0
    %v1500 = vcombine.high %v1498, 0.0
    %v1501 = vcombine.low %v1319, %v1326
    %v1503 = vunpack.c.l.s4 1983009808
    %v1504 = vunpack.c.0.s8 %v1503
    %v1505 = vlaneseq
    %v1506 = vshrl.u32 %v1505, 7
    %v1507 = vsub.s32 %v1504, %v1506
    %v1508 = vrot.slane %v1501, %v1507
    %v1509 = vcombine.low %v1329, %v1330
    %v1511 = vunpack.c.l.s4 1983009808
    %v1512 = vunpack.c.0.s8 %v1511
    %v1513 = vlaneseq
    %v1514 = vshrl.u32 %v1513, 7
    %v1515 = vsub.s32 %v1512, %v1514
    %v1516 = vrot.slane %v1509, %v1515
    %v1517 = vcombine.low %v1371, %v1378
    %v1519 = vunpack.c.l.s4 1983009808
    %v1520 = vunpack.c.0.s8 %v1519
    %v1521 = vlaneseq
    %v1522 = vshrl.u32 %v1521, 7
    %v1523 = vsub.s32 %v1520, %v1522
    %v1524 = vrot.slane %v1517, %v1523
    %v1525 = vcombine.low %v1395, %v1396
    %v1527 = vunpack.c.l.s4 1983009808
    %v1528 = vunpack.c.0.s8 %v1527
    %v1529 = vlaneseq
    %v1530 = vshrl.u32 %v1529, 7
    %v1531 = vsub.s32 %v1528, %v1530
    %v1532 = vrot.slane %v1525, %v1531
    %v1533 = vcombine.low %v1508, %v1516
    %v1534 = vcombine.high %v1508, %v1516
    %v1536 = vunpack.c.l.s4 1934713408
    %v1537 = vunpack.c.0.s8 %v1536
    %v1538 = vlaneseq
    %v1539 = vshrl.u32 %v1538, 7
    %v1540 = vsub.s32 %v1537, %v1539
    %v1541 = vrot.slane %v1533, %v1540
    %v1543 = vunpack.c.l.s4 1934713408
    %v1544 = vunpack.c.0.s8 %v1543
    %v1545 = vlaneseq
    %v1546 = vshrl.u32 %v1545, 7
    %v1547 = vsub.s32 %v1544, %v1546
    %v1548 = vrot.slane %v1534, %v1547
    %v1549 = vcombine.low %v1524, %v1532
    %v1550 = vcombine.high %v1524, %v1532
    %v1552 = vunpack.c.l.s4 1934713408
    %v1553 = vunpack.c.0.s8 %v1552
    %v1554 = vlaneseq
    %v1555 = vshrl.u32 %v1554, 7
    %v1556 = vsub.s32 %v1553, %v1555
    %v1557 = vrot.slane %v1549, %v1556
    %v1559 = vunpack.c.l.s4 1934713408
    %v1560 = vunpack.c.0.s8 %v1559
    %v1561 = vlaneseq
    %v1562 = vshrl.u32 %v1561, 7
    %v1563 = vsub.s32 %v1560, %v1562
    %v1564 = vrot.slane %v1550, %v1563
    %v1565 = vcombine.low %v1541, %v1557
    %v1566 = vcombine.high %v1541, %v1557
    %v1567 = vcombine.low %v1548, %v1564
    %v1568 = vcombine.high %v1548, %v1564
    %v1569 = vcombine.low %v1387, %v1394
    %v1571 = vunpack.c.l.s4 1983009808
    %v1572 = vunpack.c.0.s8 %v1571
    %v1573 = vlaneseq
    %v1574 = vshrl.u32 %v1573, 7
    %v1575 = vsub.s32 %v1572, %v1574
    %v1576 = vrot.slane %v1569, %v1575
    %v1577 = vcombine.low %v1397, %v1398
    %v1579 = vunpack.c.l.s4 1983009808
    %v1580 = vunpack.c.0.s8 %v1579
    %v1581 = vlaneseq
    %v1582 = vshrl.u32 %v1581, 7
    %v1583 = vsub.s32 %v1580, %v1582
    %v1584 = vrot.slane %v1577, %v1583
    %v1585 = vcombine.low %v1576, %v1584
    %v1586 = vcombine.high %v1576, %v1584
    %v1588 = vunpack.c.l.s4 1934713408
    %v1589 = vunpack.c.0.s8 %v1588
    %v1590 = vlaneseq
    %v1591 = vshrl.u32 %v1590, 7
    %v1592 = vsub.s32 %v1589, %v1591
    %v1593 = vrot.slane %v1585, %v1592
    %v1595 = vunpack.c.l.s4 1934713408
    %v1596 = vunpack.c.0.s8 %v1595
    %v1597 = vlaneseq
    %v1598 = vshrl.u32 %v1597, 7
    %v1599 = vsub.s32 %v1596, %v1598
    %v1600 = vrot.slane %v1586, %v1599
    %v1601 = vcombine.high %v1593, 0.0
    %v1602 = vcombine.high %v1600, 0.0
    %vm1603 = vcmask 130048
    %v1605 = vsel %vm1603, %v581, 0
    %v1608 = vsel %vm1603, %v609, 0
    %v1611 = vsel %vm1603, %v1025, 0
    %v1614 = vsel %vm1603, %v1053, 0
    %1616 = vmatprep.subr.mxu0 0.0
    %1617 = vmatpush1.xpose.msra.mxu0 0.0
    %1618 = vmatprep.subr.mxu0 0.0
    %1619 = vmatpush1.xpose.msra.mxu0 0.0
    %1620 = vmatprep.subr.mxu0 0.0
    %1621 = vmatpush1.xpose.msra.mxu0 0.0
    %1622 = vmatprep.subr.mxu0 0.0
    %1623 = vmatpush1.xpose.msra.mxu0 0.0
    %1624 = vmatprep.subr.mxu0 0.0
    %1625 = vmatpush1.xpose.msra.mxu0 0.0
    %1626 = vmatprep.subr.mxu0 0.0
    %1627 = vmatpush1.xpose.msra.mxu0 0.0
    %1628 = vmatprep.subr.mxu0 0.0
    %1629 = vmatpush1.xpose.msra.mxu0 0.0
    %1630 = vmatprep.subr.mxu0 0.0
    %1631 = vmatpush1.xpose.msra.mxu0 0.0
    %1632 = vmatprep.subr.mxu0 0.0
    %1633 = vmatpush1.xpose.msra.mxu0 0.0
    %1634 = vmatprep.subr.mxu0 0.0
    %1635 = vmatpush1.xpose.msra.mxu0 0.0
    %1636 = vmatprep.subr.mxu0 0.0
    %1637 = vmatpush1.xpose.msra.mxu0 0.0
    %1638 = vmatprep.subr.mxu0 0.0
    %1639 = vmatpush1.xpose.msra.mxu0 0.0
    %1640 = vmatprep.subr.mxu0 0.0
    %1641 = vmatpush1.xpose.msra.mxu0 0.0
    %1642 = vmatprep.subr.mxu0 0.0
    %1643 = vmatpush1.xpose.msra.mxu0 0.0
    %1644 = vmatprep.subr.mxu0 0.0
    %1645 = vmatpush1.xpose.msra.mxu0 %v1614
    %1646 = vmatprep.subr.mxu0 0.0
    %1647 = vmatpush1.xpose.msra.mxu0 %v1611
    %1648 = vmatprep.subr.mxu0 0.0
    %1649 = vmatpush2.xpose.msra.mxu0 0.0
    %1650 = vmatprep.subr.mxu0 0.0
    %1651 = vmatpush2.xpose.msra.mxu0 0.0
    %1652 = vmatprep.subr.mxu0 0.0
    %1653 = vmatpush2.xpose.msra.mxu0 0.0
    %1654 = vmatprep.subr.mxu0 0.0
    %1655 = vmatpush2.xpose.msra.mxu0 0.0
    %1656 = vmatprep.subr.mxu0 0.0
    %1657 = vmatpush2.xpose.msra.mxu0 0.0
    %1658 = vmatprep.subr.mxu0 0.0
    %1659 = vmatpush2.xpose.msra.mxu0 0.0
    %1660 = vmatprep.subr.mxu0 0.0
    %1661 = vmatpush2.xpose.msra.mxu0 0.0
    %1662 = vmatprep.subr.mxu0 0.0
    %1663 = vmatpush2.xpose.msra.mxu0 0.0
    %1664 = vmatprep.subr.mxu0 0.0
    %1665 = vmatpush2.xpose.msra.mxu0 0.0
    %1666 = vmatprep.subr.mxu0 0.0
    %1667 = vmatpush2.xpose.msra.mxu0 0.0
    %1668 = vmatprep.subr.mxu0 0.0
    %1669 = vmatpush2.xpose.msra.mxu0 0.0
    %1670 = vmatprep.subr.mxu0 0.0
    %1671 = vmatpush2.xpose.msra.mxu0 0.0
    %1672 = vmatprep.subr.mxu0 0.0
    %1673 = vmatpush2.xpose.msra.mxu0 0.0
    %1674 = vmatprep.subr.mxu0 0.0
    %1675 = vmatpush2.xpose.msra.mxu0 0.0
    %1676 = vmatprep.subr.mxu0 0.0
    %1677 = vmatpush2.xpose.msra.mxu0 0.0
    %1678 = vmatprep.subr.mxu0 0.0
    %1679 = vmatpush2.xpose.msra.mxu0 0.0
    %1680 = vmatprep.mubr.f32.mxu0 0.0
    %1681 = vmatmul.mubr.f32.gmra.mxu0 %v1605
    %v1682 = vpop.f32.mrf.mxu0
    %v1683 = vadd.f32 0.0, %v1682
    %v1684 = vpop.f32.mrf.mxu0
    %1685 = vmatprep.mubr.f32.mxu0 0.0
    %1686 = vmatmul.mubr.f32.gmra.mxu0 %v1608
    %v1687 = vpop.f32.mrf.mxu0
    %v1688 = vadd.f32 0.0, %v1687
    %v1689 = vpop.f32.mrf.mxu0
    %1690 = vdwg.mxu0
    %v1692 = vsel %vm1603, %v582, 0
    %v1695 = vsel %vm1603, %v617, 0
    %v1698 = vsel %vm1603, %v1026, 0
    %v1701 = vsel %vm1603, %v1061, 0
    %1703 = vmatprep.subr.mxu0 0.0
    %1704 = vmatpush1.xpose.msra.mxu0 0.0
    %1705 = vmatprep.subr.mxu0 0.0
    %1706 = vmatpush1.xpose.msra.mxu0 0.0
    %1707 = vmatprep.subr.mxu0 0.0
    %1708 = vmatpush1.xpose.msra.mxu0 0.0
    %1709 = vmatprep.subr.mxu0 0.0
    %1710 = vmatpush1.xpose.msra.mxu0 0.0
    %1711 = vmatprep.subr.mxu0 0.0
    %1712 = vmatpush1.xpose.msra.mxu0 0.0
    %1713 = vmatprep.subr.mxu0 0.0
    %1714 = vmatpush1.xpose.msra.mxu0 0.0
    %1715 = vmatprep.subr.mxu0 0.0
    %1716 = vmatpush1.xpose.msra.mxu0 0.0
    %1717 = vmatprep.subr.mxu0 0.0
    %1718 = vmatpush1.xpose.msra.mxu0 0.0
    %1719 = vmatprep.subr.mxu0 0.0
    %1720 = vmatpush1.xpose.msra.mxu0 0.0
    %1721 = vmatprep.subr.mxu0 0.0
    %1722 = vmatpush1.xpose.msra.mxu0 0.0
    %1723 = vmatprep.subr.mxu0 0.0
    %1724 = vmatpush1.xpose.msra.mxu0 0.0
    %1725 = vmatprep.subr.mxu0 0.0
    %1726 = vmatpush1.xpose.msra.mxu0 0.0
    %1727 = vmatprep.subr.mxu0 0.0
    %1728 = vmatpush1.xpose.msra.mxu0 0.0
    %1729 = vmatprep.subr.mxu0 0.0
    %1730 = vmatpush1.xpose.msra.mxu0 0.0
    %1731 = vmatprep.subr.mxu0 0.0
    %1732 = vmatpush1.xpose.msra.mxu0 %v1701
    %1733 = vmatprep.subr.mxu0 0.0
    %1734 = vmatpush1.xpose.msra.mxu0 %v1698
    %1735 = vmatprep.subr.mxu0 0.0
    %1736 = vmatpush2.xpose.msra.mxu0 0.0
    %1737 = vmatprep.subr.mxu0 0.0
    %1738 = vmatpush2.xpose.msra.mxu0 0.0
    %1739 = vmatprep.subr.mxu0 0.0
    %1740 = vmatpush2.xpose.msra.mxu0 0.0
    %1741 = vmatprep.subr.mxu0 0.0
    %1742 = vmatpush2.xpose.msra.mxu0 0.0
    %1743 = vmatprep.subr.mxu0 0.0
    %1744 = vmatpush2.xpose.msra.mxu0 0.0
    %1745 = vmatprep.subr.mxu0 0.0
    %1746 = vmatpush2.xpose.msra.mxu0 0.0
    %1747 = vmatprep.subr.mxu0 0.0
    %1748 = vmatpush2.xpose.msra.mxu0 0.0
    %1749 = vmatprep.subr.mxu0 0.0
    %1750 = vmatpush2.xpose.msra.mxu0 0.0
    %1751 = vmatprep.subr.mxu0 0.0
    %1752 = vmatpush2.xpose.msra.mxu0 0.0
    %1753 = vmatprep.subr.mxu0 0.0
    %1754 = vmatpush2.xpose.msra.mxu0 0.0
    %1755 = vmatprep.subr.mxu0 0.0
    %1756 = vmatpush2.xpose.msra.mxu0 0.0
    %1757 = vmatprep.subr.mxu0 0.0
    %1758 = vmatpush2.xpose.msra.mxu0 0.0
    %1759 = vmatprep.subr.mxu0 0.0
    %1760 = vmatpush2.xpose.msra.mxu0 0.0
    %1761 = vmatprep.subr.mxu0 0.0
    %1762 = vmatpush2.xpose.msra.mxu0 0.0
    %1763 = vmatprep.subr.mxu0 0.0
    %1764 = vmatpush2.xpose.msra.mxu0 0.0
    %1765 = vmatprep.subr.mxu0 0.0
    %1766 = vmatpush2.xpose.msra.mxu0 0.0
    %1767 = vmatprep.mubr.f32.mxu0 0.0
    %1768 = vmatmul.mubr.f32.gmra.mxu0 %v1692
    %v1769 = vpop.f32.mrf.mxu0
    %v1770 = vadd.f32 0.0, %v1769
    %v1771 = vpop.f32.mrf.mxu0
    %1772 = vmatprep.mubr.f32.mxu0 0.0
    %1773 = vmatmul.mubr.f32.gmra.mxu0 %v1695
    %v1774 = vpop.f32.mrf.mxu0
    %v1775 = vadd.f32 0.0, %v1774
    %v1776 = vpop.f32.mrf.mxu0
    %1777 = vdwg.mxu0
    %v1779 = vsel %vm1603, %v583, 0
    %v1782 = vsel %vm1603, %v616, 0
    %v1785 = vsel %vm1603, %v1027, 0
    %v1788 = vsel %vm1603, %v1060, 0
    %1790 = vmatprep.subr.mxu0 0.0
    %1791 = vmatpush1.xpose.msra.mxu0 0.0
    %1792 = vmatprep.subr.mxu0 0.0
    %1793 = vmatpush1.xpose.msra.mxu0 0.0
    %1794 = vmatprep.subr.mxu0 0.0
    %1795 = vmatpush1.xpose.msra.mxu0 0.0
    %1796 = vmatprep.subr.mxu0 0.0
    %1797 = vmatpush1.xpose.msra.mxu0 0.0
    %1798 = vmatprep.subr.mxu0 0.0
    %1799 = vmatpush1.xpose.msra.mxu0 0.0
    %1800 = vmatprep.subr.mxu0 0.0
    %1801 = vmatpush1.xpose.msra.mxu0 0.0
    %1802 = vmatprep.subr.mxu0 0.0
    %1803 = vmatpush1.xpose.msra.mxu0 0.0
    %1804 = vmatprep.subr.mxu0 0.0
    %1805 = vmatpush1.xpose.msra.mxu0 0.0
    %1806 = vmatprep.subr.mxu0 0.0
    %1807 = vmatpush1.xpose.msra.mxu0 0.0
    %1808 = vmatprep.subr.mxu0 0.0
    %1809 = vmatpush1.xpose.msra.mxu0 0.0
    %1810 = vmatprep.subr.mxu0 0.0
    %1811 = vmatpush1.xpose.msra.mxu0 0.0
    %1812 = vmatprep.subr.mxu0 0.0
    %1813 = vmatpush1.xpose.msra.mxu0 0.0
    %1814 = vmatprep.subr.mxu0 0.0
    %1815 = vmatpush1.xpose.msra.mxu0 0.0
    %1816 = vmatprep.subr.mxu0 0.0
    %1817 = vmatpush1.xpose.msra.mxu0 0.0
    %1818 = vmatprep.subr.mxu0 0.0
    %1819 = vmatpush1.xpose.msra.mxu0 %v1788
    %1820 = vmatprep.subr.mxu0 0.0
    %1821 = vmatpush1.xpose.msra.mxu0 %v1785
    %1822 = vmatprep.subr.mxu0 0.0
    %1823 = vmatpush2.xpose.msra.mxu0 0.0
    %1824 = vmatprep.subr.mxu0 0.0
    %1825 = vmatpush2.xpose.msra.mxu0 0.0
    %1826 = vmatprep.subr.mxu0 0.0
    %1827 = vmatpush2.xpose.msra.mxu0 0.0
    %1828 = vmatprep.subr.mxu0 0.0
    %1829 = vmatpush2.xpose.msra.mxu0 0.0
    %1830 = vmatprep.subr.mxu0 0.0
    %1831 = vmatpush2.xpose.msra.mxu0 0.0
    %1832 = vmatprep.subr.mxu0 0.0
    %1833 = vmatpush2.xpose.msra.mxu0 0.0
    %1834 = vmatprep.subr.mxu0 0.0
    %1835 = vmatpush2.xpose.msra.mxu0 0.0
    %1836 = vmatprep.subr.mxu0 0.0
    %1837 = vmatpush2.xpose.msra.mxu0 0.0
    %1838 = vmatprep.subr.mxu0 0.0
    %1839 = vmatpush2.xpose.msra.mxu0 0.0
    %1840 = vmatprep.subr.mxu0 0.0
    %1841 = vmatpush2.xpose.msra.mxu0 0.0
    %1842 = vmatprep.subr.mxu0 0.0
    %1843 = vmatpush2.xpose.msra.mxu0 0.0
    %1844 = vmatprep.subr.mxu0 0.0
    %1845 = vmatpush2.xpose.msra.mxu0 0.0
    %1846 = vmatprep.subr.mxu0 0.0
    %1847 = vmatpush2.xpose.msra.mxu0 0.0
    %1848 = vmatprep.subr.mxu0 0.0
    %1849 = vmatpush2.xpose.msra.mxu0 0.0
    %1850 = vmatprep.subr.mxu0 0.0
    %1851 = vmatpush2.xpose.msra.mxu0 0.0
    %1852 = vmatprep.subr.mxu0 0.0
    %1853 = vmatpush2.xpose.msra.mxu0 0.0
    %1854 = vmatprep.mubr.f32.mxu0 0.0
    %1855 = vmatmul.mubr.f32.gmra.mxu0 %v1779
    %v1856 = vpop.f32.mrf.mxu0
    %v1857 = vadd.f32 0.0, %v1856
    %v1858 = vpop.f32.mrf.mxu0
    %1859 = vmatprep.mubr.f32.mxu0 0.0
    %1860 = vmatmul.mubr.f32.gmra.mxu0 %v1782
    %v1861 = vpop.f32.mrf.mxu0
    %v1862 = vadd.f32 0.0, %v1861
    %v1863 = vpop.f32.mrf.mxu0
    %1864 = vdwg.mxu0
    %v1866 = vsel %vm1603, %v584, 0
    %v1869 = vsel %vm1603, %v618, 0
    %v1872 = vsel %vm1603, %v1028, 0
    %v1875 = vsel %vm1603, %v1062, 0
    %1877 = vmatprep.subr.mxu0 0.0
    %1878 = vmatpush1.xpose.msra.mxu0 0.0
    %1879 = vmatprep.subr.mxu0 0.0
    %1880 = vmatpush1.xpose.msra.mxu0 0.0
    %1881 = vmatprep.subr.mxu0 0.0
    %1882 = vmatpush1.xpose.msra.mxu0 0.0
    %1883 = vmatprep.subr.mxu0 0.0
    %1884 = vmatpush1.xpose.msra.mxu0 0.0
    %1885 = vmatprep.subr.mxu0 0.0
    %1886 = vmatpush1.xpose.msra.mxu0 0.0
    %1887 = vmatprep.subr.mxu0 0.0
    %1888 = vmatpush1.xpose.msra.mxu0 0.0
    %1889 = vmatprep.subr.mxu0 0.0
    %1890 = vmatpush1.xpose.msra.mxu0 0.0
    %1891 = vmatprep.subr.mxu0 0.0
    %1892 = vmatpush1.xpose.msra.mxu0 0.0
    %1893 = vmatprep.subr.mxu0 0.0
    %1894 = vmatpush1.xpose.msra.mxu0 0.0
    %1895 = vmatprep.subr.mxu0 0.0
    %1896 = vmatpush1.xpose.msra.mxu0 0.0
    %1897 = vmatprep.subr.mxu0 0.0
    %1898 = vmatpush1.xpose.msra.mxu0 0.0
    %1899 = vmatprep.subr.mxu0 0.0
    %1900 = vmatpush1.xpose.msra.mxu0 0.0
    %1901 = vmatprep.subr.mxu0 0.0
    %1902 = vmatpush1.xpose.msra.mxu0 0.0
    %1903 = vmatprep.subr.mxu0 0.0
    %1904 = vmatpush1.xpose.msra.mxu0 0.0
    %1905 = vmatprep.subr.mxu0 0.0
    %1906 = vmatpush1.xpose.msra.mxu0 %v1875
    %1907 = vmatprep.subr.mxu0 0.0
    %1908 = vmatpush1.xpose.msra.mxu0 %v1872
    %1909 = vmatprep.subr.mxu0 0.0
    %1910 = vmatpush2.xpose.msra.mxu0 0.0
    %1911 = vmatprep.subr.mxu0 0.0
    %1912 = vmatpush2.xpose.msra.mxu0 0.0
    %1913 = vmatprep.subr.mxu0 0.0
    %1914 = vmatpush2.xpose.msra.mxu0 0.0
    %1915 = vmatprep.subr.mxu0 0.0
    %1916 = vmatpush2.xpose.msra.mxu0 0.0
    %1917 = vmatprep.subr.mxu0 0.0
    %1918 = vmatpush2.xpose.msra.mxu0 0.0
    %1919 = vmatprep.subr.mxu0 0.0
    %1920 = vmatpush2.xpose.msra.mxu0 0.0
    %1921 = vmatprep.subr.mxu0 0.0
    %1922 = vmatpush2.xpose.msra.mxu0 0.0
    %1923 = vmatprep.subr.mxu0 0.0
    %1924 = vmatpush2.xpose.msra.mxu0 0.0
    %1925 = vmatprep.subr.mxu0 0.0
    %1926 = vmatpush2.xpose.msra.mxu0 0.0
    %1927 = vmatprep.subr.mxu0 0.0
    %1928 = vmatpush2.xpose.msra.mxu0 0.0
    %1929 = vmatprep.subr.mxu0 0.0
    %1930 = vmatpush2.xpose.msra.mxu0 0.0
    %1931 = vmatprep.subr.mxu0 0.0
    %1932 = vmatpush2.xpose.msra.mxu0 0.0
    %1933 = vmatprep.subr.mxu0 0.0
    %1934 = vmatpush2.xpose.msra.mxu0 0.0
    %1935 = vmatprep.subr.mxu0 0.0
    %1936 = vmatpush2.xpose.msra.mxu0 0.0
    %1937 = vmatprep.subr.mxu0 0.0
    %1938 = vmatpush2.xpose.msra.mxu0 0.0
    %1939 = vmatprep.subr.mxu0 0.0
    %1940 = vmatpush2.xpose.msra.mxu0 0.0
    %1941 = vmatprep.mubr.f32.mxu0 0.0
    %1942 = vmatmul.mubr.f32.gmra.mxu0 %v1866
    %v1943 = vpop.f32.mrf.mxu0
    %v1944 = vadd.f32 0.0, %v1943
    %v1945 = vpop.f32.mrf.mxu0
    %1946 = vmatprep.mubr.f32.mxu0 0.0
    %1947 = vmatmul.mubr.f32.gmra.mxu0 %v1869
    %v1948 = vpop.f32.mrf.mxu0
    %v1949 = vadd.f32 0.0, %v1948
    %v1950 = vpop.f32.mrf.mxu0
    %1951 = vdwg.mxu0
    %v1953 = vsel %vm1603, %v683, 0
    %v1956 = vsel %vm1603, %v711, 0
    %v1959 = vsel %vm1603, %v1127, 0
    %v1962 = vsel %vm1603, %v1155, 0
    %1964 = vmatprep.subr.mxu0 0.0
    %1965 = vmatpush1.xpose.msra.mxu0 0.0
    %1966 = vmatprep.subr.mxu0 0.0
    %1967 = vmatpush1.xpose.msra.mxu0 0.0
    %1968 = vmatprep.subr.mxu0 0.0
    %1969 = vmatpush1.xpose.msra.mxu0 0.0
    %1970 = vmatprep.subr.mxu0 0.0
    %1971 = vmatpush1.xpose.msra.mxu0 0.0
    %1972 = vmatprep.subr.mxu0 0.0
    %1973 = vmatpush1.xpose.msra.mxu0 0.0
    %1974 = vmatprep.subr.mxu0 0.0
    %1975 = vmatpush1.xpose.msra.mxu0 0.0
    %1976 = vmatprep.subr.mxu0 0.0
    %1977 = vmatpush1.xpose.msra.mxu0 0.0
    %1978 = vmatprep.subr.mxu0 0.0
    %1979 = vmatpush1.xpose.msra.mxu0 0.0
    %1980 = vmatprep.subr.mxu0 0.0
    %1981 = vmatpush1.xpose.msra.mxu0 0.0
    %1982 = vmatprep.subr.mxu0 0.0
    %1983 = vmatpush1.xpose.msra.mxu0 0.0
    %1984 = vmatprep.subr.mxu0 0.0
    %1985 = vmatpush1.xpose.msra.mxu0 0.0
    %1986 = vmatprep.subr.mxu0 0.0
    %1987 = vmatpush1.xpose.msra.mxu0 0.0
    %1988 = vmatprep.subr.mxu0 0.0
    %1989 = vmatpush1.xpose.msra.mxu0 0.0
    %1990 = vmatprep.subr.mxu0 0.0
    %1991 = vmatpush1.xpose.msra.mxu0 0.0
    %1992 = vmatprep.subr.mxu0 0.0
    %1993 = vmatpush1.xpose.msra.mxu0 %v1962
    %1994 = vmatprep.subr.mxu0 0.0
    %1995 = vmatpush1.xpose.msra.mxu0 %v1959
    %1996 = vmatprep.subr.mxu0 0.0
    %1997 = vmatpush2.xpose.msra.mxu0 0.0
    %1998 = vmatprep.subr.mxu0 0.0
    %1999 = vmatpush2.xpose.msra.mxu0 0.0
    %2000 = vmatprep.subr.mxu0 0.0
    %2001 = vmatpush2.xpose.msra.mxu0 0.0
    %2002 = vmatprep.subr.mxu0 0.0
    %2003 = vmatpush2.xpose.msra.mxu0 0.0
    %2004 = vmatprep.subr.mxu0 0.0
    %2005 = vmatpush2.xpose.msra.mxu0 0.0
    %2006 = vmatprep.subr.mxu0 0.0
    %2007 = vmatpush2.xpose.msra.mxu0 0.0
    %2008 = vmatprep.subr.mxu0 0.0
    %2009 = vmatpush2.xpose.msra.mxu0 0.0
    %2010 = vmatprep.subr.mxu0 0.0
    %2011 = vmatpush2.xpose.msra.mxu0 0.0
    %2012 = vmatprep.subr.mxu0 0.0
    %2013 = vmatpush2.xpose.msra.mxu0 0.0
    %2014 = vmatprep.subr.mxu0 0.0
    %2015 = vmatpush2.xpose.msra.mxu0 0.0
    %2016 = vmatprep.subr.mxu0 0.0
    %2017 = vmatpush2.xpose.msra.mxu0 0.0
    %2018 = vmatprep.subr.mxu0 0.0
    %2019 = vmatpush2.xpose.msra.mxu0 0.0
    %2020 = vmatprep.subr.mxu0 0.0
    %2021 = vmatpush2.xpose.msra.mxu0 0.0
    %2022 = vmatprep.subr.mxu0 0.0
    %2023 = vmatpush2.xpose.msra.mxu0 0.0
    %2024 = vmatprep.subr.mxu0 0.0
    %2025 = vmatpush2.xpose.msra.mxu0 0.0
    %2026 = vmatprep.subr.mxu0 0.0
    %2027 = vmatpush2.xpose.msra.mxu0 0.0
    %2028 = vmatprep.mubr.f32.mxu0 0.0
    %2029 = vmatmul.mubr.f32.gmra.mxu0 %v1953
    %v2030 = vpop.f32.mrf.mxu0
    %v2031 = vadd.f32 0.0, %v2030
    %v2032 = vpop.f32.mrf.mxu0
    %2033 = vmatprep.mubr.f32.mxu0 0.0
    %2034 = vmatmul.mubr.f32.gmra.mxu0 %v1956
    %v2035 = vpop.f32.mrf.mxu0
    %v2036 = vadd.f32 0.0, %v2035
    %v2037 = vpop.f32.mrf.mxu0
    %2038 = vdwg.mxu0
    %v2040 = vsel %vm1603, %v684, 0
    %v2043 = vsel %vm1603, %v719, 0
    %v2046 = vsel %vm1603, %v1128, 0
    %v2049 = vsel %vm1603, %v1163, 0
    %2051 = vmatprep.subr.mxu0 0.0
    %2052 = vmatpush1.xpose.msra.mxu0 0.0
    %2053 = vmatprep.subr.mxu0 0.0
    %2054 = vmatpush1.xpose.msra.mxu0 0.0
    %2055 = vmatprep.subr.mxu0 0.0
    %2056 = vmatpush1.xpose.msra.mxu0 0.0
    %2057 = vmatprep.subr.mxu0 0.0
    %2058 = vmatpush1.xpose.msra.mxu0 0.0
    %2059 = vmatprep.subr.mxu0 0.0
    %2060 = vmatpush1.xpose.msra.mxu0 0.0
    %2061 = vmatprep.subr.mxu0 0.0
    %2062 = vmatpush1.xpose.msra.mxu0 0.0
    %2063 = vmatprep.subr.mxu0 0.0
    %2064 = vmatpush1.xpose.msra.mxu0 0.0
    %2065 = vmatprep.subr.mxu0 0.0
    %2066 = vmatpush1.xpose.msra.mxu0 0.0
    %2067 = vmatprep.subr.mxu0 0.0
    %2068 = vmatpush1.xpose.msra.mxu0 0.0
    %2069 = vmatprep.subr.mxu0 0.0
    %2070 = vmatpush1.xpose.msra.mxu0 0.0
    %2071 = vmatprep.subr.mxu0 0.0
    %2072 = vmatpush1.xpose.msra.mxu0 0.0
    %2073 = vmatprep.subr.mxu0 0.0
    %2074 = vmatpush1.xpose.msra.mxu0 0.0
    %2075 = vmatprep.subr.mxu0 0.0
    %2076 = vmatpush1.xpose.msra.mxu0 0.0
    %2077 = vmatprep.subr.mxu0 0.0
    %2078 = vmatpush1.xpose.msra.mxu0 0.0
    %2079 = vmatprep.subr.mxu0 0.0
    %2080 = vmatpush1.xpose.msra.mxu0 %v2049
    %2081 = vmatprep.subr.mxu0 0.0
    %2082 = vmatpush1.xpose.msra.mxu0 %v2046
    %2083 = vmatprep.subr.mxu0 0.0
    %2084 = vmatpush2.xpose.msra.mxu0 0.0
    %2085 = vmatprep.subr.mxu0 0.0
    %2086 = vmatpush2.xpose.msra.mxu0 0.0
    %2087 = vmatprep.subr.mxu0 0.0
    %2088 = vmatpush2.xpose.msra.mxu0 0.0
    %2089 = vmatprep.subr.mxu0 0.0
    %2090 = vmatpush2.xpose.msra.mxu0 0.0
    %2091 = vmatprep.subr.mxu0 0.0
    %2092 = vmatpush2.xpose.msra.mxu0 0.0
    %2093 = vmatprep.subr.mxu0 0.0
    %2094 = vmatpush2.xpose.msra.mxu0 0.0
    %2095 = vmatprep.subr.mxu0 0.0
    %2096 = vmatpush2.xpose.msra.mxu0 0.0
    %2097 = vmatprep.subr.mxu0 0.0
    %2098 = vmatpush2.xpose.msra.mxu0 0.0
    %2099 = vmatprep.subr.mxu0 0.0
    %2100 = vmatpush2.xpose.msra.mxu0 0.0
    %2101 = vmatprep.subr.mxu0 0.0
    %2102 = vmatpush2.xpose.msra.mxu0 0.0
    %2103 = vmatprep.subr.mxu0 0.0
    %2104 = vmatpush2.xpose.msra.mxu0 0.0
    %2105 = vmatprep.subr.mxu0 0.0
    %2106 = vmatpush2.xpose.msra.mxu0 0.0
    %2107 = vmatprep.subr.mxu0 0.0
    %2108 = vmatpush2.xpose.msra.mxu0 0.0
    %2109 = vmatprep.subr.mxu0 0.0
    %2110 = vmatpush2.xpose.msra.mxu0 0.0
    %2111 = vmatprep.subr.mxu0 0.0
    %2112 = vmatpush2.xpose.msra.mxu0 0.0
    %2113 = vmatprep.subr.mxu0 0.0
    %2114 = vmatpush2.xpose.msra.mxu0 0.0
    %2115 = vmatprep.mubr.f32.mxu0 0.0
    %2116 = vmatmul.mubr.f32.gmra.mxu0 %v2040
    %v2117 = vpop.f32.mrf.mxu0
    %v2118 = vadd.f32 0.0, %v2117
    %v2119 = vpop.f32.mrf.mxu0
    %2120 = vmatprep.mubr.f32.mxu0 0.0
    %2121 = vmatmul.mubr.f32.gmra.mxu0 %v2043
    %v2122 = vpop.f32.mrf.mxu0
    %v2123 = vadd.f32 0.0, %v2122
    %v2124 = vpop.f32.mrf.mxu0
    %2125 = vdwg.mxu0
    %v2127 = vsel %vm1603, %v685, 0
    %v2130 = vsel %vm1603, %v718, 0
    %v2133 = vsel %vm1603, %v1129, 0
    %v2136 = vsel %vm1603, %v1162, 0
    %2138 = vmatprep.subr.mxu0 0.0
    %2139 = vmatpush1.xpose.msra.mxu0 0.0
    %2140 = vmatprep.subr.mxu0 0.0
    %2141 = vmatpush1.xpose.msra.mxu0 0.0
    %2142 = vmatprep.subr.mxu0 0.0
    %2143 = vmatpush1.xpose.msra.mxu0 0.0
    %2144 = vmatprep.subr.mxu0 0.0
    %2145 = vmatpush1.xpose.msra.mxu0 0.0
    %2146 = vmatprep.subr.mxu0 0.0
    %2147 = vmatpush1.xpose.msra.mxu0 0.0
    %2148 = vmatprep.subr.mxu0 0.0
    %2149 = vmatpush1.xpose.msra.mxu0 0.0
    %2150 = vmatprep.subr.mxu0 0.0
    %2151 = vmatpush1.xpose.msra.mxu0 0.0
    %2152 = vmatprep.subr.mxu0 0.0
    %2153 = vmatpush1.xpose.msra.mxu0 0.0
    %2154 = vmatprep.subr.mxu0 0.0
    %2155 = vmatpush1.xpose.msra.mxu0 0.0
    %2156 = vmatprep.subr.mxu0 0.0
    %2157 = vmatpush1.xpose.msra.mxu0 0.0
    %2158 = vmatprep.subr.mxu0 0.0
    %2159 = vmatpush1.xpose.msra.mxu0 0.0
    %2160 = vmatprep.subr.mxu0 0.0
    %2161 = vmatpush1.xpose.msra.mxu0 0.0
    %2162 = vmatprep.subr.mxu0 0.0
    %2163 = vmatpush1.xpose.msra.mxu0 0.0
    %2164 = vmatprep.subr.mxu0 0.0
    %2165 = vmatpush1.xpose.msra.mxu0 0.0
    %2166 = vmatprep.subr.mxu0 0.0
    %2167 = vmatpush1.xpose.msra.mxu0 %v2136
    %2168 = vmatprep.subr.mxu0 0.0
    %2169 = vmatpush1.xpose.msra.mxu0 %v2133
    %2170 = vmatprep.subr.mxu0 0.0
    %2171 = vmatpush2.xpose.msra.mxu0 0.0
    %2172 = vmatprep.subr.mxu0 0.0
    %2173 = vmatpush2.xpose.msra.mxu0 0.0
    %2174 = vmatprep.subr.mxu0 0.0
    %2175 = vmatpush2.xpose.msra.mxu0 0.0
    %2176 = vmatprep.subr.mxu0 0.0
    %2177 = vmatpush2.xpose.msra.mxu0 0.0
    %2178 = vmatprep.subr.mxu0 0.0
    %2179 = vmatpush2.xpose.msra.mxu0 0.0
    %2180 = vmatprep.subr.mxu0 0.0
    %2181 = vmatpush2.xpose.msra.mxu0 0.0
    %2182 = vmatprep.subr.mxu0 0.0
    %2183 = vmatpush2.xpose.msra.mxu0 0.0
    %2184 = vmatprep.subr.mxu0 0.0
    %2185 = vmatpush2.xpose.msra.mxu0 0.0
    %2186 = vmatprep.subr.mxu0 0.0
    %2187 = vmatpush2.xpose.msra.mxu0 0.0
    %2188 = vmatprep.subr.mxu0 0.0
    %2189 = vmatpush2.xpose.msra.mxu0 0.0
    %2190 = vmatprep.subr.mxu0 0.0
    %2191 = vmatpush2.xpose.msra.mxu0 0.0
    %2192 = vmatprep.subr.mxu0 0.0
    %2193 = vmatpush2.xpose.msra.mxu0 0.0
    %2194 = vmatprep.subr.mxu0 0.0
    %2195 = vmatpush2.xpose.msra.mxu0 0.0
    %2196 = vmatprep.subr.mxu0 0.0
    %2197 = vmatpush2.xpose.msra.mxu0 0.0
    %2198 = vmatprep.subr.mxu0 0.0
    %2199 = vmatpush2.xpose.msra.mxu0 0.0
    %2200 = vmatprep.subr.mxu0 0.0
    %2201 = vmatpush2.xpose.msra.mxu0 0.0
    %2202 = vmatprep.mubr.f32.mxu0 0.0
    %2203 = vmatmul.mubr.f32.gmra.mxu0 %v2127
    %v2204 = vpop.f32.mrf.mxu0
    %v2205 = vadd.f32 0.0, %v2204
    %v2206 = vpop.f32.mrf.mxu0
    %2207 = vmatprep.mubr.f32.mxu0 0.0
    %2208 = vmatmul.mubr.f32.gmra.mxu0 %v2130
    %v2209 = vpop.f32.mrf.mxu0
    %v2210 = vadd.f32 0.0, %v2209
    %v2211 = vpop.f32.mrf.mxu0
    %2212 = vdwg.mxu0
    %v2214 = vsel %vm1603, %v686, 0
    %v2217 = vsel %vm1603, %v720, 0
    %v2220 = vsel %vm1603, %v1130, 0
    %v2223 = vsel %vm1603, %v1164, 0
    %2225 = vmatprep.subr.mxu0 0.0
    %2226 = vmatpush1.xpose.msra.mxu0 0.0
    %2227 = vmatprep.subr.mxu0 0.0
    %2228 = vmatpush1.xpose.msra.mxu0 0.0
    %2229 = vmatprep.subr.mxu0 0.0
    %2230 = vmatpush1.xpose.msra.mxu0 0.0
    %2231 = vmatprep.subr.mxu0 0.0
    %2232 = vmatpush1.xpose.msra.mxu0 0.0
    %2233 = vmatprep.subr.mxu0 0.0
    %2234 = vmatpush1.xpose.msra.mxu0 0.0
    %2235 = vmatprep.subr.mxu0 0.0
    %2236 = vmatpush1.xpose.msra.mxu0 0.0
    %2237 = vmatprep.subr.mxu0 0.0
    %2238 = vmatpush1.xpose.msra.mxu0 0.0
    %2239 = vmatprep.subr.mxu0 0.0
    %2240 = vmatpush1.xpose.msra.mxu0 0.0
    %2241 = vmatprep.subr.mxu0 0.0
    %2242 = vmatpush1.xpose.msra.mxu0 0.0
    %2243 = vmatprep.subr.mxu0 0.0
    %2244 = vmatpush1.xpose.msra.mxu0 0.0
    %2245 = vmatprep.subr.mxu0 0.0
    %2246 = vmatpush1.xpose.msra.mxu0 0.0
    %2247 = vmatprep.subr.mxu0 0.0
    %2248 = vmatpush1.xpose.msra.mxu0 0.0
    %2249 = vmatprep.subr.mxu0 0.0
    %2250 = vmatpush1.xpose.msra.mxu0 0.0
    %2251 = vmatprep.subr.mxu0 0.0
    %2252 = vmatpush1.xpose.msra.mxu0 0.0
    %2253 = vmatprep.subr.mxu0 0.0
    %2254 = vmatpush1.xpose.msra.mxu0 %v2223
    %2255 = vmatprep.subr.mxu0 0.0
    %2256 = vmatpush1.xpose.msra.mxu0 %v2220
    %2257 = vmatprep.subr.mxu0 0.0
    %2258 = vmatpush2.xpose.msra.mxu0 0.0
    %2259 = vmatprep.subr.mxu0 0.0
    %2260 = vmatpush2.xpose.msra.mxu0 0.0
    %2261 = vmatprep.subr.mxu0 0.0
    %2262 = vmatpush2.xpose.msra.mxu0 0.0
    %2263 = vmatprep.subr.mxu0 0.0
    %2264 = vmatpush2.xpose.msra.mxu0 0.0
    %2265 = vmatprep.subr.mxu0 0.0
    %2266 = vmatpush2.xpose.msra.mxu0 0.0
    %2267 = vmatprep.subr.mxu0 0.0
    %2268 = vmatpush2.xpose.msra.mxu0 0.0
    %2269 = vmatprep.subr.mxu0 0.0
    %2270 = vmatpush2.xpose.msra.mxu0 0.0
    %2271 = vmatprep.subr.mxu0 0.0
    %2272 = vmatpush2.xpose.msra.mxu0 0.0
    %2273 = vmatprep.subr.mxu0 0.0
    %2274 = vmatpush2.xpose.msra.mxu0 0.0
    %2275 = vmatprep.subr.mxu0 0.0
    %2276 = vmatpush2.xpose.msra.mxu0 0.0
    %2277 = vmatprep.subr.mxu0 0.0
    %2278 = vmatpush2.xpose.msra.mxu0 0.0
    %2279 = vmatprep.subr.mxu0 0.0
    %2280 = vmatpush2.xpose.msra.mxu0 0.0
    %2281 = vmatprep.subr.mxu0 0.0
    %2282 = vmatpush2.xpose.msra.mxu0 0.0
    %2283 = vmatprep.subr.mxu0 0.0
    %2284 = vmatpush2.xpose.msra.mxu0 0.0
    %2285 = vmatprep.subr.mxu0 0.0
    %2286 = vmatpush2.xpose.msra.mxu0 0.0
    %2287 = vmatprep.subr.mxu0 0.0
    %2288 = vmatpush2.xpose.msra.mxu0 0.0
    %2289 = vmatprep.mubr.f32.mxu0 0.0
    %2290 = vmatmul.mubr.f32.gmra.mxu0 %v2214
    %v2291 = vpop.f32.mrf.mxu0
    %v2292 = vadd.f32 0.0, %v2291
    %v2293 = vpop.f32.mrf.mxu0
    %2294 = vmatprep.mubr.f32.mxu0 0.0
    %2295 = vmatmul.mubr.f32.gmra.mxu0 %v2217
    %v2296 = vpop.f32.mrf.mxu0
    %v2297 = vadd.f32 0.0, %v2296
    %v2298 = vpop.f32.mrf.mxu0
    %2299 = vdwg.mxu0
    %vm2300 = vcmask 97280
    %v2301 = vsel %vm2300, %v1683, -inf
    %2302 = vmax.xlane.f32.xlu0 %v2301
    %v2303 = vpop.xlane.xlu0 %2302
    %vm2304 = vcmask 93184
    %v2305 = vsel %vm2304, %v1688, -inf
    %2306 = vmax.xlane.f32.xlu0 %v2305
    %v2307 = vpop.xlane.xlu0 %2306
    %v2308 = vsel %vm2300, %v1770, -inf
    %2309 = vmax.xlane.f32.xlu0 %v2308
    %v2310 = vpop.xlane.xlu0 %2309
    %v2311 = vsel %vm2304, %v1775, -inf
    %2312 = vmax.xlane.f32.xlu0 %v2311
    %v2313 = vpop.xlane.xlu0 %2312
    %v2314 = vsel %vm2300, %v1857, -inf
    %2315 = vmax.xlane.f32.xlu0 %v2314
    %v2316 = vpop.xlane.xlu0 %2315
    %v2317 = vsel %vm2304, %v1862, -inf
    %2318 = vmax.xlane.f32.xlu0 %v2317
    %v2319 = vpop.xlane.xlu0 %2318
    %v2320 = vsel %vm2300, %v1944, -inf
    %2321 = vmax.xlane.f32.xlu0 %v2320
    %v2322 = vpop.xlane.xlu0 %2321
    %v2323 = vsel %vm2304, %v1949, -inf
    %2324 = vmax.xlane.f32.xlu0 %v2323
    %v2325 = vpop.xlane.xlu0 %2324
    %v2326 = vsel %vm2300, %v2031, -inf
    %2327 = vmax.xlane.f32.xlu0 %v2326
    %v2328 = vpop.xlane.xlu0 %2327
    %v2329 = vsel %vm2304, %v2036, -inf
    %2330 = vmax.xlane.f32.xlu0 %v2329
    %v2331 = vpop.xlane.xlu0 %2330
    %v2332 = vsel %vm2300, %v2118, -inf
    %2333 = vmax.xlane.f32.xlu0 %v2332
    %v2334 = vpop.xlane.xlu0 %2333
    %v2335 = vsel %vm2304, %v2123, -inf
    %2336 = vmax.xlane.f32.xlu0 %v2335
    %v2337 = vpop.xlane.xlu0 %2336
    %v2338 = vsel %vm2300, %v2205, -inf
    %2339 = vmax.xlane.f32.xlu0 %v2338
    %v2340 = vpop.xlane.xlu0 %2339
    %v2341 = vsel %vm2304, %v2210, -inf
    %2342 = vmax.xlane.f32.xlu0 %v2341
    %v2343 = vpop.xlane.xlu0 %2342
    %v2344 = vsel %vm2300, %v2292, -inf
    %2345 = vmax.xlane.f32.xlu0 %v2344
    %v2346 = vpop.xlane.xlu0 %2345
    %v2347 = vsel %vm2304, %v2297, -inf
    %2348 = vmax.xlane.f32.xlu0 %v2347
    %v2349 = vpop.xlane.xlu0 %2348
    %v2350 = vsub.f32 %v1683, %v2303
    %v2351 = vsub.f32 %v1688, %v2307
    %v2352 = vsub.f32 %v1770, %v2310
    %v2353 = vsub.f32 %v1775, %v2313
    %v2354 = vsub.f32 %v1857, %v2316
    %v2355 = vsub.f32 %v1862, %v2319
    %v2356 = vsub.f32 %v1944, %v2322
    %v2357 = vsub.f32 %v1949, %v2325
    %v2358 = vsub.f32 %v2031, %v2328
    %v2359 = vsub.f32 %v2036, %v2331
    %v2360 = vsub.f32 %v2118, %v2334
    %v2361 = vsub.f32 %v2123, %v2337
    %v2362 = vsub.f32 %v2205, %v2340
    %v2363 = vsub.f32 %v2210, %v2343
    %v2364 = vsub.f32 %v2292, %v2346
    %v2365 = vsub.f32 %v2297, %v2349
    %v2366 = vmul.f32 %v2350, 1.442695
    %v2367 = vpow.pop %v2366
    %v2368 = vmul.f32 %v2351, 1.442695
    %v2369 = vpow.pop %v2368
    %v2370 = vmul.f32 %v2352, 1.442695
    %v2371 = vpow.pop %v2370
    %v2372 = vmul.f32 %v2353, 1.442695
    %v2373 = vpow.pop %v2372
    %v2374 = vmul.f32 %v2354, 1.442695
    %v2375 = vpow.pop %v2374
    %v2376 = vmul.f32 %v2355, 1.442695
    %v2377 = vpow.pop %v2376
    %v2378 = vmul.f32 %v2356, 1.442695
    %v2379 = vpow.pop %v2378
    %v2380 = vmul.f32 %v2357, 1.442695
    %v2381 = vpow.pop %v2380
    %v2382 = vmul.f32 %v2358, 1.442695
    %v2383 = vpow.pop %v2382
    %v2384 = vmul.f32 %v2359, 1.442695
    %v2385 = vpow.pop %v2384
    %v2386 = vmul.f32 %v2360, 1.442695
    %v2387 = vpow.pop %v2386
    %v2388 = vmul.f32 %v2361, 1.442695
    %v2389 = vpow.pop %v2388
    %v2390 = vmul.f32 %v2362, 1.442695
    %v2391 = vpow.pop %v2390
    %v2392 = vmul.f32 %v2363, 1.442695
    %v2393 = vpow.pop %v2392
    %v2394 = vmul.f32 %v2364, 1.442695
    %v2395 = vpow.pop %v2394
    %v2396 = vmul.f32 %v2365, 1.442695
    %v2397 = vpow.pop %v2396
    %v2398 = vsel %vm2300, %v2367, 0.0
    %2399 = vadd.xlane.f32.xlu0 %v2398
    %v2400 = vpop.xlane.xlu0 %2399
    %v2401 = vsel %vm2304, %v2369, 0.0
    %2402 = vadd.xlane.f32.xlu0 %v2401
    %v2403 = vpop.xlane.xlu0 %2402
    %v2404 = vsel %vm2300, %v2371, 0.0
    %2405 = vadd.xlane.f32.xlu0 %v2404
    %v2406 = vpop.xlane.xlu0 %2405
    %v2407 = vsel %vm2304, %v2373, 0.0
    %2408 = vadd.xlane.f32.xlu0 %v2407
    %v2409 = vpop.xlane.xlu0 %2408
    %v2410 = vsel %vm2300, %v2375, 0.0
    %2411 = vadd.xlane.f32.xlu0 %v2410
    %v2412 = vpop.xlane.xlu0 %2411
    %v2413 = vsel %vm2304, %v2377, 0.0
    %2414 = vadd.xlane.f32.xlu0 %v2413
    %v2415 = vpop.xlane.xlu0 %2414
    %v2416 = vsel %vm2300, %v2379, 0.0
    %2417 = vadd.xlane.f32.xlu0 %v2416
    %v2418 = vpop.xlane.xlu0 %2417
    %v2419 = vsel %vm2304, %v2381, 0.0
    %2420 = vadd.xlane.f32.xlu0 %v2419
    %v2421 = vpop.xlane.xlu0 %2420
    %v2422 = vsel %vm2300, %v2383, 0.0
    %2423 = vadd.xlane.f32.xlu0 %v2422
    %v2424 = vpop.xlane.xlu0 %2423
    %v2425 = vsel %vm2304, %v2385, 0.0
    %2426 = vadd.xlane.f32.xlu0 %v2425
    %v2427 = vpop.xlane.xlu0 %2426
    %v2428 = vsel %vm2300, %v2387, 0.0
    %2429 = vadd.xlane.f32.xlu0 %v2428
    %v2430 = vpop.xlane.xlu0 %2429
    %v2431 = vsel %vm2304, %v2389, 0.0
    %2432 = vadd.xlane.f32.xlu0 %v2431
    %v2433 = vpop.xlane.xlu0 %2432
    %v2434 = vsel %vm2300, %v2391, 0.0
    %2435 = vadd.xlane.f32.xlu0 %v2434
    %v2436 = vpop.xlane.xlu0 %2435
    %v2437 = vsel %vm2304, %v2393, 0.0
    %2438 = vadd.xlane.f32.xlu0 %v2437
    %v2439 = vpop.xlane.xlu0 %2438
    %v2440 = vsel %vm2300, %v2395, 0.0
    %2441 = vadd.xlane.f32.xlu0 %v2440
    %v2442 = vpop.xlane.xlu0 %2441
    %v2443 = vsel %vm2304, %v2397, 0.0
    %2444 = vadd.xlane.f32.xlu0 %v2443
    %v2445 = vpop.xlane.xlu0 %2444
    %v2446 = vrcp.pop %v2400
    %v2447 = vmul.f32 %v2367, %v2446
    %v2448 = vrcp.pop %v2403
    %v2449 = vmul.f32 %v2369, %v2448
    %v2450 = vrcp.pop %v2406
    %v2451 = vmul.f32 %v2371, %v2450
    %v2452 = vrcp.pop %v2409
    %v2453 = vmul.f32 %v2373, %v2452
    %v2454 = vrcp.pop %v2412
    %v2455 = vmul.f32 %v2375, %v2454
    %v2456 = vrcp.pop %v2415
    %v2457 = vmul.f32 %v2377, %v2456
    %v2458 = vrcp.pop %v2418
    %v2459 = vmul.f32 %v2379, %v2458
    %v2460 = vrcp.pop %v2421
    %v2461 = vmul.f32 %v2381, %v2460
    %v2462 = vrcp.pop %v2424
    %v2463 = vmul.f32 %v2383, %v2462
    %v2464 = vrcp.pop %v2427
    %v2465 = vmul.f32 %v2385, %v2464
    %v2466 = vrcp.pop %v2430
    %v2467 = vmul.f32 %v2387, %v2466
    %v2468 = vrcp.pop %v2433
    %v2469 = vmul.f32 %v2389, %v2468
    %v2470 = vrcp.pop %v2436
    %v2471 = vmul.f32 %v2391, %v2470
    %v2472 = vrcp.pop %v2439
    %v2473 = vmul.f32 %v2393, %v2472
    %v2474 = vrcp.pop %v2442
    %v2475 = vmul.f32 %v2395, %v2474
    %v2476 = vrcp.pop %v2445
    %v2477 = vmul.f32 %v2397, %v2476
    %v2479 = vsel %vm2300, %v2447, 0
    %v2482 = vsel %vm2300, %v2449, 0
    %vm2484 = vcmask 1043456
    %v2486 = vsel %vm2484, %v1491, 0
    %2488 = vmatprep.subr.mxu0 0.0
    %2489 = vmatpush1.msra.mxu0 0.0
    %2490 = vmatprep.subr.mxu0 0.0
    %2491 = vmatpush1.msra.mxu0 0.0
    %2492 = vmatprep.subr.mxu0 0.0
    %2493 = vmatpush1.msra.mxu0 0.0
    %2494 = vmatprep.subr.mxu0 0.0
    %2495 = vmatpush1.msra.mxu0 0.0
    %2496 = vmatprep.subr.mxu0 0.0
    %2497 = vmatpush1.msra.mxu0 0.0
    %2498 = vmatprep.subr.mxu0 0.0
    %2499 = vmatpush1.msra.mxu0 0.0
    %2500 = vmatprep.subr.mxu0 0.0
    %2501 = vmatpush1.msra.mxu0 0.0
    %2502 = vmatprep.subr.mxu0 0.0
    %2503 = vmatpush1.msra.mxu0 0.0
    %2504 = vmatprep.subr.mxu0 0.0
    %2505 = vmatpush1.msra.mxu0 0.0
    %2506 = vmatprep.subr.mxu0 0.0
    %2507 = vmatpush1.msra.mxu0 0.0
    %2508 = vmatprep.subr.mxu0 0.0
    %2509 = vmatpush1.msra.mxu0 0.0
    %2510 = vmatprep.subr.mxu0 0.0
    %2511 = vmatpush1.msra.mxu0 0.0
    %2512 = vmatprep.subr.mxu0 0.0
    %2513 = vmatpush1.msra.mxu0 0.0
    %2514 = vmatprep.subr.mxu0 0.0
    %2515 = vmatpush1.msra.mxu0 0.0
    %2516 = vmatprep.subr.mxu0 0.0
    %2517 = vmatpush1.msra.mxu0 %v2486
    %2518 = vmatprep.subr.mxu0 0.0
    %2519 = vmatpush1.msra.mxu0 %v1463
    %2520 = vmatprep.subr.mxu0 0.0
    %2521 = vmatpush2.msra.mxu0 0.0
    %2522 = vmatprep.subr.mxu0 0.0
    %2523 = vmatpush2.msra.mxu0 0.0
    %2524 = vmatprep.subr.mxu0 0.0
    %2525 = vmatpush2.msra.mxu0 0.0
    %2526 = vmatprep.subr.mxu0 0.0
    %2527 = vmatpush2.msra.mxu0 0.0
    %2528 = vmatprep.subr.mxu0 0.0
    %2529 = vmatpush2.msra.mxu0 0.0
    %2530 = vmatprep.subr.mxu0 0.0
    %2531 = vmatpush2.msra.mxu0 0.0
    %2532 = vmatprep.subr.mxu0 0.0
    %2533 = vmatpush2.msra.mxu0 0.0
    %2534 = vmatprep.subr.mxu0 0.0
    %2535 = vmatpush2.msra.mxu0 0.0
    %2536 = vmatprep.subr.mxu0 0.0
    %2537 = vmatpush2.msra.mxu0 0.0
    %2538 = vmatprep.subr.mxu0 0.0
    %2539 = vmatpush2.msra.mxu0 0.0
    %2540 = vmatprep.subr.mxu0 0.0
    %2541 = vmatpush2.msra.mxu0 0.0
    %2542 = vmatprep.subr.mxu0 0.0
    %2543 = vmatpush2.msra.mxu0 0.0
    %2544 = vmatprep.subr.mxu0 0.0
    %2545 = vmatpush2.msra.mxu0 0.0
    %2546 = vmatprep.subr.mxu0 0.0
    %2547 = vmatpush2.msra.mxu0 0.0
    %2548 = vmatprep.subr.mxu0 0.0
    %2549 = vmatpush2.msra.mxu0 0.0
    %2550 = vmatprep.subr.mxu0 0.0
    %2551 = vmatpush2.msra.mxu0 0.0
    %2552 = vmatprep.mubr.f32.mxu0 0.0
    %2553 = vmatmul.mubr.f32.gmra.mxu0 %v2479
    %v2554 = vpop.f32.mrf.mxu0
    %v2555 = vadd.f32 0.0, %v2554
    %v2556 = vpop.f32.mrf.mxu0
    %2557 = vmatprep.mubr.f32.mxu0 0.0
    %2558 = vmatmul.mubr.f32.gmra.mxu0 %v2482
    %v2559 = vpop.f32.mrf.mxu0
    %v2560 = vadd.f32 0.0, %v2559
    %v2561 = vpop.f32.mrf.mxu0
    %2562 = vdwg.mxu0
    %v2564 = vsel %vm2300, %v2451, 0
    %v2567 = vsel %vm2300, %v2453, 0
    %v2570 = vsel %vm2484, %v1499, 0
    %2572 = vmatprep.subr.mxu0 0.0
    %2573 = vmatpush1.msra.mxu0 0.0
    %2574 = vmatprep.subr.mxu0 0.0
    %2575 = vmatpush1.msra.mxu0 0.0
    %2576 = vmatprep.subr.mxu0 0.0
    %2577 = vmatpush1.msra.mxu0 0.0
    %2578 = vmatprep.subr.mxu0 0.0
    %2579 = vmatpush1.msra.mxu0 0.0
    %2580 = vmatprep.subr.mxu0 0.0
    %2581 = vmatpush1.msra.mxu0 0.0
    %2582 = vmatprep.subr.mxu0 0.0
    %2583 = vmatpush1.msra.mxu0 0.0
    %2584 = vmatprep.subr.mxu0 0.0
    %2585 = vmatpush1.msra.mxu0 0.0
    %2586 = vmatprep.subr.mxu0 0.0
    %2587 = vmatpush1.msra.mxu0 0.0
    %2588 = vmatprep.subr.mxu0 0.0
    %2589 = vmatpush1.msra.mxu0 0.0
    %2590 = vmatprep.subr.mxu0 0.0
    %2591 = vmatpush1.msra.mxu0 0.0
    %2592 = vmatprep.subr.mxu0 0.0
    %2593 = vmatpush1.msra.mxu0 0.0
    %2594 = vmatprep.subr.mxu0 0.0
    %2595 = vmatpush1.msra.mxu0 0.0
    %2596 = vmatprep.subr.mxu0 0.0
    %2597 = vmatpush1.msra.mxu0 0.0
    %2598 = vmatprep.subr.mxu0 0.0
    %2599 = vmatpush1.msra.mxu0 0.0
    %2600 = vmatprep.subr.mxu0 0.0
    %2601 = vmatpush1.msra.mxu0 %v2570
    %2602 = vmatprep.subr.mxu0 0.0
    %2603 = vmatpush1.msra.mxu0 %v1464
    %2604 = vmatprep.subr.mxu0 0.0
    %2605 = vmatpush2.msra.mxu0 0.0
    %2606 = vmatprep.subr.mxu0 0.0
    %2607 = vmatpush2.msra.mxu0 0.0
    %2608 = vmatprep.subr.mxu0 0.0
    %2609 = vmatpush2.msra.mxu0 0.0
    %2610 = vmatprep.subr.mxu0 0.0
    %2611 = vmatpush2.msra.mxu0 0.0
    %2612 = vmatprep.subr.mxu0 0.0
    %2613 = vmatpush2.msra.mxu0 0.0
    %2614 = vmatprep.subr.mxu0 0.0
    %2615 = vmatpush2.msra.mxu0 0.0
    %2616 = vmatprep.subr.mxu0 0.0
    %2617 = vmatpush2.msra.mxu0 0.0
    %2618 = vmatprep.subr.mxu0 0.0
    %2619 = vmatpush2.msra.mxu0 0.0
    %2620 = vmatprep.subr.mxu0 0.0
    %2621 = vmatpush2.msra.mxu0 0.0
    %2622 = vmatprep.subr.mxu0 0.0
    %2623 = vmatpush2.msra.mxu0 0.0
    %2624 = vmatprep.subr.mxu0 0.0
    %2625 = vmatpush2.msra.mxu0 0.0
    %2626 = vmatprep.subr.mxu0 0.0
    %2627 = vmatpush2.msra.mxu0 0.0
    %2628 = vmatprep.subr.mxu0 0.0
    %2629 = vmatpush2.msra.mxu0 0.0
    %2630 = vmatprep.subr.mxu0 0.0
    %2631 = vmatpush2.msra.mxu0 0.0
    %2632 = vmatprep.subr.mxu0 0.0
    %2633 = vmatpush2.msra.mxu0 0.0
    %2634 = vmatprep.subr.mxu0 0.0
    %2635 = vmatpush2.msra.mxu0 0.0
    %2636 = vmatprep.mubr.f32.mxu0 0.0
    %2637 = vmatmul.mubr.f32.gmra.mxu0 %v2564
    %v2638 = vpop.f32.mrf.mxu0
    %v2639 = vadd.f32 0.0, %v2638
    %v2640 = vpop.f32.mrf.mxu0
    %2641 = vmatprep.mubr.f32.mxu0 0.0
    %2642 = vmatmul.mubr.f32.gmra.mxu0 %v2567
    %v2643 = vpop.f32.mrf.mxu0
    %v2644 = vadd.f32 0.0, %v2643
    %v2645 = vpop.f32.mrf.mxu0
    %2646 = vdwg.mxu0
    %v2648 = vsel %vm2300, %v2455, 0
    %v2651 = vsel %vm2300, %v2457, 0
    %v2654 = vsel %vm2484, %v1498, 0
    %2656 = vmatprep.subr.mxu0 0.0
    %2657 = vmatpush1.msra.mxu0 0.0
    %2658 = vmatprep.subr.mxu0 0.0
    %2659 = vmatpush1.msra.mxu0 0.0
    %2660 = vmatprep.subr.mxu0 0.0
    %2661 = vmatpush1.msra.mxu0 0.0
    %2662 = vmatprep.subr.mxu0 0.0
    %2663 = vmatpush1.msra.mxu0 0.0
    %2664 = vmatprep.subr.mxu0 0.0
    %2665 = vmatpush1.msra.mxu0 0.0
    %2666 = vmatprep.subr.mxu0 0.0
    %2667 = vmatpush1.msra.mxu0 0.0
    %2668 = vmatprep.subr.mxu0 0.0
    %2669 = vmatpush1.msra.mxu0 0.0
    %2670 = vmatprep.subr.mxu0 0.0
    %2671 = vmatpush1.msra.mxu0 0.0
    %2672 = vmatprep.subr.mxu0 0.0
    %2673 = vmatpush1.msra.mxu0 0.0
    %2674 = vmatprep.subr.mxu0 0.0
    %2675 = vmatpush1.msra.mxu0 0.0
    %2676 = vmatprep.subr.mxu0 0.0
    %2677 = vmatpush1.msra.mxu0 0.0
    %2678 = vmatprep.subr.mxu0 0.0
    %2679 = vmatpush1.msra.mxu0 0.0
    %2680 = vmatprep.subr.mxu0 0.0
    %2681 = vmatpush1.msra.mxu0 0.0
    %2682 = vmatprep.subr.mxu0 0.0
    %2683 = vmatpush1.msra.mxu0 0.0
    %2684 = vmatprep.subr.mxu0 0.0
    %2685 = vmatpush1.msra.mxu0 %v2654
    %2686 = vmatprep.subr.mxu0 0.0
    %2687 = vmatpush1.msra.mxu0 %v1465
    %2688 = vmatprep.subr.mxu0 0.0
    %2689 = vmatpush2.msra.mxu0 0.0
    %2690 = vmatprep.subr.mxu0 0.0
    %2691 = vmatpush2.msra.mxu0 0.0
    %2692 = vmatprep.subr.mxu0 0.0
    %2693 = vmatpush2.msra.mxu0 0.0
    %2694 = vmatprep.subr.mxu0 0.0
    %2695 = vmatpush2.msra.mxu0 0.0
    %2696 = vmatprep.subr.mxu0 0.0
    %2697 = vmatpush2.msra.mxu0 0.0
    %2698 = vmatprep.subr.mxu0 0.0
    %2699 = vmatpush2.msra.mxu0 0.0
    %2700 = vmatprep.subr.mxu0 0.0
    %2701 = vmatpush2.msra.mxu0 0.0
    %2702 = vmatprep.subr.mxu0 0.0
    %2703 = vmatpush2.msra.mxu0 0.0
    %2704 = vmatprep.subr.mxu0 0.0
    %2705 = vmatpush2.msra.mxu0 0.0
    %2706 = vmatprep.subr.mxu0 0.0
    %2707 = vmatpush2.msra.mxu0 0.0
    %2708 = vmatprep.subr.mxu0 0.0
    %2709 = vmatpush2.msra.mxu0 0.0
    %2710 = vmatprep.subr.mxu0 0.0
    %2711 = vmatpush2.msra.mxu0 0.0
    %2712 = vmatprep.subr.mxu0 0.0
    %2713 = vmatpush2.msra.mxu0 0.0
    %2714 = vmatprep.subr.mxu0 0.0
    %2715 = vmatpush2.msra.mxu0 0.0
    %2716 = vmatprep.subr.mxu0 0.0
    %2717 = vmatpush2.msra.mxu0 0.0
    %2718 = vmatprep.subr.mxu0 0.0
    %2719 = vmatpush2.msra.mxu0 0.0
    %2720 = vmatprep.mubr.f32.mxu0 0.0
    %2721 = vmatmul.mubr.f32.gmra.mxu0 %v2648
    %v2722 = vpop.f32.mrf.mxu0
    %v2723 = vadd.f32 0.0, %v2722
    %v2724 = vpop.f32.mrf.mxu0
    %2725 = vmatprep.mubr.f32.mxu0 0.0
    %2726 = vmatmul.mubr.f32.gmra.mxu0 %v2651
    %v2727 = vpop.f32.mrf.mxu0
    %v2728 = vadd.f32 0.0, %v2727
    %v2729 = vpop.f32.mrf.mxu0
    %2730 = vdwg.mxu0
    %v2732 = vsel %vm2300, %v2459, 0
    %v2735 = vsel %vm2300, %v2461, 0
    %v2738 = vsel %vm2484, %v1500, 0
    %2740 = vmatprep.subr.mxu0 0.0
    %2741 = vmatpush1.msra.mxu0 0.0
    %2742 = vmatprep.subr.mxu0 0.0
    %2743 = vmatpush1.msra.mxu0 0.0
    %2744 = vmatprep.subr.mxu0 0.0
    %2745 = vmatpush1.msra.mxu0 0.0
    %2746 = vmatprep.subr.mxu0 0.0
    %2747 = vmatpush1.msra.mxu0 0.0
    %2748 = vmatprep.subr.mxu0 0.0
    %2749 = vmatpush1.msra.mxu0 0.0
    %2750 = vmatprep.subr.mxu0 0.0
    %2751 = vmatpush1.msra.mxu0 0.0
    %2752 = vmatprep.subr.mxu0 0.0
    %2753 = vmatpush1.msra.mxu0 0.0
    %2754 = vmatprep.subr.mxu0 0.0
    %2755 = vmatpush1.msra.mxu0 0.0
    %2756 = vmatprep.subr.mxu0 0.0
    %2757 = vmatpush1.msra.mxu0 0.0
    %2758 = vmatprep.subr.mxu0 0.0
    %2759 = vmatpush1.msra.mxu0 0.0
    %2760 = vmatprep.subr.mxu0 0.0
    %2761 = vmatpush1.msra.mxu0 0.0
    %2762 = vmatprep.subr.mxu0 0.0
    %2763 = vmatpush1.msra.mxu0 0.0
    %2764 = vmatprep.subr.mxu0 0.0
    %2765 = vmatpush1.msra.mxu0 0.0
    %2766 = vmatprep.subr.mxu0 0.0
    %2767 = vmatpush1.msra.mxu0 0.0
    %2768 = vmatprep.subr.mxu0 0.0
    %2769 = vmatpush1.msra.mxu0 %v2738
    %2770 = vmatprep.subr.mxu0 0.0
    %2771 = vmatpush1.msra.mxu0 %v1466
    %2772 = vmatprep.subr.mxu0 0.0
    %2773 = vmatpush2.msra.mxu0 0.0
    %2774 = vmatprep.subr.mxu0 0.0
    %2775 = vmatpush2.msra.mxu0 0.0
    %2776 = vmatprep.subr.mxu0 0.0
    %2777 = vmatpush2.msra.mxu0 0.0
    %2778 = vmatprep.subr.mxu0 0.0
    %2779 = vmatpush2.msra.mxu0 0.0
    %2780 = vmatprep.subr.mxu0 0.0
    %2781 = vmatpush2.msra.mxu0 0.0
    %2782 = vmatprep.subr.mxu0 0.0
    %2783 = vmatpush2.msra.mxu0 0.0
    %2784 = vmatprep.subr.mxu0 0.0
    %2785 = vmatpush2.msra.mxu0 0.0
    %2786 = vmatprep.subr.mxu0 0.0
    %2787 = vmatpush2.msra.mxu0 0.0
    %2788 = vmatprep.subr.mxu0 0.0
    %2789 = vmatpush2.msra.mxu0 0.0
    %2790 = vmatprep.subr.mxu0 0.0
    %2791 = vmatpush2.msra.mxu0 0.0
    %2792 = vmatprep.subr.mxu0 0.0
    %2793 = vmatpush2.msra.mxu0 0.0
    %2794 = vmatprep.subr.mxu0 0.0
    %2795 = vmatpush2.msra.mxu0 0.0
    %2796 = vmatprep.subr.mxu0 0.0
    %2797 = vmatpush2.msra.mxu0 0.0
    %2798 = vmatprep.subr.mxu0 0.0
    %2799 = vmatpush2.msra.mxu0 0.0
    %2800 = vmatprep.subr.mxu0 0.0
    %2801 = vmatpush2.msra.mxu0 0.0
    %2802 = vmatprep.subr.mxu0 0.0
    %2803 = vmatpush2.msra.mxu0 0.0
    %2804 = vmatprep.mubr.f32.mxu0 0.0
    %2805 = vmatmul.mubr.f32.gmra.mxu0 %v2732
    %v2806 = vpop.f32.mrf.mxu0
    %v2807 = vadd.f32 0.0, %v2806
    %v2808 = vpop.f32.mrf.mxu0
    %2809 = vmatprep.mubr.f32.mxu0 0.0
    %2810 = vmatmul.mubr.f32.gmra.mxu0 %v2735
    %v2811 = vpop.f32.mrf.mxu0
    %v2812 = vadd.f32 0.0, %v2811
    %v2813 = vpop.f32.mrf.mxu0
    %2814 = vdwg.mxu0
    %v2816 = vsel %vm2300, %v2463, 0
    %v2819 = vsel %vm2300, %v2465, 0
    %v2822 = vsel %vm2484, %v1593, 0
    %2824 = vmatprep.subr.mxu0 0.0
    %2825 = vmatpush1.msra.mxu0 0.0
    %2826 = vmatprep.subr.mxu0 0.0
    %2827 = vmatpush1.msra.mxu0 0.0
    %2828 = vmatprep.subr.mxu0 0.0
    %2829 = vmatpush1.msra.mxu0 0.0
    %2830 = vmatprep.subr.mxu0 0.0
    %2831 = vmatpush1.msra.mxu0 0.0
    %2832 = vmatprep.subr.mxu0 0.0
    %2833 = vmatpush1.msra.mxu0 0.0
    %2834 = vmatprep.subr.mxu0 0.0
    %2835 = vmatpush1.msra.mxu0 0.0
    %2836 = vmatprep.subr.mxu0 0.0
    %2837 = vmatpush1.msra.mxu0 0.0
    %2838 = vmatprep.subr.mxu0 0.0
    %2839 = vmatpush1.msra.mxu0 0.0
    %2840 = vmatprep.subr.mxu0 0.0
    %2841 = vmatpush1.msra.mxu0 0.0
    %2842 = vmatprep.subr.mxu0 0.0
    %2843 = vmatpush1.msra.mxu0 0.0
    %2844 = vmatprep.subr.mxu0 0.0
    %2845 = vmatpush1.msra.mxu0 0.0
    %2846 = vmatprep.subr.mxu0 0.0
    %2847 = vmatpush1.msra.mxu0 0.0
    %2848 = vmatprep.subr.mxu0 0.0
    %2849 = vmatpush1.msra.mxu0 0.0
    %2850 = vmatprep.subr.mxu0 0.0
    %2851 = vmatpush1.msra.mxu0 0.0
    %2852 = vmatprep.subr.mxu0 0.0
    %2853 = vmatpush1.msra.mxu0 %v2822
    %2854 = vmatprep.subr.mxu0 0.0
    %2855 = vmatpush1.msra.mxu0 %v1565
    %2856 = vmatprep.subr.mxu0 0.0
    %2857 = vmatpush2.msra.mxu0 0.0
    %2858 = vmatprep.subr.mxu0 0.0
    %2859 = vmatpush2.msra.mxu0 0.0
    %2860 = vmatprep.subr.mxu0 0.0
    %2861 = vmatpush2.msra.mxu0 0.0
    %2862 = vmatprep.subr.mxu0 0.0
    %2863 = vmatpush2.msra.mxu0 0.0
    %2864 = vmatprep.subr.mxu0 0.0
    %2865 = vmatpush2.msra.mxu0 0.0
    %2866 = vmatprep.subr.mxu0 0.0
    %2867 = vmatpush2.msra.mxu0 0.0
    %2868 = vmatprep.subr.mxu0 0.0
    %2869 = vmatpush2.msra.mxu0 0.0
    %2870 = vmatprep.subr.mxu0 0.0
    %2871 = vmatpush2.msra.mxu0 0.0
    %2872 = vmatprep.subr.mxu0 0.0
    %2873 = vmatpush2.msra.mxu0 0.0
    %2874 = vmatprep.subr.mxu0 0.0
    %2875 = vmatpush2.msra.mxu0 0.0
    %2876 = vmatprep.subr.mxu0 0.0
    %2877 = vmatpush2.msra.mxu0 0.0
    %2878 = vmatprep.subr.mxu0 0.0
    %2879 = vmatpush2.msra.mxu0 0.0
    %2880 = vmatprep.subr.mxu0 0.0
    %2881 = vmatpush2.msra.mxu0 0.0
    %2882 = vmatprep.subr.mxu0 0.0
    %2883 = vmatpush2.msra.mxu0 0.0
    %2884 = vmatprep.subr.mxu0 0.0
    %2885 = vmatpush2.msra.mxu0 0.0
    %2886 = vmatprep.subr.mxu0 0.0
    %2887 = vmatpush2.msra.mxu0 0.0
    %2888 = vmatprep.mubr.f32.mxu0 0.0
    %2889 = vmatmul.mubr.f32.gmra.mxu0 %v2816
    %v2890 = vpop.f32.mrf.mxu0
    %v2891 = vadd.f32 0.0, %v2890
    %v2892 = vpop.f32.mrf.mxu0
    %2893 = vmatprep.mubr.f32.mxu0 0.0
    %2894 = vmatmul.mubr.f32.gmra.mxu0 %v2819
    %v2895 = vpop.f32.mrf.mxu0
    %v2896 = vadd.f32 0.0, %v2895
    %v2897 = vpop.f32.mrf.mxu0
    %2898 = vdwg.mxu0
    %v2900 = vsel %vm2300, %v2467, 0
    %v2903 = vsel %vm2300, %v2469, 0
    %v2906 = vsel %vm2484, %v1601, 0
    %2908 = vmatprep.subr.mxu0 0.0
    %2909 = vmatpush1.msra.mxu0 0.0
    %2910 = vmatprep.subr.mxu0 0.0
    %2911 = vmatpush1.msra.mxu0 0.0
    %2912 = vmatprep.subr.mxu0 0.0
    %2913 = vmatpush1.msra.mxu0 0.0
    %2914 = vmatprep.subr.mxu0 0.0
    %2915 = vmatpush1.msra.mxu0 0.0
    %2916 = vmatprep.subr.mxu0 0.0
    %2917 = vmatpush1.msra.mxu0 0.0
    %2918 = vmatprep.subr.mxu0 0.0
    %2919 = vmatpush1.msra.mxu0 0.0
    %2920 = vmatprep.subr.mxu0 0.0
    %2921 = vmatpush1.msra.mxu0 0.0
    %2922 = vmatprep.subr.mxu0 0.0
    %2923 = vmatpush1.msra.mxu0 0.0
    %2924 = vmatprep.subr.mxu0 0.0
    %2925 = vmatpush1.msra.mxu0 0.0
    %2926 = vmatprep.subr.mxu0 0.0
    %2927 = vmatpush1.msra.mxu0 0.0
    %2928 = vmatprep.subr.mxu0 0.0
    %2929 = vmatpush1.msra.mxu0 0.0
    %2930 = vmatprep.subr.mxu0 0.0
    %2931 = vmatpush1.msra.mxu0 0.0
    %2932 = vmatprep.subr.mxu0 0.0
    %2933 = vmatpush1.msra.mxu0 0.0
    %2934 = vmatprep.subr.mxu0 0.0
    %2935 = vmatpush1.msra.mxu0 0.0
    %2936 = vmatprep.subr.mxu0 0.0
    %2937 = vmatpush1.msra.mxu0 %v2906
    %2938 = vmatprep.subr.mxu0 0.0
    %2939 = vmatpush1.msra.mxu0 %v1566
    %2940 = vmatprep.subr.mxu0 0.0
    %2941 = vmatpush2.msra.mxu0 0.0
    %2942 = vmatprep.subr.mxu0 0.0
    %2943 = vmatpush2.msra.mxu0 0.0
    %2944 = vmatprep.subr.mxu0 0.0
    %2945 = vmatpush2.msra.mxu0 0.0
    %2946 = vmatprep.subr.mxu0 0.0
    %2947 = vmatpush2.msra.mxu0 0.0
    %2948 = vmatprep.subr.mxu0 0.0
    %2949 = vmatpush2.msra.mxu0 0.0
    %2950 = vmatprep.subr.mxu0 0.0
    %2951 = vmatpush2.msra.mxu0 0.0
    %2952 = vmatprep.subr.mxu0 0.0
    %2953 = vmatpush2.msra.mxu0 0.0
    %2954 = vmatprep.subr.mxu0 0.0
    %2955 = vmatpush2.msra.mxu0 0.0
    %2956 = vmatprep.subr.mxu0 0.0
    %2957 = vmatpush2.msra.mxu0 0.0
    %2958 = vmatprep.subr.mxu0 0.0
    %2959 = vmatpush2.msra.mxu0 0.0
    %2960 = vmatprep.subr.mxu0 0.0
    %2961 = vmatpush2.msra.mxu0 0.0
    %2962 = vmatprep.subr.mxu0 0.0
    %2963 = vmatpush2.msra.mxu0 0.0
    %2964 = vmatprep.subr.mxu0 0.0
    %2965 = vmatpush2.msra.mxu0 0.0
    %2966 = vmatprep.subr.mxu0 0.0
    %2967 = vmatpush2.msra.mxu0 0.0
    %2968 = vmatprep.subr.mxu0 0.0
    %2969 = vmatpush2.msra.mxu0 0.0
    %2970 = vmatprep.subr.mxu0 0.0
    %2971 = vmatpush2.msra.mxu0 0.0
    %2972 = vmatprep.mubr.f32.mxu0 0.0
    %2973 = vmatmul.mubr.f32.gmra.mxu0 %v2900
    %v2974 = vpop.f32.mrf.mxu0
    %v2975 = vadd.f32 0.0, %v2974
    %v2976 = vpop.f32.mrf.mxu0
    %2977 = vmatprep.mubr.f32.mxu0 0.0
    %2978 = vmatmul.mubr.f32.gmra.mxu0 %v2903
    %v2979 = vpop.f32.mrf.mxu0
    %v2980 = vadd.f32 0.0, %v2979
    %v2981 = vpop.f32.mrf.mxu0
    %2982 = vdwg.mxu0
    %v2984 = vsel %vm2300, %v2471, 0
    %v2987 = vsel %vm2300, %v2473, 0
    %v2990 = vsel %vm2484, %v1600, 0
    %2992 = vmatprep.subr.mxu0 0.0
    %2993 = vmatpush1.msra.mxu0 0.0
    %2994 = vmatprep.subr.mxu0 0.0
    %2995 = vmatpush1.msra.mxu0 0.0
    %2996 = vmatprep.subr.mxu0 0.0
    %2997 = vmatpush1.msra.mxu0 0.0
    %2998 = vmatprep.subr.mxu0 0.0
    %2999 = vmatpush1.msra.mxu0 0.0
    %3000 = vmatprep.subr.mxu0 0.0
    %3001 = vmatpush1.msra.mxu0 0.0
    %3002 = vmatprep.subr.mxu0 0.0
    %3003 = vmatpush1.msra.mxu0 0.0
    %3004 = vmatprep.subr.mxu0 0.0
    %3005 = vmatpush1.msra.mxu0 0.0
    %3006 = vmatprep.subr.mxu0 0.0
    %3007 = vmatpush1.msra.mxu0 0.0
    %3008 = vmatprep.subr.mxu0 0.0
    %3009 = vmatpush1.msra.mxu0 0.0
    %3010 = vmatprep.subr.mxu0 0.0
    %3011 = vmatpush1.msra.mxu0 0.0
    %3012 = vmatprep.subr.mxu0 0.0
    %3013 = vmatpush1.msra.mxu0 0.0
    %3014 = vmatprep.subr.mxu0 0.0
    %3015 = vmatpush1.msra.mxu0 0.0
    %3016 = vmatprep.subr.mxu0 0.0
    %3017 = vmatpush1.msra.mxu0 0.0
    %3018 = vmatprep.subr.mxu0 0.0
    %3019 = vmatpush1.msra.mxu0 0.0
    %3020 = vmatprep.subr.mxu0 0.0
    %3021 = vmatpush1.msra.mxu0 %v2990
    %3022 = vmatprep.subr.mxu0 0.0
    %3023 = vmatpush1.msra.mxu0 %v1567
    %3024 = vmatprep.subr.mxu0 0.0
    %3025 = vmatpush2.msra.mxu0 0.0
    %3026 = vmatprep.subr.mxu0 0.0
    %3027 = vmatpush2.msra.mxu0 0.0
    %3028 = vmatprep.subr.mxu0 0.0
    %3029 = vmatpush2.msra.mxu0 0.0
    %3030 = vmatprep.subr.mxu0 0.0
    %3031 = vmatpush2.msra.mxu0 0.0
    %3032 = vmatprep.subr.mxu0 0.0
    %3033 = vmatpush2.msra.mxu0 0.0
    %3034 = vmatprep.subr.mxu0 0.0
    %3035 = vmatpush2.msra.mxu0 0.0
    %3036 = vmatprep.subr.mxu0 0.0
    %3037 = vmatpush2.msra.mxu0 0.0
    %3038 = vmatprep.subr.mxu0 0.0
    %3039 = vmatpush2.msra.mxu0 0.0
    %3040 = vmatprep.subr.mxu0 0.0
    %3041 = vmatpush2.msra.mxu0 0.0
    %3042 = vmatprep.subr.mxu0 0.0
    %3043 = vmatpush2.msra.mxu0 0.0
    %3044 = vmatprep.subr.mxu0 0.0
    %3045 = vmatpush2.msra.mxu0 0.0
    %3046 = vmatprep.subr.mxu0 0.0
    %3047 = vmatpush2.msra.mxu0 0.0
    %3048 = vmatprep.subr.mxu0 0.0
    %3049 = vmatpush2.msra.mxu0 0.0
    %3050 = vmatprep.subr.mxu0 0.0
    %3051 = vmatpush2.msra.mxu0 0.0
    %3052 = vmatprep.subr.mxu0 0.0
    %3053 = vmatpush2.msra.mxu0 0.0
    %3054 = vmatprep.subr.mxu0 0.0
    %3055 = vmatpush2.msra.mxu0 0.0
    %3056 = vmatprep.mubr.f32.mxu0 0.0
    %3057 = vmatmul.mubr.f32.gmra.mxu0 %v2984
    %v3058 = vpop.f32.mrf.mxu0
    %v3059 = vadd.f32 0.0, %v3058
    %v3060 = vpop.f32.mrf.mxu0
    %3061 = vmatprep.mubr.f32.mxu0 0.0
    %3062 = vmatmul.mubr.f32.gmra.mxu0 %v2987
    %v3063 = vpop.f32.mrf.mxu0
    %v3064 = vadd.f32 0.0, %v3063
    %v3065 = vpop.f32.mrf.mxu0
    %3066 = vdwg.mxu0
    %v3068 = vsel %vm2300, %v2475, 0
    %v3071 = vsel %vm2300, %v2477, 0
    %v3074 = vsel %vm2484, %v1602, 0
    %3076 = vmatprep.subr.mxu0 0.0
    %3077 = vmatpush1.msra.mxu0 0.0
    %3078 = vmatprep.subr.mxu0 0.0
    %3079 = vmatpush1.msra.mxu0 0.0
    %3080 = vmatprep.subr.mxu0 0.0
    %3081 = vmatpush1.msra.mxu0 0.0
    %3082 = vmatprep.subr.mxu0 0.0
    %3083 = vmatpush1.msra.mxu0 0.0
    %3084 = vmatprep.subr.mxu0 0.0
    %3085 = vmatpush1.msra.mxu0 0.0
    %3086 = vmatprep.subr.mxu0 0.0
    %3087 = vmatpush1.msra.mxu0 0.0
    %3088 = vmatprep.subr.mxu0 0.0
    %3089 = vmatpush1.msra.mxu0 0.0
    %3090 = vmatprep.subr.mxu0 0.0
    %3091 = vmatpush1.msra.mxu0 0.0
    %3092 = vmatprep.subr.mxu0 0.0
    %3093 = vmatpush1.msra.mxu0 0.0
    %3094 = vmatprep.subr.mxu0 0.0
    %3095 = vmatpush1.msra.mxu0 0.0
    %3096 = vmatprep.subr.mxu0 0.0
    %3097 = vmatpush1.msra.mxu0 0.0
    %3098 = vmatprep.subr.mxu0 0.0
    %3099 = vmatpush1.msra.mxu0 0.0
    %3100 = vmatprep.subr.mxu0 0.0
    %3101 = vmatpush1.msra.mxu0 0.0
    %3102 = vmatprep.subr.mxu0 0.0
    %3103 = vmatpush1.msra.mxu0 0.0
    %3104 = vmatprep.subr.mxu0 0.0
    %3105 = vmatpush1.msra.mxu0 %v3074
    %3106 = vmatprep.subr.mxu0 0.0
    %3107 = vmatpush1.msra.mxu0 %v1568
    %3108 = vmatprep.subr.mxu0 0.0
    %3109 = vmatpush2.msra.mxu0 0.0
    %3110 = vmatprep.subr.mxu0 0.0
    %3111 = vmatpush2.msra.mxu0 0.0
    %3112 = vmatprep.subr.mxu0 0.0
    %3113 = vmatpush2.msra.mxu0 0.0
    %3114 = vmatprep.subr.mxu0 0.0
    %3115 = vmatpush2.msra.mxu0 0.0
    %3116 = vmatprep.subr.mxu0 0.0
    %3117 = vmatpush2.msra.mxu0 0.0
    %3118 = vmatprep.subr.mxu0 0.0
    %3119 = vmatpush2.msra.mxu0 0.0
    %3120 = vmatprep.subr.mxu0 0.0
    %3121 = vmatpush2.msra.mxu0 0.0
    %3122 = vmatprep.subr.mxu0 0.0
    %3123 = vmatpush2.msra.mxu0 0.0
    %3124 = vmatprep.subr.mxu0 0.0
    %3125 = vmatpush2.msra.mxu0 0.0
    %3126 = vmatprep.subr.mxu0 0.0
    %3127 = vmatpush2.msra.mxu0 0.0
    %3128 = vmatprep.subr.mxu0 0.0
    %3129 = vmatpush2.msra.mxu0 0.0
    %3130 = vmatprep.subr.mxu0 0.0
    %3131 = vmatpush2.msra.mxu0 0.0
    %3132 = vmatprep.subr.mxu0 0.0
    %3133 = vmatpush2.msra.mxu0 0.0
    %3134 = vmatprep.subr.mxu0 0.0
    %3135 = vmatpush2.msra.mxu0 0.0
    %3136 = vmatprep.subr.mxu0 0.0
    %3137 = vmatpush2.msra.mxu0 0.0
    %3138 = vmatprep.subr.mxu0 0.0
    %3139 = vmatpush2.msra.mxu0 0.0
    %3140 = vmatprep.mubr.f32.mxu0 0.0
    %3141 = vmatmul.mubr.f32.gmra.mxu0 %v3068
    %v3142 = vpop.f32.mrf.mxu0
    %v3143 = vadd.f32 0.0, %v3142
    %v3144 = vpop.f32.mrf.mxu0
    %3145 = vmatprep.mubr.f32.mxu0 0.0
    %3146 = vmatmul.mubr.f32.gmra.mxu0 %v3071
    %v3147 = vpop.f32.mrf.mxu0
    %v3148 = vadd.f32 0.0, %v3147
    %v3149 = vpop.f32.mrf.mxu0
    %3150 = vdwg.mxu0
    %v3151 = vcombine.low %v2555, %v2723
    %v3152 = vcombine.high %v2555, %v2723
    %v3154 = vunpack.c.l.s4 1983009808
    %v3155 = vunpack.c.0.s8 %v3154
    %v3156 = vlaneseq
    %v3157 = vshrl.u32 %v3156, 7
    %v3158 = vsub.s32 %v3155, %v3157
    %v3159 = vrot.slane %v3151, %v3158
    %v3161 = vunpack.c.l.s4 1983009808
    %v3162 = vunpack.c.0.s8 %v3161
    %v3163 = vlaneseq
    %v3164 = vshrl.u32 %v3163, 7
    %v3165 = vsub.s32 %v3162, %v3164
    %v3166 = vrot.slane %v3152, %v3165
    %v3167 = vcombine.low %v2639, %v2807
    %v3168 = vcombine.high %v2639, %v2807
    %v3170 = vunpack.c.l.s4 1983009808
    %v3171 = vunpack.c.0.s8 %v3170
    %v3172 = vlaneseq
    %v3173 = vshrl.u32 %v3172, 7
    %v3174 = vsub.s32 %v3171, %v3173
    %v3175 = vrot.slane %v3167, %v3174
    %v3177 = vunpack.c.l.s4 1983009808
    %v3178 = vunpack.c.0.s8 %v3177
    %v3179 = vlaneseq
    %v3180 = vshrl.u32 %v3179, 7
    %v3181 = vsub.s32 %v3178, %v3180
    %v3182 = vrot.slane %v3168, %v3181
    %v3183 = vcombine.low %v3159, %v3175
    %v3184 = vcombine.high %v3159, %v3175
    %v3186 = vunpack.c.l.s4 1934713408
    %v3187 = vunpack.c.0.s8 %v3186
    %v3188 = vlaneseq
    %v3189 = vshrl.u32 %v3188, 7
    %v3190 = vsub.s32 %v3187, %v3189
    %v3191 = vrot.slane %v3183, %v3190
    %v3193 = vunpack.c.l.s4 1934713408
    %v3194 = vunpack.c.0.s8 %v3193
    %v3195 = vlaneseq
    %v3196 = vshrl.u32 %v3195, 7
    %v3197 = vsub.s32 %v3194, %v3196
    %v3198 = vrot.slane %v3184, %v3197
    %v3199 = vcombine.low %v3166, %v3182
    %v3200 = vcombine.high %v3166, %v3182
    %v3202 = vunpack.c.l.s4 1934713408
    %v3203 = vunpack.c.0.s8 %v3202
    %v3204 = vlaneseq
    %v3205 = vshrl.u32 %v3204, 7
    %v3206 = vsub.s32 %v3203, %v3205
    %v3207 = vrot.slane %v3199, %v3206
    %v3209 = vunpack.c.l.s4 1934713408
    %v3210 = vunpack.c.0.s8 %v3209
    %v3211 = vlaneseq
    %v3212 = vshrl.u32 %v3211, 7
    %v3213 = vsub.s32 %v3210, %v3212
    %v3214 = vrot.slane %v3200, %v3213
    %v3215 = vcombine.high %v3191, 0.0
    %v3216 = vcombine.high %v3198, 0.0
    %v3217 = vcombine.high %v3207, 0.0
    %v3218 = vcombine.high %v3214, 0.0
    %v3219 = vcombine.low %v2560, %v2728
    %v3221 = vunpack.c.l.s4 1983009808
    %v3222 = vunpack.c.0.s8 %v3221
    %v3223 = vlaneseq
    %v3224 = vshrl.u32 %v3223, 7
    %v3225 = vsub.s32 %v3222, %v3224
    %v3226 = vrot.slane %v3219, %v3225
    %v3227 = vcombine.low %v2644, %v2812
    %v3229 = vunpack.c.l.s4 1983009808
    %v3230 = vunpack.c.0.s8 %v3229
    %v3231 = vlaneseq
    %v3232 = vshrl.u32 %v3231, 7
    %v3233 = vsub.s32 %v3230, %v3232
    %v3234 = vrot.slane %v3227, %v3233
    %v3235 = vcombine.low %v3226, %v3234
    %v3236 = vcombine.high %v3226, %v3234
    %v3238 = vunpack.c.l.s4 1934713408
    %v3239 = vunpack.c.0.s8 %v3238
    %v3240 = vlaneseq
    %v3241 = vshrl.u32 %v3240, 7
    %v3242 = vsub.s32 %v3239, %v3241
    %v3243 = vrot.slane %v3235, %v3242
    %v3245 = vunpack.c.l.s4 1934713408
    %v3246 = vunpack.c.0.s8 %v3245
    %v3247 = vlaneseq
    %v3248 = vshrl.u32 %v3247, 7
    %v3249 = vsub.s32 %v3246, %v3248
    %v3250 = vrot.slane %v3236, %v3249
    %v3251 = vcombine.high %v3243, 0.0
    %v3252 = vcombine.high %v3250, 0.0
    %v3253 = vcombine.low %v2891, %v3059
    %v3254 = vcombine.high %v2891, %v3059
    %v3256 = vunpack.c.l.s4 1983009808
    %v3257 = vunpack.c.0.s8 %v3256
    %v3258 = vlaneseq
    %v3259 = vshrl.u32 %v3258, 7
    %v3260 = vsub.s32 %v3257, %v3259
    %v3261 = vrot.slane %v3253, %v3260
    %v3263 = vunpack.c.l.s4 1983009808
    %v3264 = vunpack.c.0.s8 %v3263
    %v3265 = vlaneseq
    %v3266 = vshrl.u32 %v3265, 7
    %v3267 = vsub.s32 %v3264, %v3266
    %v3268 = vrot.slane %v3254, %v3267
    %v3269 = vcombine.low %v2975, %v3143
    %v3270 = vcombine.high %v2975, %v3143
    %v3272 = vunpack.c.l.s4 1983009808
    %v3273 = vunpack.c.0.s8 %v3272
    %v3274 = vlaneseq
    %v3275 = vshrl.u32 %v3274, 7
    %v3276 = vsub.s32 %v3273, %v3275
    %v3277 = vrot.slane %v3269, %v3276
    %v3279 = vunpack.c.l.s4 1983009808
    %v3280 = vunpack.c.0.s8 %v3279
    %v3281 = vlaneseq
    %v3282 = vshrl.u32 %v3281, 7
    %v3283 = vsub.s32 %v3280, %v3282
    %v3284 = vrot.slane %v3270, %v3283
    %v3285 = vcombine.low %v3261, %v3277
    %v3286 = vcombine.high %v3261, %v3277
    %v3288 = vunpack.c.l.s4 1934713408
    %v3289 = vunpack.c.0.s8 %v3288
    %v3290 = vlaneseq
    %v3291 = vshrl.u32 %v3290, 7
    %v3292 = vsub.s32 %v3289, %v3291
    %v3293 = vrot.slane %v3285, %v3292
    %v3295 = vunpack.c.l.s4 1934713408
    %v3296 = vunpack.c.0.s8 %v3295
    %v3297 = vlaneseq
    %v3298 = vshrl.u32 %v3297, 7
    %v3299 = vsub.s32 %v3296, %v3298
    %v3300 = vrot.slane %v3286, %v3299
    %v3301 = vcombine.low %v3268, %v3284
    %v3302 = vcombine.high %v3268, %v3284
    %v3304 = vunpack.c.l.s4 1934713408
    %v3305 = vunpack.c.0.s8 %v3304
    %v3306 = vlaneseq
    %v3307 = vshrl.u32 %v3306, 7
    %v3308 = vsub.s32 %v3305, %v3307
    %v3309 = vrot.slane %v3301, %v3308
    %v3311 = vunpack.c.l.s4 1934713408
    %v3312 = vunpack.c.0.s8 %v3311
    %v3313 = vlaneseq
    %v3314 = vshrl.u32 %v3313, 7
    %v3315 = vsub.s32 %v3312, %v3314
    %v3316 = vrot.slane %v3302, %v3315
    %v3317 = vcombine.high %v3293, 0.0
    %v3318 = vcombine.high %v3300, 0.0
    %v3319 = vcombine.high %v3309, 0.0
    %v3320 = vcombine.high %v3316, 0.0
    %v3321 = vcombine.low %v2896, %v3064
    %v3323 = vunpack.c.l.s4 1983009808
    %v3324 = vunpack.c.0.s8 %v3323
    %v3325 = vlaneseq
    %v3326 = vshrl.u32 %v3325, 7
    %v3327 = vsub.s32 %v3324, %v3326
    %v3328 = vrot.slane %v3321, %v3327
    %v3329 = vcombine.low %v2980, %v3148
    %v3331 = vunpack.c.l.s4 1983009808
    %v3332 = vunpack.c.0.s8 %v3331
    %v3333 = vlaneseq
    %v3334 = vshrl.u32 %v3333, 7
    %v3335 = vsub.s32 %v3332, %v3334
    %v3336 = vrot.slane %v3329, %v3335
    %v3337 = vcombine.low %v3328, %v3336
    %v3338 = vcombine.high %v3328, %v3336
    %v3340 = vunpack.c.l.s4 1934713408
    %v3341 = vunpack.c.0.s8 %v3340
    %v3342 = vlaneseq
    %v3343 = vshrl.u32 %v3342, 7
    %v3344 = vsub.s32 %v3341, %v3343
    %v3345 = vrot.slane %v3337, %v3344
    %v3347 = vunpack.c.l.s4 1934713408
    %v3348 = vunpack.c.0.s8 %v3347
    %v3349 = vlaneseq
    %v3350 = vshrl.u32 %v3349, 7
    %v3351 = vsub.s32 %v3348, %v3350
    %v3352 = vrot.slane %v3338, %v3351
    %v3353 = vcombine.high %v3345, 0.0
    %v3354 = vcombine.high %v3352, 0.0
    %v3355 = vcombine.low %v3191, %v3198
    %v3357 = vunpack.c.l.s4 1983009808
    %v3358 = vunpack.c.0.s8 %v3357
    %v3359 = vlaneseq
    %v3360 = vshrl.u32 %v3359, 7
    %v3361 = vsub.s32 %v3358, %v3360
    %v3362 = vrot.slane %v3355, %v3361
    %v3363 = vcombine.low %v3215, %v3216
    %v3365 = vunpack.c.l.s4 1983009808
    %v3366 = vunpack.c.0.s8 %v3365
    %v3367 = vlaneseq
    %v3368 = vshrl.u32 %v3367, 7
    %v3369 = vsub.s32 %v3366, %v3368
    %v3370 = vrot.slane %v3363, %v3369
    %v3371 = vcombine.low %v3207, %v3214
    %v3373 = vunpack.c.l.s4 1983009808
    %v3374 = vunpack.c.0.s8 %v3373
    %v3375 = vlaneseq
    %v3376 = vshrl.u32 %v3375, 7
    %v3377 = vsub.s32 %v3374, %v3376
    %v3378 = vrot.slane %v3371, %v3377
    %v3379 = vcombine.low %v3217, %v3218
    %v3381 = vunpack.c.l.s4 1983009808
    %v3382 = vunpack.c.0.s8 %v3381
    %v3383 = vlaneseq
    %v3384 = vshrl.u32 %v3383, 7
    %v3385 = vsub.s32 %v3382, %v3384
    %v3386 = vrot.slane %v3379, %v3385
    %v3387 = vcombine.low %v3362, %v3370
    %v3388 = vcombine.high %v3362, %v3370
    %v3390 = vunpack.c.l.s4 1934713408
    %v3391 = vunpack.c.0.s8 %v3390
    %v3392 = vlaneseq
    %v3393 = vshrl.u32 %v3392, 7
    %v3394 = vsub.s32 %v3391, %v3393
    %v3395 = vrot.slane %v3387, %v3394
    %v3397 = vunpack.c.l.s4 1934713408
    %v3398 = vunpack.c.0.s8 %v3397
    %v3399 = vlaneseq
    %v3400 = vshrl.u32 %v3399, 7
    %v3401 = vsub.s32 %v3398, %v3400
    %v3402 = vrot.slane %v3388, %v3401
    %v3403 = vcombine.low %v3378, %v3386
    %v3404 = vcombine.high %v3378, %v3386
    %v3406 = vunpack.c.l.s4 1934713408
    %v3407 = vunpack.c.0.s8 %v3406
    %v3408 = vlaneseq
    %v3409 = vshrl.u32 %v3408, 7
    %v3410 = vsub.s32 %v3407, %v3409
    %v3411 = vrot.slane %v3403, %v3410
    %v3413 = vunpack.c.l.s4 1934713408
    %v3414 = vunpack.c.0.s8 %v3413
    %v3415 = vlaneseq
    %v3416 = vshrl.u32 %v3415, 7
    %v3417 = vsub.s32 %v3414, %v3416
    %v3418 = vrot.slane %v3404, %v3417
    %v3419 = vcombine.low %v3395, %v3411
    %v3420 = vcombine.high %v3395, %v3411
    %v3421 = vcombine.low %v3402, %v3418
    %v3422 = vcombine.high %v3402, %v3418
    %v3423 = vcombine.low %v3243, %v3250
    %v3425 = vunpack.c.l.s4 1983009808
    %v3426 = vunpack.c.0.s8 %v3425
    %v3427 = vlaneseq
    %v3428 = vshrl.u32 %v3427, 7
    %v3429 = vsub.s32 %v3426, %v3428
    %v3430 = vrot.slane %v3423, %v3429
    %v3431 = vcombine.low %v3251, %v3252
    %v3433 = vunpack.c.l.s4 1983009808
    %v3434 = vunpack.c.0.s8 %v3433
    %v3435 = vlaneseq
    %v3436 = vshrl.u32 %v3435, 7
    %v3437 = vsub.s32 %v3434, %v3436
    %v3438 = vrot.slane %v3431, %v3437
    %v3439 = vcombine.low %v3293, %v3300
    %v3441 = vunpack.c.l.s4 1983009808
    %v3442 = vunpack.c.0.s8 %v3441
    %v3443 = vlaneseq
    %v3444 = vshrl.u32 %v3443, 7
    %v3445 = vsub.s32 %v3442, %v3444
    %v3446 = vrot.slane %v3439, %v3445
    %v3447 = vcombine.low %v3317, %v3318
    %v3449 = vunpack.c.l.s4 1983009808
    %v3450 = vunpack.c.0.s8 %v3449
    %v3451 = vlaneseq
    %v3452 = vshrl.u32 %v3451, 7
    %v3453 = vsub.s32 %v3450, %v3452
    %v3454 = vrot.slane %v3447, %v3453
    %v3455 = vcombine.low %v3430, %v3438
    %v3456 = vcombine.high %v3430, %v3438
    %v3458 = vunpack.c.l.s4 1934713408
    %v3459 = vunpack.c.0.s8 %v3458
    %v3460 = vlaneseq
    %v3461 = vshrl.u32 %v3460, 7
    %v3462 = vsub.s32 %v3459, %v3461
    %v3463 = vrot.slane %v3455, %v3462
    %v3465 = vunpack.c.l.s4 1934713408
    %v3466 = vunpack.c.0.s8 %v3465
    %v3467 = vlaneseq
    %v3468 = vshrl.u32 %v3467, 7
    %v3469 = vsub.s32 %v3466, %v3468
    %v3470 = vrot.slane %v3456, %v3469
    %v3471 = vcombine.low %v3446, %v3454
    %v3472 = vcombine.high %v3446, %v3454
    %v3474 = vunpack.c.l.s4 1934713408
    %v3475 = vunpack.c.0.s8 %v3474
    %v3476 = vlaneseq
    %v3477 = vshrl.u32 %v3476, 7
    %v3478 = vsub.s32 %v3475, %v3477
    %v3479 = vrot.slane %v3471, %v3478
    %v3481 = vunpack.c.l.s4 1934713408
    %v3482 = vunpack.c.0.s8 %v3481
    %v3483 = vlaneseq
    %v3484 = vshrl.u32 %v3483, 7
    %v3485 = vsub.s32 %v3482, %v3484
    %v3486 = vrot.slane %v3472, %v3485
    %v3487 = vcombine.low %v3463, %v3479
    %v3488 = vcombine.high %v3463, %v3479
    %v3489 = vcombine.low %v3470, %v3486
    %v3490 = vcombine.high %v3470, %v3486
    %v3491 = vcombine.low %v3309, %v3316
    %v3493 = vunpack.c.l.s4 1983009808
    %v3494 = vunpack.c.0.s8 %v3493
    %v3495 = vlaneseq
    %v3496 = vshrl.u32 %v3495, 7
    %v3497 = vsub.s32 %v3494, %v3496
    %v3498 = vrot.slane %v3491, %v3497
    %v3499 = vcombine.low %v3319, %v3320
    %v3501 = vunpack.c.l.s4 1983009808
    %v3502 = vunpack.c.0.s8 %v3501
    %v3503 = vlaneseq
    %v3504 = vshrl.u32 %v3503, 7
    %v3505 = vsub.s32 %v3502, %v3504
    %v3506 = vrot.slane %v3499, %v3505
    %v3507 = vcombine.low %v3345, %v3352
    %v3509 = vunpack.c.l.s4 1983009808
    %v3510 = vunpack.c.0.s8 %v3509
    %v3511 = vlaneseq
    %v3512 = vshrl.u32 %v3511, 7
    %v3513 = vsub.s32 %v3510, %v3512
    %v3514 = vrot.slane %v3507, %v3513
    %v3515 = vcombine.low %v3353, %v3354
    %v3517 = vunpack.c.l.s4 1983009808
    %v3518 = vunpack.c.0.s8 %v3517
    %v3519 = vlaneseq
    %v3520 = vshrl.u32 %v3519, 7
    %v3521 = vsub.s32 %v3518, %v3520
    %v3522 = vrot.slane %v3515, %v3521
    %v3523 = vcombine.low %v3498, %v3506
    %v3524 = vcombine.high %v3498, %v3506
    %v3526 = vunpack.c.l.s4 1934713408
    %v3527 = vunpack.c.0.s8 %v3526
    %v3528 = vlaneseq
    %v3529 = vshrl.u32 %v3528, 7
    %v3530 = vsub.s32 %v3527, %v3529
    %v3531 = vrot.slane %v3523, %v3530
    %v3533 = vunpack.c.l.s4 1934713408
    %v3534 = vunpack.c.0.s8 %v3533
    %v3535 = vlaneseq
    %v3536 = vshrl.u32 %v3535, 7
    %v3537 = vsub.s32 %v3534, %v3536
    %v3538 = vrot.slane %v3524, %v3537
    %v3539 = vcombine.low %v3514, %v3522
    %v3540 = vcombine.high %v3514, %v3522
    %v3542 = vunpack.c.l.s4 1934713408
    %v3543 = vunpack.c.0.s8 %v3542
    %v3544 = vlaneseq
    %v3545 = vshrl.u32 %v3544, 7
    %v3546 = vsub.s32 %v3543, %v3545
    %v3547 = vrot.slane %v3539, %v3546
    %v3549 = vunpack.c.l.s4 1934713408
    %v3550 = vunpack.c.0.s8 %v3549
    %v3551 = vlaneseq
    %v3552 = vshrl.u32 %v3551, 7
    %v3553 = vsub.s32 %v3550, %v3552
    %v3554 = vrot.slane %v3540, %v3553
    %v3555 = vcombine.low %v3531, %v3547
    %v3556 = vcombine.high %v3531, %v3547
    %v3557 = vcombine.low %v3538, %v3554
    %v3558 = vcombine.high %v3538, %v3554
    %3562 = vrot.lane.b32.xlu0 %v3420, 16
    %v3563 = vpop.permute.xlu0 %3562
    %3564 = vrot.lane.b32.xlu0 %v3488, 16
    %v3565 = vpop.permute.xlu0 %3564
    %3566 = vrot.lane.b32.xlu0 %v3556, 16
    %v3567 = vpop.permute.xlu0 %3566
    %3574 = vrot.lane.b32.xlu0 %v3421, 32
    %v3575 = vpop.permute.xlu0 %3574
    %3576 = vrot.lane.b32.xlu0 %v3489, 32
    %v3577 = vpop.permute.xlu0 %3576
    %3578 = vrot.lane.b32.xlu0 %v3557, 32
    %v3579 = vpop.permute.xlu0 %3578
    %3586 = vrot.lane.b32.xlu0 %v3422, 48
    %v3587 = vpop.permute.xlu0 %3586
    %3588 = vrot.lane.b32.xlu0 %v3490, 48
    %v3589 = vpop.permute.xlu0 %3588
    %3590 = vrot.lane.b32.xlu0 %v3558, 48
    %v3591 = vpop.permute.xlu0 %3590
    %v3595 = vsel %vm1603, %v3419, %v3563
    %v3596 = vsel %vm1603, %v3487, %v3565
    %v3597 = vsel %vm1603, %v3555, %v3567
    %vm3598 = vcmask 261120
    %v3599 = vsel %vm3598, %v3595, %v3575
    %v3600 = vsel %vm3598, %v3596, %v3577
    %v3601 = vsel %vm3598, %v3597, %v3579
    %vm3602 = vcmask 392192
    %v3603 = vsel %vm3602, %v3599, %v3587
    %v3604 = vsel %vm3602, %v3600, %v3589
    %v3605 = vsel %vm3602, %v3601, %v3591
    %v3606 = vld [vmem:[%s6] sm:$0xff]
    %v3607 = vld [vmem:[%s6 + $0x8] sm:$0xff]
    %v3608 = vld [vmem:[%s6 + $0x10] sm:$0xff]
    %v3609 = vld [vmem:[%s6 + $0x18] sm:$0xff]
    %v3610 = vld [vmem:[%s6 + $0x20] sm:$0xff]
    %v3611 = vld [vmem:[%s6 + $0x28] sm:$0xff]
    %v3612 = vld [vmem:[%s6 + $0x30] sm:$0xff]
    %v3613 = vld [vmem:[%s6 + $0x38] sm:$0xff]
    %v3614 = vlaneseq
    %v3615 = vshrl.u32 %v3614, 7
    %v3616 = vsub.s32 0, %v3615
    %v3617 = vrot.slane %v155, %v3616
    %v3619 = vsel %vm190, %v3603, 0
    %v3622 = vsel %vm190, %v3604, 0
    %v3625 = vsel %vm190, %v3605, 0
    %3627 = vmatprep.subr.mxu0 0.0
    %3628 = vmatpush1.msra.mxu0 0.0
    %3629 = vmatprep.subr.mxu0 0.0
    %3630 = vmatpush1.msra.mxu0 0.0
    %3631 = vmatprep.subr.mxu0 0.0
    %3632 = vmatpush1.msra.mxu0 0.0
    %3633 = vmatprep.subr.mxu0 0.0
    %3634 = vmatpush1.msra.mxu0 0.0
    %3635 = vmatprep.subr.mxu0 0.0
    %3636 = vmatpush1.msra.mxu0 0.0
    %3637 = vmatprep.subr.mxu0 0.0
    %3638 = vmatpush1.msra.mxu0 0.0
    %3639 = vmatprep.subr.mxu0 0.0
    %3640 = vmatpush1.msra.mxu0 0.0
    %3641 = vmatprep.subr.mxu0 0.0
    %3642 = vmatpush1.msra.mxu0 0.0
    %3643 = vmatprep.subr.mxu0 0.0
    %3644 = vmatpush1.msra.mxu0 %v3613
    %3645 = vmatprep.subr.mxu0 0.0
    %3646 = vmatpush1.msra.mxu0 %v3612
    %3647 = vmatprep.subr.mxu0 0.0
    %3648 = vmatpush1.msra.mxu0 %v3611
    %3649 = vmatprep.subr.mxu0 0.0
    %3650 = vmatpush1.msra.mxu0 %v3610
    %3651 = vmatprep.subr.mxu0 0.0
    %3652 = vmatpush1.msra.mxu0 %v3609
    %3653 = vmatprep.subr.mxu0 0.0
    %3654 = vmatpush1.msra.mxu0 %v3608
    %3655 = vmatprep.subr.mxu0 0.0
    %3656 = vmatpush1.msra.mxu0 %v3607
    %3657 = vmatprep.subr.mxu0 0.0
    %3658 = vmatpush1.msra.mxu0 %v3606
    %3659 = vmatprep.subr.mxu0 0.0
    %3660 = vmatpush2.msra.mxu0 0.0
    %3661 = vmatprep.subr.mxu0 0.0
    %3662 = vmatpush2.msra.mxu0 0.0
    %3663 = vmatprep.subr.mxu0 0.0
    %3664 = vmatpush2.msra.mxu0 0.0
    %3665 = vmatprep.subr.mxu0 0.0
    %3666 = vmatpush2.msra.mxu0 0.0
    %3667 = vmatprep.subr.mxu0 0.0
    %3668 = vmatpush2.msra.mxu0 0.0
    %3669 = vmatprep.subr.mxu0 0.0
    %3670 = vmatpush2.msra.mxu0 0.0
    %3671 = vmatprep.subr.mxu0 0.0
    %3672 = vmatpush2.msra.mxu0 0.0
    %3673 = vmatprep.subr.mxu0 0.0
    %3674 = vmatpush2.msra.mxu0 0.0
    %3675 = vmatprep.subr.mxu0 0.0
    %3676 = vmatpush2.msra.mxu0 0.0
    %3677 = vmatprep.subr.mxu0 0.0
    %3678 = vmatpush2.msra.mxu0 0.0
    %3679 = vmatprep.subr.mxu0 0.0
    %3680 = vmatpush2.msra.mxu0 0.0
    %3681 = vmatprep.subr.mxu0 0.0
    %3682 = vmatpush2.msra.mxu0 0.0
    %3683 = vmatprep.subr.mxu0 0.0
    %3684 = vmatpush2.msra.mxu0 0.0
    %3685 = vmatprep.subr.mxu0 0.0
    %3686 = vmatpush2.msra.mxu0 0.0
    %3687 = vmatprep.subr.mxu0 0.0
    %3688 = vmatpush2.msra.mxu0 0.0
    %3689 = vmatprep.subr.mxu0 0.0
    %3690 = vmatpush2.msra.mxu0 0.0
    %3691 = vmatprep.mubr.f32.mxu0 0.0
    %3692 = vmatmul.mubr.f32.gmra.mxu0 %v3619
    %v3693 = vpop.f32.mrf.mxu0
    %v3694 = vadd.f32 %v3617, %v3693
    %v3695 = vpop.f32.mrf.mxu0
    %3696 = vmatprep.mubr.f32.mxu0 0.0
    %3697 = vmatmul.mubr.f32.gmra.mxu0 %v3622
    %v3698 = vpop.f32.mrf.mxu0
    %v3699 = vadd.f32 %v3617, %v3698
    %v3700 = vpop.f32.mrf.mxu0
    %3701 = vmatprep.mubr.f32.mxu0 0.0
    %3702 = vmatmul.mubr.f32.gmra.mxu0 %v3625
    %v3703 = vpop.f32.mrf.mxu0
    %v3704 = vadd.f32 %v3617, %v3703
    %v3705 = vpop.f32.mrf.mxu0
    %3706 = vdwg.mxu0
    %v3707 = vadd.f32 %v152, %v3694
    %v3708 = vadd.f32 %v153, %v3699
    %v3709 = vadd.f32 %v154, %v3704
    %v3710 = vsel %vm190, %v3707, 0.0
    %3711 = vadd.xlane.f32.xlu0 %v3710
    %v3712 = vpop.xlane.xlu0 %3711
    %v3713 = vsel %vm190, %v3708, 0.0
    %3714 = vadd.xlane.f32.xlu0 %v3713
    %v3715 = vpop.xlane.xlu0 %3714
    %v3716 = vsel %vm190, %v3709, 0.0
    %3717 = vadd.xlane.f32.xlu0 %v3716
    %v3718 = vpop.xlane.xlu0 %3717
    %v3719 = vrcp.pop 64.0
    %v3720 = vmul.f32 %v3712, %v3719
    %v3721 = vmul.f32 %v3715, %v3719
    %v3722 = vmul.f32 %v3718, %v3719
    %v3723 = vsub.f32 %v3707, %v3720
    %v3724 = vsub.f32 %v3708, %v3721
    %v3725 = vsub.f32 %v3709, %v3722
    %v3726 = vmul.f32 %v3723, %v3723
    %v3727 = vmul.f32 %v3724, %v3724
    %v3728 = vmul.f32 %v3725, %v3725
    %v3729 = vsel %vm190, %v3726, 0.0
    %3730 = vadd.xlane.f32.xlu0 %v3729
    %v3731 = vpop.xlane.xlu0 %3730
    %v3732 = vsel %vm190, %v3727, 0.0
    %3733 = vadd.xlane.f32.xlu0 %v3732
    %v3734 = vpop.xlane.xlu0 %3733
    %v3735 = vsel %vm190, %v3728, 0.0
    %3736 = vadd.xlane.f32.xlu0 %v3735
    %v3737 = vpop.xlane.xlu0 %3736
    %v3738 = vmul.f32 %v3731, %v3719
    %v3739 = vmul.f32 %v3734, %v3719
    %v3740 = vmul.f32 %v3737, %v3719
    %v3741 = vadd.f32 %v3738, 1e-05
    %v3742 = vadd.f32 %v3739, 1e-05
    %v3743 = vadd.f32 %v3740, 1e-05
    %v3744 = vrsqrt.pop %v3741
    %v3745 = vrsqrt.pop %v3742
    %v3746 = vrsqrt.pop %v3743
    %v3747 = vmul.f32 %v3723, %v3744
    %v3748 = vmul.f32 %v3724, %v3745
    %v3749 = vmul.f32 %v3725, %v3746
    %v3750 = vlaneseq
    %v3751 = vshrl.u32 %v3750, 7
    %v3752 = vsub.s32 0, %v3751
    %v3753 = vrot.slane %v158, %v3752
    %v3754 = vmul.f32 %v3747, %v3753
    %v3755 = vmul.f32 %v3748, %v3753
    %v3756 = vmul.f32 %v3749, %v3753
    %v3757 = vlaneseq
    %v3758 = vshrl.u32 %v3757, 7
    %v3759 = vsub.s32 0, %v3758
    %v3760 = vrot.slane %v159, %v3759
    %v3761 = vadd.f32 %v3754, %v3760
    %v3762 = vadd.f32 %v3755, %v3760
    %v3763 = vadd.f32 %v3756, %v3760
    %s3764 = scalar_lea.vmem %s6, 64
    %v3765 = vld [vmem:[%s3764] sm:$0xff]
    %v3766 = vld [vmem:[%s3764 + $0x8] sm:$0xff]
    %v3767 = vld [vmem:[%s3764 + $0x10] sm:$0xff]
    %v3768 = vld [vmem:[%s3764 + $0x18] sm:$0xff]
    %v3769 = vld [vmem:[%s3764 + $0x20] sm:$0xff]
    %v3770 = vld [vmem:[%s3764 + $0x28] sm:$0xff]
    %v3771 = vld [vmem:[%s3764 + $0x30] sm:$0xff]
    %v3772 = vld [vmem:[%s3764 + $0x38] sm:$0xff]
    %v3773 = vlaneseq
    %v3774 = vshrl.u32 %v3773, 7
    %v3775 = vsub.s32 0, %v3774
    %v3776 = vrot.slane %v156, %v3775
    %v3778 = vsel %vm190, %v3761, 0
    %v3781 = vsel %vm190, %v3762, 0
    %v3784 = vsel %vm190, %v3763, 0
    %3786 = vmatprep.subr.mxu0 0.0
    %3787 = vmatpush1.msra.mxu0 0.0
    %3788 = vmatprep.subr.mxu0 0.0
    %3789 = vmatpush1.msra.mxu0 0.0
    %3790 = vmatprep.subr.mxu0 0.0
    %3791 = vmatpush1.msra.mxu0 0.0
    %3792 = vmatprep.subr.mxu0 0.0
    %3793 = vmatpush1.msra.mxu0 0.0
    %3794 = vmatprep.subr.mxu0 0.0
    %3795 = vmatpush1.msra.mxu0 0.0
    %3796 = vmatprep.subr.mxu0 0.0
    %3797 = vmatpush1.msra.mxu0 0.0
    %3798 = vmatprep.subr.mxu0 0.0
    %3799 = vmatpush1.msra.mxu0 0.0
    %3800 = vmatprep.subr.mxu0 0.0
    %3801 = vmatpush1.msra.mxu0 0.0
    %3802 = vmatprep.subr.mxu0 0.0
    %3803 = vmatpush1.msra.mxu0 %v3772
    %3804 = vmatprep.subr.mxu0 0.0
    %3805 = vmatpush1.msra.mxu0 %v3771
    %3806 = vmatprep.subr.mxu0 0.0
    %3807 = vmatpush1.msra.mxu0 %v3770
    %3808 = vmatprep.subr.mxu0 0.0
    %3809 = vmatpush1.msra.mxu0 %v3769
    %3810 = vmatprep.subr.mxu0 0.0
    %3811 = vmatpush1.msra.mxu0 %v3768
    %3812 = vmatprep.subr.mxu0 0.0
    %3813 = vmatpush1.msra.mxu0 %v3767
    %3814 = vmatprep.subr.mxu0 0.0
    %3815 = vmatpush1.msra.mxu0 %v3766
    %3816 = vmatprep.subr.mxu0 0.0
    %3817 = vmatpush1.msra.mxu0 %v3765
    %3818 = vmatprep.subr.mxu0 0.0
    %3819 = vmatpush2.msra.mxu0 0.0
    %3820 = vmatprep.subr.mxu0 0.0
    %3821 = vmatpush2.msra.mxu0 0.0
    %3822 = vmatprep.subr.mxu0 0.0
    %3823 = vmatpush2.msra.mxu0 0.0
    %3824 = vmatprep.subr.mxu0 0.0
    %3825 = vmatpush2.msra.mxu0 0.0
    %3826 = vmatprep.subr.mxu0 0.0
    %3827 = vmatpush2.msra.mxu0 0.0
    %3828 = vmatprep.subr.mxu0 0.0
    %3829 = vmatpush2.msra.mxu0 0.0
    %3830 = vmatprep.subr.mxu0 0.0
    %3831 = vmatpush2.msra.mxu0 0.0
    %3832 = vmatprep.subr.mxu0 0.0
    %3833 = vmatpush2.msra.mxu0 0.0
    %3834 = vmatprep.subr.mxu0 0.0
    %3835 = vmatpush2.msra.mxu0 0.0
    %3836 = vmatprep.subr.mxu0 0.0
    %3837 = vmatpush2.msra.mxu0 0.0
    %3838 = vmatprep.subr.mxu0 0.0
    %3839 = vmatpush2.msra.mxu0 0.0
    %3840 = vmatprep.subr.mxu0 0.0
    %3841 = vmatpush2.msra.mxu0 0.0
    %3842 = vmatprep.subr.mxu0 0.0
    %3843 = vmatpush2.msra.mxu0 0.0
    %3844 = vmatprep.subr.mxu0 0.0
    %3845 = vmatpush2.msra.mxu0 0.0
    %3846 = vmatprep.subr.mxu0 0.0
    %3847 = vmatpush2.msra.mxu0 0.0
    %3848 = vmatprep.subr.mxu0 0.0
    %3849 = vmatpush2.msra.mxu0 0.0
    %3850 = vmatprep.mubr.f32.mxu0 0.0
    %3851 = vmatmul.mubr.f32.gmra.mxu0 %v3778
    %v3852 = vpop.f32.mrf.mxu0
    %v3853 = vadd.f32 %v3776, %v3852
    %v3854 = vpop.f32.mrf.mxu0
    %3855 = vmatprep.mubr.f32.mxu0 0.0
    %3856 = vmatmul.mubr.f32.gmra.mxu0 %v3781
    %v3857 = vpop.f32.mrf.mxu0
    %v3858 = vadd.f32 %v3776, %v3857
    %v3859 = vpop.f32.mrf.mxu0
    %3860 = vmatprep.mubr.f32.mxu0 0.0
    %3861 = vmatmul.mubr.f32.gmra.mxu0 %v3784
    %v3862 = vpop.f32.mrf.mxu0
    %v3863 = vadd.f32 %v3776, %v3862
    %v3864 = vpop.f32.mrf.mxu0
    %3865 = vdwg.mxu0
    %v3866 = vmax.f32 %v3853, 0.0
    %v3867 = vmax.f32 %v3858, 0.0
    %v3868 = vmax.f32 %v3863, 0.0
    %s3869 = scalar_lea.vmem %s6, 128
    %v3870 = vld [vmem:[%s3869] sm:$0xff]
    %v3871 = vld [vmem:[%s3869 + $0x8] sm:$0xff]
    %v3872 = vld [vmem:[%s3869 + $0x10] sm:$0xff]
    %v3873 = vld [vmem:[%s3869 + $0x18] sm:$0xff]
    %v3874 = vld [vmem:[%s3869 + $0x20] sm:$0xff]
    %v3875 = vld [vmem:[%s3869 + $0x28] sm:$0xff]
    %v3876 = vld [vmem:[%s3869 + $0x30] sm:$0xff]
    %v3877 = vld [vmem:[%s3869 + $0x38] sm:$0xff]
    %v3878 = vlaneseq
    %v3879 = vshrl.u32 %v3878, 7
    %v3880 = vsub.s32 0, %v3879
    %v3881 = vrot.slane %v157, %v3880
    %v3883 = vsel %vm190, %v3866, 0
    %v3886 = vsel %vm190, %v3867, 0
    %v3889 = vsel %vm190, %v3868, 0
    %3891 = vmatprep.subr.mxu0 0.0
    %3892 = vmatpush1.msra.mxu0 0.0
    %3893 = vmatprep.subr.mxu0 0.0
    %3894 = vmatpush1.msra.mxu0 0.0
    %3895 = vmatprep.subr.mxu0 0.0
    %3896 = vmatpush1.msra.mxu0 0.0
    %3897 = vmatprep.subr.mxu0 0.0
    %3898 = vmatpush1.msra.mxu0 0.0
    %3899 = vmatprep.subr.mxu0 0.0
    %3900 = vmatpush1.msra.mxu0 0.0
    %3901 = vmatprep.subr.mxu0 0.0
    %3902 = vmatpush1.msra.mxu0 0.0
    %3903 = vmatprep.subr.mxu0 0.0
    %3904 = vmatpush1.msra.mxu0 0.0
    %3905 = vmatprep.subr.mxu0 0.0
    %3906 = vmatpush1.msra.mxu0 0.0
    %3907 = vmatprep.subr.mxu0 0.0
    %3908 = vmatpush1.msra.mxu0 %v3877
    %3909 = vmatprep.subr.mxu0 0.0
    %3910 = vmatpush1.msra.mxu0 %v3876
    %3911 = vmatprep.subr.mxu0 0.0
    %3912 = vmatpush1.msra.mxu0 %v3875
    %3913 = vmatprep.subr.mxu0 0.0
    %3914 = vmatpush1.msra.mxu0 %v3874
    %3915 = vmatprep.subr.mxu0 0.0
    %3916 = vmatpush1.msra.mxu0 %v3873
    %3917 = vmatprep.subr.mxu0 0.0
    %3918 = vmatpush1.msra.mxu0 %v3872
    %3919 = vmatprep.subr.mxu0 0.0
    %3920 = vmatpush1.msra.mxu0 %v3871
    %3921 = vmatprep.subr.mxu0 0.0
    %3922 = vmatpush1.msra.mxu0 %v3870
    %3923 = vmatprep.subr.mxu0 0.0
    %3924 = vmatpush2.msra.mxu0 0.0
    %3925 = vmatprep.subr.mxu0 0.0
    %3926 = vmatpush2.msra.mxu0 0.0
    %3927 = vmatprep.subr.mxu0 0.0
    %3928 = vmatpush2.msra.mxu0 0.0
    %3929 = vmatprep.subr.mxu0 0.0
    %3930 = vmatpush2.msra.mxu0 0.0
    %3931 = vmatprep.subr.mxu0 0.0
    %3932 = vmatpush2.msra.mxu0 0.0
    %3933 = vmatprep.subr.mxu0 0.0
    %3934 = vmatpush2.msra.mxu0 0.0
    %3935 = vmatprep.subr.mxu0 0.0
    %3936 = vmatpush2.msra.mxu0 0.0
    %3937 = vmatprep.subr.mxu0 0.0
    %3938 = vmatpush2.msra.mxu0 0.0
    %3939 = vmatprep.subr.mxu0 0.0
    %3940 = vmatpush2.msra.mxu0 0.0
    %3941 = vmatprep.subr.mxu0 0.0
    %3942 = vmatpush2.msra.mxu0 0.0
    %3943 = vmatprep.subr.mxu0 0.0
    %3944 = vmatpush2.msra.mxu0 0.0
    %3945 = vmatprep.subr.mxu0 0.0
    %3946 = vmatpush2.msra.mxu0 0.0
    %3947 = vmatprep.subr.mxu0 0.0
    %3948 = vmatpush2.msra.mxu0 0.0
    %3949 = vmatprep.subr.mxu0 0.0
    %3950 = vmatpush2.msra.mxu0 0.0
    %3951 = vmatprep.subr.mxu0 0.0
    %3952 = vmatpush2.msra.mxu0 0.0
    %3953 = vmatprep.subr.mxu0 0.0
    %3954 = vmatpush2.msra.mxu0 0.0
    %3955 = vmatprep.mubr.f32.mxu0 0.0
    %3956 = vmatmul.mubr.f32.gmra.mxu0 %v3883
    %v3957 = vpop.f32.mrf.mxu0
    %v3958 = vadd.f32 %v3881, %v3957
    %v3959 = vpop.f32.mrf.mxu0
    %3960 = vmatprep.mubr.f32.mxu0 0.0
    %3961 = vmatmul.mubr.f32.gmra.mxu0 %v3886
    %v3962 = vpop.f32.mrf.mxu0
    %v3963 = vadd.f32 %v3881, %v3962
    %v3964 = vpop.f32.mrf.mxu0
    %3965 = vmatprep.mubr.f32.mxu0 0.0
    %3966 = vmatmul.mubr.f32.gmra.mxu0 %v3889
    %v3967 = vpop.f32.mrf.mxu0
    %v3968 = vadd.f32 %v3881, %v3967
    %v3969 = vpop.f32.mrf.mxu0
    %3970 = vdwg.mxu0
    %v3971 = vadd.f32 %v3761, %v3958
    %v3972 = vadd.f32 %v3762, %v3963
    %v3973 = vadd.f32 %v3763, %v3968
    %v3974 = vsel %vm190, %v3971, 0.0
    %3975 = vadd.xlane.f32.xlu0 %v3974
    %v3976 = vpop.xlane.xlu0 %3975
    %v3977 = vsel %vm190, %v3972, 0.0
    %3978 = vadd.xlane.f32.xlu0 %v3977
    %v3979 = vpop.xlane.xlu0 %3978
    %v3980 = vsel %vm190, %v3973, 0.0
    %3981 = vadd.xlane.f32.xlu0 %v3980
    %v3982 = vpop.xlane.xlu0 %3981
    %v3983 = vmul.f32 %v3976, %v3719
    %v3984 = vmul.f32 %v3979, %v3719
    %v3985 = vmul.f32 %v3982, %v3719
    %v3986 = vsub.f32 %v3971, %v3983
    %v3987 = vsub.f32 %v3972, %v3984
    %v3988 = vsub.f32 %v3973, %v3985
    %v3989 = vmul.f32 %v3986, %v3986
    %v3990 = vmul.f32 %v3987, %v3987
    %v3991 = vmul.f32 %v3988, %v3988
    %v3992 = vsel %vm190, %v3989, 0.0
    %3993 = vadd.xlane.f32.xlu0 %v3992
    %v3994 = vpop.xlane.xlu0 %3993
    %v3995 = vsel %vm190, %v3990, 0.0
    %3996 = vadd.xlane.f32.xlu0 %v3995
    %v3997 = vpop.xlane.xlu0 %3996
    %v3998 = vsel %vm190, %v3991, 0.0
    %3999 = vadd.xlane.f32.xlu0 %v3998
    %v4000 = vpop.xlane.xlu0 %3999
    %v4001 = vmul.f32 %v3994, %v3719
    %v4002 = vmul.f32 %v3997, %v3719
    %v4003 = vmul.f32 %v4000, %v3719
    %v4004 = vadd.f32 %v4001, 1e-05
    %v4005 = vadd.f32 %v4002, 1e-05
    %v4006 = vadd.f32 %v4003, 1e-05
    %v4007 = vrsqrt.pop %v4004
    %v4008 = vrsqrt.pop %v4005
    %v4009 = vrsqrt.pop %v4006
    %v4010 = vmul.f32 %v3986, %v4007
    %v4011 = vmul.f32 %v3987, %v4008
    %v4012 = vmul.f32 %v3988, %v4009
    %v4013 = vlaneseq
    %v4014 = vshrl.u32 %v4013, 7
    %v4015 = vsub.s32 0, %v4014
    %v4016 = vrot.slane %v160, %v4015
    %v4017 = vmul.f32 %v4010, %v4016
    %v4018 = vmul.f32 %v4011, %v4016
    %v4019 = vmul.f32 %v4012, %v4016
    %v4020 = vlaneseq
    %v4021 = vshrl.u32 %v4020, 7
    %v4022 = vsub.s32 0, %v4021
    %v4023 = vrot.slane %v161, %v4022
    %v4024 = vadd.f32 %v4017, %v4023
    %v4025 = vadd.f32 %v4018, %v4023
    %v4026 = vadd.f32 %v4019, %v4023
    %v4027 = vld [vmem:[%s7 + $0x9] sm:$0x1]
    %v4028 = vld [vmem:[%s7 + $0xa] sm:$0x1]
    %v4029 = vld [vmem:[%s7 + $0xb] sm:$0x1]
    %v4030 = vld [vmem:[%s7 + $0xc] sm:$0x1]
    %v4031 = vld [vmem:[%s7 + $0xd] sm:$0x1]
    %v4032 = vld [vmem:[%s7 + $0xe] sm:$0x1]
    %v4033 = vld [vmem:[%s7 + $0xf] sm:$0x1]
    %s4034 = scalar_lea.vmem [#allocation2], 128
    %v4035 = vld [vmem:[%s4034] sm:$0xff]
    %v4036 = vld [vmem:[%s4034 + $0x8] sm:$0xff]
    %v4037 = vld [vmem:[%s4034 + $0x10] sm:$0xff]
    %v4038 = vld [vmem:[%s4034 + $0x18] sm:$0xff]
    %v4039 = vld [vmem:[%s4034 + $0x20] sm:$0xff]
    %v4040 = vld [vmem:[%s4034 + $0x28] sm:$0xff]
    %v4041 = vld [vmem:[%s4034 + $0x30] sm:$0xff]
    %v4042 = vld [vmem:[%s4034 + $0x38] sm:$0xff]
    %v4043 = vld [vmem:[%s4034 + $0x40] sm:$0xff]
    %v4044 = vld [vmem:[%s4034 + $0x48] sm:$0xff]
    %v4045 = vld [vmem:[%s4034 + $0x50] sm:$0xff]
    %v4046 = vld [vmem:[%s4034 + $0x58] sm:$0xff]
    %v4047 = vld [vmem:[%s4034 + $0x60] sm:$0xff]
    %v4048 = vld [vmem:[%s4034 + $0x68] sm:$0xff]
    %v4049 = vld [vmem:[%s4034 + $0x70] sm:$0xff]
    %v4050 = vld [vmem:[%s4034 + $0x78] sm:$0xff]
    %s4051 = scalar_lea.vmem %s5, 2
    %v4052 = vld [vmem:[%s4051] sm:$0x3]
    %v4054 = vlaneseq
    %v4055 = vshrl.u32 %v4054, 7
    %v4056 = vsub.s32 0, %v4055
    %v4057 = vrot.slane %v4052, %v4056
    %v4058 = vlaneseq
    %v4059 = vshrl.u32 %v4058, 7
    %v4060 = vsub.s32 1, %v4059
    %v4061 = vrot.slane %v4052, %v4060
    %v4065 = vsel %vm190, %v4024, 0
    %v4068 = vsel %vm190, %v4025, 0
    %v4071 = vsel %vm190, %v4026, 0
    %4073 = vmatprep.subr.mxu0 0.0
    %4074 = vmatpush1.msra.mxu0 0.0
    %4075 = vmatprep.subr.mxu0 0.0
    %4076 = vmatpush1.msra.mxu0 0.0
    %4077 = vmatprep.subr.mxu0 0.0
    %4078 = vmatpush1.msra.mxu0 0.0
    %4079 = vmatprep.subr.mxu0 0.0
    %4080 = vmatpush1.msra.mxu0 0.0
    %4081 = vmatprep.subr.mxu0 0.0
    %4082 = vmatpush1.msra.mxu0 0.0
    %4083 = vmatprep.subr.mxu0 0.0
    %4084 = vmatpush1.msra.mxu0 0.0
    %4085 = vmatprep.subr.mxu0 0.0
    %4086 = vmatpush1.msra.mxu0 0.0
    %4087 = vmatprep.subr.mxu0 0.0
    %4088 = vmatpush1.msra.mxu0 0.0
    %4089 = vmatprep.subr.mxu0 %v4050
    %4090 = vmatpush1.msra.mxu0 %v4049
    %4091 = vmatprep.subr.mxu0 %v4048
    %4092 = vmatpush1.msra.mxu0 %v4047
    %4093 = vmatprep.subr.mxu0 %v4046
    %4094 = vmatpush1.msra.mxu0 %v4045
    %4095 = vmatprep.subr.mxu0 %v4044
    %4096 = vmatpush1.msra.mxu0 %v4043
    %4097 = vmatprep.subr.mxu0 %v4042
    %4098 = vmatpush1.msra.mxu0 %v4041
    %4099 = vmatprep.subr.mxu0 %v4040
    %4100 = vmatpush1.msra.mxu0 %v4039
    %4101 = vmatprep.subr.mxu0 %v4038
    %4102 = vmatpush1.msra.mxu0 %v4037
    %4103 = vmatprep.subr.mxu0 %v4036
    %4104 = vmatpush1.msra.mxu0 %v4035
    %4105 = vmatprep.subr.mxu0 0.0
    %4106 = vmatpush2.msra.mxu0 0.0
    %4107 = vmatprep.subr.mxu0 0.0
    %4108 = vmatpush2.msra.mxu0 0.0
    %4109 = vmatprep.subr.mxu0 0.0
    %4110 = vmatpush2.msra.mxu0 0.0
    %4111 = vmatprep.subr.mxu0 0.0
    %4112 = vmatpush2.msra.mxu0 0.0
    %4113 = vmatprep.subr.mxu0 0.0
    %4114 = vmatpush2.msra.mxu0 0.0
    %4115 = vmatprep.subr.mxu0 0.0
    %4116 = vmatpush2.msra.mxu0 0.0
    %4117 = vmatprep.subr.mxu0 0.0
    %4118 = vmatpush2.msra.mxu0 0.0
    %4119 = vmatprep.subr.mxu0 0.0
    %4120 = vmatpush2.msra.mxu0 0.0
    %4121 = vmatprep.subr.mxu0 0.0
    %4122 = vmatpush2.msra.mxu0 0.0
    %4123 = vmatprep.subr.mxu0 0.0
    %4124 = vmatpush2.msra.mxu0 0.0
    %4125 = vmatprep.subr.mxu0 0.0
    %4126 = vmatpush2.msra.mxu0 0.0
    %4127 = vmatprep.subr.mxu0 0.0
    %4128 = vmatpush2.msra.mxu0 0.0
    %4129 = vmatprep.subr.mxu0 0.0
    %4130 = vmatpush2.msra.mxu0 0.0
    %4131 = vmatprep.subr.mxu0 0.0
    %4132 = vmatpush2.msra.mxu0 0.0
    %4133 = vmatprep.subr.mxu0 0.0
    %4134 = vmatpush2.msra.mxu0 0.0
    %4135 = vmatprep.subr.mxu0 0.0
    %4136 = vmatpush2.msra.mxu0 0.0
    %4137 = vmatprep.mubr.f32.mxu0 0.0
    %4138 = vmatmul.mubr.f32.gmra.mxu0 %v4065
    %v4139 = vpop.f32.mrf.mxu0
    %v4140 = vadd.f32 %v4057, %v4139
    %v4141 = vpop.f32.mrf.mxu0
    %v4142 = vadd.f32 %v4061, %v4141
    %4143 = vmatprep.mubr.f32.mxu0 0.0
    %4144 = vmatmul.mubr.f32.gmra.mxu0 %v4068
    %v4145 = vpop.f32.mrf.mxu0
    %v4146 = vadd.f32 %v4057, %v4145
    %v4147 = vpop.f32.mrf.mxu0
    %v4148 = vadd.f32 %v4061, %v4147
    %4149 = vmatprep.mubr.f32.mxu0 0.0
    %4150 = vmatmul.mubr.f32.gmra.mxu0 %v4071
    %v4151 = vpop.f32.mrf.mxu0
    %v4152 = vadd.f32 %v4057, %v4151
    %v4153 = vpop.f32.mrf.mxu0
    %v4154 = vadd.f32 %v4061, %v4153
    %4155 = vdwg.mxu0
    %4159 = vrot.lane.b32.xlu0 %v4140, 112
    %v4160 = vpop.permute.xlu0 %4159
    %4161 = vrot.lane.b32.xlu0 %v4146, 112
    %v4162 = vpop.permute.xlu0 %4161
    %4163 = vrot.lane.b32.xlu0 %v4152, 112
    %v4164 = vpop.permute.xlu0 %4163
    %4168 = vrot.lane.b32.xlu0 %v4140, 96
    %v4169 = vpop.permute.xlu0 %4168
    %4170 = vrot.lane.b32.xlu0 %v4146, 96
    %v4171 = vpop.permute.xlu0 %4170
    %4172 = vrot.lane.b32.xlu0 %v4152, 96
    %v4173 = vpop.permute.xlu0 %4172
    %4177 = vrot.lane.b32.xlu0 %v4140, 80
    %v4178 = vpop.permute.xlu0 %4177
    %4179 = vrot.lane.b32.xlu0 %v4146, 80
    %v4180 = vpop.permute.xlu0 %4179
    %4181 = vrot.lane.b32.xlu0 %v4152, 80
    %v4182 = vpop.permute.xlu0 %4181
    %v4186 = vcombine.low %v4140, %v4169
    %v4187 = vcombine.high %v4140, %v4169
    %v4189 = vunpack.c.l.s4 1983009808
    %v4190 = vunpack.c.0.s8 %v4189
    %v4191 = vlaneseq
    %v4192 = vshrl.u32 %v4191, 7
    %v4193 = vsub.s32 %v4190, %v4192
    %v4194 = vrot.slane %v4186, %v4193
    %v4196 = vunpack.c.l.s4 1983009808
    %v4197 = vunpack.c.0.s8 %v4196
    %v4198 = vlaneseq
    %v4199 = vshrl.u32 %v4198, 7
    %v4200 = vsub.s32 %v4197, %v4199
    %v4201 = vrot.slane %v4187, %v4200
    %v4202 = vcombine.low %v4160, %v4178
    %v4203 = vcombine.high %v4160, %v4178
    %v4205 = vunpack.c.l.s4 1983009808
    %v4206 = vunpack.c.0.s8 %v4205
    %v4207 = vlaneseq
    %v4208 = vshrl.u32 %v4207, 7
    %v4209 = vsub.s32 %v4206, %v4208
    %v4210 = vrot.slane %v4202, %v4209
    %v4212 = vunpack.c.l.s4 1983009808
    %v4213 = vunpack.c.0.s8 %v4212
    %v4214 = vlaneseq
    %v4215 = vshrl.u32 %v4214, 7
    %v4216 = vsub.s32 %v4213, %v4215
    %v4217 = vrot.slane %v4203, %v4216
    %v4218 = vcombine.low %v4194, %v4210
    %v4219 = vcombine.high %v4194, %v4210
    %v4221 = vunpack.c.l.s4 1934713408
    %v4222 = vunpack.c.0.s8 %v4221
    %v4223 = vlaneseq
    %v4224 = vshrl.u32 %v4223, 7
    %v4225 = vsub.s32 %v4222, %v4224
    %v4226 = vrot.slane %v4218, %v4225
    %v4228 = vunpack.c.l.s4 1934713408
    %v4229 = vunpack.c.0.s8 %v4228
    %v4230 = vlaneseq
    %v4231 = vshrl.u32 %v4230, 7
    %v4232 = vsub.s32 %v4229, %v4231
    %v4233 = vrot.slane %v4219, %v4232
    %v4234 = vcombine.low %v4201, %v4217
    %v4235 = vcombine.high %v4201, %v4217
    %v4237 = vunpack.c.l.s4 1934713408
    %v4238 = vunpack.c.0.s8 %v4237
    %v4239 = vlaneseq
    %v4240 = vshrl.u32 %v4239, 7
    %v4241 = vsub.s32 %v4238, %v4240
    %v4242 = vrot.slane %v4234, %v4241
    %v4244 = vunpack.c.l.s4 1934713408
    %v4245 = vunpack.c.0.s8 %v4244
    %v4246 = vlaneseq
    %v4247 = vshrl.u32 %v4246, 7
    %v4248 = vsub.s32 %v4245, %v4247
    %v4249 = vrot.slane %v4235, %v4248
    %v4250 = vcombine.high %v4226, 0.0
    %v4251 = vcombine.high %v4233, 0.0
    %v4252 = vcombine.high %v4242, 0.0
    %v4253 = vcombine.high %v4249, 0.0
    %v4254 = vcombine.low %v4146, %v4171
    %v4255 = vcombine.high %v4146, %v4171
    %v4257 = vunpack.c.l.s4 1983009808
    %v4258 = vunpack.c.0.s8 %v4257
    %v4259 = vlaneseq
    %v4260 = vshrl.u32 %v4259, 7
    %v4261 = vsub.s32 %v4258, %v4260
    %v4262 = vrot.slane %v4254, %v4261
    %v4264 = vunpack.c.l.s4 1983009808
    %v4265 = vunpack.c.0.s8 %v4264
    %v4266 = vlaneseq
    %v4267 = vshrl.u32 %v4266, 7
    %v4268 = vsub.s32 %v4265, %v4267
    %v4269 = vrot.slane %v4255, %v4268
    %v4270 = vcombine.low %v4162, %v4180
    %v4271 = vcombine.high %v4162, %v4180
    %v4273 = vunpack.c.l.s4 1983009808
    %v4274 = vunpack.c.0.s8 %v4273
    %v4275 = vlaneseq
    %v4276 = vshrl.u32 %v4275, 7
    %v4277 = vsub.s32 %v4274, %v4276
    %v4278 = vrot.slane %v4270, %v4277
    %v4280 = vunpack.c.l.s4 1983009808
    %v4281 = vunpack.c.0.s8 %v4280
    %v4282 = vlaneseq
    %v4283 = vshrl.u32 %v4282, 7
    %v4284 = vsub.s32 %v4281, %v4283
    %v4285 = vrot.slane %v4271, %v4284
    %v4286 = vcombine.low %v4262, %v4278
    %v4287 = vcombine.high %v4262, %v4278
    %v4289 = vunpack.c.l.s4 1934713408
    %v4290 = vunpack.c.0.s8 %v4289
    %v4291 = vlaneseq
    %v4292 = vshrl.u32 %v4291, 7
    %v4293 = vsub.s32 %v4290, %v4292
    %v4294 = vrot.slane %v4286, %v4293
    %v4296 = vunpack.c.l.s4 1934713408
    %v4297 = vunpack.c.0.s8 %v4296
    %v4298 = vlaneseq
    %v4299 = vshrl.u32 %v4298, 7
    %v4300 = vsub.s32 %v4297, %v4299
    %v4301 = vrot.slane %v4287, %v4300
    %v4302 = vcombine.low %v4269, %v4285
    %v4303 = vcombine.high %v4269, %v4285
    %v4305 = vunpack.c.l.s4 1934713408
    %v4306 = vunpack.c.0.s8 %v4305
    %v4307 = vlaneseq
    %v4308 = vshrl.u32 %v4307, 7
    %v4309 = vsub.s32 %v4306, %v4308
    %v4310 = vrot.slane %v4302, %v4309
    %v4312 = vunpack.c.l.s4 1934713408
    %v4313 = vunpack.c.0.s8 %v4312
    %v4314 = vlaneseq
    %v4315 = vshrl.u32 %v4314, 7
    %v4316 = vsub.s32 %v4313, %v4315
    %v4317 = vrot.slane %v4303, %v4316
    %v4318 = vcombine.high %v4294, 0.0
    %v4319 = vcombine.high %v4301, 0.0
    %v4320 = vcombine.high %v4310, 0.0
    %v4321 = vcombine.high %v4317, 0.0
    %v4322 = vcombine.low %v4152, %v4173
    %v4323 = vcombine.high %v4152, %v4173
    %v4325 = vunpack.c.l.s4 1983009808
    %v4326 = vunpack.c.0.s8 %v4325
    %v4327 = vlaneseq
    %v4328 = vshrl.u32 %v4327, 7
    %v4329 = vsub.s32 %v4326, %v4328
    %v4330 = vrot.slane %v4322, %v4329
    %v4332 = vunpack.c.l.s4 1983009808
    %v4333 = vunpack.c.0.s8 %v4332
    %v4334 = vlaneseq
    %v4335 = vshrl.u32 %v4334, 7
    %v4336 = vsub.s32 %v4333, %v4335
    %v4337 = vrot.slane %v4323, %v4336
    %v4338 = vcombine.low %v4164, %v4182
    %v4339 = vcombine.high %v4164, %v4182
    %v4341 = vunpack.c.l.s4 1983009808
    %v4342 = vunpack.c.0.s8 %v4341
    %v4343 = vlaneseq
    %v4344 = vshrl.u32 %v4343, 7
    %v4345 = vsub.s32 %v4342, %v4344
    %v4346 = vrot.slane %v4338, %v4345
    %v4348 = vunpack.c.l.s4 1983009808
    %v4349 = vunpack.c.0.s8 %v4348
    %v4350 = vlaneseq
    %v4351 = vshrl.u32 %v4350, 7
    %v4352 = vsub.s32 %v4349, %v4351
    %v4353 = vrot.slane %v4339, %v4352
    %v4354 = vcombine.low %v4330, %v4346
    %v4355 = vcombine.high %v4330, %v4346
    %v4357 = vunpack.c.l.s4 1934713408
    %v4358 = vunpack.c.0.s8 %v4357
    %v4359 = vlaneseq
    %v4360 = vshrl.u32 %v4359, 7
    %v4361 = vsub.s32 %v4358, %v4360
    %v4362 = vrot.slane %v4354, %v4361
    %v4364 = vunpack.c.l.s4 1934713408
    %v4365 = vunpack.c.0.s8 %v4364
    %v4366 = vlaneseq
    %v4367 = vshrl.u32 %v4366, 7
    %v4368 = vsub.s32 %v4365, %v4367
    %v4369 = vrot.slane %v4355, %v4368
    %v4370 = vcombine.low %v4337, %v4353
    %v4371 = vcombine.high %v4337, %v4353
    %v4373 = vunpack.c.l.s4 1934713408
    %v4374 = vunpack.c.0.s8 %v4373
    %v4375 = vlaneseq
    %v4376 = vshrl.u32 %v4375, 7
    %v4377 = vsub.s32 %v4374, %v4376
    %v4378 = vrot.slane %v4370, %v4377
    %v4380 = vunpack.c.l.s4 1934713408
    %v4381 = vunpack.c.0.s8 %v4380
    %v4382 = vlaneseq
    %v4383 = vshrl.u32 %v4382, 7
    %v4384 = vsub.s32 %v4381, %v4383
    %v4385 = vrot.slane %v4371, %v4384
    %v4386 = vcombine.high %v4362, 0.0
    %v4387 = vcombine.high %v4369, 0.0
    %v4388 = vcombine.high %v4378, 0.0
    %v4389 = vcombine.high %v4385, 0.0
    %v4390 = vcombine.low %v4226, %v4233
    %v4392 = vunpack.c.l.s4 1983009808
    %v4393 = vunpack.c.0.s8 %v4392
    %v4394 = vlaneseq
    %v4395 = vshrl.u32 %v4394, 7
    %v4396 = vsub.s32 %v4393, %v4395
    %v4397 = vrot.slane %v4390, %v4396
    %v4398 = vcombine.low %v4250, %v4251
    %v4400 = vunpack.c.l.s4 1983009808
    %v4401 = vunpack.c.0.s8 %v4400
    %v4402 = vlaneseq
    %v4403 = vshrl.u32 %v4402, 7
    %v4404 = vsub.s32 %v4401, %v4403
    %v4405 = vrot.slane %v4398, %v4404
    %v4406 = vcombine.low %v4242, %v4249
    %v4408 = vunpack.c.l.s4 1983009808
    %v4409 = vunpack.c.0.s8 %v4408
    %v4410 = vlaneseq
    %v4411 = vshrl.u32 %v4410, 7
    %v4412 = vsub.s32 %v4409, %v4411
    %v4413 = vrot.slane %v4406, %v4412
    %v4414 = vcombine.low %v4252, %v4253
    %v4416 = vunpack.c.l.s4 1983009808
    %v4417 = vunpack.c.0.s8 %v4416
    %v4418 = vlaneseq
    %v4419 = vshrl.u32 %v4418, 7
    %v4420 = vsub.s32 %v4417, %v4419
    %v4421 = vrot.slane %v4414, %v4420
    %v4422 = vcombine.low %v4397, %v4405
    %v4423 = vcombine.high %v4397, %v4405
    %v4425 = vunpack.c.l.s4 1934713408
    %v4426 = vunpack.c.0.s8 %v4425
    %v4427 = vlaneseq
    %v4428 = vshrl.u32 %v4427, 7
    %v4429 = vsub.s32 %v4426, %v4428
    %v4430 = vrot.slane %v4422, %v4429
    %v4432 = vunpack.c.l.s4 1934713408
    %v4433 = vunpack.c.0.s8 %v4432
    %v4434 = vlaneseq
    %v4435 = vshrl.u32 %v4434, 7
    %v4436 = vsub.s32 %v4433, %v4435
    %v4437 = vrot.slane %v4423, %v4436
    %v4438 = vcombine.low %v4413, %v4421
    %v4439 = vcombine.high %v4413, %v4421
    %v4441 = vunpack.c.l.s4 1934713408
    %v4442 = vunpack.c.0.s8 %v4441
    %v4443 = vlaneseq
    %v4444 = vshrl.u32 %v4443, 7
    %v4445 = vsub.s32 %v4442, %v4444
    %v4446 = vrot.slane %v4438, %v4445
    %v4448 = vunpack.c.l.s4 1934713408
    %v4449 = vunpack.c.0.s8 %v4448
    %v4450 = vlaneseq
    %v4451 = vshrl.u32 %v4450, 7
    %v4452 = vsub.s32 %v4449, %v4451
    %v4453 = vrot.slane %v4439, %v4452
    %v4454 = vcombine.low %v4430, %v4446
    %v4455 = vcombine.high %v4430, %v4446
    %v4456 = vcombine.low %v4437, %v4453
    %v4457 = vcombine.high %v4437, %v4453
    %v4458 = vcombine.low %v4294, %v4301
    %v4460 = vunpack.c.l.s4 1983009808
    %v4461 = vunpack.c.0.s8 %v4460
    %v4462 = vlaneseq
    %v4463 = vshrl.u32 %v4462, 7
    %v4464 = vsub.s32 %v4461, %v4463
    %v4465 = vrot.slane %v4458, %v4464
    %v4466 = vcombine.low %v4318, %v4319
    %v4468 = vunpack.c.l.s4 1983009808
    %v4469 = vunpack.c.0.s8 %v4468
    %v4470 = vlaneseq
    %v4471 = vshrl.u32 %v4470, 7
    %v4472 = vsub.s32 %v4469, %v4471
    %v4473 = vrot.slane %v4466, %v4472
    %v4474 = vcombine.low %v4465, %v4473
    %v4475 = vcombine.high %v4465, %v4473
    %v4477 = vunpack.c.l.s4 1934713408
    %v4478 = vunpack.c.0.s8 %v4477
    %v4479 = vlaneseq
    %v4480 = vshrl.u32 %v4479, 7
    %v4481 = vsub.s32 %v4478, %v4480
    %v4482 = vrot.slane %v4474, %v4481
    %v4484 = vunpack.c.l.s4 1934713408
    %v4485 = vunpack.c.0.s8 %v4484
    %v4486 = vlaneseq
    %v4487 = vshrl.u32 %v4486, 7
    %v4488 = vsub.s32 %v4485, %v4487
    %v4489 = vrot.slane %v4475, %v4488
    %v4490 = vcombine.high %v4482, 0.0
    %v4491 = vcombine.high %v4489, 0.0
    %v4492 = vcombine.low %v4310, %v4317
    %v4494 = vunpack.c.l.s4 1983009808
    %v4495 = vunpack.c.0.s8 %v4494
    %v4496 = vlaneseq
    %v4497 = vshrl.u32 %v4496, 7
    %v4498 = vsub.s32 %v4495, %v4497
    %v4499 = vrot.slane %v4492, %v4498
    %v4500 = vcombine.low %v4320, %v4321
    %v4502 = vunpack.c.l.s4 1983009808
    %v4503 = vunpack.c.0.s8 %v4502
    %v4504 = vlaneseq
    %v4505 = vshrl.u32 %v4504, 7
    %v4506 = vsub.s32 %v4503, %v4505
    %v4507 = vrot.slane %v4500, %v4506
    %v4508 = vcombine.low %v4362, %v4369
    %v4510 = vunpack.c.l.s4 1983009808
    %v4511 = vunpack.c.0.s8 %v4510
    %v4512 = vlaneseq
    %v4513 = vshrl.u32 %v4512, 7
    %v4514 = vsub.s32 %v4511, %v4513
    %v4515 = vrot.slane %v4508, %v4514
    %v4516 = vcombine.low %v4386, %v4387
    %v4518 = vunpack.c.l.s4 1983009808
    %v4519 = vunpack.c.0.s8 %v4518
    %v4520 = vlaneseq
    %v4521 = vshrl.u32 %v4520, 7
    %v4522 = vsub.s32 %v4519, %v4521
    %v4523 = vrot.slane %v4516, %v4522
    %v4524 = vcombine.low %v4499, %v4507
    %v4525 = vcombine.high %v4499, %v4507
    %v4527 = vunpack.c.l.s4 1934713408
    %v4528 = vunpack.c.0.s8 %v4527
    %v4529 = vlaneseq
    %v4530 = vshrl.u32 %v4529, 7
    %v4531 = vsub.s32 %v4528, %v4530
    %v4532 = vrot.slane %v4524, %v4531
    %v4534 = vunpack.c.l.s4 1934713408
    %v4535 = vunpack.c.0.s8 %v4534
    %v4536 = vlaneseq
    %v4537 = vshrl.u32 %v4536, 7
    %v4538 = vsub.s32 %v4535, %v4537
    %v4539 = vrot.slane %v4525, %v4538
    %v4540 = vcombine.low %v4515, %v4523
    %v4541 = vcombine.high %v4515, %v4523
    %v4543 = vunpack.c.l.s4 1934713408
    %v4544 = vunpack.c.0.s8 %v4543
    %v4545 = vlaneseq
    %v4546 = vshrl.u32 %v4545, 7
    %v4547 = vsub.s32 %v4544, %v4546
    %v4548 = vrot.slane %v4540, %v4547
    %v4550 = vunpack.c.l.s4 1934713408
    %v4551 = vunpack.c.0.s8 %v4550
    %v4552 = vlaneseq
    %v4553 = vshrl.u32 %v4552, 7
    %v4554 = vsub.s32 %v4551, %v4553
    %v4555 = vrot.slane %v4541, %v4554
    %v4556 = vcombine.low %v4532, %v4548
    %v4557 = vcombine.high %v4532, %v4548
    %v4558 = vcombine.low %v4539, %v4555
    %v4559 = vcombine.high %v4539, %v4555
    %v4560 = vcombine.low %v4378, %v4385
    %v4562 = vunpack.c.l.s4 1983009808
    %v4563 = vunpack.c.0.s8 %v4562
    %v4564 = vlaneseq
    %v4565 = vshrl.u32 %v4564, 7
    %v4566 = vsub.s32 %v4563, %v4565
    %v4567 = vrot.slane %v4560, %v4566
    %v4568 = vcombine.low %v4388, %v4389
    %v4570 = vunpack.c.l.s4 1983009808
    %v4571 = vunpack.c.0.s8 %v4570
    %v4572 = vlaneseq
    %v4573 = vshrl.u32 %v4572, 7
    %v4574 = vsub.s32 %v4571, %v4573
    %v4575 = vrot.slane %v4568, %v4574
    %v4576 = vcombine.low %v4567, %v4575
    %v4577 = vcombine.high %v4567, %v4575
    %v4579 = vunpack.c.l.s4 1934713408
    %v4580 = vunpack.c.0.s8 %v4579
    %v4581 = vlaneseq
    %v4582 = vshrl.u32 %v4581, 7
    %v4583 = vsub.s32 %v4580, %v4582
    %v4584 = vrot.slane %v4576, %v4583
    %v4586 = vunpack.c.l.s4 1934713408
    %v4587 = vunpack.c.0.s8 %v4586
    %v4588 = vlaneseq
    %v4589 = vshrl.u32 %v4588, 7
    %v4590 = vsub.s32 %v4587, %v4589
    %v4591 = vrot.slane %v4577, %v4590
    %v4592 = vcombine.high %v4584, 0.0
    %v4593 = vcombine.high %v4591, 0.0
    %4594 = vrot.lane.b32.xlu0 %v4140, 64
    %v4595 = vpop.permute.xlu0 %4594
    %4596 = vrot.lane.b32.xlu0 %v4146, 64
    %v4597 = vpop.permute.xlu0 %4596
    %4598 = vrot.lane.b32.xlu0 %v4152, 64
    %v4599 = vpop.permute.xlu0 %4598
    %4600 = vrot.lane.b32.xlu0 %v4160, 64
    %v4601 = vpop.permute.xlu0 %4600
    %4602 = vrot.lane.b32.xlu0 %v4162, 64
    %v4603 = vpop.permute.xlu0 %4602
    %4604 = vrot.lane.b32.xlu0 %v4164, 64
    %v4605 = vpop.permute.xlu0 %4604
    %4606 = vrot.lane.b32.xlu0 %v4169, 64
    %v4607 = vpop.permute.xlu0 %4606
    %4608 = vrot.lane.b32.xlu0 %v4171, 64
    %v4609 = vpop.permute.xlu0 %4608
    %4610 = vrot.lane.b32.xlu0 %v4173, 64
    %v4611 = vpop.permute.xlu0 %4610
    %4612 = vrot.lane.b32.xlu0 %v4178, 64
    %v4613 = vpop.permute.xlu0 %4612
    %4614 = vrot.lane.b32.xlu0 %v4180, 64
    %v4615 = vpop.permute.xlu0 %4614
    %4616 = vrot.lane.b32.xlu0 %v4182, 64
    %v4617 = vpop.permute.xlu0 %4616
    %v4630 = vcombine.low %v4595, %v4607
    %v4631 = vcombine.high %v4595, %v4607
    %v4633 = vunpack.c.l.s4 1983009808
    %v4634 = vunpack.c.0.s8 %v4633
    %v4635 = vlaneseq
    %v4636 = vshrl.u32 %v4635, 7
    %v4637 = vsub.s32 %v4634, %v4636
    %v4638 = vrot.slane %v4630, %v4637
    %v4640 = vunpack.c.l.s4 1983009808
    %v4641 = vunpack.c.0.s8 %v4640
    %v4642 = vlaneseq
    %v4643 = vshrl.u32 %v4642, 7
    %v4644 = vsub.s32 %v4641, %v4643
    %v4645 = vrot.slane %v4631, %v4644
    %v4646 = vcombine.low %v4601, %v4613
    %v4647 = vcombine.high %v4601, %v4613
    %v4649 = vunpack.c.l.s4 1983009808
    %v4650 = vunpack.c.0.s8 %v4649
    %v4651 = vlaneseq
    %v4652 = vshrl.u32 %v4651, 7
    %v4653 = vsub.s32 %v4650, %v4652
    %v4654 = vrot.slane %v4646, %v4653
    %v4656 = vunpack.c.l.s4 1983009808
    %v4657 = vunpack.c.0.s8 %v4656
    %v4658 = vlaneseq
    %v4659 = vshrl.u32 %v4658, 7
    %v4660 = vsub.s32 %v4657, %v4659
    %v4661 = vrot.slane %v4647, %v4660
    %v4662 = vcombine.low %v4638, %v4654
    %v4663 = vcombine.high %v4638, %v4654
    %v4665 = vunpack.c.l.s4 1934713408
    %v4666 = vunpack.c.0.s8 %v4665
    %v4667 = vlaneseq
    %v4668 = vshrl.u32 %v4667, 7
    %v4669 = vsub.s32 %v4666, %v4668
    %v4670 = vrot.slane %v4662, %v4669
    %v4672 = vunpack.c.l.s4 1934713408
    %v4673 = vunpack.c.0.s8 %v4672
    %v4674 = vlaneseq
    %v4675 = vshrl.u32 %v4674, 7
    %v4676 = vsub.s32 %v4673, %v4675
    %v4677 = vrot.slane %v4663, %v4676
    %v4678 = vcombine.low %v4645, %v4661
    %v4679 = vcombine.high %v4645, %v4661
    %v4681 = vunpack.c.l.s4 1934713408
    %v4682 = vunpack.c.0.s8 %v4681
    %v4683 = vlaneseq
    %v4684 = vshrl.u32 %v4683, 7
    %v4685 = vsub.s32 %v4682, %v4684
    %v4686 = vrot.slane %v4678, %v4685
    %v4688 = vunpack.c.l.s4 1934713408
    %v4689 = vunpack.c.0.s8 %v4688
    %v4690 = vlaneseq
    %v4691 = vshrl.u32 %v4690, 7
    %v4692 = vsub.s32 %v4689, %v4691
    %v4693 = vrot.slane %v4679, %v4692
    %v4694 = vcombine.high %v4670, 0.0
    %v4695 = vcombine.high %v4677, 0.0
    %v4696 = vcombine.high %v4686, 0.0
    %v4697 = vcombine.high %v4693, 0.0
    %v4698 = vcombine.low %v4597, %v4609
    %v4699 = vcombine.high %v4597, %v4609
    %v4701 = vunpack.c.l.s4 1983009808
    %v4702 = vunpack.c.0.s8 %v4701
    %v4703 = vlaneseq
    %v4704 = vshrl.u32 %v4703, 7
    %v4705 = vsub.s32 %v4702, %v4704
    %v4706 = vrot.slane %v4698, %v4705
    %v4708 = vunpack.c.l.s4 1983009808
    %v4709 = vunpack.c.0.s8 %v4708
    %v4710 = vlaneseq
    %v4711 = vshrl.u32 %v4710, 7
    %v4712 = vsub.s32 %v4709, %v4711
    %v4713 = vrot.slane %v4699, %v4712
    %v4714 = vcombine.low %v4603, %v4615
    %v4715 = vcombine.high %v4603, %v4615
    %v4717 = vunpack.c.l.s4 1983009808
    %v4718 = vunpack.c.0.s8 %v4717
    %v4719 = vlaneseq
    %v4720 = vshrl.u32 %v4719, 7
    %v4721 = vsub.s32 %v4718, %v4720
    %v4722 = vrot.slane %v4714, %v4721
    %v4724 = vunpack.c.l.s4 1983009808
    %v4725 = vunpack.c.0.s8 %v4724
    %v4726 = vlaneseq
    %v4727 = vshrl.u32 %v4726, 7
    %v4728 = vsub.s32 %v4725, %v4727
    %v4729 = vrot.slane %v4715, %v4728
    %v4730 = vcombine.low %v4706, %v4722
    %v4731 = vcombine.high %v4706, %v4722
    %v4733 = vunpack.c.l.s4 1934713408
    %v4734 = vunpack.c.0.s8 %v4733
    %v4735 = vlaneseq
    %v4736 = vshrl.u32 %v4735, 7
    %v4737 = vsub.s32 %v4734, %v4736
    %v4738 = vrot.slane %v4730, %v4737
    %v4740 = vunpack.c.l.s4 1934713408
    %v4741 = vunpack.c.0.s8 %v4740
    %v4742 = vlaneseq
    %v4743 = vshrl.u32 %v4742, 7
    %v4744 = vsub.s32 %v4741, %v4743
    %v4745 = vrot.slane %v4731, %v4744
    %v4746 = vcombine.low %v4713, %v4729
    %v4747 = vcombine.high %v4713, %v4729
    %v4749 = vunpack.c.l.s4 1934713408
    %v4750 = vunpack.c.0.s8 %v4749
    %v4751 = vlaneseq
    %v4752 = vshrl.u32 %v4751, 7
    %v4753 = vsub.s32 %v4750, %v4752
    %v4754 = vrot.slane %v4746, %v4753
    %v4756 = vunpack.c.l.s4 1934713408
    %v4757 = vunpack.c.0.s8 %v4756
    %v4758 = vlaneseq
    %v4759 = vshrl.u32 %v4758, 7
    %v4760 = vsub.s32 %v4757, %v4759
    %v4761 = vrot.slane %v4747, %v4760
    %v4762 = vcombine.high %v4738, 0.0
    %v4763 = vcombine.high %v4745, 0.0
    %v4764 = vcombine.high %v4754, 0.0
    %v4765 = vcombine.high %v4761, 0.0
    %v4766 = vcombine.low %v4599, %v4611
    %v4767 = vcombine.high %v4599, %v4611
    %v4769 = vunpack.c.l.s4 1983009808
    %v4770 = vunpack.c.0.s8 %v4769
    %v4771 = vlaneseq
    %v4772 = vshrl.u32 %v4771, 7
    %v4773 = vsub.s32 %v4770, %v4772
    %v4774 = vrot.slane %v4766, %v4773
    %v4776 = vunpack.c.l.s4 1983009808
    %v4777 = vunpack.c.0.s8 %v4776
    %v4778 = vlaneseq
    %v4779 = vshrl.u32 %v4778, 7
    %v4780 = vsub.s32 %v4777, %v4779
    %v4781 = vrot.slane %v4767, %v4780
    %v4782 = vcombine.low %v4605, %v4617
    %v4783 = vcombine.high %v4605, %v4617
    %v4785 = vunpack.c.l.s4 1983009808
    %v4786 = vunpack.c.0.s8 %v4785
    %v4787 = vlaneseq
    %v4788 = vshrl.u32 %v4787, 7
    %v4789 = vsub.s32 %v4786, %v4788
    %v4790 = vrot.slane %v4782, %v4789
    %v4792 = vunpack.c.l.s4 1983009808
    %v4793 = vunpack.c.0.s8 %v4792
    %v4794 = vlaneseq
    %v4795 = vshrl.u32 %v4794, 7
    %v4796 = vsub.s32 %v4793, %v4795
    %v4797 = vrot.slane %v4783, %v4796
    %v4798 = vcombine.low %v4774, %v4790
    %v4799 = vcombine.high %v4774, %v4790
    %v4801 = vunpack.c.l.s4 1934713408
    %v4802 = vunpack.c.0.s8 %v4801
    %v4803 = vlaneseq
    %v4804 = vshrl.u32 %v4803, 7
    %v4805 = vsub.s32 %v4802, %v4804
    %v4806 = vrot.slane %v4798, %v4805
    %v4808 = vunpack.c.l.s4 1934713408
    %v4809 = vunpack.c.0.s8 %v4808
    %v4810 = vlaneseq
    %v4811 = vshrl.u32 %v4810, 7
    %v4812 = vsub.s32 %v4809, %v4811
    %v4813 = vrot.slane %v4799, %v4812
    %v4814 = vcombine.low %v4781, %v4797
    %v4815 = vcombine.high %v4781, %v4797
    %v4817 = vunpack.c.l.s4 1934713408
    %v4818 = vunpack.c.0.s8 %v4817
    %v4819 = vlaneseq
    %v4820 = vshrl.u32 %v4819, 7
    %v4821 = vsub.s32 %v4818, %v4820
    %v4822 = vrot.slane %v4814, %v4821
    %v4824 = vunpack.c.l.s4 1934713408
    %v4825 = vunpack.c.0.s8 %v4824
    %v4826 = vlaneseq
    %v4827 = vshrl.u32 %v4826, 7
    %v4828 = vsub.s32 %v4825, %v4827
    %v4829 = vrot.slane %v4815, %v4828
    %v4830 = vcombine.high %v4806, 0.0
    %v4831 = vcombine.high %v4813, 0.0
    %v4832 = vcombine.high %v4822, 0.0
    %v4833 = vcombine.high %v4829, 0.0
    %v4834 = vcombine.low %v4670, %v4677
    %v4836 = vunpack.c.l.s4 1983009808
    %v4837 = vunpack.c.0.s8 %v4836
    %v4838 = vlaneseq
    %v4839 = vshrl.u32 %v4838, 7
    %v4840 = vsub.s32 %v4837, %v4839
    %v4841 = vrot.slane %v4834, %v4840
    %v4842 = vcombine.low %v4694, %v4695
    %v4844 = vunpack.c.l.s4 1983009808
    %v4845 = vunpack.c.0.s8 %v4844
    %v4846 = vlaneseq
    %v4847 = vshrl.u32 %v4846, 7
    %v4848 = vsub.s32 %v4845, %v4847
    %v4849 = vrot.slane %v4842, %v4848
    %v4850 = vcombine.low %v4686, %v4693
    %v4852 = vunpack.c.l.s4 1983009808
    %v4853 = vunpack.c.0.s8 %v4852
    %v4854 = vlaneseq
    %v4855 = vshrl.u32 %v4854, 7
    %v4856 = vsub.s32 %v4853, %v4855
    %v4857 = vrot.slane %v4850, %v4856
    %v4858 = vcombine.low %v4696, %v4697
    %v4860 = vunpack.c.l.s4 1983009808
    %v4861 = vunpack.c.0.s8 %v4860
    %v4862 = vlaneseq
    %v4863 = vshrl.u32 %v4862, 7
    %v4864 = vsub.s32 %v4861, %v4863
    %v4865 = vrot.slane %v4858, %v4864
    %v4866 = vcombine.low %v4841, %v4849
    %v4867 = vcombine.high %v4841, %v4849
    %v4869 = vunpack.c.l.s4 1934713408
    %v4870 = vunpack.c.0.s8 %v4869
    %v4871 = vlaneseq
    %v4872 = vshrl.u32 %v4871, 7
    %v4873 = vsub.s32 %v4870, %v4872
    %v4874 = vrot.slane %v4866, %v4873
    %v4876 = vunpack.c.l.s4 1934713408
    %v4877 = vunpack.c.0.s8 %v4876
    %v4878 = vlaneseq
    %v4879 = vshrl.u32 %v4878, 7
    %v4880 = vsub.s32 %v4877, %v4879
    %v4881 = vrot.slane %v4867, %v4880
    %v4882 = vcombine.low %v4857, %v4865
    %v4883 = vcombine.high %v4857, %v4865
    %v4885 = vunpack.c.l.s4 1934713408
    %v4886 = vunpack.c.0.s8 %v4885
    %v4887 = vlaneseq
    %v4888 = vshrl.u32 %v4887, 7
    %v4889 = vsub.s32 %v4886, %v4888
    %v4890 = vrot.slane %v4882, %v4889
    %v4892 = vunpack.c.l.s4 1934713408
    %v4893 = vunpack.c.0.s8 %v4892
    %v4894 = vlaneseq
    %v4895 = vshrl.u32 %v4894, 7
    %v4896 = vsub.s32 %v4893, %v4895
    %v4897 = vrot.slane %v4883, %v4896
    %v4898 = vcombine.low %v4874, %v4890
    %v4899 = vcombine.high %v4874, %v4890
    %v4900 = vcombine.low %v4881, %v4897
    %v4901 = vcombine.high %v4881, %v4897
    %v4902 = vcombine.low %v4738, %v4745
    %v4904 = vunpack.c.l.s4 1983009808
    %v4905 = vunpack.c.0.s8 %v4904
    %v4906 = vlaneseq
    %v4907 = vshrl.u32 %v4906, 7
    %v4908 = vsub.s32 %v4905, %v4907
    %v4909 = vrot.slane %v4902, %v4908
    %v4910 = vcombine.low %v4762, %v4763
    %v4912 = vunpack.c.l.s4 1983009808
    %v4913 = vunpack.c.0.s8 %v4912
    %v4914 = vlaneseq
    %v4915 = vshrl.u32 %v4914, 7
    %v4916 = vsub.s32 %v4913, %v4915
    %v4917 = vrot.slane %v4910, %v4916
    %v4918 = vcombine.low %v4909, %v4917
    %v4919 = vcombine.high %v4909, %v4917
    %v4921 = vunpack.c.l.s4 1934713408
    %v4922 = vunpack.c.0.s8 %v4921
    %v4923 = vlaneseq
    %v4924 = vshrl.u32 %v4923, 7
    %v4925 = vsub.s32 %v4922, %v4924
    %v4926 = vrot.slane %v4918, %v4925
    %v4928 = vunpack.c.l.s4 1934713408
    %v4929 = vunpack.c.0.s8 %v4928
    %v4930 = vlaneseq
    %v4931 = vshrl.u32 %v4930, 7
    %v4932 = vsub.s32 %v4929, %v4931
    %v4933 = vrot.slane %v4919, %v4932
    %v4934 = vcombine.high %v4926, 0.0
    %v4935 = vcombine.high %v4933, 0.0
    %v4936 = vcombine.low %v4754, %v4761
    %v4938 = vunpack.c.l.s4 1983009808
    %v4939 = vunpack.c.0.s8 %v4938
    %v4940 = vlaneseq
    %v4941 = vshrl.u32 %v4940, 7
    %v4942 = vsub.s32 %v4939, %v4941
    %v4943 = vrot.slane %v4936, %v4942
    %v4944 = vcombine.low %v4764, %v4765
    %v4946 = vunpack.c.l.s4 1983009808
    %v4947 = vunpack.c.0.s8 %v4946
    %v4948 = vlaneseq
    %v4949 = vshrl.u32 %v4948, 7
    %v4950 = vsub.s32 %v4947, %v4949
    %v4951 = vrot.slane %v4944, %v4950
    %v4952 = vcombine.low %v4806, %v4813
    %v4954 = vunpack.c.l.s4 1983009808
    %v4955 = vunpack.c.0.s8 %v4954
    %v4956 = vlaneseq
    %v4957 = vshrl.u32 %v4956, 7
    %v4958 = vsub.s32 %v4955, %v4957
    %v4959 = vrot.slane %v4952, %v4958
    %v4960 = vcombine.low %v4830, %v4831
    %v4962 = vunpack.c.l.s4 1983009808
    %v4963 = vunpack.c.0.s8 %v4962
    %v4964 = vlaneseq
    %v4965 = vshrl.u32 %v4964, 7
    %v4966 = vsub.s32 %v4963, %v4965
    %v4967 = vrot.slane %v4960, %v4966
    %v4968 = vcombine.low %v4943, %v4951
    %v4969 = vcombine.high %v4943, %v4951
    %v4971 = vunpack.c.l.s4 1934713408
    %v4972 = vunpack.c.0.s8 %v4971
    %v4973 = vlaneseq
    %v4974 = vshrl.u32 %v4973, 7
    %v4975 = vsub.s32 %v4972, %v4974
    %v4976 = vrot.slane %v4968, %v4975
    %v4978 = vunpack.c.l.s4 1934713408
    %v4979 = vunpack.c.0.s8 %v4978
    %v4980 = vlaneseq
    %v4981 = vshrl.u32 %v4980, 7
    %v4982 = vsub.s32 %v4979, %v4981
    %v4983 = vrot.slane %v4969, %v4982
    %v4984 = vcombine.low %v4959, %v4967
    %v4985 = vcombine.high %v4959, %v4967
    %v4987 = vunpack.c.l.s4 1934713408
    %v4988 = vunpack.c.0.s8 %v4987
    %v4989 = vlaneseq
    %v4990 = vshrl.u32 %v4989, 7
    %v4991 = vsub.s32 %v4988, %v4990
    %v4992 = vrot.slane %v4984, %v4991
    %v4994 = vunpack.c.l.s4 1934713408
    %v4995 = vunpack.c.0.s8 %v4994
    %v4996 = vlaneseq
    %v4997 = vshrl.u32 %v4996, 7
    %v4998 = vsub.s32 %v4995, %v4997
    %v4999 = vrot.slane %v4985, %v4998
    %v5000 = vcombine.low %v4976, %v4992
    %v5001 = vcombine.high %v4976, %v4992
    %v5002 = vcombine.low %v4983, %v4999
    %v5003 = vcombine.high %v4983, %v4999
    %v5004 = vcombine.low %v4822, %v4829
    %v5006 = vunpack.c.l.s4 1983009808
    %v5007 = vunpack.c.0.s8 %v5006
    %v5008 = vlaneseq
    %v5009 = vshrl.u32 %v5008, 7
    %v5010 = vsub.s32 %v5007, %v5009
    %v5011 = vrot.slane %v5004, %v5010
    %v5012 = vcombine.low %v4832, %v4833
    %v5014 = vunpack.c.l.s4 1983009808
    %v5015 = vunpack.c.0.s8 %v5014
    %v5016 = vlaneseq
    %v5017 = vshrl.u32 %v5016, 7
    %v5018 = vsub.s32 %v5015, %v5017
    %v5019 = vrot.slane %v5012, %v5018
    %v5020 = vcombine.low %v5011, %v5019
    %v5021 = vcombine.high %v5011, %v5019
    %v5023 = vunpack.c.l.s4 1934713408
    %v5024 = vunpack.c.0.s8 %v5023
    %v5025 = vlaneseq
    %v5026 = vshrl.u32 %v5025, 7
    %v5027 = vsub.s32 %v5024, %v5026
    %v5028 = vrot.slane %v5020, %v5027
    %v5030 = vunpack.c.l.s4 1934713408
    %v5031 = vunpack.c.0.s8 %v5030
    %v5032 = vlaneseq
    %v5033 = vshrl.u32 %v5032, 7
    %v5034 = vsub.s32 %v5031, %v5033
    %v5035 = vrot.slane %v5021, %v5034
    %v5036 = vcombine.high %v5028, 0.0
    %v5037 = vcombine.high %v5035, 0.0
    %5041 = vrot.lane.b32.xlu0 %v4142, 112
    %v5042 = vpop.permute.xlu0 %5041
    %5043 = vrot.lane.b32.xlu0 %v4148, 112
    %v5044 = vpop.permute.xlu0 %5043
    %5045 = vrot.lane.b32.xlu0 %v4154, 112
    %v5046 = vpop.permute.xlu0 %5045
    %5050 = vrot.lane.b32.xlu0 %v4142, 96
    %v5051 = vpop.permute.xlu0 %5050
    %5052 = vrot.lane.b32.xlu0 %v4148, 96
    %v5053 = vpop.permute.xlu0 %5052
    %5054 = vrot.lane.b32.xlu0 %v4154, 96
    %v5055 = vpop.permute.xlu0 %5054
    %5059 = vrot.lane.b32.xlu0 %v4142, 80
    %v5060 = vpop.permute.xlu0 %5059
    %5061 = vrot.lane.b32.xlu0 %v4148, 80
    %v5062 = vpop.permute.xlu0 %5061
    %5063 = vrot.lane.b32.xlu0 %v4154, 80
    %v5064 = vpop.permute.xlu0 %5063
    %v5068 = vcombine.low %v4142, %v5051
    %v5069 = vcombine.high %v4142, %v5051
    %v5071 = vunpack.c.l.s4 1983009808
    %v5072 = vunpack.c.0.s8 %v5071
    %v5073 = vlaneseq
    %v5074 = vshrl.u32 %v5073, 7
    %v5075 = vsub.s32 %v5072, %v5074
    %v5076 = vrot.slane %v5068, %v5075
    %v5078 = vunpack.c.l.s4 1983009808
    %v5079 = vunpack.c.0.s8 %v5078
    %v5080 = vlaneseq
    %v5081 = vshrl.u32 %v5080, 7
    %v5082 = vsub.s32 %v5079, %v5081
    %v5083 = vrot.slane %v5069, %v5082
    %v5084 = vcombine.low %v5042, %v5060
    %v5085 = vcombine.high %v5042, %v5060
    %v5087 = vunpack.c.l.s4 1983009808
    %v5088 = vunpack.c.0.s8 %v5087
    %v5089 = vlaneseq
    %v5090 = vshrl.u32 %v5089, 7
    %v5091 = vsub.s32 %v5088, %v5090
    %v5092 = vrot.slane %v5084, %v5091
    %v5094 = vunpack.c.l.s4 1983009808
    %v5095 = vunpack.c.0.s8 %v5094
    %v5096 = vlaneseq
    %v5097 = vshrl.u32 %v5096, 7
    %v5098 = vsub.s32 %v5095, %v5097
    %v5099 = vrot.slane %v5085, %v5098
    %v5100 = vcombine.low %v5076, %v5092
    %v5101 = vcombine.high %v5076, %v5092
    %v5103 = vunpack.c.l.s4 1934713408
    %v5104 = vunpack.c.0.s8 %v5103
    %v5105 = vlaneseq
    %v5106 = vshrl.u32 %v5105, 7
    %v5107 = vsub.s32 %v5104, %v5106
    %v5108 = vrot.slane %v5100, %v5107
    %v5110 = vunpack.c.l.s4 1934713408
    %v5111 = vunpack.c.0.s8 %v5110
    %v5112 = vlaneseq
    %v5113 = vshrl.u32 %v5112, 7
    %v5114 = vsub.s32 %v5111, %v5113
    %v5115 = vrot.slane %v5101, %v5114
    %v5116 = vcombine.low %v5083, %v5099
    %v5117 = vcombine.high %v5083, %v5099
    %v5119 = vunpack.c.l.s4 1934713408
    %v5120 = vunpack.c.0.s8 %v5119
    %v5121 = vlaneseq
    %v5122 = vshrl.u32 %v5121, 7
    %v5123 = vsub.s32 %v5120, %v5122
    %v5124 = vrot.slane %v5116, %v5123
    %v5126 = vunpack.c.l.s4 1934713408
    %v5127 = vunpack.c.0.s8 %v5126
    %v5128 = vlaneseq
    %v5129 = vshrl.u32 %v5128, 7
    %v5130 = vsub.s32 %v5127, %v5129
    %v5131 = vrot.slane %v5117, %v5130
    %v5132 = vcombine.high %v5108, 0.0
    %v5133 = vcombine.high %v5115, 0.0
    %v5134 = vcombine.high %v5124, 0.0
    %v5135 = vcombine.high %v5131, 0.0
    %v5136 = vcombine.low %v4148, %v5053
    %v5137 = vcombine.high %v4148, %v5053
    %v5139 = vunpack.c.l.s4 1983009808
    %v5140 = vunpack.c.0.s8 %v5139
    %v5141 = vlaneseq
    %v5142 = vshrl.u32 %v5141, 7
    %v5143 = vsub.s32 %v5140, %v5142
    %v5144 = vrot.slane %v5136, %v5143
    %v5146 = vunpack.c.l.s4 1983009808
    %v5147 = vunpack.c.0.s8 %v5146
    %v5148 = vlaneseq
    %v5149 = vshrl.u32 %v5148, 7
    %v5150 = vsub.s32 %v5147, %v5149
    %v5151 = vrot.slane %v5137, %v5150
    %v5152 = vcombine.low %v5044, %v5062
    %v5153 = vcombine.high %v5044, %v5062
    %v5155 = vunpack.c.l.s4 1983009808
    %v5156 = vunpack.c.0.s8 %v5155
    %v5157 = vlaneseq
    %v5158 = vshrl.u32 %v5157, 7
    %v5159 = vsub.s32 %v5156, %v5158
    %v5160 = vrot.slane %v5152, %v5159
    %v5162 = vunpack.c.l.s4 1983009808
    %v5163 = vunpack.c.0.s8 %v5162
    %v5164 = vlaneseq
    %v5165 = vshrl.u32 %v5164, 7
    %v5166 = vsub.s32 %v5163, %v5165
    %v5167 = vrot.slane %v5153, %v5166
    %v5168 = vcombine.low %v5144, %v5160
    %v5169 = vcombine.high %v5144, %v5160
    %v5171 = vunpack.c.l.s4 1934713408
    %v5172 = vunpack.c.0.s8 %v5171
    %v5173 = vlaneseq
    %v5174 = vshrl.u32 %v5173, 7
    %v5175 = vsub.s32 %v5172, %v5174
    %v5176 = vrot.slane %v5168, %v5175
    %v5178 = vunpack.c.l.s4 1934713408
    %v5179 = vunpack.c.0.s8 %v5178
    %v5180 = vlaneseq
    %v5181 = vshrl.u32 %v5180, 7
    %v5182 = vsub.s32 %v5179, %v5181
    %v5183 = vrot.slane %v5169, %v5182
    %v5184 = vcombine.low %v5151, %v5167
    %v5185 = vcombine.high %v5151, %v5167
    %v5187 = vunpack.c.l.s4 1934713408
    %v5188 = vunpack.c.0.s8 %v5187
    %v5189 = vlaneseq
    %v5190 = vshrl.u32 %v5189, 7
    %v5191 = vsub.s32 %v5188, %v5190
    %v5192 = vrot.slane %v5184, %v5191
    %v5194 = vunpack.c.l.s4 1934713408
    %v5195 = vunpack.c.0.s8 %v5194
    %v5196 = vlaneseq
    %v5197 = vshrl.u32 %v5196, 7
    %v5198 = vsub.s32 %v5195, %v5197
    %v5199 = vrot.slane %v5185, %v5198
    %v5200 = vcombine.high %v5176, 0.0
    %v5201 = vcombine.high %v5183, 0.0
    %v5202 = vcombine.high %v5192, 0.0
    %v5203 = vcombine.high %v5199, 0.0
    %v5204 = vcombine.low %v4154, %v5055
    %v5205 = vcombine.high %v4154, %v5055
    %v5207 = vunpack.c.l.s4 1983009808
    %v5208 = vunpack.c.0.s8 %v5207
    %v5209 = vlaneseq
    %v5210 = vshrl.u32 %v5209, 7
    %v5211 = vsub.s32 %v5208, %v5210
    %v5212 = vrot.slane %v5204, %v5211
    %v5214 = vunpack.c.l.s4 1983009808
    %v5215 = vunpack.c.0.s8 %v5214
    %v5216 = vlaneseq
    %v5217 = vshrl.u32 %v5216, 7
    %v5218 = vsub.s32 %v5215, %v5217
    %v5219 = vrot.slane %v5205, %v5218
    %v5220 = vcombine.low %v5046, %v5064
    %v5221 = vcombine.high %v5046, %v5064
    %v5223 = vunpack.c.l.s4 1983009808
    %v5224 = vunpack.c.0.s8 %v5223
    %v5225 = vlaneseq
    %v5226 = vshrl.u32 %v5225, 7
    %v5227 = vsub.s32 %v5224, %v5226
    %v5228 = vrot.slane %v5220, %v5227
    %v5230 = vunpack.c.l.s4 1983009808
    %v5231 = vunpack.c.0.s8 %v5230
    %v5232 = vlaneseq
    %v5233 = vshrl.u32 %v5232, 7
    %v5234 = vsub.s32 %v5231, %v5233
    %v5235 = vrot.slane %v5221, %v5234
    %v5236 = vcombine.low %v5212, %v5228
    %v5237 = vcombine.high %v5212, %v5228
    %v5239 = vunpack.c.l.s4 1934713408
    %v5240 = vunpack.c.0.s8 %v5239
    %v5241 = vlaneseq
    %v5242 = vshrl.u32 %v5241, 7
    %v5243 = vsub.s32 %v5240, %v5242
    %v5244 = vrot.slane %v5236, %v5243
    %v5246 = vunpack.c.l.s4 1934713408
    %v5247 = vunpack.c.0.s8 %v5246
    %v5248 = vlaneseq
    %v5249 = vshrl.u32 %v5248, 7
    %v5250 = vsub.s32 %v5247, %v5249
    %v5251 = vrot.slane %v5237, %v5250
    %v5252 = vcombine.low %v5219, %v5235
    %v5253 = vcombine.high %v5219, %v5235
    %v5255 = vunpack.c.l.s4 1934713408
    %v5256 = vunpack.c.0.s8 %v5255
    %v5257 = vlaneseq
    %v5258 = vshrl.u32 %v5257, 7
    %v5259 = vsub.s32 %v5256, %v5258
    %v5260 = vrot.slane %v5252, %v5259
    %v5262 = vunpack.c.l.s4 1934713408
    %v5263 = vunpack.c.0.s8 %v5262
    %v5264 = vlaneseq
    %v5265 = vshrl.u32 %v5264, 7
    %v5266 = vsub.s32 %v5263, %v5265
    %v5267 = vrot.slane %v5253, %v5266
    %v5268 = vcombine.high %v5244, 0.0
    %v5269 = vcombine.high %v5251, 0.0
    %v5270 = vcombine.high %v5260, 0.0
    %v5271 = vcombine.high %v5267, 0.0
    %v5272 = vcombine.low %v5108, %v5115
    %v5274 = vunpack.c.l.s4 1983009808
    %v5275 = vunpack.c.0.s8 %v5274
    %v5276 = vlaneseq
    %v5277 = vshrl.u32 %v5276, 7
    %v5278 = vsub.s32 %v5275, %v5277
    %v5279 = vrot.slane %v5272, %v5278
    %v5280 = vcombine.low %v5132, %v5133
    %v5282 = vunpack.c.l.s4 1983009808
    %v5283 = vunpack.c.0.s8 %v5282
    %v5284 = vlaneseq
    %v5285 = vshrl.u32 %v5284, 7
    %v5286 = vsub.s32 %v5283, %v5285
    %v5287 = vrot.slane %v5280, %v5286
    %v5288 = vcombine.low %v5124, %v5131
    %v5290 = vunpack.c.l.s4 1983009808
    %v5291 = vunpack.c.0.s8 %v5290
    %v5292 = vlaneseq
    %v5293 = vshrl.u32 %v5292, 7
    %v5294 = vsub.s32 %v5291, %v5293
    %v5295 = vrot.slane %v5288, %v5294
    %v5296 = vcombine.low %v5134, %v5135
    %v5298 = vunpack.c.l.s4 1983009808
    %v5299 = vunpack.c.0.s8 %v5298
    %v5300 = vlaneseq
    %v5301 = vshrl.u32 %v5300, 7
    %v5302 = vsub.s32 %v5299, %v5301
    %v5303 = vrot.slane %v5296, %v5302
    %v5304 = vcombine.low %v5279, %v5287
    %v5305 = vcombine.high %v5279, %v5287
    %v5307 = vunpack.c.l.s4 1934713408
    %v5308 = vunpack.c.0.s8 %v5307
    %v5309 = vlaneseq
    %v5310 = vshrl.u32 %v5309, 7
    %v5311 = vsub.s32 %v5308, %v5310
    %v5312 = vrot.slane %v5304, %v5311
    %v5314 = vunpack.c.l.s4 1934713408
    %v5315 = vunpack.c.0.s8 %v5314
    %v5316 = vlaneseq
    %v5317 = vshrl.u32 %v5316, 7
    %v5318 = vsub.s32 %v5315, %v5317
    %v5319 = vrot.slane %v5305, %v5318
    %v5320 = vcombine.low %v5295, %v5303
    %v5321 = vcombine.high %v5295, %v5303
    %v5323 = vunpack.c.l.s4 1934713408
    %v5324 = vunpack.c.0.s8 %v5323
    %v5325 = vlaneseq
    %v5326 = vshrl.u32 %v5325, 7
    %v5327 = vsub.s32 %v5324, %v5326
    %v5328 = vrot.slane %v5320, %v5327
    %v5330 = vunpack.c.l.s4 1934713408
    %v5331 = vunpack.c.0.s8 %v5330
    %v5332 = vlaneseq
    %v5333 = vshrl.u32 %v5332, 7
    %v5334 = vsub.s32 %v5331, %v5333
    %v5335 = vrot.slane %v5321, %v5334
    %v5336 = vcombine.low %v5312, %v5328
    %v5337 = vcombine.high %v5312, %v5328
    %v5338 = vcombine.low %v5319, %v5335
    %v5339 = vcombine.high %v5319, %v5335
    %v5340 = vcombine.low %v5176, %v5183
    %v5342 = vunpack.c.l.s4 1983009808
    %v5343 = vunpack.c.0.s8 %v5342
    %v5344 = vlaneseq
    %v5345 = vshrl.u32 %v5344, 7
    %v5346 = vsub.s32 %v5343, %v5345
    %v5347 = vrot.slane %v5340, %v5346
    %v5348 = vcombine.low %v5200, %v5201
    %v5350 = vunpack.c.l.s4 1983009808
    %v5351 = vunpack.c.0.s8 %v5350
    %v5352 = vlaneseq
    %v5353 = vshrl.u32 %v5352, 7
    %v5354 = vsub.s32 %v5351, %v5353
    %v5355 = vrot.slane %v5348, %v5354
    %v5356 = vcombine.low %v5347, %v5355
    %v5357 = vcombine.high %v5347, %v5355
    %v5359 = vunpack.c.l.s4 1934713408
    %v5360 = vunpack.c.0.s8 %v5359
    %v5361 = vlaneseq
    %v5362 = vshrl.u32 %v5361, 7
    %v5363 = vsub.s32 %v5360, %v5362
    %v5364 = vrot.slane %v5356, %v5363
    %v5366 = vunpack.c.l.s4 1934713408
    %v5367 = vunpack.c.0.s8 %v5366
    %v5368 = vlaneseq
    %v5369 = vshrl.u32 %v5368, 7
    %v5370 = vsub.s32 %v5367, %v5369
    %v5371 = vrot.slane %v5357, %v5370
    %v5372 = vcombine.high %v5364, 0.0
    %v5373 = vcombine.high %v5371, 0.0
    %v5374 = vcombine.low %v5192, %v5199
    %v5376 = vunpack.c.l.s4 1983009808
    %v5377 = vunpack.c.0.s8 %v5376
    %v5378 = vlaneseq
    %v5379 = vshrl.u32 %v5378, 7
    %v5380 = vsub.s32 %v5377, %v5379
    %v5381 = vrot.slane %v5374, %v5380
    %v5382 = vcombine.low %v5202, %v5203
    %v5384 = vunpack.c.l.s4 1983009808
    %v5385 = vunpack.c.0.s8 %v5384
    %v5386 = vlaneseq
    %v5387 = vshrl.u32 %v5386, 7
    %v5388 = vsub.s32 %v5385, %v5387
    %v5389 = vrot.slane %v5382, %v5388
    %v5390 = vcombine.low %v5244, %v5251
    %v5392 = vunpack.c.l.s4 1983009808
    %v5393 = vunpack.c.0.s8 %v5392
    %v5394 = vlaneseq
    %v5395 = vshrl.u32 %v5394, 7
    %v5396 = vsub.s32 %v5393, %v5395
    %v5397 = vrot.slane %v5390, %v5396
    %v5398 = vcombine.low %v5268, %v5269
    %v5400 = vunpack.c.l.s4 1983009808
    %v5401 = vunpack.c.0.s8 %v5400
    %v5402 = vlaneseq
    %v5403 = vshrl.u32 %v5402, 7
    %v5404 = vsub.s32 %v5401, %v5403
    %v5405 = vrot.slane %v5398, %v5404
    %v5406 = vcombine.low %v5381, %v5389
    %v5407 = vcombine.high %v5381, %v5389
    %v5409 = vunpack.c.l.s4 1934713408
    %v5410 = vunpack.c.0.s8 %v5409
    %v5411 = vlaneseq
    %v5412 = vshrl.u32 %v5411, 7
    %v5413 = vsub.s32 %v5410, %v5412
    %v5414 = vrot.slane %v5406, %v5413
    %v5416 = vunpack.c.l.s4 1934713408
    %v5417 = vunpack.c.0.s8 %v5416
    %v5418 = vlaneseq
    %v5419 = vshrl.u32 %v5418, 7
    %v5420 = vsub.s32 %v5417, %v5419
    %v5421 = vrot.slane %v5407, %v5420
    %v5422 = vcombine.low %v5397, %v5405
    %v5423 = vcombine.high %v5397, %v5405
    %v5425 = vunpack.c.l.s4 1934713408
    %v5426 = vunpack.c.0.s8 %v5425
    %v5427 = vlaneseq
    %v5428 = vshrl.u32 %v5427, 7
    %v5429 = vsub.s32 %v5426, %v5428
    %v5430 = vrot.slane %v5422, %v5429
    %v5432 = vunpack.c.l.s4 1934713408
    %v5433 = vunpack.c.0.s8 %v5432
    %v5434 = vlaneseq
    %v5435 = vshrl.u32 %v5434, 7
    %v5436 = vsub.s32 %v5433, %v5435
    %v5437 = vrot.slane %v5423, %v5436
    %v5438 = vcombine.low %v5414, %v5430
    %v5439 = vcombine.high %v5414, %v5430
    %v5440 = vcombine.low %v5421, %v5437
    %v5441 = vcombine.high %v5421, %v5437
    %v5442 = vcombine.low %v5260, %v5267
    %v5444 = vunpack.c.l.s4 1983009808
    %v5445 = vunpack.c.0.s8 %v5444
    %v5446 = vlaneseq
    %v5447 = vshrl.u32 %v5446, 7
    %v5448 = vsub.s32 %v5445, %v5447
    %v5449 = vrot.slane %v5442, %v5448
    %v5450 = vcombine.low %v5270, %v5271
    %v5452 = vunpack.c.l.s4 1983009808
    %v5453 = vunpack.c.0.s8 %v5452
    %v5454 = vlaneseq
    %v5455 = vshrl.u32 %v5454, 7
    %v5456 = vsub.s32 %v5453, %v5455
    %v5457 = vrot.slane %v5450, %v5456
    %v5458 = vcombine.low %v5449, %v5457
    %v5459 = vcombine.high %v5449, %v5457
    %v5461 = vunpack.c.l.s4 1934713408
    %v5462 = vunpack.c.0.s8 %v5461
    %v5463 = vlaneseq
    %v5464 = vshrl.u32 %v5463, 7
    %v5465 = vsub.s32 %v5462, %v5464
    %v5466 = vrot.slane %v5458, %v5465
    %v5468 = vunpack.c.l.s4 1934713408
    %v5469 = vunpack.c.0.s8 %v5468
    %v5470 = vlaneseq
    %v5471 = vshrl.u32 %v5470, 7
    %v5472 = vsub.s32 %v5469, %v5471
    %v5473 = vrot.slane %v5459, %v5472
    %v5474 = vcombine.high %v5466, 0.0
    %v5475 = vcombine.high %v5473, 0.0
    %v5477 = vsel %vm1603, %v4454, 0
    %v5480 = vsel %vm1603, %v4482, 0
    %v5483 = vsel %vm1603, %v4898, 0
    %v5486 = vsel %vm1603, %v4926, 0
    %5488 = vmatprep.subr.mxu0 0.0
    %5489 = vmatpush1.xpose.msra.mxu0 0.0
    %5490 = vmatprep.subr.mxu0 0.0
    %5491 = vmatpush1.xpose.msra.mxu0 0.0
    %5492 = vmatprep.subr.mxu0 0.0
    %5493 = vmatpush1.xpose.msra.mxu0 0.0
    %5494 = vmatprep.subr.mxu0 0.0
    %5495 = vmatpush1.xpose.msra.mxu0 0.0
    %5496 = vmatprep.subr.mxu0 0.0
    %5497 = vmatpush1.xpose.msra.mxu0 0.0
    %5498 = vmatprep.subr.mxu0 0.0
    %5499 = vmatpush1.xpose.msra.mxu0 0.0
    %5500 = vmatprep.subr.mxu0 0.0
    %5501 = vmatpush1.xpose.msra.mxu0 0.0
    %5502 = vmatprep.subr.mxu0 0.0
    %5503 = vmatpush1.xpose.msra.mxu0 0.0
    %5504 = vmatprep.subr.mxu0 0.0
    %5505 = vmatpush1.xpose.msra.mxu0 0.0
    %5506 = vmatprep.subr.mxu0 0.0
    %5507 = vmatpush1.xpose.msra.mxu0 0.0
    %5508 = vmatprep.subr.mxu0 0.0
    %5509 = vmatpush1.xpose.msra.mxu0 0.0
    %5510 = vmatprep.subr.mxu0 0.0
    %5511 = vmatpush1.xpose.msra.mxu0 0.0
    %5512 = vmatprep.subr.mxu0 0.0
    %5513 = vmatpush1.xpose.msra.mxu0 0.0
    %5514 = vmatprep.subr.mxu0 0.0
    %5515 = vmatpush1.xpose.msra.mxu0 0.0
    %5516 = vmatprep.subr.mxu0 0.0
    %5517 = vmatpush1.xpose.msra.mxu0 %v5486
    %5518 = vmatprep.subr.mxu0 0.0
    %5519 = vmatpush1.xpose.msra.mxu0 %v5483
    %5520 = vmatprep.subr.mxu0 0.0
    %5521 = vmatpush2.xpose.msra.mxu0 0.0
    %5522 = vmatprep.subr.mxu0 0.0
    %5523 = vmatpush2.xpose.msra.mxu0 0.0
    %5524 = vmatprep.subr.mxu0 0.0
    %5525 = vmatpush2.xpose.msra.mxu0 0.0
    %5526 = vmatprep.subr.mxu0 0.0
    %5527 = vmatpush2.xpose.msra.mxu0 0.0
    %5528 = vmatprep.subr.mxu0 0.0
    %5529 = vmatpush2.xpose.msra.mxu0 0.0
    %5530 = vmatprep.subr.mxu0 0.0
    %5531 = vmatpush2.xpose.msra.mxu0 0.0
    %5532 = vmatprep.subr.mxu0 0.0
    %5533 = vmatpush2.xpose.msra.mxu0 0.0
    %5534 = vmatprep.subr.mxu0 0.0
    %5535 = vmatpush2.xpose.msra.mxu0 0.0
    %5536 = vmatprep.subr.mxu0 0.0
    %5537 = vmatpush2.xpose.msra.mxu0 0.0
    %5538 = vmatprep.subr.mxu0 0.0
    %5539 = vmatpush2.xpose.msra.mxu0 0.0
    %5540 = vmatprep.subr.mxu0 0.0
    %5541 = vmatpush2.xpose.msra.mxu0 0.0
    %5542 = vmatprep.subr.mxu0 0.0
    %5543 = vmatpush2.xpose.msra.mxu0 0.0
    %5544 = vmatprep.subr.mxu0 0.0
    %5545 = vmatpush2.xpose.msra.mxu0 0.0
    %5546 = vmatprep.subr.mxu0 0.0
    %5547 = vmatpush2.xpose.msra.mxu0 0.0
    %5548 = vmatprep.subr.mxu0 0.0
    %5549 = vmatpush2.xpose.msra.mxu0 0.0
    %5550 = vmatprep.subr.mxu0 0.0
    %5551 = vmatpush2.xpose.msra.mxu0 0.0
    %5552 = vmatprep.mubr.f32.mxu0 0.0
    %5553 = vmatmul.mubr.f32.gmra.mxu0 %v5477
    %v5554 = vpop.f32.mrf.mxu0
    %v5555 = vadd.f32 0.0, %v5554
    %v5556 = vpop.f32.mrf.mxu0
    %5557 = vmatprep.mubr.f32.mxu0 0.0
    %5558 = vmatmul.mubr.f32.gmra.mxu0 %v5480
    %v5559 = vpop.f32.mrf.mxu0
    %v5560 = vadd.f32 0.0, %v5559
    %v5561 = vpop.f32.mrf.mxu0
    %5562 = vdwg.mxu0
    %v5564 = vsel %vm1603, %v4455, 0
    %v5567 = vsel %vm1603, %v4490, 0
    %v5570 = vsel %vm1603, %v4899, 0
    %v5573 = vsel %vm1603, %v4934, 0
    %5575 = vmatprep.subr.mxu0 0.0
    %5576 = vmatpush1.xpose.msra.mxu0 0.0
    %5577 = vmatprep.subr.mxu0 0.0
    %5578 = vmatpush1.xpose.msra.mxu0 0.0
    %5579 = vmatprep.subr.mxu0 0.0
    %5580 = vmatpush1.xpose.msra.mxu0 0.0
    %5581 = vmatprep.subr.mxu0 0.0
    %5582 = vmatpush1.xpose.msra.mxu0 0.0
    %5583 = vmatprep.subr.mxu0 0.0
    %5584 = vmatpush1.xpose.msra.mxu0 0.0
    %5585 = vmatprep.subr.mxu0 0.0
    %5586 = vmatpush1.xpose.msra.mxu0 0.0
    %5587 = vmatprep.subr.mxu0 0.0
    %5588 = vmatpush1.xpose.msra.mxu0 0.0
    %5589 = vmatprep.subr.mxu0 0.0
    %5590 = vmatpush1.xpose.msra.mxu0 0.0
    %5591 = vmatprep.subr.mxu0 0.0
    %5592 = vmatpush1.xpose.msra.mxu0 0.0
    %5593 = vmatprep.subr.mxu0 0.0
    %5594 = vmatpush1.xpose.msra.mxu0 0.0
    %5595 = vmatprep.subr.mxu0 0.0
    %5596 = vmatpush1.xpose.msra.mxu0 0.0
    %5597 = vmatprep.subr.mxu0 0.0
    %5598 = vmatpush1.xpose.msra.mxu0 0.0
    %5599 = vmatprep.subr.mxu0 0.0
    %5600 = vmatpush1.xpose.msra.mxu0 0.0
    %5601 = vmatprep.subr.mxu0 0.0
    %5602 = vmatpush1.xpose.msra.mxu0 0.0
    %5603 = vmatprep.subr.mxu0 0.0
    %5604 = vmatpush1.xpose.msra.mxu0 %v5573
    %5605 = vmatprep.subr.mxu0 0.0
    %5606 = vmatpush1.xpose.msra.mxu0 %v5570
    %5607 = vmatprep.subr.mxu0 0.0
    %5608 = vmatpush2.xpose.msra.mxu0 0.0
    %5609 = vmatprep.subr.mxu0 0.0
    %5610 = vmatpush2.xpose.msra.mxu0 0.0
    %5611 = vmatprep.subr.mxu0 0.0
    %5612 = vmatpush2.xpose.msra.mxu0 0.0
    %5613 = vmatprep.subr.mxu0 0.0
    %5614 = vmatpush2.xpose.msra.mxu0 0.0
    %5615 = vmatprep.subr.mxu0 0.0
    %5616 = vmatpush2.xpose.msra.mxu0 0.0
    %5617 = vmatprep.subr.mxu0 0.0
    %5618 = vmatpush2.xpose.msra.mxu0 0.0
    %5619 = vmatprep.subr.mxu0 0.0
    %5620 = vmatpush2.xpose.msra.mxu0 0.0
    %5621 = vmatprep.subr.mxu0 0.0
    %5622 = vmatpush2.xpose.msra.mxu0 0.0
    %5623 = vmatprep.subr.mxu0 0.0
    %5624 = vmatpush2.xpose.msra.mxu0 0.0
    %5625 = vmatprep.subr.mxu0 0.0
    %5626 = vmatpush2.xpose.msra.mxu0 0.0
    %5627 = vmatprep.subr.mxu0 0.0
    %5628 = vmatpush2.xpose.msra.mxu0 0.0
    %5629 = vmatprep.subr.mxu0 0.0
    %5630 = vmatpush2.xpose.msra.mxu0 0.0
    %5631 = vmatprep.subr.mxu0 0.0
    %5632 = vmatpush2.xpose.msra.mxu0 0.0
    %5633 = vmatprep.subr.mxu0 0.0
    %5634 = vmatpush2.xpose.msra.mxu0 0.0
    %5635 = vmatprep.subr.mxu0 0.0
    %5636 = vmatpush2.xpose.msra.mxu0 0.0
    %5637 = vmatprep.subr.mxu0 0.0
    %5638 = vmatpush2.xpose.msra.mxu0 0.0
    %5639 = vmatprep.mubr.f32.mxu0 0.0
    %5640 = vmatmul.mubr.f32.gmra.mxu0 %v5564
    %v5641 = vpop.f32.mrf.mxu0
    %v5642 = vadd.f32 0.0, %v5641
    %v5643 = vpop.f32.mrf.mxu0
    %5644 = vmatprep.mubr.f32.mxu0 0.0
    %5645 = vmatmul.mubr.f32.gmra.mxu0 %v5567
    %v5646 = vpop.f32.mrf.mxu0
    %v5647 = vadd.f32 0.0, %v5646
    %v5648 = vpop.f32.mrf.mxu0
    %5649 = vdwg.mxu0
    %v5651 = vsel %vm1603, %v4456, 0
    %v5654 = vsel %vm1603, %v4489, 0
    %v5657 = vsel %vm1603, %v4900, 0
    %v5660 = vsel %vm1603, %v4933, 0
    %5662 = vmatprep.subr.mxu0 0.0
    %5663 = vmatpush1.xpose.msra.mxu0 0.0
    %5664 = vmatprep.subr.mxu0 0.0
    %5665 = vmatpush1.xpose.msra.mxu0 0.0
    %5666 = vmatprep.subr.mxu0 0.0
    %5667 = vmatpush1.xpose.msra.mxu0 0.0
    %5668 = vmatprep.subr.mxu0 0.0
    %5669 = vmatpush1.xpose.msra.mxu0 0.0
    %5670 = vmatprep.subr.mxu0 0.0
    %5671 = vmatpush1.xpose.msra.mxu0 0.0
    %5672 = vmatprep.subr.mxu0 0.0
    %5673 = vmatpush1.xpose.msra.mxu0 0.0
    %5674 = vmatprep.subr.mxu0 0.0
    %5675 = vmatpush1.xpose.msra.mxu0 0.0
    %5676 = vmatprep.subr.mxu0 0.0
    %5677 = vmatpush1.xpose.msra.mxu0 0.0
    %5678 = vmatprep.subr.mxu0 0.0
    %5679 = vmatpush1.xpose.msra.mxu0 0.0
    %5680 = vmatprep.subr.mxu0 0.0
    %5681 = vmatpush1.xpose.msra.mxu0 0.0
    %5682 = vmatprep.subr.mxu0 0.0
    %5683 = vmatpush1.xpose.msra.mxu0 0.0
    %5684 = vmatprep.subr.mxu0 0.0
    %5685 = vmatpush1.xpose.msra.mxu0 0.0
    %5686 = vmatprep.subr.mxu0 0.0
    %5687 = vmatpush1.xpose.msra.mxu0 0.0
    %5688 = vmatprep.subr.mxu0 0.0
    %5689 = vmatpush1.xpose.msra.mxu0 0.0
    %5690 = vmatprep.subr.mxu0 0.0
    %5691 = vmatpush1.xpose.msra.mxu0 %v5660
    %5692 = vmatprep.subr.mxu0 0.0
    %5693 = vmatpush1.xpose.msra.mxu0 %v5657
    %5694 = vmatprep.subr.mxu0 0.0
    %5695 = vmatpush2.xpose.msra.mxu0 0.0
    %5696 = vmatprep.subr.mxu0 0.0
    %5697 = vmatpush2.xpose.msra.mxu0 0.0
    %5698 = vmatprep.subr.mxu0 0.0
    %5699 = vmatpush2.xpose.msra.mxu0 0.0
    %5700 = vmatprep.subr.mxu0 0.0
    %5701 = vmatpush2.xpose.msra.mxu0 0.0
    %5702 = vmatprep.subr.mxu0 0.0
    %5703 = vmatpush2.xpose.msra.mxu0 0.0
    %5704 = vmatprep.subr.mxu0 0.0
    %5705 = vmatpush2.xpose.msra.mxu0 0.0
    %5706 = vmatprep.subr.mxu0 0.0
    %5707 = vmatpush2.xpose.msra.mxu0 0.0
    %5708 = vmatprep.subr.mxu0 0.0
    %5709 = vmatpush2.xpose.msra.mxu0 0.0
    %5710 = vmatprep.subr.mxu0 0.0
    %5711 = vmatpush2.xpose.msra.mxu0 0.0
    %5712 = vmatprep.subr.mxu0 0.0
    %5713 = vmatpush2.xpose.msra.mxu0 0.0
    %5714 = vmatprep.subr.mxu0 0.0
    %5715 = vmatpush2.xpose.msra.mxu0 0.0
    %5716 = vmatprep.subr.mxu0 0.0
    %5717 = vmatpush2.xpose.msra.mxu0 0.0
    %5718 = vmatprep.subr.mxu0 0.0
    %5719 = vmatpush2.xpose.msra.mxu0 0.0
    %5720 = vmatprep.subr.mxu0 0.0
    %5721 = vmatpush2.xpose.msra.mxu0 0.0
    %5722 = vmatprep.subr.mxu0 0.0
    %5723 = vmatpush2.xpose.msra.mxu0 0.0
    %5724 = vmatprep.subr.mxu0 0.0
    %5725 = vmatpush2.xpose.msra.mxu0 0.0
    %5726 = vmatprep.mubr.f32.mxu0 0.0
    %5727 = vmatmul.mubr.f32.gmra.mxu0 %v5651
    %v5728 = vpop.f32.mrf.mxu0
    %v5729 = vadd.f32 0.0, %v5728
    %v5730 = vpop.f32.mrf.mxu0
    %5731 = vmatprep.mubr.f32.mxu0 0.0
    %5732 = vmatmul.mubr.f32.gmra.mxu0 %v5654
    %v5733 = vpop.f32.mrf.mxu0
    %v5734 = vadd.f32 0.0, %v5733
    %v5735 = vpop.f32.mrf.mxu0
    %5736 = vdwg.mxu0
    %v5738 = vsel %vm1603, %v4457, 0
    %v5741 = vsel %vm1603, %v4491, 0
    %v5744 = vsel %vm1603, %v4901, 0
    %v5747 = vsel %vm1603, %v4935, 0
    %5749 = vmatprep.subr.mxu0 0.0
    %5750 = vmatpush1.xpose.msra.mxu0 0.0
    %5751 = vmatprep.subr.mxu0 0.0
    %5752 = vmatpush1.xpose.msra.mxu0 0.0
    %5753 = vmatprep.subr.mxu0 0.0
    %5754 = vmatpush1.xpose.msra.mxu0 0.0
    %5755 = vmatprep.subr.mxu0 0.0
    %5756 = vmatpush1.xpose.msra.mxu0 0.0
    %5757 = vmatprep.subr.mxu0 0.0
    %5758 = vmatpush1.xpose.msra.mxu0 0.0
    %5759 = vmatprep.subr.mxu0 0.0
    %5760 = vmatpush1.xpose.msra.mxu0 0.0
    %5761 = vmatprep.subr.mxu0 0.0
    %5762 = vmatpush1.xpose.msra.mxu0 0.0
    %5763 = vmatprep.subr.mxu0 0.0
    %5764 = vmatpush1.xpose.msra.mxu0 0.0
    %5765 = vmatprep.subr.mxu0 0.0
    %5766 = vmatpush1.xpose.msra.mxu0 0.0
    %5767 = vmatprep.subr.mxu0 0.0
    %5768 = vmatpush1.xpose.msra.mxu0 0.0
    %5769 = vmatprep.subr.mxu0 0.0
    %5770 = vmatpush1.xpose.msra.mxu0 0.0
    %5771 = vmatprep.subr.mxu0 0.0
    %5772 = vmatpush1.xpose.msra.mxu0 0.0
    %5773 = vmatprep.subr.mxu0 0.0
    %5774 = vmatpush1.xpose.msra.mxu0 0.0
    %5775 = vmatprep.subr.mxu0 0.0
    %5776 = vmatpush1.xpose.msra.mxu0 0.0
    %5777 = vmatprep.subr.mxu0 0.0
    %5778 = vmatpush1.xpose.msra.mxu0 %v5747
    %5779 = vmatprep.subr.mxu0 0.0
    %5780 = vmatpush1.xpose.msra.mxu0 %v5744
    %5781 = vmatprep.subr.mxu0 0.0
    %5782 = vmatpush2.xpose.msra.mxu0 0.0
    %5783 = vmatprep.subr.mxu0 0.0
    %5784 = vmatpush2.xpose.msra.mxu0 0.0
    %5785 = vmatprep.subr.mxu0 0.0
    %5786 = vmatpush2.xpose.msra.mxu0 0.0
    %5787 = vmatprep.subr.mxu0 0.0
    %5788 = vmatpush2.xpose.msra.mxu0 0.0
    %5789 = vmatprep.subr.mxu0 0.0
    %5790 = vmatpush2.xpose.msra.mxu0 0.0
    %5791 = vmatprep.subr.mxu0 0.0
    %5792 = vmatpush2.xpose.msra.mxu0 0.0
    %5793 = vmatprep.subr.mxu0 0.0
    %5794 = vmatpush2.xpose.msra.mxu0 0.0
    %5795 = vmatprep.subr.mxu0 0.0
    %5796 = vmatpush2.xpose.msra.mxu0 0.0
    %5797 = vmatprep.subr.mxu0 0.0
    %5798 = vmatpush2.xpose.msra.mxu0 0.0
    %5799 = vmatprep.subr.mxu0 0.0
    %5800 = vmatpush2.xpose.msra.mxu0 0.0
    %5801 = vmatprep.subr.mxu0 0.0
    %5802 = vmatpush2.xpose.msra.mxu0 0.0
    %5803 = vmatprep.subr.mxu0 0.0
    %5804 = vmatpush2.xpose.msra.mxu0 0.0
    %5805 = vmatprep.subr.mxu0 0.0
    %5806 = vmatpush2.xpose.msra.mxu0 0.0
    %5807 = vmatprep.subr.mxu0 0.0
    %5808 = vmatpush2.xpose.msra.mxu0 0.0
    %5809 = vmatprep.subr.mxu0 0.0
    %5810 = vmatpush2.xpose.msra.mxu0 0.0
    %5811 = vmatprep.subr.mxu0 0.0
    %5812 = vmatpush2.xpose.msra.mxu0 0.0
    %5813 = vmatprep.mubr.f32.mxu0 0.0
    %5814 = vmatmul.mubr.f32.gmra.mxu0 %v5738
    %v5815 = vpop.f32.mrf.mxu0
    %v5816 = vadd.f32 0.0, %v5815
    %v5817 = vpop.f32.mrf.mxu0
    %5818 = vmatprep.mubr.f32.mxu0 0.0
    %5819 = vmatmul.mubr.f32.gmra.mxu0 %v5741
    %v5820 = vpop.f32.mrf.mxu0
    %v5821 = vadd.f32 0.0, %v5820
    %v5822 = vpop.f32.mrf.mxu0
    %5823 = vdwg.mxu0
    %v5825 = vsel %vm1603, %v4556, 0
    %v5828 = vsel %vm1603, %v4584, 0
    %v5831 = vsel %vm1603, %v5000, 0
    %v5834 = vsel %vm1603, %v5028, 0
    %5836 = vmatprep.subr.mxu0 0.0
    %5837 = vmatpush1.xpose.msra.mxu0 0.0
    %5838 = vmatprep.subr.mxu0 0.0
    %5839 = vmatpush1.xpose.msra.mxu0 0.0
    %5840 = vmatprep.subr.mxu0 0.0
    %5841 = vmatpush1.xpose.msra.mxu0 0.0
    %5842 = vmatprep.subr.mxu0 0.0
    %5843 = vmatpush1.xpose.msra.mxu0 0.0
    %5844 = vmatprep.subr.mxu0 0.0
    %5845 = vmatpush1.xpose.msra.mxu0 0.0
    %5846 = vmatprep.subr.mxu0 0.0
    %5847 = vmatpush1.xpose.msra.mxu0 0.0
    %5848 = vmatprep.subr.mxu0 0.0
    %5849 = vmatpush1.xpose.msra.mxu0 0.0
    %5850 = vmatprep.subr.mxu0 0.0
    %5851 = vmatpush1.xpose.msra.mxu0 0.0
    %5852 = vmatprep.subr.mxu0 0.0
    %5853 = vmatpush1.xpose.msra.mxu0 0.0
    %5854 = vmatprep.subr.mxu0 0.0
    %5855 = vmatpush1.xpose.msra.mxu0 0.0
    %5856 = vmatprep.subr.mxu0 0.0
    %5857 = vmatpush1.xpose.msra.mxu0 0.0
    %5858 = vmatprep.subr.mxu0 0.0
    %5859 = vmatpush1.xpose.msra.mxu0 0.0
    %5860 = vmatprep.subr.mxu0 0.0
    %5861 = vmatpush1.xpose.msra.mxu0 0.0
    %5862 = vmatprep.subr.mxu0 0.0
    %5863 = vmatpush1.xpose.msra.mxu0 0.0
    %5864 = vmatprep.subr.mxu0 0.0
    %5865 = vmatpush1.xpose.msra.mxu0 %v5834
    %5866 = vmatprep.subr.mxu0 0.0
    %5867 = vmatpush1.xpose.msra.mxu0 %v5831
    %5868 = vmatprep.subr.mxu0 0.0
    %5869 = vmatpush2.xpose.msra.mxu0 0.0
    %5870 = vmatprep.subr.mxu0 0.0
    %5871 = vmatpush2.xpose.msra.mxu0 0.0
    %5872 = vmatprep.subr.mxu0 0.0
    %5873 = vmatpush2.xpose.msra.mxu0 0.0
    %5874 = vmatprep.subr.mxu0 0.0
    %5875 = vmatpush2.xpose.msra.mxu0 0.0
    %5876 = vmatprep.subr.mxu0 0.0
    %5877 = vmatpush2.xpose.msra.mxu0 0.0
    %5878 = vmatprep.subr.mxu0 0.0
    %5879 = vmatpush2.xpose.msra.mxu0 0.0
    %5880 = vmatprep.subr.mxu0 0.0
    %5881 = vmatpush2.xpose.msra.mxu0 0.0
    %5882 = vmatprep.subr.mxu0 0.0
    %5883 = vmatpush2.xpose.msra.mxu0 0.0
    %5884 = vmatprep.subr.mxu0 0.0
    %5885 = vmatpush2.xpose.msra.mxu0 0.0
    %5886 = vmatprep.subr.mxu0 0.0
    %5887 = vmatpush2.xpose.msra.mxu0 0.0
    %5888 = vmatprep.subr.mxu0 0.0
    %5889 = vmatpush2.xpose.msra.mxu0 0.0
    %5890 = vmatprep.subr.mxu0 0.0
    %5891 = vmatpush2.xpose.msra.mxu0 0.0
    %5892 = vmatprep.subr.mxu0 0.0
    %5893 = vmatpush2.xpose.msra.mxu0 0.0
    %5894 = vmatprep.subr.mxu0 0.0
    %5895 = vmatpush2.xpose.msra.mxu0 0.0
    %5896 = vmatprep.subr.mxu0 0.0
    %5897 = vmatpush2.xpose.msra.mxu0 0.0
    %5898 = vmatprep.subr.mxu0 0.0
    %5899 = vmatpush2.xpose.msra.mxu0 0.0
    %5900 = vmatprep.mubr.f32.mxu0 0.0
    %5901 = vmatmul.mubr.f32.gmra.mxu0 %v5825
    %v5902 = vpop.f32.mrf.mxu0
    %v5903 = vadd.f32 0.0, %v5902
    %v5904 = vpop.f32.mrf.mxu0
    %5905 = vmatprep.mubr.f32.mxu0 0.0
    %5906 = vmatmul.mubr.f32.gmra.mxu0 %v5828
    %v5907 = vpop.f32.mrf.mxu0
    %v5908 = vadd.f32 0.0, %v5907
    %v5909 = vpop.f32.mrf.mxu0
    %5910 = vdwg.mxu0
    %v5912 = vsel %vm1603, %v4557, 0
    %v5915 = vsel %vm1603, %v4592, 0
    %v5918 = vsel %vm1603, %v5001, 0
    %v5921 = vsel %vm1603, %v5036, 0
    %5923 = vmatprep.subr.mxu0 0.0
    %5924 = vmatpush1.xpose.msra.mxu0 0.0
    %5925 = vmatprep.subr.mxu0 0.0
    %5926 = vmatpush1.xpose.msra.mxu0 0.0
    %5927 = vmatprep.subr.mxu0 0.0
    %5928 = vmatpush1.xpose.msra.mxu0 0.0
    %5929 = vmatprep.subr.mxu0 0.0
    %5930 = vmatpush1.xpose.msra.mxu0 0.0
    %5931 = vmatprep.subr.mxu0 0.0
    %5932 = vmatpush1.xpose.msra.mxu0 0.0
    %5933 = vmatprep.subr.mxu0 0.0
    %5934 = vmatpush1.xpose.msra.mxu0 0.0
    %5935 = vmatprep.subr.mxu0 0.0
    %5936 = vmatpush1.xpose.msra.mxu0 0.0
    %5937 = vmatprep.subr.mxu0 0.0
    %5938 = vmatpush1.xpose.msra.mxu0 0.0
    %5939 = vmatprep.subr.mxu0 0.0
    %5940 = vmatpush1.xpose.msra.mxu0 0.0
    %5941 = vmatprep.subr.mxu0 0.0
    %5942 = vmatpush1.xpose.msra.mxu0 0.0
    %5943 = vmatprep.subr.mxu0 0.0
    %5944 = vmatpush1.xpose.msra.mxu0 0.0
    %5945 = vmatprep.subr.mxu0 0.0
    %5946 = vmatpush1.xpose.msra.mxu0 0.0
    %5947 = vmatprep.subr.mxu0 0.0
    %5948 = vmatpush1.xpose.msra.mxu0 0.0
    %5949 = vmatprep.subr.mxu0 0.0
    %5950 = vmatpush1.xpose.msra.mxu0 0.0
    %5951 = vmatprep.subr.mxu0 0.0
    %5952 = vmatpush1.xpose.msra.mxu0 %v5921
    %5953 = vmatprep.subr.mxu0 0.0
    %5954 = vmatpush1.xpose.msra.mxu0 %v5918
    %5955 = vmatprep.subr.mxu0 0.0
    %5956 = vmatpush2.xpose.msra.mxu0 0.0
    %5957 = vmatprep.subr.mxu0 0.0
    %5958 = vmatpush2.xpose.msra.mxu0 0.0
    %5959 = vmatprep.subr.mxu0 0.0
    %5960 = vmatpush2.xpose.msra.mxu0 0.0
    %5961 = vmatprep.subr.mxu0 0.0
    %5962 = vmatpush2.xpose.msra.mxu0 0.0
    %5963 = vmatprep.subr.mxu0 0.0
    %5964 = vmatpush2.xpose.msra.mxu0 0.0
    %5965 = vmatprep.subr.mxu0 0.0
    %5966 = vmatpush2.xpose.msra.mxu0 0.0
    %5967 = vmatprep.subr.mxu0 0.0
    %5968 = vmatpush2.xpose.msra.mxu0 0.0
    %5969 = vmatprep.subr.mxu0 0.0
    %5970 = vmatpush2.xpose.msra.mxu0 0.0
    %5971 = vmatprep.subr.mxu0 0.0
    %5972 = vmatpush2.xpose.msra.mxu0 0.0
    %5973 = vmatprep.subr.mxu0 0.0
    %5974 = vmatpush2.xpose.msra.mxu0 0.0
    %5975 = vmatprep.subr.mxu0 0.0
    %5976 = vmatpush2.xpose.msra.mxu0 0.0
    %5977 = vmatprep.subr.mxu0 0.0
    %5978 = vmatpush2.xpose.msra.mxu0 0.0
    %5979 = vmatprep.subr.mxu0 0.0
    %5980 = vmatpush2.xpose.msra.mxu0 0.0
    %5981 = vmatprep.subr.mxu0 0.0
    %5982 = vmatpush2.xpose.msra.mxu0 0.0
    %5983 = vmatprep.subr.mxu0 0.0
    %5984 = vmatpush2.xpose.msra.mxu0 0.0
    %5985 = vmatprep.subr.mxu0 0.0
    %5986 = vmatpush2.xpose.msra.mxu0 0.0
    %5987 = vmatprep.mubr.f32.mxu0 0.0
    %5988 = vmatmul.mubr.f32.gmra.mxu0 %v5912
    %v5989 = vpop.f32.mrf.mxu0
    %v5990 = vadd.f32 0.0, %v5989
    %v5991 = vpop.f32.mrf.mxu0
    %5992 = vmatprep.mubr.f32.mxu0 0.0
    %5993 = vmatmul.mubr.f32.gmra.mxu0 %v5915
    %v5994 = vpop.f32.mrf.mxu0
    %v5995 = vadd.f32 0.0, %v5994
    %v5996 = vpop.f32.mrf.mxu0
    %5997 = vdwg.mxu0
    %v5999 = vsel %vm1603, %v4558, 0
    %v6002 = vsel %vm1603, %v4591, 0
    %v6005 = vsel %vm1603, %v5002, 0
    %v6008 = vsel %vm1603, %v5035, 0
    %6010 = vmatprep.subr.mxu0 0.0
    %6011 = vmatpush1.xpose.msra.mxu0 0.0
    %6012 = vmatprep.subr.mxu0 0.0
    %6013 = vmatpush1.xpose.msra.mxu0 0.0
    %6014 = vmatprep.subr.mxu0 0.0
    %6015 = vmatpush1.xpose.msra.mxu0 0.0
    %6016 = vmatprep.subr.mxu0 0.0
    %6017 = vmatpush1.xpose.msra.mxu0 0.0
    %6018 = vmatprep.subr.mxu0 0.0
    %6019 = vmatpush1.xpose.msra.mxu0 0.0
    %6020 = vmatprep.subr.mxu0 0.0
    %6021 = vmatpush1.xpose.msra.mxu0 0.0
    %6022 = vmatprep.subr.mxu0 0.0
    %6023 = vmatpush1.xpose.msra.mxu0 0.0
    %6024 = vmatprep.subr.mxu0 0.0
    %6025 = vmatpush1.xpose.msra.mxu0 0.0
    %6026 = vmatprep.subr.mxu0 0.0
    %6027 = vmatpush1.xpose.msra.mxu0 0.0
    %6028 = vmatprep.subr.mxu0 0.0
    %6029 = vmatpush1.xpose.msra.mxu0 0.0
    %6030 = vmatprep.subr.mxu0 0.0
    %6031 = vmatpush1.xpose.msra.mxu0 0.0
    %6032 = vmatprep.subr.mxu0 0.0
    %6033 = vmatpush1.xpose.msra.mxu0 0.0
    %6034 = vmatprep.subr.mxu0 0.0
    %6035 = vmatpush1.xpose.msra.mxu0 0.0
    %6036 = vmatprep.subr.mxu0 0.0
    %6037 = vmatpush1.xpose.msra.mxu0 0.0
    %6038 = vmatprep.subr.mxu0 0.0
    %6039 = vmatpush1.xpose.msra.mxu0 %v6008
    %6040 = vmatprep.subr.mxu0 0.0
    %6041 = vmatpush1.xpose.msra.mxu0 %v6005
    %6042 = vmatprep.subr.mxu0 0.0
    %6043 = vmatpush2.xpose.msra.mxu0 0.0
    %6044 = vmatprep.subr.mxu0 0.0
    %6045 = vmatpush2.xpose.msra.mxu0 0.0
    %6046 = vmatprep.subr.mxu0 0.0
    %6047 = vmatpush2.xpose.msra.mxu0 0.0
    %6048 = vmatprep.subr.mxu0 0.0
    %6049 = vmatpush2.xpose.msra.mxu0 0.0
    %6050 = vmatprep.subr.mxu0 0.0
    %6051 = vmatpush2.xpose.msra.mxu0 0.0
    %6052 = vmatprep.subr.mxu0 0.0
    %6053 = vmatpush2.xpose.msra.mxu0 0.0
    %6054 = vmatprep.subr.mxu0 0.0
    %6055 = vmatpush2.xpose.msra.mxu0 0.0
    %6056 = vmatprep.subr.mxu0 0.0
    %6057 = vmatpush2.xpose.msra.mxu0 0.0
    %6058 = vmatprep.subr.mxu0 0.0
    %6059 = vmatpush2.xpose.msra.mxu0 0.0
    %6060 = vmatprep.subr.mxu0 0.0
    %6061 = vmatpush2.xpose.msra.mxu0 0.0
    %6062 = vmatprep.subr.mxu0 0.0
    %6063 = vmatpush2.xpose.msra.mxu0 0.0
    %6064 = vmatprep.subr.mxu0 0.0
    %6065 = vmatpush2.xpose.msra.mxu0 0.0
    %6066 = vmatprep.subr.mxu0 0.0
    %6067 = vmatpush2.xpose.msra.mxu0 0.0
    %6068 = vmatprep.subr.mxu0 0.0
    %6069 = vmatpush2.xpose.msra.mxu0 0.0
    %6070 = vmatprep.subr.mxu0 0.0
    %6071 = vmatpush2.xpose.msra.mxu0 0.0
    %6072 = vmatprep.subr.mxu0 0.0
    %6073 = vmatpush2.xpose.msra.mxu0 0.0
    %6074 = vmatprep.mubr.f32.mxu0 0.0
    %6075 = vmatmul.mubr.f32.gmra.mxu0 %v5999
    %v6076 = vpop.f32.mrf.mxu0
    %v6077 = vadd.f32 0.0, %v6076
    %v6078 = vpop.f32.mrf.mxu0
    %6079 = vmatprep.mubr.f32.mxu0 0.0
    %6080 = vmatmul.mubr.f32.gmra.mxu0 %v6002
    %v6081 = vpop.f32.mrf.mxu0
    %v6082 = vadd.f32 0.0, %v6081
    %v6083 = vpop.f32.mrf.mxu0
    %6084 = vdwg.mxu0
    %v6086 = vsel %vm1603, %v4559, 0
    %v6089 = vsel %vm1603, %v4593, 0
    %v6092 = vsel %vm1603, %v5003, 0
    %v6095 = vsel %vm1603, %v5037, 0
    %6097 = vmatprep.subr.mxu0 0.0
    %6098 = vmatpush1.xpose.msra.mxu0 0.0
    %6099 = vmatprep.subr.mxu0 0.0
    %6100 = vmatpush1.xpose.msra.mxu0 0.0
    %6101 = vmatprep.subr.mxu0 0.0
    %6102 = vmatpush1.xpose.msra.mxu0 0.0
    %6103 = vmatprep.subr.mxu0 0.0
    %6104 = vmatpush1.xpose.msra.mxu0 0.0
    %6105 = vmatprep.subr.mxu0 0.0
    %6106 = vmatpush1.xpose.msra.mxu0 0.0
    %6107 = vmatprep.subr.mxu0 0.0
    %6108 = vmatpush1.xpose.msra.mxu0 0.0
    %6109 = vmatprep.subr.mxu0 0.0
    %6110 = vmatpush1.xpose.msra.mxu0 0.0
    %6111 = vmatprep.subr.mxu0 0.0
    %6112 = vmatpush1.xpose.msra.mxu0 0.0
    %6113 = vmatprep.subr.mxu0 0.0
    %6114 = vmatpush1.xpose.msra.mxu0 0.0
    %6115 = vmatprep.subr.mxu0 0.0
    %6116 = vmatpush1.xpose.msra.mxu0 0.0
    %6117 = vmatprep.subr.mxu0 0.0
    %6118 = vmatpush1.xpose.msra.mxu0 0.0
    %6119 = vmatprep.subr.mxu0 0.0
    %6120 = vmatpush1.xpose.msra.mxu0 0.0
    %6121 = vmatprep.subr.mxu0 0.0
    %6122 = vmatpush1.xpose.msra.mxu0 0.0
    %6123 = vmatprep.subr.mxu0 0.0
    %6124 = vmatpush1.xpose.msra.mxu0 0.0
    %6125 = vmatprep.subr.mxu0 0.0
    %6126 = vmatpush1.xpose.msra.mxu0 %v6095
    %6127 = vmatprep.subr.mxu0 0.0
    %6128 = vmatpush1.xpose.msra.mxu0 %v6092
    %6129 = vmatprep.subr.mxu0 0.0
    %6130 = vmatpush2.xpose.msra.mxu0 0.0
    %6131 = vmatprep.subr.mxu0 0.0
    %6132 = vmatpush2.xpose.msra.mxu0 0.0
    %6133 = vmatprep.subr.mxu0 0.0
    %6134 = vmatpush2.xpose.msra.mxu0 0.0
    %6135 = vmatprep.subr.mxu0 0.0
    %6136 = vmatpush2.xpose.msra.mxu0 0.0
    %6137 = vmatprep.subr.mxu0 0.0
    %6138 = vmatpush2.xpose.msra.mxu0 0.0
    %6139 = vmatprep.subr.mxu0 0.0
    %6140 = vmatpush2.xpose.msra.mxu0 0.0
    %6141 = vmatprep.subr.mxu0 0.0
    %6142 = vmatpush2.xpose.msra.mxu0 0.0
    %6143 = vmatprep.subr.mxu0 0.0
    %6144 = vmatpush2.xpose.msra.mxu0 0.0
    %6145 = vmatprep.subr.mxu0 0.0
    %6146 = vmatpush2.xpose.msra.mxu0 0.0
    %6147 = vmatprep.subr.mxu0 0.0
    %6148 = vmatpush2.xpose.msra.mxu0 0.0
    %6149 = vmatprep.subr.mxu0 0.0
    %6150 = vmatpush2.xpose.msra.mxu0 0.0
    %6151 = vmatprep.subr.mxu0 0.0
    %6152 = vmatpush2.xpose.msra.mxu0 0.0
    %6153 = vmatprep.subr.mxu0 0.0
    %6154 = vmatpush2.xpose.msra.mxu0 0.0
    %6155 = vmatprep.subr.mxu0 0.0
    %6156 = vmatpush2.xpose.msra.mxu0 0.0
    %6157 = vmatprep.subr.mxu0 0.0
    %6158 = vmatpush2.xpose.msra.mxu0 0.0
    %6159 = vmatprep.subr.mxu0 0.0
    %6160 = vmatpush2.xpose.msra.mxu0 0.0
    %6161 = vmatprep.mubr.f32.mxu0 0.0
    %6162 = vmatmul.mubr.f32.gmra.mxu0 %v6086
    %v6163 = vpop.f32.mrf.mxu0
    %v6164 = vadd.f32 0.0, %v6163
    %v6165 = vpop.f32.mrf.mxu0
    %6166 = vmatprep.mubr.f32.mxu0 0.0
    %6167 = vmatmul.mubr.f32.gmra.mxu0 %v6089
    %v6168 = vpop.f32.mrf.mxu0
    %v6169 = vadd.f32 0.0, %v6168
    %v6170 = vpop.f32.mrf.mxu0
    %6171 = vdwg.mxu0
    %v6172 = vsel %vm2300, %v5555, -inf
    %6173 = vmax.xlane.f32.xlu0 %v6172
    %v6174 = vpop.xlane.xlu0 %6173
    %v6175 = vsel %vm2304, %v5560, -inf
    %6176 = vmax.xlane.f32.xlu0 %v6175
    %v6177 = vpop.xlane.xlu0 %6176
    %v6178 = vsel %vm2300, %v5642, -inf
    %6179 = vmax.xlane.f32.xlu0 %v6178
    %v6180 = vpop.xlane.xlu0 %6179
    %v6181 = vsel %vm2304, %v5647, -inf
    %6182 = vmax.xlane.f32.xlu0 %v6181
    %v6183 = vpop.xlane.xlu0 %6182
    %v6184 = vsel %vm2300, %v5729, -inf
    %6185 = vmax.xlane.f32.xlu0 %v6184
    %v6186 = vpop.xlane.xlu0 %6185
    %v6187 = vsel %vm2304, %v5734, -inf
    %6188 = vmax.xlane.f32.xlu0 %v6187
    %v6189 = vpop.xlane.xlu0 %6188
    %v6190 = vsel %vm2300, %v5816, -inf
    %6191 = vmax.xlane.f32.xlu0 %v6190
    %v6192 = vpop.xlane.xlu0 %6191
    %v6193 = vsel %vm2304, %v5821, -inf
    %6194 = vmax.xlane.f32.xlu0 %v6193
    %v6195 = vpop.xlane.xlu0 %6194
    %v6196 = vsel %vm2300, %v5903, -inf
    %6197 = vmax.xlane.f32.xlu0 %v6196
    %v6198 = vpop.xlane.xlu0 %6197
    %v6199 = vsel %vm2304, %v5908, -inf
    %6200 = vmax.xlane.f32.xlu0 %v6199
    %v6201 = vpop.xlane.xlu0 %6200
    %v6202 = vsel %vm2300, %v5990, -inf
    %6203 = vmax.xlane.f32.xlu0 %v6202
    %v6204 = vpop.xlane.xlu0 %6203
    %v6205 = vsel %vm2304, %v5995, -inf
    %6206 = vmax.xlane.f32.xlu0 %v6205
    %v6207 = vpop.xlane.xlu0 %6206
    %v6208 = vsel %vm2300, %v6077, -inf
    %6209 = vmax.xlane.f32.xlu0 %v6208
    %v6210 = vpop.xlane.xlu0 %6209
    %v6211 = vsel %vm2304, %v6082, -inf
    %6212 = vmax.xlane.f32.xlu0 %v6211
    %v6213 = vpop.xlane.xlu0 %6212
    %v6214 = vsel %vm2300, %v6164, -inf
    %6215 = vmax.xlane.f32.xlu0 %v6214
    %v6216 = vpop.xlane.xlu0 %6215
    %v6217 = vsel %vm2304, %v6169, -inf
    %6218 = vmax.xlane.f32.xlu0 %v6217
    %v6219 = vpop.xlane.xlu0 %6218
    %v6220 = vsub.f32 %v5555, %v6174
    %v6221 = vsub.f32 %v5560, %v6177
    %v6222 = vsub.f32 %v5642, %v6180
    %v6223 = vsub.f32 %v5647, %v6183
    %v6224 = vsub.f32 %v5729, %v6186
    %v6225 = vsub.f32 %v5734, %v6189
    %v6226 = vsub.f32 %v5816, %v6192
    %v6227 = vsub.f32 %v5821, %v6195
    %v6228 = vsub.f32 %v5903, %v6198
    %v6229 = vsub.f32 %v5908, %v6201
    %v6230 = vsub.f32 %v5990, %v6204
    %v6231 = vsub.f32 %v5995, %v6207
    %v6232 = vsub.f32 %v6077, %v6210
    %v6233 = vsub.f32 %v6082, %v6213
    %v6234 = vsub.f32 %v6164, %v6216
    %v6235 = vsub.f32 %v6169, %v6219
    %v6236 = vmul.f32 %v6220, 1.442695
    %v6237 = vpow.pop %v6236
    %v6238 = vmul.f32 %v6221, 1.442695
    %v6239 = vpow.pop %v6238
    %v6240 = vmul.f32 %v6222, 1.442695
    %v6241 = vpow.pop %v6240
    %v6242 = vmul.f32 %v6223, 1.442695
    %v6243 = vpow.pop %v6242
    %v6244 = vmul.f32 %v6224, 1.442695
    %v6245 = vpow.pop %v6244
    %v6246 = vmul.f32 %v6225, 1.442695
    %v6247 = vpow.pop %v6246
    %v6248 = vmul.f32 %v6226, 1.442695
    %v6249 = vpow.pop %v6248
    %v6250 = vmul.f32 %v6227, 1.442695
    %v6251 = vpow.pop %v6250
    %v6252 = vmul.f32 %v6228, 1.442695
    %v6253 = vpow.pop %v6252
    %v6254 = vmul.f32 %v6229, 1.442695
    %v6255 = vpow.pop %v6254
    %v6256 = vmul.f32 %v6230, 1.442695
    %v6257 = vpow.pop %v6256
    %v6258 = vmul.f32 %v6231, 1.442695
    %v6259 = vpow.pop %v6258
    %v6260 = vmul.f32 %v6232, 1.442695
    %v6261 = vpow.pop %v6260
    %v6262 = vmul.f32 %v6233, 1.442695
    %v6263 = vpow.pop %v6262
    %v6264 = vmul.f32 %v6234, 1.442695
    %v6265 = vpow.pop %v6264
    %v6266 = vmul.f32 %v6235, 1.442695
    %v6267 = vpow.pop %v6266
    %v6268 = vsel %vm2300, %v6237, 0.0
    %6269 = vadd.xlane.f32.xlu0 %v6268
    %v6270 = vpop.xlane.xlu0 %6269
    %v6271 = vsel %vm2304, %v6239, 0.0
    %6272 = vadd.xlane.f32.xlu0 %v6271
    %v6273 = vpop.xlane.xlu0 %6272
    %v6274 = vsel %vm2300, %v6241, 0.0
    %6275 = vadd.xlane.f32.xlu0 %v6274
    %v6276 = vpop.xlane.xlu0 %6275
    %v6277 = vsel %vm2304, %v6243, 0.0
    %6278 = vadd.xlane.f32.xlu0 %v6277
    %v6279 = vpop.xlane.xlu0 %6278
    %v6280 = vsel %vm2300, %v6245, 0.0
    %6281 = vadd.xlane.f32.xlu0 %v6280
    %v6282 = vpop.xlane.xlu0 %6281
    %v6283 = vsel %vm2304, %v6247, 0.0
    %6284 = vadd.xlane.f32.xlu0 %v6283
    %v6285 = vpop.xlane.xlu0 %6284
    %v6286 = vsel %vm2300, %v6249, 0.0
    %6287 = vadd.xlane.f32.xlu0 %v6286
    %v6288 = vpop.xlane.xlu0 %6287
    %v6289 = vsel %vm2304, %v6251, 0.0
    %6290 = vadd.xlane.f32.xlu0 %v6289
    %v6291 = vpop.xlane.xlu0 %6290
    %v6292 = vsel %vm2300, %v6253, 0.0
    %6293 = vadd.xlane.f32.xlu0 %v6292
    %v6294 = vpop.xlane.xlu0 %6293
    %v6295 = vsel %vm2304, %v6255, 0.0
    %6296 = vadd.xlane.f32.xlu0 %v6295
    %v6297 = vpop.xlane.xlu0 %6296
    %v6298 = vsel %vm2300, %v6257, 0.0
    %6299 = vadd.xlane.f32.xlu0 %v6298
    %v6300 = vpop.xlane.xlu0 %6299
    %v6301 = vsel %vm2304, %v6259, 0.0
    %6302 = vadd.xlane.f32.xlu0 %v6301
    %v6303 = vpop.xlane.xlu0 %6302
    %v6304 = vsel %vm2300, %v6261, 0.0
    %6305 = vadd.xlane.f32.xlu0 %v6304
    %v6306 = vpop.xlane.xlu0 %6305
    %v6307 = vsel %vm2304, %v6263, 0.0
    %6308 = vadd.xlane.f32.xlu0 %v6307
    %v6309 = vpop.xlane.xlu0 %6308
    %v6310 = vsel %vm2300, %v6265, 0.0
    %6311 = vadd.xlane.f32.xlu0 %v6310
    %v6312 = vpop.xlane.xlu0 %6311
    %v6313 = vsel %vm2304, %v6267, 0.0
    %6314 = vadd.xlane.f32.xlu0 %v6313
    %v6315 = vpop.xlane.xlu0 %6314
    %v6316 = vrcp.pop %v6270
    %v6317 = vmul.f32 %v6237, %v6316
    %v6318 = vrcp.pop %v6273
    %v6319 = vmul.f32 %v6239, %v6318
    %v6320 = vrcp.pop %v6276
    %v6321 = vmul.f32 %v6241, %v6320
    %v6322 = vrcp.pop %v6279
    %v6323 = vmul.f32 %v6243, %v6322
    %v6324 = vrcp.pop %v6282
    %v6325 = vmul.f32 %v6245, %v6324
    %v6326 = vrcp.pop %v6285
    %v6327 = vmul.f32 %v6247, %v6326
    %v6328 = vrcp.pop %v6288
    %v6329 = vmul.f32 %v6249, %v6328
    %v6330 = vrcp.pop %v6291
    %v6331 = vmul.f32 %v6251, %v6330
    %v6332 = vrcp.pop %v6294
    %v6333 = vmul.f32 %v6253, %v6332
    %v6334 = vrcp.pop %v6297
    %v6335 = vmul.f32 %v6255, %v6334
    %v6336 = vrcp.pop %v6300
    %v6337 = vmul.f32 %v6257, %v6336
    %v6338 = vrcp.pop %v6303
    %v6339 = vmul.f32 %v6259, %v6338
    %v6340 = vrcp.pop %v6306
    %v6341 = vmul.f32 %v6261, %v6340
    %v6342 = vrcp.pop %v6309
    %v6343 = vmul.f32 %v6263, %v6342
    %v6344 = vrcp.pop %v6312
    %v6345 = vmul.f32 %v6265, %v6344
    %v6346 = vrcp.pop %v6315
    %v6347 = vmul.f32 %v6267, %v6346
    %v6349 = vsel %vm2300, %v6317, 0
    %v6352 = vsel %vm2300, %v6319, 0
    %v6355 = vsel %vm2484, %v5364, 0
    %6357 = vmatprep.subr.mxu0 0.0
    %6358 = vmatpush1.msra.mxu0 0.0
    %6359 = vmatprep.subr.mxu0 0.0
    %6360 = vmatpush1.msra.mxu0 0.0
    %6361 = vmatprep.subr.mxu0 0.0
    %6362 = vmatpush1.msra.mxu0 0.0
    %6363 = vmatprep.subr.mxu0 0.0
    %6364 = vmatpush1.msra.mxu0 0.0
    %6365 = vmatprep.subr.mxu0 0.0
    %6366 = vmatpush1.msra.mxu0 0.0
    %6367 = vmatprep.subr.mxu0 0.0
    %6368 = vmatpush1.msra.mxu0 0.0
    %6369 = vmatprep.subr.mxu0 0.0
    %6370 = vmatpush1.msra.mxu0 0.0
    %6371 = vmatprep.subr.mxu0 0.0
    %6372 = vmatpush1.msra.mxu0 0.0
    %6373 = vmatprep.subr.mxu0 0.0
    %6374 = vmatpush1.msra.mxu0 0.0
    %6375 = vmatprep.subr.mxu0 0.0
    %6376 = vmatpush1.msra.mxu0 0.0
    %6377 = vmatprep.subr.mxu0 0.0
    %6378 = vmatpush1.msra.mxu0 0.0
    %6379 = vmatprep.subr.mxu0 0.0
    %6380 = vmatpush1.msra.mxu0 0.0
    %6381 = vmatprep.subr.mxu0 0.0
    %6382 = vmatpush1.msra.mxu0 0.0
    %6383 = vmatprep.subr.mxu0 0.0
    %6384 = vmatpush1.msra.mxu0 0.0
    %6385 = vmatprep.subr.mxu0 0.0
    %6386 = vmatpush1.msra.mxu0 %v6355
    %6387 = vmatprep.subr.mxu0 0.0
    %6388 = vmatpush1.msra.mxu0 %v5336
    %6389 = vmatprep.subr.mxu0 0.0
    %6390 = vmatpush2.msra.mxu0 0.0
    %6391 = vmatprep.subr.mxu0 0.0
    %6392 = vmatpush2.msra.mxu0 0.0
    %6393 = vmatprep.subr.mxu0 0.0
    %6394 = vmatpush2.msra.mxu0 0.0
    %6395 = vmatprep.subr.mxu0 0.0
    %6396 = vmatpush2.msra.mxu0 0.0
    %6397 = vmatprep.subr.mxu0 0.0
    %6398 = vmatpush2.msra.mxu0 0.0
    %6399 = vmatprep.subr.mxu0 0.0
    %6400 = vmatpush2.msra.mxu0 0.0
    %6401 = vmatprep.subr.mxu0 0.0
    %6402 = vmatpush2.msra.mxu0 0.0
    %6403 = vmatprep.subr.mxu0 0.0
    %6404 = vmatpush2.msra.mxu0 0.0
    %6405 = vmatprep.subr.mxu0 0.0
    %6406 = vmatpush2.msra.mxu0 0.0
    %6407 = vmatprep.subr.mxu0 0.0
    %6408 = vmatpush2.msra.mxu0 0.0
    %6409 = vmatprep.subr.mxu0 0.0
    %6410 = vmatpush2.msra.mxu0 0.0
    %6411 = vmatprep.subr.mxu0 0.0
    %6412 = vmatpush2.msra.mxu0 0.0
    %6413 = vmatprep.subr.mxu0 0.0
    %6414 = vmatpush2.msra.mxu0 0.0
    %6415 = vmatprep.subr.mxu0 0.0
    %6416 = vmatpush2.msra.mxu0 0.0
    %6417 = vmatprep.subr.mxu0 0.0
    %6418 = vmatpush2.msra.mxu0 0.0
    %6419 = vmatprep.subr.mxu0 0.0
    %6420 = vmatpush2.msra.mxu0 0.0
    %6421 = vmatprep.mubr.f32.mxu0 0.0
    %6422 = vmatmul.mubr.f32.gmra.mxu0 %v6349
    %v6423 = vpop.f32.mrf.mxu0
    %v6424 = vadd.f32 0.0, %v6423
    %v6425 = vpop.f32.mrf.mxu0
    %6426 = vmatprep.mubr.f32.mxu0 0.0
    %6427 = vmatmul.mubr.f32.gmra.mxu0 %v6352
    %v6428 = vpop.f32.mrf.mxu0
    %v6429 = vadd.f32 0.0, %v6428
    %v6430 = vpop.f32.mrf.mxu0
    %6431 = vdwg.mxu0
    %v6433 = vsel %vm2300, %v6321, 0
    %v6436 = vsel %vm2300, %v6323, 0
    %v6439 = vsel %vm2484, %v5372, 0
    %6441 = vmatprep.subr.mxu0 0.0
    %6442 = vmatpush1.msra.mxu0 0.0
    %6443 = vmatprep.subr.mxu0 0.0
    %6444 = vmatpush1.msra.mxu0 0.0
    %6445 = vmatprep.subr.mxu0 0.0
    %6446 = vmatpush1.msra.mxu0 0.0
    %6447 = vmatprep.subr.mxu0 0.0
    %6448 = vmatpush1.msra.mxu0 0.0
    %6449 = vmatprep.subr.mxu0 0.0
    %6450 = vmatpush1.msra.mxu0 0.0
    %6451 = vmatprep.subr.mxu0 0.0
    %6452 = vmatpush1.msra.mxu0 0.0
    %6453 = vmatprep.subr.mxu0 0.0
    %6454 = vmatpush1.msra.mxu0 0.0
    %6455 = vmatprep.subr.mxu0 0.0
    %6456 = vmatpush1.msra.mxu0 0.0
    %6457 = vmatprep.subr.mxu0 0.0
    %6458 = vmatpush1.msra.mxu0 0.0
    %6459 = vmatprep.subr.mxu0 0.0
    %6460 = vmatpush1.msra.mxu0 0.0
    %6461 = vmatprep.subr.mxu0 0.0
    %6462 = vmatpush1.msra.mxu0 0.0
    %6463 = vmatprep.subr.mxu0 0.0
    %6464 = vmatpush1.msra.mxu0 0.0
    %6465 = vmatprep.subr.mxu0 0.0
    %6466 = vmatpush1.msra.mxu0 0.0
    %6467 = vmatprep.subr.mxu0 0.0
    %6468 = vmatpush1.msra.mxu0 0.0
    %6469 = vmatprep.subr.mxu0 0.0
    %6470 = vmatpush1.msra.mxu0 %v6439
    %6471 = vmatprep.subr.mxu0 0.0
    %6472 = vmatpush1.msra.mxu0 %v5337
    %6473 = vmatprep.subr.mxu0 0.0
    %6474 = vmatpush2.msra.mxu0 0.0
    %6475 = vmatprep.subr.mxu0 0.0
    %6476 = vmatpush2.msra.mxu0 0.0
    %6477 = vmatprep.subr.mxu0 0.0
    %6478 = vmatpush2.msra.mxu0 0.0
    %6479 = vmatprep.subr.mxu0 0.0
    %6480 = vmatpush2.msra.mxu0 0.0
    %6481 = vmatprep.subr.mxu0 0.0
    %6482 = vmatpush2.msra.mxu0 0.0
    %6483 = vmatprep.subr.mxu0 0.0
    %6484 = vmatpush2.msra.mxu0 0.0
    %6485 = vmatprep.subr.mxu0 0.0
    %6486 = vmatpush2.msra.mxu0 0.0
    %6487 = vmatprep.subr.mxu0 0.0
    %6488 = vmatpush2.msra.mxu0 0.0
    %6489 = vmatprep.subr.mxu0 0.0
    %6490 = vmatpush2.msra.mxu0 0.0
    %6491 = vmatprep.subr.mxu0 0.0
    %6492 = vmatpush2.msra.mxu0 0.0
    %6493 = vmatprep.subr.mxu0 0.0
    %6494 = vmatpush2.msra.mxu0 0.0
    %6495 = vmatprep.subr.mxu0 0.0
    %6496 = vmatpush2.msra.mxu0 0.0
    %6497 = vmatprep.subr.mxu0 0.0
    %6498 = vmatpush2.msra.mxu0 0.0
    %6499 = vmatprep.subr.mxu0 0.0
    %6500 = vmatpush2.msra.mxu0 0.0
    %6501 = vmatprep.subr.mxu0 0.0
    %6502 = vmatpush2.msra.mxu0 0.0
    %6503 = vmatprep.subr.mxu0 0.0
    %6504 = vmatpush2.msra.mxu0 0.0
    %6505 = vmatprep.mubr.f32.mxu0 0.0
    %6506 = vmatmul.mubr.f32.gmra.mxu0 %v6433
    %v6507 = vpop.f32.mrf.mxu0
    %v6508 = vadd.f32 0.0, %v6507
    %v6509 = vpop.f32.mrf.mxu0
    %6510 = vmatprep.mubr.f32.mxu0 0.0
    %6511 = vmatmul.mubr.f32.gmra.mxu0 %v6436
    %v6512 = vpop.f32.mrf.mxu0
    %v6513 = vadd.f32 0.0, %v6512
    %v6514 = vpop.f32.mrf.mxu0
    %6515 = vdwg.mxu0
    %v6517 = vsel %vm2300, %v6325, 0
    %v6520 = vsel %vm2300, %v6327, 0
    %v6523 = vsel %vm2484, %v5371, 0
    %6525 = vmatprep.subr.mxu0 0.0
    %6526 = vmatpush1.msra.mxu0 0.0
    %6527 = vmatprep.subr.mxu0 0.0
    %6528 = vmatpush1.msra.mxu0 0.0
    %6529 = vmatprep.subr.mxu0 0.0
    %6530 = vmatpush1.msra.mxu0 0.0
    %6531 = vmatprep.subr.mxu0 0.0
    %6532 = vmatpush1.msra.mxu0 0.0
    %6533 = vmatprep.subr.mxu0 0.0
    %6534 = vmatpush1.msra.mxu0 0.0
    %6535 = vmatprep.subr.mxu0 0.0
    %6536 = vmatpush1.msra.mxu0 0.0
    %6537 = vmatprep.subr.mxu0 0.0
    %6538 = vmatpush1.msra.mxu0 0.0
    %6539 = vmatprep.subr.mxu0 0.0
    %6540 = vmatpush1.msra.mxu0 0.0
    %6541 = vmatprep.subr.mxu0 0.0
    %6542 = vmatpush1.msra.mxu0 0.0
    %6543 = vmatprep.subr.mxu0 0.0
    %6544 = vmatpush1.msra.mxu0 0.0
    %6545 = vmatprep.subr.mxu0 0.0
    %6546 = vmatpush1.msra.mxu0 0.0
    %6547 = vmatprep.subr.mxu0 0.0
    %6548 = vmatpush1.msra.mxu0 0.0
    %6549 = vmatprep.subr.mxu0 0.0
    %6550 = vmatpush1.msra.mxu0 0.0
    %6551 = vmatprep.subr.mxu0 0.0
    %6552 = vmatpush1.msra.mxu0 0.0
    %6553 = vmatprep.subr.mxu0 0.0
    %6554 = vmatpush1.msra.mxu0 %v6523
    %6555 = vmatprep.subr.mxu0 0.0
    %6556 = vmatpush1.msra.mxu0 %v5338
    %6557 = vmatprep.subr.mxu0 0.0
    %6558 = vmatpush2.msra.mxu0 0.0
    %6559 = vmatprep.subr.mxu0 0.0
    %6560 = vmatpush2.msra.mxu0 0.0
    %6561 = vmatprep.subr.mxu0 0.0
    %6562 = vmatpush2.msra.mxu0 0.0
    %6563 = vmatprep.subr.mxu0 0.0
    %6564 = vmatpush2.msra.mxu0 0.0
    %6565 = vmatprep.subr.mxu0 0.0
    %6566 = vmatpush2.msra.mxu0 0.0
    %6567 = vmatprep.subr.mxu0 0.0
    %6568 = vmatpush2.msra.mxu0 0.0
    %6569 = vmatprep.subr.mxu0 0.0
    %6570 = vmatpush2.msra.mxu0 0.0
    %6571 = vmatprep.subr.mxu0 0.0
    %6572 = vmatpush2.msra.mxu0 0.0
    %6573 = vmatprep.subr.mxu0 0.0
    %6574 = vmatpush2.msra.mxu0 0.0
    %6575 = vmatprep.subr.mxu0 0.0
    %6576 = vmatpush2.msra.mxu0 0.0
    %6577 = vmatprep.subr.mxu0 0.0
    %6578 = vmatpush2.msra.mxu0 0.0
    %6579 = vmatprep.subr.mxu0 0.0
    %6580 = vmatpush2.msra.mxu0 0.0
    %6581 = vmatprep.subr.mxu0 0.0
    %6582 = vmatpush2.msra.mxu0 0.0
    %6583 = vmatprep.subr.mxu0 0.0
    %6584 = vmatpush2.msra.mxu0 0.0
    %6585 = vmatprep.subr.mxu0 0.0
    %6586 = vmatpush2.msra.mxu0 0.0
    %6587 = vmatprep.subr.mxu0 0.0
    %6588 = vmatpush2.msra.mxu0 0.0
    %6589 = vmatprep.mubr.f32.mxu0 0.0
    %6590 = vmatmul.mubr.f32.gmra.mxu0 %v6517
    %v6591 = vpop.f32.mrf.mxu0
    %v6592 = vadd.f32 0.0, %v6591
    %v6593 = vpop.f32.mrf.mxu0
    %6594 = vmatprep.mubr.f32.mxu0 0.0
    %6595 = vmatmul.mubr.f32.gmra.mxu0 %v6520
    %v6596 = vpop.f32.mrf.mxu0
    %v6597 = vadd.f32 0.0, %v6596
    %v6598 = vpop.f32.mrf.mxu0
    %6599 = vdwg.mxu0
    %v6601 = vsel %vm2300, %v6329, 0
    %v6604 = vsel %vm2300, %v6331, 0
    %v6607 = vsel %vm2484, %v5373, 0
    %6609 = vmatprep.subr.mxu0 0.0
    %6610 = vmatpush1.msra.mxu0 0.0
    %6611 = vmatprep.subr.mxu0 0.0
    %6612 = vmatpush1.msra.mxu0 0.0
    %6613 = vmatprep.subr.mxu0 0.0
    %6614 = vmatpush1.msra.mxu0 0.0
    %6615 = vmatprep.subr.mxu0 0.0
    %6616 = vmatpush1.msra.mxu0 0.0
    %6617 = vmatprep.subr.mxu0 0.0
    %6618 = vmatpush1.msra.mxu0 0.0
    %6619 = vmatprep.subr.mxu0 0.0
    %6620 = vmatpush1.msra.mxu0 0.0
    %6621 = vmatprep.subr.mxu0 0.0
    %6622 = vmatpush1.msra.mxu0 0.0
    %6623 = vmatprep.subr.mxu0 0.0
    %6624 = vmatpush1.msra.mxu0 0.0
    %6625 = vmatprep.subr.mxu0 0.0
    %6626 = vmatpush1.msra.mxu0 0.0
    %6627 = vmatprep.subr.mxu0 0.0
    %6628 = vmatpush1.msra.mxu0 0.0
    %6629 = vmatprep.subr.mxu0 0.0
    %6630 = vmatpush1.msra.mxu0 0.0
    %6631 = vmatprep.subr.mxu0 0.0
    %6632 = vmatpush1.msra.mxu0 0.0
    %6633 = vmatprep.subr.mxu0 0.0
    %6634 = vmatpush1.msra.mxu0 0.0
    %6635 = vmatprep.subr.mxu0 0.0
    %6636 = vmatpush1.msra.mxu0 0.0
    %6637 = vmatprep.subr.mxu0 0.0
    %6638 = vmatpush1.msra.mxu0 %v6607
    %6639 = vmatprep.subr.mxu0 0.0
    %6640 = vmatpush1.msra.mxu0 %v5339
    %6641 = vmatprep.subr.mxu0 0.0
    %6642 = vmatpush2.msra.mxu0 0.0
    %6643 = vmatprep.subr.mxu0 0.0
    %6644 = vmatpush2.msra.mxu0 0.0
    %6645 = vmatprep.subr.mxu0 0.0
    %6646 = vmatpush2.msra.mxu0 0.0
    %6647 = vmatprep.subr.mxu0 0.0
    %6648 = vmatpush2.msra.mxu0 0.0
    %6649 = vmatprep.subr.mxu0 0.0
    %6650 = vmatpush2.msra.mxu0 0.0
    %6651 = vmatprep.subr.mxu0 0.0
    %6652 = vmatpush2.msra.mxu0 0.0
    %6653 = vmatprep.subr.mxu0 0.0
    %6654 = vmatpush2.msra.mxu0 0.0
    %6655 = vmatprep.subr.mxu0 0.0
    %6656 = vmatpush2.msra.mxu0 0.0
    %6657 = vmatprep.subr.mxu0 0.0
    %6658 = vmatpush2.msra.mxu0 0.0
    %6659 = vmatprep.subr.mxu0 0.0
    %6660 = vmatpush2.msra.mxu0 0.0
    %6661 = vmatprep.subr.mxu0 0.0
    %6662 = vmatpush2.msra.mxu0 0.0
    %6663 = vmatprep.subr.mxu0 0.0
    %6664 = vmatpush2.msra.mxu0 0.0
    %6665 = vmatprep.subr.mxu0 0.0
    %6666 = vmatpush2.msra.mxu0 0.0
    %6667 = vmatprep.subr.mxu0 0.0
    %6668 = vmatpush2.msra.mxu0 0.0
    %6669 = vmatprep.subr.mxu0 0.0
    %6670 = vmatpush2.msra.mxu0 0.0
    %6671 = vmatprep.subr.mxu0 0.0
    %6672 = vmatpush2.msra.mxu0 0.0
    %6673 = vmatprep.mubr.f32.mxu0 0.0
    %6674 = vmatmul.mubr.f32.gmra.mxu0 %v6601
    %v6675 = vpop.f32.mrf.mxu0
    %v6676 = vadd.f32 0.0, %v6675
    %v6677 = vpop.f32.mrf.mxu0
    %6678 = vmatprep.mubr.f32.mxu0 0.0
    %6679 = vmatmul.mubr.f32.gmra.mxu0 %v6604
    %v6680 = vpop.f32.mrf.mxu0
    %v6681 = vadd.f32 0.0, %v6680
    %v6682 = vpop.f32.mrf.mxu0
    %6683 = vdwg.mxu0
    %v6685 = vsel %vm2300, %v6333, 0
    %v6688 = vsel %vm2300, %v6335, 0
    %v6691 = vsel %vm2484, %v5466, 0
    %6693 = vmatprep.subr.mxu0 0.0
    %6694 = vmatpush1.msra.mxu0 0.0
    %6695 = vmatprep.subr.mxu0 0.0
    %6696 = vmatpush1.msra.mxu0 0.0
    %6697 = vmatprep.subr.mxu0 0.0
    %6698 = vmatpush1.msra.mxu0 0.0
    %6699 = vmatprep.subr.mxu0 0.0
    %6700 = vmatpush1.msra.mxu0 0.0
    %6701 = vmatprep.subr.mxu0 0.0
    %6702 = vmatpush1.msra.mxu0 0.0
    %6703 = vmatprep.subr.mxu0 0.0
    %6704 = vmatpush1.msra.mxu0 0.0
    %6705 = vmatprep.subr.mxu0 0.0
    %6706 = vmatpush1.msra.mxu0 0.0
    %6707 = vmatprep.subr.mxu0 0.0
    %6708 = vmatpush1.msra.mxu0 0.0
    %6709 = vmatprep.subr.mxu0 0.0
    %6710 = vmatpush1.msra.mxu0 0.0
    %6711 = vmatprep.subr.mxu0 0.0
    %6712 = vmatpush1.msra.mxu0 0.0
    %6713 = vmatprep.subr.mxu0 0.0
    %6714 = vmatpush1.msra.mxu0 0.0
    %6715 = vmatprep.subr.mxu0 0.0
    %6716 = vmatpush1.msra.mxu0 0.0
    %6717 = vmatprep.subr.mxu0 0.0
    %6718 = vmatpush1.msra.mxu0 0.0
    %6719 = vmatprep.subr.mxu0 0.0
    %6720 = vmatpush1.msra.mxu0 0.0
    %6721 = vmatprep.subr.mxu0 0.0
    %6722 = vmatpush1.msra.mxu0 %v6691
    %6723 = vmatprep.subr.mxu0 0.0
    %6724 = vmatpush1.msra.mxu0 %v5438
    %6725 = vmatprep.subr.mxu0 0.0
    %6726 = vmatpush2.msra.mxu0 0.0
    %6727 = vmatprep.subr.mxu0 0.0
    %6728 = vmatpush2.msra.mxu0 0.0
    %6729 = vmatprep.subr.mxu0 0.0
    %6730 = vmatpush2.msra.mxu0 0.0
    %6731 = vmatprep.subr.mxu0 0.0
    %6732 = vmatpush2.msra.mxu0 0.0
    %6733 = vmatprep.subr.mxu0 0.0
    %6734 = vmatpush2.msra.mxu0 0.0
    %6735 = vmatprep.subr.mxu0 0.0
    %6736 = vmatpush2.msra.mxu0 0.0
    %6737 = vmatprep.subr.mxu0 0.0
    %6738 = vmatpush2.msra.mxu0 0.0
    %6739 = vmatprep.subr.mxu0 0.0
    %6740 = vmatpush2.msra.mxu0 0.0
    %6741 = vmatprep.subr.mxu0 0.0
    %6742 = vmatpush2.msra.mxu0 0.0
    %6743 = vmatprep.subr.mxu0 0.0
    %6744 = vmatpush2.msra.mxu0 0.0
    %6745 = vmatprep.subr.mxu0 0.0
    %6746 = vmatpush2.msra.mxu0 0.0
    %6747 = vmatprep.subr.mxu0 0.0
    %6748 = vmatpush2.msra.mxu0 0.0
    %6749 = vmatprep.subr.mxu0 0.0
    %6750 = vmatpush2.msra.mxu0 0.0
    %6751 = vmatprep.subr.mxu0 0.0
    %6752 = vmatpush2.msra.mxu0 0.0
    %6753 = vmatprep.subr.mxu0 0.0
    %6754 = vmatpush2.msra.mxu0 0.0
    %6755 = vmatprep.subr.mxu0 0.0
    %6756 = vmatpush2.msra.mxu0 0.0
    %6757 = vmatprep.mubr.f32.mxu0 0.0
    %6758 = vmatmul.mubr.f32.gmra.mxu0 %v6685
    %v6759 = vpop.f32.mrf.mxu0
    %v6760 = vadd.f32 0.0, %v6759
    %v6761 = vpop.f32.mrf.mxu0
    %6762 = vmatprep.mubr.f32.mxu0 0.0
    %6763 = vmatmul.mubr.f32.gmra.mxu0 %v6688
    %v6764 = vpop.f32.mrf.mxu0
    %v6765 = vadd.f32 0.0, %v6764
    %v6766 = vpop.f32.mrf.mxu0
    %6767 = vdwg.mxu0
    %v6769 = vsel %vm2300, %v6337, 0
    %v6772 = vsel %vm2300, %v6339, 0
    %v6775 = vsel %vm2484, %v5474, 0
    %6777 = vmatprep.subr.mxu0 0.0
    %6778 = vmatpush1.msra.mxu0 0.0
    %6779 = vmatprep.subr.mxu0 0.0
    %6780 = vmatpush1.msra.mxu0 0.0
    %6781 = vmatprep.subr.mxu0 0.0
    %6782 = vmatpush1.msra.mxu0 0.0
    %6783 = vmatprep.subr.mxu0 0.0
    %6784 = vmatpush1.msra.mxu0 0.0
    %6785 = vmatprep.subr.mxu0 0.0
    %6786 = vmatpush1.msra.mxu0 0.0
    %6787 = vmatprep.subr.mxu0 0.0
    %6788 = vmatpush1.msra.mxu0 0.0
    %6789 = vmatprep.subr.mxu0 0.0
    %6790 = vmatpush1.msra.mxu0 0.0
    %6791 = vmatprep.subr.mxu0 0.0
    %6792 = vmatpush1.msra.mxu0 0.0
    %6793 = vmatprep.subr.mxu0 0.0
    %6794 = vmatpush1.msra.mxu0 0.0
    %6795 = vmatprep.subr.mxu0 0.0
    %6796 = vmatpush1.msra.mxu0 0.0
    %6797 = vmatprep.subr.mxu0 0.0
    %6798 = vmatpush1.msra.mxu0 0.0
    %6799 = vmatprep.subr.mxu0 0.0
    %6800 = vmatpush1.msra.mxu0 0.0
    %6801 = vmatprep.subr.mxu0 0.0
    %6802 = vmatpush1.msra.mxu0 0.0
    %6803 = vmatprep.subr.mxu0 0.0
    %6804 = vmatpush1.msra.mxu0 0.0
    %6805 = vmatprep.subr.mxu0 0.0
    %6806 = vmatpush1.msra.mxu0 %v6775
    %6807 = vmatprep.subr.mxu0 0.0
    %6808 = vmatpush1.msra.mxu0 %v5439
    %6809 = vmatprep.subr.mxu0 0.0
    %6810 = vmatpush2.msra.mxu0 0.0
    %6811 = vmatprep.subr.mxu0 0.0
    %6812 = vmatpush2.msra.mxu0 0.0
    %6813 = vmatprep.subr.mxu0 0.0
    %6814 = vmatpush2.msra.mxu0 0.0
    %6815 = vmatprep.subr.mxu0 0.0
    %6816 = vmatpush2.msra.mxu0 0.0
    %6817 = vmatprep.subr.mxu0 0.0
    %6818 = vmatpush2.msra.mxu0 0.0
    %6819 = vmatprep.subr.mxu0 0.0
    %6820 = vmatpush2.msra.mxu0 0.0
    %6821 = vmatprep.subr.mxu0 0.0
    %6822 = vmatpush2.msra.mxu0 0.0
    %6823 = vmatprep.subr.mxu0 0.0
    %6824 = vmatpush2.msra.mxu0 0.0
    %6825 = vmatprep.subr.mxu0 0.0
    %6826 = vmatpush2.msra.mxu0 0.0
    %6827 = vmatprep.subr.mxu0 0.0
    %6828 = vmatpush2.msra.mxu0 0.0
    %6829 = vmatprep.subr.mxu0 0.0
    %6830 = vmatpush2.msra.mxu0 0.0
    %6831 = vmatprep.subr.mxu0 0.0
    %6832 = vmatpush2.msra.mxu0 0.0
    %6833 = vmatprep.subr.mxu0 0.0
    %6834 = vmatpush2.msra.mxu0 0.0
    %6835 = vmatprep.subr.mxu0 0.0
    %6836 = vmatpush2.msra.mxu0 0.0
    %6837 = vmatprep.subr.mxu0 0.0
    %6838 = vmatpush2.msra.mxu0 0.0
    %6839 = vmatprep.subr.mxu0 0.0
    %6840 = vmatpush2.msra.mxu0 0.0
    %6841 = vmatprep.mubr.f32.mxu0 0.0
    %6842 = vmatmul.mubr.f32.gmra.mxu0 %v6769
    %v6843 = vpop.f32.mrf.mxu0
    %v6844 = vadd.f32 0.0, %v6843
    %v6845 = vpop.f32.mrf.mxu0
    %6846 = vmatprep.mubr.f32.mxu0 0.0
    %6847 = vmatmul.mubr.f32.gmra.mxu0 %v6772
    %v6848 = vpop.f32.mrf.mxu0
    %v6849 = vadd.f32 0.0, %v6848
    %v6850 = vpop.f32.mrf.mxu0
    %6851 = vdwg.mxu0
    %v6853 = vsel %vm2300, %v6341, 0
    %v6856 = vsel %vm2300, %v6343, 0
    %v6859 = vsel %vm2484, %v5473, 0
    %6861 = vmatprep.subr.mxu0 0.0
    %6862 = vmatpush1.msra.mxu0 0.0
    %6863 = vmatprep.subr.mxu0 0.0
    %6864 = vmatpush1.msra.mxu0 0.0
    %6865 = vmatprep.subr.mxu0 0.0
    %6866 = vmatpush1.msra.mxu0 0.0
    %6867 = vmatprep.subr.mxu0 0.0
    %6868 = vmatpush1.msra.mxu0 0.0
    %6869 = vmatprep.subr.mxu0 0.0
    %6870 = vmatpush1.msra.mxu0 0.0
    %6871 = vmatprep.subr.mxu0 0.0
    %6872 = vmatpush1.msra.mxu0 0.0
    %6873 = vmatprep.subr.mxu0 0.0
    %6874 = vmatpush1.msra.mxu0 0.0
    %6875 = vmatprep.subr.mxu0 0.0
    %6876 = vmatpush1.msra.mxu0 0.0
    %6877 = vmatprep.subr.mxu0 0.0
    %6878 = vmatpush1.msra.mxu0 0.0
    %6879 = vmatprep.subr.mxu0 0.0
    %6880 = vmatpush1.msra.mxu0 0.0
    %6881 = vmatprep.subr.mxu0 0.0
    %6882 = vmatpush1.msra.mxu0 0.0
    %6883 = vmatprep.subr.mxu0 0.0
    %6884 = vmatpush1.msra.mxu0 0.0
    %6885 = vmatprep.subr.mxu0 0.0
    %6886 = vmatpush1.msra.mxu0 0.0
    %6887 = vmatprep.subr.mxu0 0.0
    %6888 = vmatpush1.msra.mxu0 0.0
    %6889 = vmatprep.subr.mxu0 0.0
    %6890 = vmatpush1.msra.mxu0 %v6859
    %6891 = vmatprep.subr.mxu0 0.0
    %6892 = vmatpush1.msra.mxu0 %v5440
    %6893 = vmatprep.subr.mxu0 0.0
    %6894 = vmatpush2.msra.mxu0 0.0
    %6895 = vmatprep.subr.mxu0 0.0
    %6896 = vmatpush2.msra.mxu0 0.0
    %6897 = vmatprep.subr.mxu0 0.0
    %6898 = vmatpush2.msra.mxu0 0.0
    %6899 = vmatprep.subr.mxu0 0.0
    %6900 = vmatpush2.msra.mxu0 0.0
    %6901 = vmatprep.subr.mxu0 0.0
    %6902 = vmatpush2.msra.mxu0 0.0
    %6903 = vmatprep.subr.mxu0 0.0
    %6904 = vmatpush2.msra.mxu0 0.0
    %6905 = vmatprep.subr.mxu0 0.0
    %6906 = vmatpush2.msra.mxu0 0.0
    %6907 = vmatprep.subr.mxu0 0.0
    %6908 = vmatpush2.msra.mxu0 0.0
    %6909 = vmatprep.subr.mxu0 0.0
    %6910 = vmatpush2.msra.mxu0 0.0
    %6911 = vmatprep.subr.mxu0 0.0
    %6912 = vmatpush2.msra.mxu0 0.0
    %6913 = vmatprep.subr.mxu0 0.0
    %6914 = vmatpush2.msra.mxu0 0.0
    %6915 = vmatprep.subr.mxu0 0.0
    %6916 = vmatpush2.msra.mxu0 0.0
    %6917 = vmatprep.subr.mxu0 0.0
    %6918 = vmatpush2.msra.mxu0 0.0
    %6919 = vmatprep.subr.mxu0 0.0
    %6920 = vmatpush2.msra.mxu0 0.0
    %6921 = vmatprep.subr.mxu0 0.0
    %6922 = vmatpush2.msra.mxu0 0.0
    %6923 = vmatprep.subr.mxu0 0.0
    %6924 = vmatpush2.msra.mxu0 0.0
    %6925 = vmatprep.mubr.f32.mxu0 0.0
    %6926 = vmatmul.mubr.f32.gmra.mxu0 %v6853
    %v6927 = vpop.f32.mrf.mxu0
    %v6928 = vadd.f32 0.0, %v6927
    %v6929 = vpop.f32.mrf.mxu0
    %6930 = vmatprep.mubr.f32.mxu0 0.0
    %6931 = vmatmul.mubr.f32.gmra.mxu0 %v6856
    %v6932 = vpop.f32.mrf.mxu0
    %v6933 = vadd.f32 0.0, %v6932
    %v6934 = vpop.f32.mrf.mxu0
    %6935 = vdwg.mxu0
    %v6937 = vsel %vm2300, %v6345, 0
    %v6940 = vsel %vm2300, %v6347, 0
    %v6943 = vsel %vm2484, %v5475, 0
    %6945 = vmatprep.subr.mxu0 0.0
    %6946 = vmatpush1.msra.mxu0 0.0
    %6947 = vmatprep.subr.mxu0 0.0
    %6948 = vmatpush1.msra.mxu0 0.0
    %6949 = vmatprep.subr.mxu0 0.0
    %6950 = vmatpush1.msra.mxu0 0.0
    %6951 = vmatprep.subr.mxu0 0.0
    %6952 = vmatpush1.msra.mxu0 0.0
    %6953 = vmatprep.subr.mxu0 0.0
    %6954 = vmatpush1.msra.mxu0 0.0
    %6955 = vmatprep.subr.mxu0 0.0
    %6956 = vmatpush1.msra.mxu0 0.0
    %6957 = vmatprep.subr.mxu0 0.0
    %6958 = vmatpush1.msra.mxu0 0.0
    %6959 = vmatprep.subr.mxu0 0.0
    %6960 = vmatpush1.msra.mxu0 0.0
    %6961 = vmatprep.subr.mxu0 0.0
    %6962 = vmatpush1.msra.mxu0 0.0
    %6963 = vmatprep.subr.mxu0 0.0
    %6964 = vmatpush1.msra.mxu0 0.0
    %6965 = vmatprep.subr.mxu0 0.0
    %6966 = vmatpush1.msra.mxu0 0.0
    %6967 = vmatprep.subr.mxu0 0.0
    %6968 = vmatpush1.msra.mxu0 0.0
    %6969 = vmatprep.subr.mxu0 0.0
    %6970 = vmatpush1.msra.mxu0 0.0
    %6971 = vmatprep.subr.mxu0 0.0
    %6972 = vmatpush1.msra.mxu0 0.0
    %6973 = vmatprep.subr.mxu0 0.0
    %6974 = vmatpush1.msra.mxu0 %v6943
    %6975 = vmatprep.subr.mxu0 0.0
    %6976 = vmatpush1.msra.mxu0 %v5441
    %6977 = vmatprep.subr.mxu0 0.0
    %6978 = vmatpush2.msra.mxu0 0.0
    %6979 = vmatprep.subr.mxu0 0.0
    %6980 = vmatpush2.msra.mxu0 0.0
    %6981 = vmatprep.subr.mxu0 0.0
    %6982 = vmatpush2.msra.mxu0 0.0
    %6983 = vmatprep.subr.mxu0 0.0
    %6984 = vmatpush2.msra.mxu0 0.0
    %6985 = vmatprep.subr.mxu0 0.0
    %6986 = vmatpush2.msra.mxu0 0.0
    %6987 = vmatprep.subr.mxu0 0.0
    %6988 = vmatpush2.msra.mxu0 0.0
    %6989 = vmatprep.subr.mxu0 0.0
    %6990 = vmatpush2.msra.mxu0 0.0
    %6991 = vmatprep.subr.mxu0 0.0
    %6992 = vmatpush2.msra.mxu0 0.0
    %6993 = vmatprep.subr.mxu0 0.0
    %6994 = vmatpush2.msra.mxu0 0.0
    %6995 = vmatprep.subr.mxu0 0.0
    %6996 = vmatpush2.msra.mxu0 0.0
    %6997 = vmatprep.subr.mxu0 0.0
    %6998 = vmatpush2.msra.mxu0 0.0
    %6999 = vmatprep.subr.mxu0 0.0
    %7000 = vmatpush2.msra.mxu0 0.0
    %7001 = vmatprep.subr.mxu0 0.0
    %7002 = vmatpush2.msra.mxu0 0.0
    %7003 = vmatprep.subr.mxu0 0.0
    %7004 = vmatpush2.msra.mxu0 0.0
    %7005 = vmatprep.subr.mxu0 0.0
    %7006 = vmatpush2.msra.mxu0 0.0
    %7007 = vmatprep.subr.mxu0 0.0
    %7008 = vmatpush2.msra.mxu0 0.0
    %7009 = vmatprep.mubr.f32.mxu0 0.0
    %7010 = vmatmul.mubr.f32.gmra.mxu0 %v6937
    %v7011 = vpop.f32.mrf.mxu0
    %v7012 = vadd.f32 0.0, %v7011
    %v7013 = vpop.f32.mrf.mxu0
    %7014 = vmatprep.mubr.f32.mxu0 0.0
    %7015 = vmatmul.mubr.f32.gmra.mxu0 %v6940
    %v7016 = vpop.f32.mrf.mxu0
    %v7017 = vadd.f32 0.0, %v7016
    %v7018 = vpop.f32.mrf.mxu0
    %7019 = vdwg.mxu0
    %v7020 = vcombine.low %v6424, %v6592
    %v7021 = vcombine.high %v6424, %v6592
    %v7023 = vunpack.c.l.s4 1983009808
    %v7024 = vunpack.c.0.s8 %v7023
    %v7025 = vlaneseq
    %v7026 = vshrl.u32 %v7025, 7
    %v7027 = vsub.s32 %v7024, %v7026
    %v7028 = vrot.slane %v7020, %v7027
    %v7030 = vunpack.c.l.s4 1983009808
    %v7031 = vunpack.c.0.s8 %v7030
    %v7032 = vlaneseq
    %v7033 = vshrl.u32 %v7032, 7
    %v7034 = vsub.s32 %v7031, %v7033
    %v7035 = vrot.slane %v7021, %v7034
    %v7036 = vcombine.low %v6508, %v6676
    %v7037 = vcombine.high %v6508, %v6676
    %v7039 = vunpack.c.l.s4 1983009808
    %v7040 = vunpack.c.0.s8 %v7039
    %v7041 = vlaneseq
    %v7042 = vshrl.u32 %v7041, 7
    %v7043 = vsub.s32 %v7040, %v7042
    %v7044 = vrot.slane %v7036, %v7043
    %v7046 = vunpack.c.l.s4 1983009808
    %v7047 = vunpack.c.0.s8 %v7046
    %v7048 = vlaneseq
    %v7049 = vshrl.u32 %v7048, 7
    %v7050 = vsub.s32 %v7047, %v7049
    %v7051 = vrot.slane %v7037, %v7050
    %v7052 = vcombine.low %v7028, %v7044
    %v7053 = vcombine.high %v7028, %v7044
    %v7055 = vunpack.c.l.s4 1934713408
    %v7056 = vunpack.c.0.s8 %v7055
    %v7057 = vlaneseq
    %v7058 = vshrl.u32 %v7057, 7
    %v7059 = vsub.s32 %v7056, %v7058
    %v7060 = vrot.slane %v7052, %v7059
    %v7062 = vunpack.c.l.s4 1934713408
    %v7063 = vunpack.c.0.s8 %v7062
    %v7064 = vlaneseq
    %v7065 = vshrl.u32 %v7064, 7
    %v7066 = vsub.s32 %v7063, %v7065
    %v7067 = vrot.slane %v7053, %v7066
    %v7068 = vcombine.low %v7035, %v7051
    %v7069 = vcombine.high %v7035, %v7051
    %v7071 = vunpack.c.l.s4 1934713408
    %v7072 = vunpack.c.0.s8 %v7071
    %v7073 = vlaneseq
    %v7074 = vshrl.u32 %v7073, 7
    %v7075 = vsub.s32 %v7072, %v7074
    %v7076 = vrot.slane %v7068, %v7075
    %v7078 = vunpack.c.l.s4 1934713408
    %v7079 = vunpack.c.0.s8 %v7078
    %v7080 = vlaneseq
    %v7081 = vshrl.u32 %v7080, 7
    %v7082 = vsub.s32 %v7079, %v7081
    %v7083 = vrot.slane %v7069, %v7082
    %v7084 = vcombine.high %v7060, 0.0
    %v7085 = vcombine.high %v7067, 0.0
    %v7086 = vcombine.high %v7076, 0.0
    %v7087 = vcombine.high %v7083, 0.0
    %v7088 = vcombine.low %v6429, %v6597
    %v7090 = vunpack.c.l.s4 1983009808
    %v7091 = vunpack.c.0.s8 %v7090
    %v7092 = vlaneseq
    %v7093 = vshrl.u32 %v7092, 7
    %v7094 = vsub.s32 %v7091, %v7093
    %v7095 = vrot.slane %v7088, %v7094
    %v7096 = vcombine.low %v6513, %v6681
    %v7098 = vunpack.c.l.s4 1983009808
    %v7099 = vunpack.c.0.s8 %v7098
    %v7100 = vlaneseq
    %v7101 = vshrl.u32 %v7100, 7
    %v7102 = vsub.s32 %v7099, %v7101
    %v7103 = vrot.slane %v7096, %v7102
    %v7104 = vcombine.low %v7095, %v7103
    %v7105 = vcombine.high %v7095, %v7103
    %v7107 = vunpack.c.l.s4 1934713408
    %v7108 = vunpack.c.0.s8 %v7107
    %v7109 = vlaneseq
    %v7110 = vshrl.u32 %v7109, 7
    %v7111 = vsub.s32 %v7108, %v7110
    %v7112 = vrot.slane %v7104, %v7111
    %v7114 = vunpack.c.l.s4 1934713408
    %v7115 = vunpack.c.0.s8 %v7114
    %v7116 = vlaneseq
    %v7117 = vshrl.u32 %v7116, 7
    %v7118 = vsub.s32 %v7115, %v7117
    %v7119 = vrot.slane %v7105, %v7118
    %v7120 = vcombine.high %v7112, 0.0
    %v7121 = vcombine.high %v7119, 0.0
    %v7122 = vcombine.low %v6760, %v6928
    %v7123 = vcombine.high %v6760, %v6928
    %v7125 = vunpack.c.l.s4 1983009808
    %v7126 = vunpack.c.0.s8 %v7125
    %v7127 = vlaneseq
    %v7128 = vshrl.u32 %v7127, 7
    %v7129 = vsub.s32 %v7126, %v7128
    %v7130 = vrot.slane %v7122, %v7129
    %v7132 = vunpack.c.l.s4 1983009808
    %v7133 = vunpack.c.0.s8 %v7132
    %v7134 = vlaneseq
    %v7135 = vshrl.u32 %v7134, 7
    %v7136 = vsub.s32 %v7133, %v7135
    %v7137 = vrot.slane %v7123, %v7136
    %v7138 = vcombine.low %v6844, %v7012
    %v7139 = vcombine.high %v6844, %v7012
    %v7141 = vunpack.c.l.s4 1983009808
    %v7142 = vunpack.c.0.s8 %v7141
    %v7143 = vlaneseq
    %v7144 = vshrl.u32 %v7143, 7
    %v7145 = vsub.s32 %v7142, %v7144
    %v7146 = vrot.slane %v7138, %v7145
    %v7148 = vunpack.c.l.s4 1983009808
    %v7149 = vunpack.c.0.s8 %v7148
    %v7150 = vlaneseq
    %v7151 = vshrl.u32 %v7150, 7
    %v7152 = vsub.s32 %v7149, %v7151
    %v7153 = vrot.slane %v7139, %v7152
    %v7154 = vcombine.low %v7130, %v7146
    %v7155 = vcombine.high %v7130, %v7146
    %v7157 = vunpack.c.l.s4 1934713408
    %v7158 = vunpack.c.0.s8 %v7157
    %v7159 = vlaneseq
    %v7160 = vshrl.u32 %v7159, 7
    %v7161 = vsub.s32 %v7158, %v7160
    %v7162 = vrot.slane %v7154, %v7161
    %v7164 = vunpack.c.l.s4 1934713408
    %v7165 = vunpack.c.0.s8 %v7164
    %v7166 = vlaneseq
    %v7167 = vshrl.u32 %v7166, 7
    %v7168 = vsub.s32 %v7165, %v7167
    %v7169 = vrot.slane %v7155, %v7168
    %v7170 = vcombine.low %v7137, %v7153
    %v7171 = vcombine.high %v7137, %v7153
    %v7173 = vunpack.c.l.s4 1934713408
    %v7174 = vunpack.c.0.s8 %v7173
    %v7175 = vlaneseq
    %v7176 = vshrl.u32 %v7175, 7
    %v7177 = vsub.s32 %v7174, %v7176
    %v7178 = vrot.slane %v7170, %v7177
    %v7180 = vunpack.c.l.s4 1934713408
    %v7181 = vunpack.c.0.s8 %v7180
    %v7182 = vlaneseq
    %v7183 = vshrl.u32 %v7182, 7
    %v7184 = vsub.s32 %v7181, %v7183
    %v7185 = vrot.slane %v7171, %v7184
    %v7186 = vcombine.high %v7162, 0.0
    %v7187 = vcombine.high %v7169, 0.0
    %v7188 = vcombine.high %v7178, 0.0
    %v7189 = vcombine.high %v7185, 0.0
    %v7190 = vcombine.low %v6765, %v6933
    %v7192 = vunpack.c.l.s4 1983009808
    %v7193 = vunpack.c.0.s8 %v7192
    %v7194 = vlaneseq
    %v7195 = vshrl.u32 %v7194, 7
    %v7196 = vsub.s32 %v7193, %v7195
    %v7197 = vrot.slane %v7190, %v7196
    %v7198 = vcombine.low %v6849, %v7017
    %v7200 = vunpack.c.l.s4 1983009808
    %v7201 = vunpack.c.0.s8 %v7200
    %v7202 = vlaneseq
    %v7203 = vshrl.u32 %v7202, 7
    %v7204 = vsub.s32 %v7201, %v7203
    %v7205 = vrot.slane %v7198, %v7204
    %v7206 = vcombine.low %v7197, %v7205
    %v7207 = vcombine.high %v7197, %v7205
    %v7209 = vunpack.c.l.s4 1934713408
    %v7210 = vunpack.c.0.s8 %v7209
    %v7211 = vlaneseq
    %v7212 = vshrl.u32 %v7211, 7
    %v7213 = vsub.s32 %v7210, %v7212
    %v7214 = vrot.slane %v7206, %v7213
    %v7216 = vunpack.c.l.s4 1934713408
    %v7217 = vunpack.c.0.s8 %v7216
    %v7218 = vlaneseq
    %v7219 = vshrl.u32 %v7218, 7
    %v7220 = vsub.s32 %v7217, %v7219
    %v7221 = vrot.slane %v7207, %v7220
    %v7222 = vcombine.high %v7214, 0.0
    %v7223 = vcombine.high %v7221, 0.0
    %v7224 = vcombine.low %v7060, %v7067
    %v7226 = vunpack.c.l.s4 1983009808
    %v7227 = vunpack.c.0.s8 %v7226
    %v7228 = vlaneseq
    %v7229 = vshrl.u32 %v7228, 7
    %v7230 = vsub.s32 %v7227, %v7229
    %v7231 = vrot.slane %v7224, %v7230
    %v7232 = vcombine.low %v7084, %v7085
    %v7234 = vunpack.c.l.s4 1983009808
    %v7235 = vunpack.c.0.s8 %v7234
    %v7236 = vlaneseq
    %v7237 = vshrl.u32 %v7236, 7
    %v7238 = vsub.s32 %v7235, %v7237
    %v7239 = vrot.slane %v7232, %v7238
    %v7240 = vcombine.low %v7076, %v7083
    %v7242 = vunpack.c.l.s4 1983009808
    %v7243 = vunpack.c.0.s8 %v7242
    %v7244 = vlaneseq
    %v7245 = vshrl.u32 %v7244, 7
    %v7246 = vsub.s32 %v7243, %v7245
    %v7247 = vrot.slane %v7240, %v7246
    %v7248 = vcombine.low %v7086, %v7087
    %v7250 = vunpack.c.l.s4 1983009808
    %v7251 = vunpack.c.0.s8 %v7250
    %v7252 = vlaneseq
    %v7253 = vshrl.u32 %v7252, 7
    %v7254 = vsub.s32 %v7251, %v7253
    %v7255 = vrot.slane %v7248, %v7254
    %v7256 = vcombine.low %v7231, %v7239
    %v7257 = vcombine.high %v7231, %v7239
    %v7259 = vunpack.c.l.s4 1934713408
    %v7260 = vunpack.c.0.s8 %v7259
    %v7261 = vlaneseq
    %v7262 = vshrl.u32 %v7261, 7
    %v7263 = vsub.s32 %v7260, %v7262
    %v7264 = vrot.slane %v7256, %v7263
    %v7266 = vunpack.c.l.s4 1934713408
    %v7267 = vunpack.c.0.s8 %v7266
    %v7268 = vlaneseq
    %v7269 = vshrl.u32 %v7268, 7
    %v7270 = vsub.s32 %v7267, %v7269
    %v7271 = vrot.slane %v7257, %v7270
    %v7272 = vcombine.low %v7247, %v7255
    %v7273 = vcombine.high %v7247, %v7255
    %v7275 = vunpack.c.l.s4 1934713408
    %v7276 = vunpack.c.0.s8 %v7275
    %v7277 = vlaneseq
    %v7278 = vshrl.u32 %v7277, 7
    %v7279 = vsub.s32 %v7276, %v7278
    %v7280 = vrot.slane %v7272, %v7279
    %v7282 = vunpack.c.l.s4 1934713408
    %v7283 = vunpack.c.0.s8 %v7282
    %v7284 = vlaneseq
    %v7285 = vshrl.u32 %v7284, 7
    %v7286 = vsub.s32 %v7283, %v7285
    %v7287 = vrot.slane %v7273, %v7286
    %v7288 = vcombine.low %v7264, %v7280
    %v7289 = vcombine.high %v7264, %v7280
    %v7290 = vcombine.low %v7271, %v7287
    %v7291 = vcombine.high %v7271, %v7287
    %v7292 = vcombine.low %v7112, %v7119
    %v7294 = vunpack.c.l.s4 1983009808
    %v7295 = vunpack.c.0.s8 %v7294
    %v7296 = vlaneseq
    %v7297 = vshrl.u32 %v7296, 7
    %v7298 = vsub.s32 %v7295, %v7297
    %v7299 = vrot.slane %v7292, %v7298
    %v7300 = vcombine.low %v7120, %v7121
    %v7302 = vunpack.c.l.s4 1983009808
    %v7303 = vunpack.c.0.s8 %v7302
    %v7304 = vlaneseq
    %v7305 = vshrl.u32 %v7304, 7
    %v7306 = vsub.s32 %v7303, %v7305
    %v7307 = vrot.slane %v7300, %v7306
    %v7308 = vcombine.low %v7162, %v7169
    %v7310 = vunpack.c.l.s4 1983009808
    %v7311 = vunpack.c.0.s8 %v7310
    %v7312 = vlaneseq
    %v7313 = vshrl.u32 %v7312, 7
    %v7314 = vsub.s32 %v7311, %v7313
    %v7315 = vrot.slane %v7308, %v7314
    %v7316 = vcombine.low %v7186, %v7187
    %v7318 = vunpack.c.l.s4 1983009808
    %v7319 = vunpack.c.0.s8 %v7318
    %v7320 = vlaneseq
    %v7321 = vshrl.u32 %v7320, 7
    %v7322 = vsub.s32 %v7319, %v7321
    %v7323 = vrot.slane %v7316, %v7322
    %v7324 = vcombine.low %v7299, %v7307
    %v7325 = vcombine.high %v7299, %v7307
    %v7327 = vunpack.c.l.s4 1934713408
    %v7328 = vunpack.c.0.s8 %v7327
    %v7329 = vlaneseq
    %v7330 = vshrl.u32 %v7329, 7
    %v7331 = vsub.s32 %v7328, %v7330
    %v7332 = vrot.slane %v7324, %v7331
    %v7334 = vunpack.c.l.s4 1934713408
    %v7335 = vunpack.c.0.s8 %v7334
    %v7336 = vlaneseq
    %v7337 = vshrl.u32 %v7336, 7
    %v7338 = vsub.s32 %v7335, %v7337
    %v7339 = vrot.slane %v7325, %v7338
    %v7340 = vcombine.low %v7315, %v7323
    %v7341 = vcombine.high %v7315, %v7323
    %v7343 = vunpack.c.l.s4 1934713408
    %v7344 = vunpack.c.0.s8 %v7343
    %v7345 = vlaneseq
    %v7346 = vshrl.u32 %v7345, 7
    %v7347 = vsub.s32 %v7344, %v7346
    %v7348 = vrot.slane %v7340, %v7347
    %v7350 = vunpack.c.l.s4 1934713408
    %v7351 = vunpack.c.0.s8 %v7350
    %v7352 = vlaneseq
    %v7353 = vshrl.u32 %v7352, 7
    %v7354 = vsub.s32 %v7351, %v7353
    %v7355 = vrot.slane %v7341, %v7354
    %v7356 = vcombine.low %v7332, %v7348
    %v7357 = vcombine.high %v7332, %v7348
    %v7358 = vcombine.low %v7339, %v7355
    %v7359 = vcombine.high %v7339, %v7355
    %v7360 = vcombine.low %v7178, %v7185
    %v7362 = vunpack.c.l.s4 1983009808
    %v7363 = vunpack.c.0.s8 %v7362
    %v7364 = vlaneseq
    %v7365 = vshrl.u32 %v7364, 7
    %v7366 = vsub.s32 %v7363, %v7365
    %v7367 = vrot.slane %v7360, %v7366
    %v7368 = vcombine.low %v7188, %v7189
    %v7370 = vunpack.c.l.s4 1983009808
    %v7371 = vunpack.c.0.s8 %v7370
    %v7372 = vlaneseq
    %v7373 = vshrl.u32 %v7372, 7
    %v7374 = vsub.s32 %v7371, %v7373
    %v7375 = vrot.slane %v7368, %v7374
    %v7376 = vcombine.low %v7214, %v7221
    %v7378 = vunpack.c.l.s4 1983009808
    %v7379 = vunpack.c.0.s8 %v7378
    %v7380 = vlaneseq
    %v7381 = vshrl.u32 %v7380, 7
    %v7382 = vsub.s32 %v7379, %v7381
    %v7383 = vrot.slane %v7376, %v7382
    %v7384 = vcombine.low %v7222, %v7223
    %v7386 = vunpack.c.l.s4 1983009808
    %v7387 = vunpack.c.0.s8 %v7386
    %v7388 = vlaneseq
    %v7389 = vshrl.u32 %v7388, 7
    %v7390 = vsub.s32 %v7387, %v7389
    %v7391 = vrot.slane %v7384, %v7390
    %v7392 = vcombine.low %v7367, %v7375
    %v7393 = vcombine.high %v7367, %v7375
    %v7395 = vunpack.c.l.s4 1934713408
    %v7396 = vunpack.c.0.s8 %v7395
    %v7397 = vlaneseq
    %v7398 = vshrl.u32 %v7397, 7
    %v7399 = vsub.s32 %v7396, %v7398
    %v7400 = vrot.slane %v7392, %v7399
    %v7402 = vunpack.c.l.s4 1934713408
    %v7403 = vunpack.c.0.s8 %v7402
    %v7404 = vlaneseq
    %v7405 = vshrl.u32 %v7404, 7
    %v7406 = vsub.s32 %v7403, %v7405
    %v7407 = vrot.slane %v7393, %v7406
    %v7408 = vcombine.low %v7383, %v7391
    %v7409 = vcombine.high %v7383, %v7391
    %v7411 = vunpack.c.l.s4 1934713408
    %v7412 = vunpack.c.0.s8 %v7411
    %v7413 = vlaneseq
    %v7414 = vshrl.u32 %v7413, 7
    %v7415 = vsub.s32 %v7412, %v7414
    %v7416 = vrot.slane %v7408, %v7415
    %v7418 = vunpack.c.l.s4 1934713408
    %v7419 = vunpack.c.0.s8 %v7418
    %v7420 = vlaneseq
    %v7421 = vshrl.u32 %v7420, 7
    %v7422 = vsub.s32 %v7419, %v7421
    %v7423 = vrot.slane %v7409, %v7422
    %v7424 = vcombine.low %v7400, %v7416
    %v7425 = vcombine.high %v7400, %v7416
    %v7426 = vcombine.low %v7407, %v7423
    %v7427 = vcombine.high %v7407, %v7423
    %7431 = vrot.lane.b32.xlu0 %v7289, 16
    %v7432 = vpop.permute.xlu0 %7431
    %7433 = vrot.lane.b32.xlu0 %v7357, 16
    %v7434 = vpop.permute.xlu0 %7433
    %7435 = vrot.lane.b32.xlu0 %v7425, 16
    %v7436 = vpop.permute.xlu0 %7435
    %7443 = vrot.lane.b32.xlu0 %v7290, 32
    %v7444 = vpop.permute.xlu0 %7443
    %7445 = vrot.lane.b32.xlu0 %v7358, 32
    %v7446 = vpop.permute.xlu0 %7445
    %7447 = vrot.lane.b32.xlu0 %v7426, 32
    %v7448 = vpop.permute.xlu0 %7447
    %7455 = vrot.lane.b32.xlu0 %v7291, 48
    %v7456 = vpop.permute.xlu0 %7455
    %7457 = vrot.lane.b32.xlu0 %v7359, 48
    %v7458 = vpop.permute.xlu0 %7457
    %7459 = vrot.lane.b32.xlu0 %v7427, 48
    %v7460 = vpop.permute.xlu0 %7459
    %v7464 = vsel %vm1603, %v7288, %v7432
    %v7465 = vsel %vm1603, %v7356, %v7434
    %v7466 = vsel %vm1603, %v7424, %v7436
    %v7467 = vsel %vm3598, %v7464, %v7444
    %v7468 = vsel %vm3598, %v7465, %v7446
    %v7469 = vsel %vm3598, %v7466, %v7448
    %v7470 = vsel %vm3602, %v7467, %v7456
    %v7471 = vsel %vm3602, %v7468, %v7458
    %v7472 = vsel %vm3602, %v7469, %v7460
    %s7473 = scalar_lea.vmem %s6, 192
    %v7474 = vld [vmem:[%s7473] sm:$0xff]
    %v7475 = vld [vmem:[%s7473 + $0x8] sm:$0xff]
    %v7476 = vld [vmem:[%s7473 + $0x10] sm:$0xff]
    %v7477 = vld [vmem:[%s7473 + $0x18] sm:$0xff]
    %v7478 = vld [vmem:[%s7473 + $0x20] sm:$0xff]
    %v7479 = vld [vmem:[%s7473 + $0x28] sm:$0xff]
    %v7480 = vld [vmem:[%s7473 + $0x30] sm:$0xff]
    %v7481 = vld [vmem:[%s7473 + $0x38] sm:$0xff]
    %v7482 = vlaneseq
    %v7483 = vshrl.u32 %v7482, 7
    %v7484 = vsub.s32 0, %v7483
    %v7485 = vrot.slane %v4027, %v7484
    %v7487 = vsel %vm190, %v7470, 0
    %v7490 = vsel %vm190, %v7471, 0
    %v7493 = vsel %vm190, %v7472, 0
    %7495 = vmatprep.subr.mxu0 0.0
    %7496 = vmatpush1.msra.mxu0 0.0
    %7497 = vmatprep.subr.mxu0 0.0
    %7498 = vmatpush1.msra.mxu0 0.0
    %7499 = vmatprep.subr.mxu0 0.0
    %7500 = vmatpush1.msra.mxu0 0.0
    %7501 = vmatprep.subr.mxu0 0.0
    %7502 = vmatpush1.msra.mxu0 0.0
    %7503 = vmatprep.subr.mxu0 0.0
    %7504 = vmatpush1.msra.mxu0 0.0
    %7505 = vmatprep.subr.mxu0 0.0
    %7506 = vmatpush1.msra.mxu0 0.0
    %7507 = vmatprep.subr.mxu0 0.0
    %7508 = vmatpush1.msra.mxu0 0.0
    %7509 = vmatprep.subr.mxu0 0.0
    %7510 = vmatpush1.msra.mxu0 0.0
    %7511 = vmatprep.subr.mxu0 0.0
    %7512 = vmatpush1.msra.mxu0 %v7481
    %7513 = vmatprep.subr.mxu0 0.0
    %7514 = vmatpush1.msra.mxu0 %v7480
    %7515 = vmatprep.subr.mxu0 0.0
    %7516 = vmatpush1.msra.mxu0 %v7479
    %7517 = vmatprep.subr.mxu0 0.0
    %7518 = vmatpush1.msra.mxu0 %v7478
    %7519 = vmatprep.subr.mxu0 0.0
    %7520 = vmatpush1.msra.mxu0 %v7477
    %7521 = vmatprep.subr.mxu0 0.0
    %7522 = vmatpush1.msra.mxu0 %v7476
    %7523 = vmatprep.subr.mxu0 0.0
    %7524 = vmatpush1.msra.mxu0 %v7475
    %7525 = vmatprep.subr.mxu0 0.0
    %7526 = vmatpush1.msra.mxu0 %v7474
    %7527 = vmatprep.subr.mxu0 0.0
    %7528 = vmatpush2.msra.mxu0 0.0
    %7529 = vmatprep.subr.mxu0 0.0
    %7530 = vmatpush2.msra.mxu0 0.0
    %7531 = vmatprep.subr.mxu0 0.0
    %7532 = vmatpush2.msra.mxu0 0.0
    %7533 = vmatprep.subr.mxu0 0.0
    %7534 = vmatpush2.msra.mxu0 0.0
    %7535 = vmatprep.subr.mxu0 0.0
    %7536 = vmatpush2.msra.mxu0 0.0
    %7537 = vmatprep.subr.mxu0 0.0
    %7538 = vmatpush2.msra.mxu0 0.0
    %7539 = vmatprep.subr.mxu0 0.0
    %7540 = vmatpush2.msra.mxu0 0.0
    %7541 = vmatprep.subr.mxu0 0.0
    %7542 = vmatpush2.msra.mxu0 0.0
    %7543 = vmatprep.subr.mxu0 0.0
    %7544 = vmatpush2.msra.mxu0 0.0
    %7545 = vmatprep.subr.mxu0 0.0
    %7546 = vmatpush2.msra.mxu0 0.0
    %7547 = vmatprep.subr.mxu0 0.0
    %7548 = vmatpush2.msra.mxu0 0.0
    %7549 = vmatprep.subr.mxu0 0.0
    %7550 = vmatpush2.msra.mxu0 0.0
    %7551 = vmatprep.subr.mxu0 0.0
    %7552 = vmatpush2.msra.mxu0 0.0
    %7553 = vmatprep.subr.mxu0 0.0
    %7554 = vmatpush2.msra.mxu0 0.0
    %7555 = vmatprep.subr.mxu0 0.0
    %7556 = vmatpush2.msra.mxu0 0.0
    %7557 = vmatprep.subr.mxu0 0.0
    %7558 = vmatpush2.msra.mxu0 0.0
    %7559 = vmatprep.mubr.f32.mxu0 0.0
    %7560 = vmatmul.mubr.f32.gmra.mxu0 %v7487
    %v7561 = vpop.f32.mrf.mxu0
    %v7562 = vadd.f32 %v7485, %v7561
    %v7563 = vpop.f32.mrf.mxu0
    %7564 = vmatprep.mubr.f32.mxu0 0.0
    %7565 = vmatmul.mubr.f32.gmra.mxu0 %v7490
    %v7566 = vpop.f32.mrf.mxu0
    %v7567 = vadd.f32 %v7485, %v7566
    %v7568 = vpop.f32.mrf.mxu0
    %7569 = vmatprep.mubr.f32.mxu0 0.0
    %7570 = vmatmul.mubr.f32.gmra.mxu0 %v7493
    %v7571 = vpop.f32.mrf.mxu0
    %v7572 = vadd.f32 %v7485, %v7571
    %v7573 = vpop.f32.mrf.mxu0
    %7574 = vdwg.mxu0
    %v7575 = vadd.f32 %v4024, %v7562
    %v7576 = vadd.f32 %v4025, %v7567
    %v7577 = vadd.f32 %v4026, %v7572
    %v7578 = vsel %vm190, %v7575, 0.0
    %7579 = vadd.xlane.f32.xlu0 %v7578
    %v7580 = vpop.xlane.xlu0 %7579
    %v7581 = vsel %vm190, %v7576, 0.0
    %7582 = vadd.xlane.f32.xlu0 %v7581
    %v7583 = vpop.xlane.xlu0 %7582
    %v7584 = vsel %vm190, %v7577, 0.0
    %7585 = vadd.xlane.f32.xlu0 %v7584
    %v7586 = vpop.xlane.xlu0 %7585
    %v7587 = vmul.f32 %v7580, %v3719
    %v7588 = vmul.f32 %v7583, %v3719
    %v7589 = vmul.f32 %v7586, %v3719
    %v7590 = vsub.f32 %v7575, %v7587
    %v7591 = vsub.f32 %v7576, %v7588
    %v7592 = vsub.f32 %v7577, %v7589
    %v7593 = vmul.f32 %v7590, %v7590
    %v7594 = vmul.f32 %v7591, %v7591
    %v7595 = vmul.f32 %v7592, %v7592
    %v7596 = vsel %vm190, %v7593, 0.0
    %7597 = vadd.xlane.f32.xlu0 %v7596
    %v7598 = vpop.xlane.xlu0 %7597
    %v7599 = vsel %vm190, %v7594, 0.0
    %7600 = vadd.xlane.f32.xlu0 %v7599
    %v7601 = vpop.xlane.xlu0 %7600
    %v7602 = vsel %vm190, %v7595, 0.0
    %7603 = vadd.xlane.f32.xlu0 %v7602
    %v7604 = vpop.xlane.xlu0 %7603
    %v7605 = vmul.f32 %v7598, %v3719
    %v7606 = vmul.f32 %v7601, %v3719
    %v7607 = vmul.f32 %v7604, %v3719
    %v7608 = vadd.f32 %v7605, 1e-05
    %v7609 = vadd.f32 %v7606, 1e-05
    %v7610 = vadd.f32 %v7607, 1e-05
    %v7611 = vrsqrt.pop %v7608
    %v7612 = vrsqrt.pop %v7609
    %v7613 = vrsqrt.pop %v7610
    %v7614 = vmul.f32 %v7590, %v7611
    %v7615 = vmul.f32 %v7591, %v7612
    %v7616 = vmul.f32 %v7592, %v7613
    %v7617 = vlaneseq
    %v7618 = vshrl.u32 %v7617, 7
    %v7619 = vsub.s32 0, %v7618
    %v7620 = vrot.slane %v4030, %v7619
    %v7621 = vmul.f32 %v7614, %v7620
    %v7622 = vmul.f32 %v7615, %v7620
    %v7623 = vmul.f32 %v7616, %v7620
    %v7624 = vlaneseq
    %v7625 = vshrl.u32 %v7624, 7
    %v7626 = vsub.s32 0, %v7625
    %v7627 = vrot.slane %v4031, %v7626
    %v7628 = vadd.f32 %v7621, %v7627
    %v7629 = vadd.f32 %v7622, %v7627
    %v7630 = vadd.f32 %v7623, %v7627
    %s7631 = scalar_lea.vmem %s6, 256
    %v7632 = vld [vmem:[%s7631] sm:$0xff]
    %v7633 = vld [vmem:[%s7631 + $0x8] sm:$0xff]
    %v7634 = vld [vmem:[%s7631 + $0x10] sm:$0xff]
    %v7635 = vld [vmem:[%s7631 + $0x18] sm:$0xff]
    %v7636 = vld [vmem:[%s7631 + $0x20] sm:$0xff]
    %v7637 = vld [vmem:[%s7631 + $0x28] sm:$0xff]
    %v7638 = vld [vmem:[%s7631 + $0x30] sm:$0xff]
    %v7639 = vld [vmem:[%s7631 + $0x38] sm:$0xff]
    %v7640 = vlaneseq
    %v7641 = vshrl.u32 %v7640, 7
    %v7642 = vsub.s32 0, %v7641
    %v7643 = vrot.slane %v4028, %v7642
    %v7645 = vsel %vm190, %v7628, 0
    %v7648 = vsel %vm190, %v7629, 0
    %v7651 = vsel %vm190, %v7630, 0
    %7653 = vmatprep.subr.mxu0 0.0
    %7654 = vmatpush1.msra.mxu0 0.0
    %7655 = vmatprep.subr.mxu0 0.0
    %7656 = vmatpush1.msra.mxu0 0.0
    %7657 = vmatprep.subr.mxu0 0.0
    %7658 = vmatpush1.msra.mxu0 0.0
    %7659 = vmatprep.subr.mxu0 0.0
    %7660 = vmatpush1.msra.mxu0 0.0
    %7661 = vmatprep.subr.mxu0 0.0
    %7662 = vmatpush1.msra.mxu0 0.0
    %7663 = vmatprep.subr.mxu0 0.0
    %7664 = vmatpush1.msra.mxu0 0.0
    %7665 = vmatprep.subr.mxu0 0.0
    %7666 = vmatpush1.msra.mxu0 0.0
    %7667 = vmatprep.subr.mxu0 0.0
    %7668 = vmatpush1.msra.mxu0 0.0
    %7669 = vmatprep.subr.mxu0 0.0
    %7670 = vmatpush1.msra.mxu0 %v7639
    %7671 = vmatprep.subr.mxu0 0.0
    %7672 = vmatpush1.msra.mxu0 %v7638
    %7673 = vmatprep.subr.mxu0 0.0
    %7674 = vmatpush1.msra.mxu0 %v7637
    %7675 = vmatprep.subr.mxu0 0.0
    %7676 = vmatpush1.msra.mxu0 %v7636
    %7677 = vmatprep.subr.mxu0 0.0
    %7678 = vmatpush1.msra.mxu0 %v7635
    %7679 = vmatprep.subr.mxu0 0.0
    %7680 = vmatpush1.msra.mxu0 %v7634
    %7681 = vmatprep.subr.mxu0 0.0
    %7682 = vmatpush1.msra.mxu0 %v7633
    %7683 = vmatprep.subr.mxu0 0.0
    %7684 = vmatpush1.msra.mxu0 %v7632
    %7685 = vmatprep.subr.mxu0 0.0
    %7686 = vmatpush2.msra.mxu0 0.0
    %7687 = vmatprep.subr.mxu0 0.0
    %7688 = vmatpush2.msra.mxu0 0.0
    %7689 = vmatprep.subr.mxu0 0.0
    %7690 = vmatpush2.msra.mxu0 0.0
    %7691 = vmatprep.subr.mxu0 0.0
    %7692 = vmatpush2.msra.mxu0 0.0
    %7693 = vmatprep.subr.mxu0 0.0
    %7694 = vmatpush2.msra.mxu0 0.0
    %7695 = vmatprep.subr.mxu0 0.0
    %7696 = vmatpush2.msra.mxu0 0.0
    %7697 = vmatprep.subr.mxu0 0.0
    %7698 = vmatpush2.msra.mxu0 0.0
    %7699 = vmatprep.subr.mxu0 0.0
    %7700 = vmatpush2.msra.mxu0 0.0
    %7701 = vmatprep.subr.mxu0 0.0
    %7702 = vmatpush2.msra.mxu0 0.0
    %7703 = vmatprep.subr.mxu0 0.0
    %7704 = vmatpush2.msra.mxu0 0.0
    %7705 = vmatprep.subr.mxu0 0.0
    %7706 = vmatpush2.msra.mxu0 0.0
    %7707 = vmatprep.subr.mxu0 0.0
    %7708 = vmatpush2.msra.mxu0 0.0
    %7709 = vmatprep.subr.mxu0 0.0
    %7710 = vmatpush2.msra.mxu0 0.0
    %7711 = vmatprep.subr.mxu0 0.0
    %7712 = vmatpush2.msra.mxu0 0.0
    %7713 = vmatprep.subr.mxu0 0.0
    %7714 = vmatpush2.msra.mxu0 0.0
    %7715 = vmatprep.subr.mxu0 0.0
    %7716 = vmatpush2.msra.mxu0 0.0
    %7717 = vmatprep.mubr.f32.mxu0 0.0
    %7718 = vmatmul.mubr.f32.gmra.mxu0 %v7645
    %v7719 = vpop.f32.mrf.mxu0
    %v7720 = vadd.f32 %v7643, %v7719
    %v7721 = vpop.f32.mrf.mxu0
    %7722 = vmatprep.mubr.f32.mxu0 0.0
    %7723 = vmatmul.mubr.f32.gmra.mxu0 %v7648
    %v7724 = vpop.f32.mrf.mxu0
    %v7725 = vadd.f32 %v7643, %v7724
    %v7726 = vpop.f32.mrf.mxu0
    %7727 = vmatprep.mubr.f32.mxu0 0.0
    %7728 = vmatmul.mubr.f32.gmra.mxu0 %v7651
    %v7729 = vpop.f32.mrf.mxu0
    %v7730 = vadd.f32 %v7643, %v7729
    %v7731 = vpop.f32.mrf.mxu0
    %7732 = vdwg.mxu0
    %v7733 = vmax.f32 %v7720, 0.0
    %v7734 = vmax.f32 %v7725, 0.0
    %v7735 = vmax.f32 %v7730, 0.0
    %s7736 = scalar_lea.vmem %s6, 320
    %v7737 = vld [vmem:[%s7736] sm:$0xff]
    %v7738 = vld [vmem:[%s7736 + $0x8] sm:$0xff]
    %v7739 = vld [vmem:[%s7736 + $0x10] sm:$0xff]
    %v7740 = vld [vmem:[%s7736 + $0x18] sm:$0xff]
    %v7741 = vld [vmem:[%s7736 + $0x20] sm:$0xff]
    %v7742 = vld [vmem:[%s7736 + $0x28] sm:$0xff]
    %v7743 = vld [vmem:[%s7736 + $0x30] sm:$0xff]
    %v7744 = vld [vmem:[%s7736 + $0x38] sm:$0xff]
    %v7745 = vlaneseq
    %v7746 = vshrl.u32 %v7745, 7
    %v7747 = vsub.s32 0, %v7746
    %v7748 = vrot.slane %v4029, %v7747
    %v7750 = vsel %vm190, %v7733, 0
    %v7753 = vsel %vm190, %v7734, 0
    %v7756 = vsel %vm190, %v7735, 0
    %7758 = vmatprep.subr.mxu0 0.0
    %7759 = vmatpush1.msra.mxu0 0.0
    %7760 = vmatprep.subr.mxu0 0.0
    %7761 = vmatpush1.msra.mxu0 0.0
    %7762 = vmatprep.subr.mxu0 0.0
    %7763 = vmatpush1.msra.mxu0 0.0
    %7764 = vmatprep.subr.mxu0 0.0
    %7765 = vmatpush1.msra.mxu0 0.0
    %7766 = vmatprep.subr.mxu0 0.0
    %7767 = vmatpush1.msra.mxu0 0.0
    %7768 = vmatprep.subr.mxu0 0.0
    %7769 = vmatpush1.msra.mxu0 0.0
    %7770 = vmatprep.subr.mxu0 0.0
    %7771 = vmatpush1.msra.mxu0 0.0
    %7772 = vmatprep.subr.mxu0 0.0
    %7773 = vmatpush1.msra.mxu0 0.0
    %7774 = vmatprep.subr.mxu0 0.0
    %7775 = vmatpush1.msra.mxu0 %v7744
    %7776 = vmatprep.subr.mxu0 0.0
    %7777 = vmatpush1.msra.mxu0 %v7743
    %7778 = vmatprep.subr.mxu0 0.0
    %7779 = vmatpush1.msra.mxu0 %v7742
    %7780 = vmatprep.subr.mxu0 0.0
    %7781 = vmatpush1.msra.mxu0 %v7741
    %7782 = vmatprep.subr.mxu0 0.0
    %7783 = vmatpush1.msra.mxu0 %v7740
    %7784 = vmatprep.subr.mxu0 0.0
    %7785 = vmatpush1.msra.mxu0 %v7739
    %7786 = vmatprep.subr.mxu0 0.0
    %7787 = vmatpush1.msra.mxu0 %v7738
    %7788 = vmatprep.subr.mxu0 0.0
    %7789 = vmatpush1.msra.mxu0 %v7737
    %7790 = vmatprep.subr.mxu0 0.0
    %7791 = vmatpush2.msra.mxu0 0.0
    %7792 = vmatprep.subr.mxu0 0.0
    %7793 = vmatpush2.msra.mxu0 0.0
    %7794 = vmatprep.subr.mxu0 0.0
    %7795 = vmatpush2.msra.mxu0 0.0
    %7796 = vmatprep.subr.mxu0 0.0
    %7797 = vmatpush2.msra.mxu0 0.0
    %7798 = vmatprep.subr.mxu0 0.0
    %7799 = vmatpush2.msra.mxu0 0.0
    %7800 = vmatprep.subr.mxu0 0.0
    %7801 = vmatpush2.msra.mxu0 0.0
    %7802 = vmatprep.subr.mxu0 0.0
    %7803 = vmatpush2.msra.mxu0 0.0
    %7804 = vmatprep.subr.mxu0 0.0
    %7805 = vmatpush2.msra.mxu0 0.0
    %7806 = vmatprep.subr.mxu0 0.0
    %7807 = vmatpush2.msra.mxu0 0.0
    %7808 = vmatprep.subr.mxu0 0.0
    %7809 = vmatpush2.msra.mxu0 0.0
    %7810 = vmatprep.subr.mxu0 0.0
    %7811 = vmatpush2.msra.mxu0 0.0
    %7812 = vmatprep.subr.mxu0 0.0
    %7813 = vmatpush2.msra.mxu0 0.0
    %7814 = vmatprep.subr.mxu0 0.0
    %7815 = vmatpush2.msra.mxu0 0.0
    %7816 = vmatprep.subr.mxu0 0.0
    %7817 = vmatpush2.msra.mxu0 0.0
    %7818 = vmatprep.subr.mxu0 0.0
    %7819 = vmatpush2.msra.mxu0 0.0
    %7820 = vmatprep.subr.mxu0 0.0
    %7821 = vmatpush2.msra.mxu0 0.0
    %7822 = vmatprep.mubr.f32.mxu0 0.0
    %7823 = vmatmul.mubr.f32.gmra.mxu0 %v7750
    %v7824 = vpop.f32.mrf.mxu0
    %v7825 = vadd.f32 %v7748, %v7824
    %v7826 = vpop.f32.mrf.mxu0
    %7827 = vmatprep.mubr.f32.mxu0 0.0
    %7828 = vmatmul.mubr.f32.gmra.mxu0 %v7753
    %v7829 = vpop.f32.mrf.mxu0
    %v7830 = vadd.f32 %v7748, %v7829
    %v7831 = vpop.f32.mrf.mxu0
    %7832 = vmatprep.mubr.f32.mxu0 0.0
    %7833 = vmatmul.mubr.f32.gmra.mxu0 %v7756
    %v7834 = vpop.f32.mrf.mxu0
    %v7835 = vadd.f32 %v7748, %v7834
    %v7836 = vpop.f32.mrf.mxu0
    %7837 = vdwg.mxu0
    %v7838 = vadd.f32 %v7628, %v7825
    %v7839 = vadd.f32 %v7629, %v7830
    %v7840 = vadd.f32 %v7630, %v7835
    %v7841 = vsel %vm190, %v7838, 0.0
    %7842 = vadd.xlane.f32.xlu0 %v7841
    %v7843 = vpop.xlane.xlu0 %7842
    %v7844 = vsel %vm190, %v7839, 0.0
    %7845 = vadd.xlane.f32.xlu0 %v7844
    %v7846 = vpop.xlane.xlu0 %7845
    %v7847 = vsel %vm190, %v7840, 0.0
    %7848 = vadd.xlane.f32.xlu0 %v7847
    %v7849 = vpop.xlane.xlu0 %7848
    %v7850 = vmul.f32 %v7843, %v3719
    %v7851 = vmul.f32 %v7846, %v3719
    %v7852 = vmul.f32 %v7849, %v3719
    %v7853 = vsub.f32 %v7838, %v7850
    %v7854 = vsub.f32 %v7839, %v7851
    %v7855 = vsub.f32 %v7840, %v7852
    %v7856 = vmul.f32 %v7853, %v7853
    %v7857 = vmul.f32 %v7854, %v7854
    %v7858 = vmul.f32 %v7855, %v7855
    %v7859 = vsel %vm190, %v7856, 0.0
    %7860 = vadd.xlane.f32.xlu0 %v7859
    %v7861 = vpop.xlane.xlu0 %7860
    %v7862 = vsel %vm190, %v7857, 0.0
    %7863 = vadd.xlane.f32.xlu0 %v7862
    %v7864 = vpop.xlane.xlu0 %7863
    %v7865 = vsel %vm190, %v7858, 0.0
    %7866 = vadd.xlane.f32.xlu0 %v7865
    %v7867 = vpop.xlane.xlu0 %7866
    %v7868 = vmul.f32 %v7861, %v3719
    %v7869 = vmul.f32 %v7864, %v3719
    %v7870 = vmul.f32 %v7867, %v3719
    %v7871 = vadd.f32 %v7868, 1e-05
    %v7872 = vadd.f32 %v7869, 1e-05
    %v7873 = vadd.f32 %v7870, 1e-05
    %v7874 = vrsqrt.pop %v7871
    %v7875 = vrsqrt.pop %v7872
    %v7876 = vrsqrt.pop %v7873
    %v7877 = vmul.f32 %v7853, %v7874
    %v7878 = vmul.f32 %v7854, %v7875
    %v7879 = vmul.f32 %v7855, %v7876
    %v7880 = vlaneseq
    %v7881 = vshrl.u32 %v7880, 7
    %v7882 = vsub.s32 0, %v7881
    %v7883 = vrot.slane %v4032, %v7882
    %v7884 = vmul.f32 %v7877, %v7883
    %v7885 = vmul.f32 %v7878, %v7883
    %v7886 = vmul.f32 %v7879, %v7883
    %v7887 = vlaneseq
    %v7888 = vshrl.u32 %v7887, 7
    %v7889 = vsub.s32 0, %v7888
    %v7890 = vrot.slane %v4033, %v7889
    %v7891 = vadd.f32 %v7884, %v7890
    %v7892 = vadd.f32 %v7885, %v7890
    %v7893 = vadd.f32 %v7886, %v7890
    %v7894 = vld [vmem:[%s7 + $0x1] sm:$0x1]
    %v7895 = vld [vmem:[%s3] sm:$0xff]
    %v7896 = vld [vmem:[%s3 + $0x8] sm:$0xff]
    %v7897 = vld [vmem:[%s3 + $0x10] sm:$0xff]
    %v7898 = vld [vmem:[%s3 + $0x18] sm:$0xff]
    %v7899 = vld [vmem:[%s3 + $0x20] sm:$0xff]
    %v7900 = vld [vmem:[%s3 + $0x28] sm:$0xff]
    %v7901 = vld [vmem:[%s3 + $0x30] sm:$0xff]
    %v7902 = vld [vmem:[%s3 + $0x38] sm:$0xff]
    %v7903 = vlaneseq
    %v7904 = vshrl.u32 %v7903, 7
    %v7905 = vsub.s32 0, %v7904
    %v7906 = vrot.slane %v7894, %v7905
    %v7908 = vsel %vm190, %v7891, 0
    %v7911 = vsel %vm190, %v7892, 0
    %v7914 = vsel %vm190, %v7893, 0
    %7916 = vmatprep.subr.mxu0 0.0
    %7917 = vmatpush1.msra.mxu0 0.0
    %7918 = vmatprep.subr.mxu0 0.0
    %7919 = vmatpush1.msra.mxu0 0.0
    %7920 = vmatprep.subr.mxu0 0.0
    %7921 = vmatpush1.msra.mxu0 0.0
    %7922 = vmatprep.subr.mxu0 0.0
    %7923 = vmatpush1.msra.mxu0 0.0
    %7924 = vmatprep.subr.mxu0 0.0
    %7925 = vmatpush1.msra.mxu0 0.0
    %7926 = vmatprep.subr.mxu0 0.0
    %7927 = vmatpush1.msra.mxu0 0.0
    %7928 = vmatprep.subr.mxu0 0.0
    %7929 = vmatpush1.msra.mxu0 0.0
    %7930 = vmatprep.subr.mxu0 0.0
    %7931 = vmatpush1.msra.mxu0 0.0
    %7932 = vmatprep.subr.mxu0 0.0
    %7933 = vmatpush1.msra.mxu0 %v7902
    %7934 = vmatprep.subr.mxu0 0.0
    %7935 = vmatpush1.msra.mxu0 %v7901
    %7936 = vmatprep.subr.mxu0 0.0
    %7937 = vmatpush1.msra.mxu0 %v7900
    %7938 = vmatprep.subr.mxu0 0.0
    %7939 = vmatpush1.msra.mxu0 %v7899
    %7940 = vmatprep.subr.mxu0 0.0
    %7941 = vmatpush1.msra.mxu0 %v7898
    %7942 = vmatprep.subr.mxu0 0.0
    %7943 = vmatpush1.msra.mxu0 %v7897
    %7944 = vmatprep.subr.mxu0 0.0
    %7945 = vmatpush1.msra.mxu0 %v7896
    %7946 = vmatprep.subr.mxu0 0.0
    %7947 = vmatpush1.msra.mxu0 %v7895
    %7948 = vmatprep.subr.mxu0 0.0
    %7949 = vmatpush2.msra.mxu0 0.0
    %7950 = vmatprep.subr.mxu0 0.0
    %7951 = vmatpush2.msra.mxu0 0.0
    %7952 = vmatprep.subr.mxu0 0.0
    %7953 = vmatpush2.msra.mxu0 0.0
    %7954 = vmatprep.subr.mxu0 0.0
    %7955 = vmatpush2.msra.mxu0 0.0
    %7956 = vmatprep.subr.mxu0 0.0
    %7957 = vmatpush2.msra.mxu0 0.0
    %7958 = vmatprep.subr.mxu0 0.0
    %7959 = vmatpush2.msra.mxu0 0.0
    %7960 = vmatprep.subr.mxu0 0.0
    %7961 = vmatpush2.msra.mxu0 0.0
    %7962 = vmatprep.subr.mxu0 0.0
    %7963 = vmatpush2.msra.mxu0 0.0
    %7964 = vmatprep.subr.mxu0 0.0
    %7965 = vmatpush2.msra.mxu0 0.0
    %7966 = vmatprep.subr.mxu0 0.0
    %7967 = vmatpush2.msra.mxu0 0.0
    %7968 = vmatprep.subr.mxu0 0.0
    %7969 = vmatpush2.msra.mxu0 0.0
    %7970 = vmatprep.subr.mxu0 0.0
    %7971 = vmatpush2.msra.mxu0 0.0
    %7972 = vmatprep.subr.mxu0 0.0
    %7973 = vmatpush2.msra.mxu0 0.0
    %7974 = vmatprep.subr.mxu0 0.0
    %7975 = vmatpush2.msra.mxu0 0.0
    %7976 = vmatprep.subr.mxu0 0.0
    %7977 = vmatpush2.msra.mxu0 0.0
    %7978 = vmatprep.subr.mxu0 0.0
    %7979 = vmatpush2.msra.mxu0 0.0
    %7980 = vmatprep.mubr.f32.mxu0 0.0
    %7981 = vmatmul.mubr.f32.gmra.mxu0 %v7908
    %v7982 = vpop.f32.mrf.mxu0
    %v7983 = vadd.f32 %v7906, %v7982
    %v7984 = vpop.f32.mrf.mxu0
    %7985 = vmatprep.mubr.f32.mxu0 0.0
    %7986 = vmatmul.mubr.f32.gmra.mxu0 %v7911
    %v7987 = vpop.f32.mrf.mxu0
    %v7988 = vadd.f32 %v7906, %v7987
    %v7989 = vpop.f32.mrf.mxu0
    %7990 = vmatprep.mubr.f32.mxu0 0.0
    %7991 = vmatmul.mubr.f32.gmra.mxu0 %v7914
    %v7992 = vpop.f32.mrf.mxu0
    %v7993 = vadd.f32 %v7906, %v7992
    %v7994 = vpop.f32.mrf.mxu0
    %7995 = vdwg.mxu0
    %v7999 = vcombine.high %v7983, %v7983
    %v8000 = vcombine.high %v7988, %v7988
    %v8001 = vcombine.high %v7993, %v7993
    %v8003 = vcombine.low %v7983, %v7999
    %v8004 = vcombine.low %v8000, %v7993
    %8007 = vst.msk [vmem:[%s8] sm:$0xff] %vm62, %v8003
    %vm8008 = vcmask 60416
    %8009 = vst.msk [vmem:[%s8 + $0x8] sm:$0xf] %vm8008, %v7988
    %8010 = vst.msk [vmem:[%s8 + $0x10] sm:$0xff] %vm62, %v8004
    %8011 = vst.msk [vmem:[%s8 + $0x18] sm:$0xf] %vm8008, %v8001
    // Predicated region
    $region38: #{baseline_transformer_forward.1} parent=1 // pred_check
      _
    $region39: #{baseline_transformer_forward.1} parent=1 // pred_check_branch
      %8013 = sbr.rel (0) target = $region41
    $region40: #{baseline_transformer_forward.1} parent=1 // pred_region
      _
    $region41: #{baseline_transformer_forward.1} parent=1 // pred_fallthru
      _
    // Predicated region
    $region42: #{baseline_transformer_forward.1} parent=1 // pred_check
      _
    $region43: #{baseline_transformer_forward.1} parent=1 // pred_check_branch
      %8015 = sbr.rel (0) target = $region45
    $region44: #{baseline_transformer_forward.1} parent=1 // pred_region
      _
    $region45: #{baseline_transformer_forward.1} parent=1 // pred_fallthru
      _
    %8016 = vsyncpa [#allocation3], 1

</llo_original>
